<compile_context>
chip_gen: v7x
topology: tpu7x:2x2x1
jax: 0.10.0
libtpu: 0.0.40
codegen_flags: <defaults>
</compile_context>

<pallas_src>
import math

import jax
import jax.numpy as jnp
from jax.experimental import pallas as pl
from jax.experimental.pallas import tpu as pltpu

D_MODEL = 256
N_HEADS_TRANS = 8
HEAD_DIM = D_MODEL // N_HEADS_TRANS
FFN = 512
LN_EPS = 1e-5
NEG_INF = -1e30


# --------------------------- fused Pallas kernel ----------------------------

def _make_fused_kernel(treedef, n_w, B, S_ct):
    D = D_MODEL
    H = N_HEADS_TRANS
    HD = HEAD_DIM
    co_scale = 1.0 / math.sqrt(D)     # co-attention: single 256-wide head
    sa_scale = 1.0 / math.sqrt(HD)    # encoder self-attention: 8 heads of 32

    def layernorm(x, g, b):
        mu = jnp.mean(x, axis=-1, keepdims=True)
        xc = x - mu
        var = jnp.mean(xc * xc, axis=-1, keepdims=True)
        return xc * jax.lax.rsqrt(var + LN_EPS) * g + b

    def matmul(x, w_bf16, b_f32):
        # weight-bearing matmul: bf16 inputs, f32 MXU accumulation
        return jnp.dot(x.astype(jnp.bfloat16), w_bf16,
                       preferred_element_type=jnp.float32) + b_f32

    def fdot(a, b):
        # activation x activation / small constant matmul, kept f32
        return jnp.dot(a, b, preferred_element_type=jnp.float32)

    def kernel(*refs):
        x_ct_ref, x_dsa_ref, sel_ref, seg_ref, emat_ref = refs[:5]
        w_refs = refs[5:5 + n_w]
        probs_ref, coattn_ref = refs[5 + n_w], refs[6 + n_w]
        p = jax.tree_util.tree_unflatten(treedef, list(w_refs))

        seg = seg_ref[...]       # (D, H) head-segment sum matrix (0/1)
        emat = emat_ref[...]     # (H, D) head-expansion matrix (0/1)

        # ---- ct_fc / dsa_fc : Linear + ReLU (dropout = eval identity) ----
        h_ct = jnp.maximum(
            matmul(x_ct_ref[...], p["ct_fc_w"][...], p["ct_fc_b"][...]), 0.0)    # (B*S_ct, D)
        h_dsa = jnp.maximum(
            matmul(x_dsa_ref[...], p["dsa_fc_w"][...], p["dsa_fc_b"][...]), 0.0)  # (B, D)

        # ---- co-attention (1 head): query = dsa rows, key+value = ct tokens ----
        q = matmul(h_dsa, p["co_q_w"][...], p["co_q_b"][...])          # (B, D)
        kv = matmul(h_ct, p["co_kv_w"][...], p["co_kv_b"][...])        # (B*S_ct, 2D) fused K|V
        k = kv[:, :D]
        v = kv[:, D:]
        s = jax.lax.dot_general(q, k, (((1,), (1,)), ((), ())),
                                preferred_element_type=jnp.float32) * co_scale   # (B, B*S_ct)
        row = jax.lax.broadcasted_iota(jnp.int32, (B, B * S_ct), 0)
        col = jax.lax.broadcasted_iota(jnp.int32, (B, B * S_ct), 1)
        valid = (col >= row * S_ct) & (col < (row + 1) * S_ct)         # block-diagonal mask
        s = jnp.where(valid, s, NEG_INF)
        s = s - jnp.max(s, axis=-1, keepdims=True)
        e = jnp.exp(s)                                                 # masked entries -> 0.0
        pr = e * pl.reciprocal(jnp.sum(e, axis=-1, keepdims=True), approx=True)  # (B, B*S_ct)
        coattn_ref[...] = fdot(pr, sel_ref[...])                       # (B, S_ct) diag blocks
        ctx = fdot(pr, v)                                              # (B, D)
        h_co = matmul(ctx, p["co_out_w"][...], p["co_out_b"][...])     # (B, D)

        # ---- shared encoder tail (post-norm, relu FFN, eval) ----
        def dense_tail(x, sa, ln1_w, ln1_b, w1, b1, w2, b2, ln2_w, ln2_b):
            x = layernorm(x + sa, ln1_w, ln1_b)
            h = jnp.maximum(matmul(x, w1, b1), 0.0)                    # (., FFN)
            h = matmul(h, w2, b2)
            return layernorm(x + h, ln2_w, ln2_b)

        def ct_layer(x, l):
            # x: (S, D) tokens-as-rows, batch=1 (ct_transformer: S == B)
            S = x.shape[0]
            qkv = matmul(x, p["ct_qkv_w"][l], p["ct_qkv_b"][l])        # (S, 3D) fused QKV
            q_a, k_a, v_a = qkv[:, :D], qkv[:, D:2 * D], qkv[:, 2 * D:]
            # all-head scores per key row j via one segment-sum matmul (no per-head loop)
            s_list = []
            for j in range(S):                                          # static unroll (S == B tiny)
                prod = q_a * k_a[j:j + 1, :]                            # (S, D) VPU
                s_list.append(fdot(prod, seg) * sa_scale)               # (S, H)
            m = s_list[0]
            for sj in s_list[1:]:
                m = jnp.maximum(m, sj)
            e_list = [jnp.exp(sj - m) for sj in s_list]
            den = e_list[0]
            for ej in e_list[1:]:
                den = den + ej
            inv = pl.reciprocal(den, approx=True)                       # (S, H)
            ctx_h = None
            for j in range(S):
                pexp = fdot(e_list[j] * inv, emat)                      # (S, D) per-head probs
                term = pexp * v_a[j:j + 1, :]
                ctx_h = term if ctx_h is None else ctx_h + term
            sa = matmul(ctx_h, p["ct_out_w"][l], p["ct_out_b"][l])
            return dense_tail(x, sa,
                              p["ct_ln1_w"][l], p["ct_ln1_b"][l],
                              p["ct_w1"][l], p["ct_b1"][l],
                              p["ct_w2"][l], p["ct_b2"][l],
                              p["ct_ln2_w"][l], p["ct_ln2_b"][l])

        def dsa_layer(x, l):
            # seq length 1: softmax over one key == 1 -> attention == fused V*out projection
            sa = matmul(x, p["dsa_sa_w"][l], p["dsa_sa_b"][l])
            return dense_tail(x, sa,
                              p["dsa_ln1_w"][l], p["dsa_ln1_b"][l],
                              p["dsa_w1"][l], p["dsa_b1"][l],
                              p["dsa_w2"][l], p["dsa_b2"][l],
                              p["dsa_ln2_w"][l], p["dsa_ln2_b"][l])

        # ct_transformer input is (B, 1, D); batch_first=False => seq=B, batch=1
        h_ct_t = ct_layer(ct_layer(h_co, 0), 1)                         # (B, D)
        # dsa_transformer input is (1, B, D) => seq=1, batch=B
        h_dsa_t = dsa_layer(dsa_layer(h_dsa, 0), 1)                     # (B, D)

        # ---- attention pooling ----
        # ct: softmax over a size-1 axis == 1.0 -> pooled value is the token itself;
        # ct_attention Linear is dead compute and skipped (exact).
        h_ct_final = h_ct_t                                             # (B, D)
        # dsa: softmax over the original dim=1 (== batch axis here, as in PyTorch source)
        sc = matmul(h_dsa_t, p["dsa_attn_w"][...], p["dsa_attn_b"][...])  # (B, 1)
        sc = sc - jnp.max(sc, axis=0, keepdims=True)
        ew = jnp.exp(sc)
        wgt = ew * pl.reciprocal(jnp.sum(ew, axis=0, keepdims=True), approx=True)  # (B, 1)
        h_dsa_final = jnp.sum(wgt * h_dsa_t, axis=0, keepdims=True)     # (1, D)

        # ---- fusion = 'concat' (split into two halves, no concat) + classifier ----
        h = jnp.dot(h_ct_final.astype(jnp.bfloat16), p["fuse1_w_ct"][...],
                    preferred_element_type=jnp.float32)
        h = h + jnp.dot(h_dsa_final.astype(jnp.bfloat16), p["fuse1_w_dsa"][...],
                        preferred_element_type=jnp.float32)             # (1,D) broadcasts to (B,D)
        h = jnp.maximum(h + p["fuse1_b"][...], 0.0)
        h = jnp.maximum(matmul(h, p["fuse2_w"][...], p["fuse2_b"][...]), 0.0)
        logits = matmul(h, p["cls_w"][...], p["cls_b"][...])            # (B, 1)
        probs_ref[...] = 1.0 / (1.0 + jnp.exp(-logits))

    return kernel


# ----------------------- weight layout prep (wrapper) -----------------------

def _prep_kernel_params(params):
    """Transpose matmul weights to (K, N) and cast to bf16; biases / LayerNorm
    params stay f32 reshaped to (1, N).  The two ct encoder layers keep full
    QKV/out weights; the two dsa (seq-1) layers ship a single fused V*out
    projection.  fusion_layer's first Linear is split into two 256-wide halves."""
    D = D_MODEL
    f32 = jnp.float32
    bf16 = jnp.bfloat16

    def tw(w):
        return jnp.asarray(w, f32).T.astype(bf16)

    def rb(b):
        return jnp.asarray(b, f32).reshape(1, -1)

    co = params["coattn"]
    ct_layers = list(params["ct_layers"])
    dsa_layers = list(params["dsa_layers"])

    def stack(layers, fn):
        return jnp.stack([fn(lp) for lp in layers], axis=0)

    # exact fusion of the seq-1 attention: sa(x) = x @ (Wv^T Wo^T) + (bv Wo^T + bo)
    def fused_sa_w(lp):
        w_v = jnp.asarray(lp["attn"]["in_proj_w"], f32)[2 * D:]        # (D, D)
        w_o = jnp.asarray(lp["attn"]["out_proj_w"], f32)               # (D, D)
        return (w_v.T @ w_o.T).astype(bf16)

    def fused_sa_b(lp):
        b_v = jnp.asarray(lp["attn"]["in_proj_b"], f32)[2 * D:]        # (D,)
        w_o = jnp.asarray(lp["attn"]["out_proj_w"], f32)
        b_o = jnp.asarray(lp["attn"]["out_proj_b"], f32)
        return (b_v @ w_o.T + b_o).reshape(1, -1)                      # (1, D) f32

    fuse1_w = jnp.asarray(params["fuse1_w"], f32)                       # (256, 512)

    return dict(
        ct_fc_w=tw(params["ct_fc_w"]), ct_fc_b=rb(params["ct_fc_b"]),
        dsa_fc_w=tw(params["dsa_fc_w"]), dsa_fc_b=rb(params["dsa_fc_b"]),
        co_q_w=tw(co["in_proj_w"][:D]), co_q_b=rb(co["in_proj_b"][:D]),
        co_kv_w=tw(co["in_proj_w"][D:]), co_kv_b=rb(co["in_proj_b"][D:]),
        co_out_w=tw(co["out_proj_w"]), co_out_b=rb(co["out_proj_b"]),
        # ct transformer (full self-attention over S=B tokens)
        ct_qkv_w=stack(ct_layers, lambda lp: tw(lp["attn"]["in_proj_w"])),   # (2, D, 3D) bf16
        ct_qkv_b=stack(ct_layers, lambda lp: rb(lp["attn"]["in_proj_b"])),   # (2, 1, 3D) f32
        ct_out_w=stack(ct_layers, lambda lp: tw(lp["attn"]["out_proj_w"])),  # (2, D, D) bf16
        ct_out_b=stack(ct_layers, lambda lp: rb(lp["attn"]["out_proj_b"])),
        ct_ln1_w=stack(ct_layers, lambda lp: rb(lp["ln1_w"])),
        ct_ln1_b=stack(ct_layers, lambda lp: rb(lp["ln1_b"])),
        ct_w1=stack(ct_layers, lambda lp: tw(lp["w1"])),                     # (2, D, FFN) bf16
        ct_b1=stack(ct_layers, lambda lp: rb(lp["b1"])),
        ct_w2=stack(ct_layers, lambda lp: tw(lp["w2"])),                     # (2, FFN, D) bf16
        ct_b2=stack(ct_layers, lambda lp: rb(lp["b2"])),
        ct_ln2_w=stack(ct_layers, lambda lp: rb(lp["ln2_w"])),
        ct_ln2_b=stack(ct_layers, lambda lp: rb(lp["ln2_b"])),
        # dsa transformer (seq length 1): only the fused V*out projection + FFN/LN
        dsa_sa_w=stack(dsa_layers, fused_sa_w),                              # (2, D, D) bf16
        dsa_sa_b=stack(dsa_layers, fused_sa_b),                              # (2, 1, D) f32
        dsa_ln1_w=stack(dsa_layers, lambda lp: rb(lp["ln1_w"])),
        dsa_ln1_b=stack(dsa_layers, lambda lp: rb(lp["ln1_b"])),
        dsa_w1=stack(dsa_layers, lambda lp: tw(lp["w1"])),
        dsa_b1=stack(dsa_layers, lambda lp: rb(lp["b1"])),
        dsa_w2=stack(dsa_layers, lambda lp: tw(lp["w2"])),
        dsa_b2=stack(dsa_layers, lambda lp: rb(lp["b2"])),
        dsa_ln2_w=stack(dsa_layers, lambda lp: rb(lp["ln2_w"])),
        dsa_ln2_b=stack(dsa_layers, lambda lp: rb(lp["ln2_b"])),
        dsa_attn_w=tw(params["dsa_attn_w"]), dsa_attn_b=rb(params["dsa_attn_b"]),
        fuse1_w_ct=fuse1_w[:, :D].T.astype(bf16),                            # (D, D)
        fuse1_w_dsa=fuse1_w[:, D:].T.astype(bf16),                           # (D, D)
        fuse1_b=rb(params["fuse1_b"]),
        fuse2_w=tw(params["fuse2_w"]), fuse2_b=rb(params["fuse2_b"]),
        cls_w=tw(params["cls_w"]), cls_b=rb(params["cls_b"]),
        # NOTE: params["ct_attn_w"/"ct_attn_b"] intentionally not passed:
        # softmax over a size-1 axis is identically 1, so they never affect the output.
    )


def mcat_surv_forward(params, x_ct, x_dsa):
    """x_ct:(B,10,256), x_dsa:(B,1,256) -> (probs:(B,1), coattn:(B,1,10))."""
    B, S_ct, D = x_ct.shape
    assert D == D_MODEL and x_dsa.shape == (B, 1, D)

    x_ct_2d = x_ct.reshape(B * S_ct, D).astype(jnp.float32)
    x_dsa_2d = x_dsa.reshape(B, D).astype(jnp.float32)

    # tiny in-VMEM constants (built once in the wrapper, zero in-kernel lowering risk)
    sel = jnp.tile(jnp.eye(S_ct, dtype=jnp.float32), (B, 1))               # (B*S_ct, S_ct)
    head_id = jnp.arange(D_MODEL, dtype=jnp.int32) // HEAD_DIM
    seg = (head_id[:, None] ==
           jnp.arange(N_HEADS_TRANS, dtype=jnp.int32)[None, :]).astype(jnp.float32)  # (D, H)
    emat = seg.T                                                           # (H, D)

    leaves, treedef = jax.tree_util.tree_flatten(_prep_kernel_params(params))
    n_w = len(leaves)
    kernel = _make_fused_kernel(treedef, n_w, B, S_ct)

    def vmem():
        return pl.BlockSpec(memory_space=pltpu.MemorySpace.VMEM)

    probs, coattn2d = pl.pallas_call(
        kernel,
        in_specs=[vmem() for _ in range(5 + n_w)],   # whole arrays, single-buffered
        out_specs=(vmem(), vmem()),
        out_shape=(
            jax.ShapeDtypeStruct((B, 1), jnp.float32),
            jax.ShapeDtypeStruct((B, S_ct), jnp.float32),
        ),
        compiler_params=pltpu.CompilerParams(vmem_limit_bytes=32 * 1024 * 1024),
    )(x_ct_2d, x_dsa_2d, sel, seg, emat, *leaves)
    return probs, coattn2d.reshape(B, 1, S_ct)


# ----------------------------- parameter init -------------------------------

def init_params(key):
    keys = iter(jax.random.split(key, 64))

    def nrm(shape, scale=0.05):
        return scale * jax.random.normal(next(keys), shape, dtype=jnp.float32)

    D = D_MODEL

    def mha_params(d):
        return dict(
            in_proj_w=nrm((3 * d, d)),
            in_proj_b=nrm((3 * d,), 0.01),
            out_proj_w=nrm((d, d)),
            out_proj_b=jnp.zeros((d,), jnp.float32),
        )

    def enc_layer_params():
        return dict(
            attn=mha_params(D),
            ln1_w=jnp.ones((D,), jnp.float32), ln1_b=jnp.zeros((D,), jnp.float32),
            w1=nrm((FFN, D)), b1=jnp.zeros((FFN,), jnp.float32),
            w2=nrm((D, FFN)), b2=jnp.zeros((D,), jnp.float32),
            ln2_w=jnp.ones((D,), jnp.float32), ln2_b=jnp.zeros((D,), jnp.float32),
        )

    # nn.TransformerEncoder deep-copies one encoder_layer -> identical init params
    shared_layer = enc_layer_params()

    return dict(
        ct_fc_w=nrm((D, D)), ct_fc_b=jnp.zeros((D,), jnp.float32),
        dsa_fc_w=nrm((D, D)), dsa_fc_b=jnp.zeros((D,), jnp.float32),
        coattn=mha_params(D),
        ct_layers=[shared_layer, shared_layer],
        dsa_layers=[shared_layer, shared_layer],
        # kept for module parity; mathematically inert (softmax over size-1 axis)
        ct_attn_w=nrm((1, D)), ct_attn_b=jnp.zeros((1,), jnp.float32),
        dsa_attn_w=nrm((1, D)), dsa_attn_b=jnp.zeros((1,), jnp.float32),
        fuse1_w=nrm((D, 2 * D)), fuse1_b=jnp.zeros((D,), jnp.float32),
        fuse2_w=nrm((D, D)), fuse2_b=jnp.zeros((D,), jnp.float32),
        cls_w=nrm((1, D)), cls_b=jnp.zeros((1,), jnp.float32),
    )


# --------------------------------- main --------------------------------------

if __name__ == "__main__":
    key = jax.random.PRNGKey(0)
    kp, kc, kd = jax.random.split(key, 3)
    params = init_params(kp)

    B = 2
    x_ct = jax.random.normal(kc, (B, 10, D_MODEL), dtype=jnp.float32)
    x_dsa = jax.random.normal(kd, (B, 1, D_MODEL), dtype=jnp.float32)

    fwd = jax.jit(mcat_surv_forward)
    probs, coattn = fwd(params, x_ct, x_dsa)
    jax.block_until_ready((probs, coattn))

    assert probs.shape == (B, 1), probs.shape
    assert coattn.shape == (B, 1, 10), coattn.shape
    assert bool(jnp.all(jnp.isfinite(probs))) and bool(jnp.all(jnp.isfinite(coattn)))
    print("KERNEL_OK")
</pallas_src>

<mosaic_0001>
module attributes {stable_mosaic.version = 11 : i64} {
  func.func @kernel(%arg0: memref<20x256xf32, #tpu.memory_space<vmem>>, %arg1: memref<2x256xf32, #tpu.memory_space<vmem>>, %arg2: memref<20x10xf32, #tpu.memory_space<vmem>>, %arg3: memref<256x8xf32, #tpu.memory_space<vmem>>, %arg4: memref<8x256xf32, #tpu.memory_space<vmem>>, %arg5: memref<1x1xf32, #tpu.memory_space<vmem>>, %arg6: memref<256x1xbf16, #tpu.memory_space<vmem>>, %arg7: memref<1x512xf32, #tpu.memory_space<vmem>>, %arg8: memref<256x512xbf16, #tpu.memory_space<vmem>>, %arg9: memref<1x256xf32, #tpu.memory_space<vmem>>, %arg10: memref<256x256xbf16, #tpu.memory_space<vmem>>, %arg11: memref<1x256xf32, #tpu.memory_space<vmem>>, %arg12: memref<256x256xbf16, #tpu.memory_space<vmem>>, %arg13: memref<2x1x512xf32, #tpu.memory_space<vmem>>, %arg14: memref<2x1x256xf32, #tpu.memory_space<vmem>>, %arg15: memref<1x256xf32, #tpu.memory_space<vmem>>, %arg16: memref<256x256xbf16, #tpu.memory_space<vmem>>, %arg17: memref<2x1x256xf32, #tpu.memory_space<vmem>>, %arg18: memref<2x1x256xf32, #tpu.memory_space<vmem>>, %arg19: memref<2x1x256xf32, #tpu.memory_space<vmem>>, %arg20: memref<2x1x256xf32, #tpu.memory_space<vmem>>, %arg21: memref<2x1x256xf32, #tpu.memory_space<vmem>>, %arg22: memref<2x256x256xbf16, #tpu.memory_space<vmem>>, %arg23: memref<2x1x768xf32, #tpu.memory_space<vmem>>, %arg24: memref<2x256x768xbf16, #tpu.memory_space<vmem>>, %arg25: memref<2x256x512xbf16, #tpu.memory_space<vmem>>, %arg26: memref<2x512x256xbf16, #tpu.memory_space<vmem>>, %arg27: memref<1x1xf32, #tpu.memory_space<vmem>>, %arg28: memref<256x1xbf16, #tpu.memory_space<vmem>>, %arg29: memref<2x1x512xf32, #tpu.memory_space<vmem>>, %arg30: memref<2x1x256xf32, #tpu.memory_space<vmem>>, %arg31: memref<1x256xf32, #tpu.memory_space<vmem>>, %arg32: memref<256x256xbf16, #tpu.memory_space<vmem>>, %arg33: memref<2x1x256xf32, #tpu.memory_space<vmem>>, %arg34: memref<2x1x256xf32, #tpu.memory_space<vmem>>, %arg35: memref<2x1x256xf32, #tpu.memory_space<vmem>>, %arg36: memref<2x1x256xf32, #tpu.memory_space<vmem>>, %arg37: memref<2x1x256xf32, #tpu.memory_space<vmem>>, %arg38: memref<2x256x256xbf16, #tpu.memory_space<vmem>>, %arg39: memref<2x256x512xbf16, #tpu.memory_space<vmem>>, %arg40: memref<2x512x256xbf16, #tpu.memory_space<vmem>>, %arg41: memref<1x256xf32, #tpu.memory_space<vmem>>, %arg42: memref<256x256xbf16, #tpu.memory_space<vmem>>, %arg43: memref<256x256xbf16, #tpu.memory_space<vmem>>, %arg44: memref<1x256xf32, #tpu.memory_space<vmem>>, %arg45: memref<256x256xbf16, #tpu.memory_space<vmem>>, %arg46: memref<2x1xf32, #tpu.memory_space<vmem>>, %arg47: memref<2x10xf32, #tpu.memory_space<vmem>>) attributes {dimension_semantics = [], scalar_prefetch = 0 : i64, scratch_operands = 0 : i64, tpu.core_type = #tpu.core_type<tc>} {
    %c0 = arith.constant 0 : index
    %c0_0 = arith.constant 0 : index
    %0 = vector.load %arg3[%c0, %c0_0] : memref<256x8xf32, #tpu.memory_space<vmem>>, vector<256x8xf32>
    %c0_1 = arith.constant 0 : index
    %c0_2 = arith.constant 0 : index
    %1 = vector.load %arg4[%c0_1, %c0_2] : memref<8x256xf32, #tpu.memory_space<vmem>>, vector<8x256xf32>
    %c0_3 = arith.constant 0 : index
    %c0_4 = arith.constant 0 : index
    %2 = vector.load %arg0[%c0_3, %c0_4] : memref<20x256xf32, #tpu.memory_space<vmem>>, vector<20x256xf32>
    %c0_5 = arith.constant 0 : index
    %c0_6 = arith.constant 0 : index
    %3 = vector.load %arg16[%c0_5, %c0_6] : memref<256x256xbf16, #tpu.memory_space<vmem>>, vector<256x256xbf16>
    %c0_7 = arith.constant 0 : index
    %c0_8 = arith.constant 0 : index
    %4 = vector.load %arg15[%c0_7, %c0_8] : memref<1x256xf32, #tpu.memory_space<vmem>>, vector<1x256xf32>
    %5 = arith.truncf %2 : vector<20x256xf32> to vector<20x256xbf16>
    %cst = arith.constant dense<0.000000e+00> : vector<20x256xf32>
    %6 = tpu.matmul %5, %3, %cst {dimension_numbers = #tpu.dot_dimension_numbers<[1], [0], [0], [1], [0, 0, 1, 1], [], []>} : vector<20x256xbf16>, vector<256x256xbf16>, vector<20x256xf32> -> vector<20x256xf32>
    %7 = vector.broadcast %4 : vector<1x256xf32> to vector<20x256xf32>
    %8 = arith.addf %6, %7 : vector<20x256xf32>
    %cst_9 = arith.constant 0.000000e+00 : f32
    %9 = vector.broadcast %cst_9 : f32 to vector<20x256xf32>
    %10 = arith.maximumf %8, %9 : vector<20x256xf32>
    %c0_10 = arith.constant 0 : index
    %c0_11 = arith.constant 0 : index
    %11 = vector.load %arg1[%c0_10, %c0_11] : memref<2x256xf32, #tpu.memory_space<vmem>>, vector<2x256xf32>
    %c0_12 = arith.constant 0 : index
    %c0_13 = arith.constant 0 : index
    %12 = vector.load %arg32[%c0_12, %c0_13] : memref<256x256xbf16, #tpu.memory_space<vmem>>, vector<256x256xbf16>
    %c0_14 = arith.constant 0 : index
    %c0_15 = arith.constant 0 : index
    %13 = vector.load %arg31[%c0_14, %c0_15] : memref<1x256xf32, #tpu.memory_space<vmem>>, vector<1x256xf32>
    %14 = arith.truncf %11 : vector<2x256xf32> to vector<2x256xbf16>
    %cst_16 = arith.constant dense<0.000000e+00> : vector<2x256xf32>
    %15 = tpu.matmul %14, %12, %cst_16 {dimension_numbers = #tpu.dot_dimension_numbers<[1], [0], [0], [1], [0, 0, 1, 1], [], []>} : vector<2x256xbf16>, vector<256x256xbf16>, vector<2x256xf32> -> vector<2x256xf32>
    %16 = vector.broadcast %13 : vector<1x256xf32> to vector<2x256xf32>
    %17 = arith.addf %15, %16 : vector<2x256xf32>
    %cst_17 = arith.constant 0.000000e+00 : f32
    %18 = vector.broadcast %cst_17 : f32 to vector<2x256xf32>
    %19 = arith.maximumf %17, %18 : vector<2x256xf32>
    %c0_18 = arith.constant 0 : index
    %c0_19 = arith.constant 0 : index
    %20 = vector.load %arg12[%c0_18, %c0_19] : memref<256x256xbf16, #tpu.memory_space<vmem>>, vector<256x256xbf16>
    %c0_20 = arith.constant 0 : index
    %c0_21 = arith.constant 0 : index
    %21 = vector.load %arg11[%c0_20, %c0_21] : memref<1x256xf32, #tpu.memory_space<vmem>>, vector<1x256xf32>
    %22 = arith.truncf %19 : vector<2x256xf32> to vector<2x256xbf16>
    %cst_22 = arith.constant dense<0.000000e+00> : vector<2x256xf32>
    %23 = tpu.matmul %22, %20, %cst_22 {dimension_numbers = #tpu.dot_dimension_numbers<[1], [0], [0], [1], [0, 0, 1, 1], [], []>} : vector<2x256xbf16>, vector<256x256xbf16>, vector<2x256xf32> -> vector<2x256xf32>
    %24 = vector.broadcast %21 : vector<1x256xf32> to vector<2x256xf32>
    %25 = arith.addf %23, %24 : vector<2x256xf32>
    %c0_23 = arith.constant 0 : index
    %c0_24 = arith.constant 0 : index
    %26 = vector.load %arg8[%c0_23, %c0_24] : memref<256x512xbf16, #tpu.memory_space<vmem>>, vector<256x512xbf16>
    %c0_25 = arith.constant 0 : index
    %c0_26 = arith.constant 0 : index
    %27 = vector.load %arg7[%c0_25, %c0_26] : memref<1x512xf32, #tpu.memory_space<vmem>>, vector<1x512xf32>
    %28 = arith.truncf %10 : vector<20x256xf32> to vector<20x256xbf16>
    %cst_27 = arith.constant dense<0.000000e+00> : vector<20x512xf32>
    %29 = tpu.matmul %28, %26, %cst_27 {dimension_numbers = #tpu.dot_dimension_numbers<[1], [0], [0], [1], [0, 0, 1, 1], [], []>} : vector<20x256xbf16>, vector<256x512xbf16>, vector<20x512xf32> -> vector<20x512xf32>
    %30 = vector.broadcast %27 : vector<1x512xf32> to vector<20x512xf32>
    %31 = arith.addf %29, %30 : vector<20x512xf32>
    %32 = vector.extract_strided_slice %31 {offsets = [0, 0], sizes = [20, 256], strides = [1, 1]} : vector<20x512xf32> to vector<20x256xf32>
    %33 = vector.extract_strided_slice %31 {offsets = [0, 256], sizes = [20, 256], strides = [1, 1]} : vector<20x512xf32> to vector<20x256xf32>
    %cst_28 = arith.constant dense<0.000000e+00> : vector<2x20xf32>
    %34 = tpu.matmul %25, %32, %cst_28 {dimension_numbers = #tpu.dot_dimension_numbers<[1], [1], [0], [0], [0, 0, 1, 0], [], []>} : vector<2x256xf32>, vector<20x256xf32>, vector<2x20xf32> -> vector<2x20xf32>
    %cst_29 = arith.constant 6.250000e-02 : f32
    %35 = vector.broadcast %cst_29 : f32 to vector<2x20xf32>
    %36 = arith.mulf %34, %35 : vector<2x20xf32>
    %37 = tpu.iota {dimensions = array<i32: 0>} : vector<2x20xi32>
    %38 = tpu.iota {dimensions = array<i32: 1>} : vector<2x20xi32>
    %c10_i32 = arith.constant 10 : i32
    %39 = vector.broadcast %c10_i32 : i32 to vector<2x20xi32>
    %40 = arith.muli %37, %39 : vector<2x20xi32>
    %41 = arith.cmpi sge, %38, %40 : vector<2x20xi32>
    %c1_i32 = arith.constant 1 : i32
    %42 = vector.broadcast %c1_i32 : i32 to vector<2x20xi32>
    %43 = arith.addi %37, %42 : vector<2x20xi32>
    %c10_i32_30 = arith.constant 10 : i32
    %44 = vector.broadcast %c10_i32_30 : i32 to vector<2x20xi32>
    %45 = arith.muli %43, %44 : vector<2x20xi32>
    %46 = arith.cmpi slt, %38, %45 : vector<2x20xi32>
    %47 = arith.andi %41, %46 : vector<2x20xi1>
    %cst_31 = arith.constant -1.000000e+30 : f32
    %48 = vector.broadcast %cst_31 : f32 to vector<2x20xf32>
    %49 = arith.select %47, %36, %48 : vector<2x20xi1>, vector<2x20xf32>
    %cst_32 = arith.constant dense<0xFF800000> : vector<2xf32>
    %50 = vector.multi_reduction <maximumf>, %49, %cst_32 [1] : vector<2x20xf32> to vector<2xf32>
    %51 = vector.shape_cast %50 : vector<2xf32> to vector<2x1xf32>
    %52 = vector.broadcast %51 : vector<2x1xf32> to vector<2x20xf32>
    %53 = arith.subf %49, %52 : vector<2x20xf32>
    %54 = math.exp %53 : vector<2x20xf32>
    %cst_33 = arith.constant dense<0.000000e+00> : vector<2xf32>
    %55 = vector.multi_reduction <add>, %54, %cst_33 [1] : vector<2x20xf32> to vector<2xf32>
    %56 = vector.shape_cast %55 : vector<2xf32> to vector<2x1xf32>
    %57 = tpu.reciprocal %56 {approx = true} : vector<2x1xf32> -> vector<2x1xf32>
    %58 = vector.broadcast %57 : vector<2x1xf32> to vector<2x20xf32>
    %59 = arith.mulf %54, %58 : vector<2x20xf32>
    %c0_34 = arith.constant 0 : index
    %c0_35 = arith.constant 0 : index
    %60 = vector.load %arg2[%c0_34, %c0_35] : memref<20x10xf32, #tpu.memory_space<vmem>>, vector<20x10xf32>
    %cst_36 = arith.constant dense<0.000000e+00> : vector<2x10xf32>
    %61 = tpu.matmul %59, %60, %cst_36 {dimension_numbers = #tpu.dot_dimension_numbers<[1], [0], [0], [1], [0, 0, 1, 1], [], []>} : vector<2x20xf32>, vector<20x10xf32>, vector<2x10xf32> -> vector<2x10xf32>
    %c0_37 = arith.constant 0 : index
    %c0_38 = arith.constant 0 : index
    %62 = vector.load %arg47[%c0_37, %c0_38] : memref<2x10xf32, #tpu.memory_space<vmem>>, vector<2x10xf32>
    tpu.vector_store %arg47[%c0_37, %c0_38], %61 {strides = array<i32>} : memref<2x10xf32, #tpu.memory_space<vmem>>, vector<2x10xf32>,
    %cst_39 = arith.constant dense<0.000000e+00> : vector<2x256xf32>
    %63 = tpu.matmul %59, %33, %cst_39 {dimension_numbers = #tpu.dot_dimension_numbers<[1], [0], [0], [1], [0, 0, 1, 1], [], []>} : vector<2x20xf32>, vector<20x256xf32>, vector<2x256xf32> -> vector<2x256xf32>
    %c0_40 = arith.constant 0 : index
    %c0_41 = arith.constant 0 : index
    %64 = vector.load %arg10[%c0_40, %c0_41] : memref<256x256xbf16, #tpu.memory_space<vmem>>, vector<256x256xbf16>
    %c0_42 = arith.constant 0 : index
    %c0_43 = arith.constant 0 : index
    %65 = vector.load %arg9[%c0_42, %c0_43] : memref<1x256xf32, #tpu.memory_space<vmem>>, vector<1x256xf32>
    %66 = arith.truncf %63 : vector<2x256xf32> to vector<2x256xbf16>
    %cst_44 = arith.constant dense<0.000000e+00> : vector<2x256xf32>
    %67 = tpu.matmul %66, %64, %cst_44 {dimension_numbers = #tpu.dot_dimension_numbers<[1], [0], [0], [1], [0, 0, 1, 1], [], []>} : vector<2x256xbf16>, vector<256x256xbf16>, vector<2x256xf32> -> vector<2x256xf32>
    %68 = vector.broadcast %65 : vector<1x256xf32> to vector<2x256xf32>
    %69 = arith.addf %67, %68 : vector<2x256xf32>
    %c0_45 = arith.constant 0 : index
    %c0_46 = arith.constant 0 : index
    %c0_47 = arith.constant 0 : index
    %70 = vector.load %arg24[%c0_45, %c0_46, %c0_47] : memref<2x256x768xbf16, #tpu.memory_space<vmem>>, vector<1x256x768xbf16>
    %71 = vector.shape_cast %70 : vector<1x256x768xbf16> to vector<256x768xbf16>
    %c0_48 = arith.constant 0 : index
    %c0_49 = arith.constant 0 : index
    %c0_50 = arith.constant 0 : index
    %72 = vector.load %arg23[%c0_48, %c0_49, %c0_50] : memref<2x1x768xf32, #tpu.memory_space<vmem>>, vector<1x1x768xf32>
    %73 = vector.shape_cast %72 : vector<1x1x768xf32> to vector<1x768xf32>
    %74 = arith.truncf %69 : vector<2x256xf32> to vector<2x256xbf16>
    %cst_51 = arith.constant dense<0.000000e+00> : vector<2x768xf32>
    %75 = tpu.matmul %74, %71, %cst_51 {dimension_numbers = #tpu.dot_dimension_numbers<[1], [0], [0], [1], [0, 0, 1, 1], [], []>} : vector<2x256xbf16>, vector<256x768xbf16>, vector<2x768xf32> -> vector<2x768xf32>
    %76 = vector.broadcast %73 : vector<1x768xf32> to vector<2x768xf32>
    %77 = arith.addf %75, %76 : vector<2x768xf32>
    %78 = vector.extract_strided_slice %77 {offsets = [0, 0], sizes = [2, 256], strides = [1, 1]} : vector<2x768xf32> to vector<2x256xf32>
    %79 = vector.extract_strided_slice %77 {offsets = [0, 256], sizes = [2, 256], strides = [1, 1]} : vector<2x768xf32> to vector<2x256xf32>
    %80 = vector.extract_strided_slice %77 {offsets = [0, 512], sizes = [2, 256], strides = [1, 1]} : vector<2x768xf32> to vector<2x256xf32>
    %81 = vector.extract_strided_slice %79 {offsets = [0, 0], sizes = [1, 256], strides = [1, 1]} : vector<2x256xf32> to vector<1x256xf32>
    %82 = vector.broadcast %81 : vector<1x256xf32> to vector<2x256xf32>
    %83 = arith.mulf %78, %82 : vector<2x256xf32>
    %cst_52 = arith.constant dense<0.000000e+00> : vector<2x8xf32>
    %84 = tpu.matmul %83, %0, %cst_52 {dimension_numbers = #tpu.dot_dimension_numbers<[1], [0], [0], [1], [0, 0, 1, 1], [], []>} : vector<2x256xf32>, vector<256x8xf32>, vector<2x8xf32> -> vector<2x8xf32>
    %cst_53 = arith.constant 0.176776692 : f32
    %85 = vector.broadcast %cst_53 : f32 to vector<2x8xf32>
    %86 = arith.mulf %84, %85 : vector<2x8xf32>
    %87 = vector.extract_strided_slice %79 {offsets = [1, 0], sizes = [1, 256], strides = [1, 1]} : vector<2x256xf32> to vector<1x256xf32>
    %88 = vector.broadcast %87 : vector<1x256xf32> to vector<2x256xf32>
    %89 = arith.mulf %78, %88 : vector<2x256xf32>
    %cst_54 = arith.constant dense<0.000000e+00> : vector<2x8xf32>
    %90 = tpu.matmul %89, %0, %cst_54 {dimension_numbers = #tpu.dot_dimension_numbers<[1], [0], [0], [1], [0, 0, 1, 1], [], []>} : vector<2x256xf32>, vector<256x8xf32>, vector<2x8xf32> -> vector<2x8xf32>
    %cst_55 = arith.constant 0.176776692 : f32
    %91 = vector.broadcast %cst_55 : f32 to vector<2x8xf32>
    %92 = arith.mulf %90, %91 : vector<2x8xf32>
    %93 = arith.maximumf %86, %92 : vector<2x8xf32>
    %94 = arith.subf %86, %93 : vector<2x8xf32>
    %95 = math.exp %94 : vector<2x8xf32>
    %96 = arith.subf %92, %93 : vector<2x8xf32>
    %97 = math.exp %96 : vector<2x8xf32>
    %98 = arith.addf %95, %97 : vector<2x8xf32>
    %99 = tpu.reciprocal %98 {approx = true} : vector<2x8xf32> -> vector<2x8xf32>
    %100 = arith.mulf %95, %99 : vector<2x8xf32>
    %cst_56 = arith.constant dense<0.000000e+00> : vector<2x256xf32>
    %101 = tpu.matmul %100, %1, %cst_56 {dimension_numbers = #tpu.dot_dimension_numbers<[1], [0], [0], [1], [0, 0, 1, 1], [], []>} : vector<2x8xf32>, vector<8x256xf32>, vector<2x256xf32> -> vector<2x256xf32>
    %102 = vector.extract_strided_slice %80 {offsets = [0, 0], sizes = [1, 256], strides = [1, 1]} : vector<2x256xf32> to vector<1x256xf32>
    %103 = vector.broadcast %102 : vector<1x256xf32> to vector<2x256xf32>
    %104 = arith.mulf %101, %103 : vector<2x256xf32>
    %105 = arith.mulf %97, %99 : vector<2x8xf32>
    %cst_57 = arith.constant dense<0.000000e+00> : vector<2x256xf32>
    %106 = tpu.matmul %105, %1, %cst_57 {dimension_numbers = #tpu.dot_dimension_numbers<[1], [0], [0], [1], [0, 0, 1, 1], [], []>} : vector<2x8xf32>, vector<8x256xf32>, vector<2x256xf32> -> vector<2x256xf32>
    %107 = vector.extract_strided_slice %80 {offsets = [1, 0], sizes = [1, 256], strides = [1, 1]} : vector<2x256xf32> to vector<1x256xf32>
    %108 = vector.broadcast %107 : vector<1x256xf32> to vector<2x256xf32>
    %109 = arith.mulf %106, %108 : vector<2x256xf32>
    %110 = arith.addf %104, %109 : vector<2x256xf32>
    %c0_58 = arith.constant 0 : index
    %c0_59 = arith.constant 0 : index
    %c0_60 = arith.constant 0 : index
    %111 = vector.load %arg22[%c0_58, %c0_59, %c0_60] : memref<2x256x256xbf16, #tpu.memory_space<vmem>>, vector<1x256x256xbf16>
    %112 = vector.shape_cast %111 : vector<1x256x256xbf16> to vector<256x256xbf16>
    %c0_61 = arith.constant 0 : index
    %c0_62 = arith.constant 0 : index
    %c0_63 = arith.constant 0 : index
    %113 = vector.load %arg21[%c0_61, %c0_62, %c0_63] : memref<2x1x256xf32, #tpu.memory_space<vmem>>, vector<1x1x256xf32>
    %114 = vector.shape_cast %113 : vector<1x1x256xf32> to vector<1x256xf32>
    %115 = arith.truncf %110 : vector<2x256xf32> to vector<2x256xbf16>
    %cst_64 = arith.constant dense<0.000000e+00> : vector<2x256xf32>
    %116 = tpu.matmul %115, %112, %cst_64 {dimension_numbers = #tpu.dot_dimension_numbers<[1], [0], [0], [1], [0, 0, 1, 1], [], []>} : vector<2x256xbf16>, vector<256x256xbf16>, vector<2x256xf32> -> vector<2x256xf32>
    %117 = vector.broadcast %114 : vector<1x256xf32> to vector<2x256xf32>
    %118 = arith.addf %116, %117 : vector<2x256xf32>
    %c0_65 = arith.constant 0 : index
    %c0_66 = arith.constant 0 : index
    %c0_67 = arith.constant 0 : index
    %119 = vector.load %arg18[%c0_65, %c0_66, %c0_67] : memref<2x1x256xf32, #tpu.memory_space<vmem>>, vector<1x1x256xf32>
    %120 = vector.shape_cast %119 : vector<1x1x256xf32> to vector<1x256xf32>
    %c0_68 = arith.constant 0 : index
    %c0_69 = arith.constant 0 : index
    %c0_70 = arith.constant 0 : index
    %121 = vector.load %arg17[%c0_68, %c0_69, %c0_70] : memref<2x1x256xf32, #tpu.memory_space<vmem>>, vector<1x1x256xf32>
    %122 = vector.shape_cast %121 : vector<1x1x256xf32> to vector<1x256xf32>
    %c0_71 = arith.constant 0 : index
    %c0_72 = arith.constant 0 : index
    %c0_73 = arith.constant 0 : index
    %123 = vector.load %arg25[%c0_71, %c0_72, %c0_73] : memref<2x256x512xbf16, #tpu.memory_space<vmem>>, vector<1x256x512xbf16>
    %124 = vector.shape_cast %123 : vector<1x256x512xbf16> to vector<256x512xbf16>
    %c0_74 = arith.constant 0 : index
    %c0_75 = arith.constant 0 : index
    %c0_76 = arith.constant 0 : index
    %125 = vector.load %arg13[%c0_74, %c0_75, %c0_76] : memref<2x1x512xf32, #tpu.memory_space<vmem>>, vector<1x1x512xf32>
    %126 = vector.shape_cast %125 : vector<1x1x512xf32> to vector<1x512xf32>
    %c0_77 = arith.constant 0 : index
    %c0_78 = arith.constant 0 : index
    %c0_79 = arith.constant 0 : index
    %127 = vector.load %arg26[%c0_77, %c0_78, %c0_79] : memref<2x512x256xbf16, #tpu.memory_space<vmem>>, vector<1x512x256xbf16>
    %128 = vector.shape_cast %127 : vector<1x512x256xbf16> to vector<512x256xbf16>
    %c0_80 = arith.constant 0 : index
    %c0_81 = arith.constant 0 : index
    %c0_82 = arith.constant 0 : index
    %129 = vector.load %arg14[%c0_80, %c0_81, %c0_82] : memref<2x1x256xf32, #tpu.memory_space<vmem>>, vector<1x1x256xf32>
    %130 = vector.shape_cast %129 : vector<1x1x256xf32> to vector<1x256xf32>
    %c0_83 = arith.constant 0 : index
    %c0_84 = arith.constant 0 : index
    %c0_85 = arith.constant 0 : index
    %131 = vector.load %arg20[%c0_83, %c0_84, %c0_85] : memref<2x1x256xf32, #tpu.memory_space<vmem>>, vector<1x1x256xf32>
    %132 = vector.shape_cast %131 : vector<1x1x256xf32> to vector<1x256xf32>
    %c0_86 = arith.constant 0 : index
    %c0_87 = arith.constant 0 : index
    %c0_88 = arith.constant 0 : index
    %133 = vector.load %arg19[%c0_86, %c0_87, %c0_88] : memref<2x1x256xf32, #tpu.memory_space<vmem>>, vector<1x1x256xf32>
    %134 = vector.shape_cast %133 : vector<1x1x256xf32> to vector<1x256xf32>
    %135 = arith.addf %69, %118 : vector<2x256xf32>
    %cst_89 = arith.constant dense<0.000000e+00> : vector<2xf32>
    %136 = vector.multi_reduction <add>, %135, %cst_89 [1] : vector<2x256xf32> to vector<2xf32>
    %137 = vector.shape_cast %136 : vector<2xf32> to vector<2x1xf32>
    %cst_90 = arith.constant 2.560000e+02 : f32
    %138 = vector.broadcast %cst_90 : f32 to vector<2x1xf32>
    %139 = arith.divf %137, %138 : vector<2x1xf32>
    %140 = vector.broadcast %139 : vector<2x1xf32> to vector<2x256xf32>
    %141 = arith.subf %135, %140 : vector<2x256xf32>
    %142 = arith.mulf %141, %141 : vector<2x256xf32>
    %cst_91 = arith.constant dense<0.000000e+00> : vector<2xf32>
    %143 = vector.multi_reduction <add>, %142, %cst_91 [1] : vector<2x256xf32> to vector<2xf32>
    %144 = vector.shape_cast %143 : vector<2xf32> to vector<2x1xf32>
    %cst_92 = arith.constant 2.560000e+02 : f32
    %145 = vector.broadcast %cst_92 : f32 to vector<2x1xf32>
    %146 = arith.divf %144, %145 : vector<2x1xf32>
    %cst_93 = arith.constant 9.99999974E-6 : f32
    %147 = vector.broadcast %cst_93 : f32 to vector<2x1xf32>
    %148 = arith.addf %146, %147 : vector<2x1xf32>
    %149 = math.rsqrt %148 : vector<2x1xf32>
    %150 = vector.broadcast %149 : vector<2x1xf32> to vector<2x256xf32>
    %151 = arith.mulf %141, %150 : vector<2x256xf32>
    %152 = vector.broadcast %120 : vector<1x256xf32> to vector<2x256xf32>
    %153 = arith.mulf %151, %152 : vector<2x256xf32>
    %154 = vector.broadcast %122 : vector<1x256xf32> to vector<2x256xf32>
    %155 = arith.addf %153, %154 : vector<2x256xf32>
    %156 = arith.truncf %155 : vector<2x256xf32> to vector<2x256xbf16>
    %cst_94 = arith.constant dense<0.000000e+00> : vector<2x512xf32>
    %157 = tpu.matmul %156, %124, %cst_94 {dimension_numbers = #tpu.dot_dimension_numbers<[1], [0], [0], [1], [0, 0, 1, 1], [], []>} : vector<2x256xbf16>, vector<256x512xbf16>, vector<2x512xf32> -> vector<2x512xf32>
    %158 = vector.broadcast %126 : vector<1x512xf32> to vector<2x512xf32>
    %159 = arith.addf %157, %158 : vector<2x512xf32>
    %cst_95 = arith.constant 0.000000e+00 : f32
    %160 = vector.broadcast %cst_95 : f32 to vector<2x512xf32>
    %161 = arith.maximumf %159, %160 : vector<2x512xf32>
    %162 = arith.truncf %161 : vector<2x512xf32> to vector<2x512xbf16>
    %cst_96 = arith.constant dense<0.000000e+00> : vector<2x256xf32>
    %163 = tpu.matmul %162, %128, %cst_96 {dimension_numbers = #tpu.dot_dimension_numbers<[1], [0], [0], [1], [0, 0, 1, 1], [], []>} : vector<2x512xbf16>, vector<512x256xbf16>, vector<2x256xf32> -> vector<2x256xf32>
    %164 = vector.broadcast %130 : vector<1x256xf32> to vector<2x256xf32>
    %165 = arith.addf %163, %164 : vector<2x256xf32>
    %166 = arith.addf %155, %165 : vector<2x256xf32>
    %cst_97 = arith.constant dense<0.000000e+00> : vector<2xf32>
    %167 = vector.multi_reduction <add>, %166, %cst_97 [1] : vector<2x256xf32> to vector<2xf32>
    %168 = vector.shape_cast %167 : vector<2xf32> to vector<2x1xf32>
    %cst_98 = arith.constant 2.560000e+02 : f32
    %169 = vector.broadcast %cst_98 : f32 to vector<2x1xf32>
    %170 = arith.divf %168, %169 : vector<2x1xf32>
    %171 = vector.broadcast %170 : vector<2x1xf32> to vector<2x256xf32>
    %172 = arith.subf %166, %171 : vector<2x256xf32>
    %173 = arith.mulf %172, %172 : vector<2x256xf32>
    %cst_99 = arith.constant dense<0.000000e+00> : vector<2xf32>
    %174 = vector.multi_reduction <add>, %173, %cst_99 [1] : vector<2x256xf32> to vector<2xf32>
    %175 = vector.shape_cast %174 : vector<2xf32> to vector<2x1xf32>
    %cst_100 = arith.constant 2.560000e+02 : f32
    %176 = vector.broadcast %cst_100 : f32 to vector<2x1xf32>
    %177 = arith.divf %175, %176 : vector<2x1xf32>
    %cst_101 = arith.constant 9.99999974E-6 : f32
    %178 = vector.broadcast %cst_101 : f32 to vector<2x1xf32>
    %179 = arith.addf %177, %178 : vector<2x1xf32>
    %180 = math.rsqrt %179 : vector<2x1xf32>
    %181 = vector.broadcast %180 : vector<2x1xf32> to vector<2x256xf32>
    %182 = arith.mulf %172, %181 : vector<2x256xf32>
    %183 = vector.broadcast %132 : vector<1x256xf32> to vector<2x256xf32>
    %184 = arith.mulf %182, %183 : vector<2x256xf32>
    %185 = vector.broadcast %134 : vector<1x256xf32> to vector<2x256xf32>
    %186 = arith.addf %184, %185 : vector<2x256xf32>
    %c1 = arith.constant 1 : index
    %c0_102 = arith.constant 0 : index
    %c0_103 = arith.constant 0 : index
    %187 = vector.load %arg24[%c1, %c0_102, %c0_103] : memref<2x256x768xbf16, #tpu.memory_space<vmem>>, vector<1x256x768xbf16>
    %188 = vector.shape_cast %187 : vector<1x256x768xbf16> to vector<256x768xbf16>
    %c1_104 = arith.constant 1 : index
    %c0_105 = arith.constant 0 : index
    %c0_106 = arith.constant 0 : index
    %189 = vector.load %arg23[%c1_104, %c0_105, %c0_106] : memref<2x1x768xf32, #tpu.memory_space<vmem>>, vector<1x1x768xf32>
    %190 = vector.shape_cast %189 : vector<1x1x768xf32> to vector<1x768xf32>
    %191 = arith.truncf %186 : vector<2x256xf32> to vector<2x256xbf16>
    %cst_107 = arith.constant dense<0.000000e+00> : vector<2x768xf32>
    %192 = tpu.matmul %191, %188, %cst_107 {dimension_numbers = #tpu.dot_dimension_numbers<[1], [0], [0], [1], [0, 0, 1, 1], [], []>} : vector<2x256xbf16>, vector<256x768xbf16>, vector<2x768xf32> -> vector<2x768xf32>
    %193 = vector.broadcast %190 : vector<1x768xf32> to vector<2x768xf32>
    %194 = arith.addf %192, %193 : vector<2x768xf32>
    %195 = vector.extract_strided_slice %194 {offsets = [0, 0], sizes = [2, 256], strides = [1, 1]} : vector<2x768xf32> to vector<2x256xf32>
    %196 = vector.extract_strided_slice %194 {offsets = [0, 256], sizes = [2, 256], strides = [1, 1]} : vector<2x768xf32> to vector<2x256xf32>
    %197 = vector.extract_strided_slice %194 {offsets = [0, 512], sizes = [2, 256], strides = [1, 1]} : vector<2x768xf32> to vector<2x256xf32>
    %198 = vector.extract_strided_slice %196 {offsets = [0, 0], sizes = [1, 256], strides = [1, 1]} : vector<2x256xf32> to vector<1x256xf32>
    %199 = vector.broadcast %198 : vector<1x256xf32> to vector<2x256xf32>
    %200 = arith.mulf %195, %199 : vector<2x256xf32>
    %cst_108 = arith.constant dense<0.000000e+00> : vector<2x8xf32>
    %201 = tpu.matmul %200, %0, %cst_108 {dimension_numbers = #tpu.dot_dimension_numbers<[1], [0], [0], [1], [0, 0, 1, 1], [], []>} : vector<2x256xf32>, vector<256x8xf32>, vector<2x8xf32> -> vector<2x8xf32>
    %cst_109 = arith.constant 0.176776692 : f32
    %202 = vector.broadcast %cst_109 : f32 to vector<2x8xf32>
    %203 = arith.mulf %201, %202 : vector<2x8xf32>
    %204 = vector.extract_strided_slice %196 {offsets = [1, 0], sizes = [1, 256], strides = [1, 1]} : vector<2x256xf32> to vector<1x256xf32>
    %205 = vector.broadcast %204 : vector<1x256xf32> to vector<2x256xf32>
    %206 = arith.mulf %195, %205 : vector<2x256xf32>
    %cst_110 = arith.constant dense<0.000000e+00> : vector<2x8xf32>
    %207 = tpu.matmul %206, %0, %cst_110 {dimension_numbers = #tpu.dot_dimension_numbers<[1], [0], [0], [1], [0, 0, 1, 1], [], []>} : vector<2x256xf32>, vector<256x8xf32>, vector<2x8xf32> -> vector<2x8xf32>
    %cst_111 = arith.constant 0.176776692 : f32
    %208 = vector.broadcast %cst_111 : f32 to vector<2x8xf32>
    %209 = arith.mulf %207, %208 : vector<2x8xf32>
    %210 = arith.maximumf %203, %209 : vector<2x8xf32>
    %211 = arith.subf %203, %210 : vector<2x8xf32>
    %212 = math.exp %211 : vector<2x8xf32>
    %213 = arith.subf %209, %210 : vector<2x8xf32>
    %214 = math.exp %213 : vector<2x8xf32>
    %215 = arith.addf %212, %214 : vector<2x8xf32>
    %216 = tpu.reciprocal %215 {approx = true} : vector<2x8xf32> -> vector<2x8xf32>
    %217 = arith.mulf %212, %216 : vector<2x8xf32>
    %cst_112 = arith.constant dense<0.000000e+00> : vector<2x256xf32>
    %218 = tpu.matmul %217, %1, %cst_112 {dimension_numbers = #tpu.dot_dimension_numbers<[1], [0], [0], [1], [0, 0, 1, 1], [], []>} : vector<2x8xf32>, vector<8x256xf32>, vector<2x256xf32> -> vector<2x256xf32>
    %219 = vector.extract_strided_slice %197 {offsets = [0, 0], sizes = [1, 256], strides = [1, 1]} : vector<2x256xf32> to vector<1x256xf32>
    %220 = vector.broadcast %219 : vector<1x256xf32> to vector<2x256xf32>
    %221 = arith.mulf %218, %220 : vector<2x256xf32>
    %222 = arith.mulf %214, %216 : vector<2x8xf32>
    %cst_113 = arith.constant dense<0.000000e+00> : vector<2x256xf32>
    %223 = tpu.matmul %222, %1, %cst_113 {dimension_numbers = #tpu.dot_dimension_numbers<[1], [0], [0], [1], [0, 0, 1, 1], [], []>} : vector<2x8xf32>, vector<8x256xf32>, vector<2x256xf32> -> vector<2x256xf32>
    %224 = vector.extract_strided_slice %197 {offsets = [1, 0], sizes = [1, 256], strides = [1, 1]} : vector<2x256xf32> to vector<1x256xf32>
    %225 = vector.broadcast %224 : vector<1x256xf32> to vector<2x256xf32>
    %226 = arith.mulf %223, %225 : vector<2x256xf32>
    %227 = arith.addf %221, %226 : vector<2x256xf32>
    %c1_114 = arith.constant 1 : index
    %c0_115 = arith.constant 0 : index
    %c0_116 = arith.constant 0 : index
    %228 = vector.load %arg22[%c1_114, %c0_115, %c0_116] : memref<2x256x256xbf16, #tpu.memory_space<vmem>>, vector<1x256x256xbf16>
    %229 = vector.shape_cast %228 : vector<1x256x256xbf16> to vector<256x256xbf16>
    %c1_117 = arith.constant 1 : index
    %c0_118 = arith.constant 0 : index
    %c0_119 = arith.constant 0 : index
    %230 = vector.load %arg21[%c1_117, %c0_118, %c0_119] : memref<2x1x256xf32, #tpu.memory_space<vmem>>, vector<1x1x256xf32>
    %231 = vector.shape_cast %230 : vector<1x1x256xf32> to vector<1x256xf32>
    %232 = arith.truncf %227 : vector<2x256xf32> to vector<2x256xbf16>
    %cst_120 = arith.constant dense<0.000000e+00> : vector<2x256xf32>
    %233 = tpu.matmul %232, %229, %cst_120 {dimension_numbers = #tpu.dot_dimension_numbers<[1], [0], [0], [1], [0, 0, 1, 1], [], []>} : vector<2x256xbf16>, vector<256x256xbf16>, vector<2x256xf32> -> vector<2x256xf32>
    %234 = vector.broadcast %231 : vector<1x256xf32> to vector<2x256xf32>
    %235 = arith.addf %233, %234 : vector<2x256xf32>
    %c1_121 = arith.constant 1 : index
    %c0_122 = arith.constant 0 : index
    %c0_123 = arith.constant 0 : index
    %236 = vector.load %arg18[%c1_121, %c0_122, %c0_123] : memref<2x1x256xf32, #tpu.memory_space<vmem>>, vector<1x1x256xf32>
    %237 = vector.shape_cast %236 : vector<1x1x256xf32> to vector<1x256xf32>
    %c1_124 = arith.constant 1 : index
    %c0_125 = arith.constant 0 : index
    %c0_126 = arith.constant 0 : index
    %238 = vector.load %arg17[%c1_124, %c0_125, %c0_126] : memref<2x1x256xf32, #tpu.memory_space<vmem>>, vector<1x1x256xf32>
    %239 = vector.shape_cast %238 : vector<1x1x256xf32> to vector<1x256xf32>
    %c1_127 = arith.constant 1 : index
    %c0_128 = arith.constant 0 : index
    %c0_129 = arith.constant 0 : index
    %240 = vector.load %arg25[%c1_127, %c0_128, %c0_129] : memref<2x256x512xbf16, #tpu.memory_space<vmem>>, vector<1x256x512xbf16>
    %241 = vector.shape_cast %240 : vector<1x256x512xbf16> to vector<256x512xbf16>
    %c1_130 = arith.constant 1 : index
    %c0_131 = arith.constant 0 : index
    %c0_132 = arith.constant 0 : index
    %242 = vector.load %arg13[%c1_130, %c0_131, %c0_132] : memref<2x1x512xf32, #tpu.memory_space<vmem>>, vector<1x1x512xf32>
    %243 = vector.shape_cast %242 : vector<1x1x512xf32> to vector<1x512xf32>
    %c1_133 = arith.constant 1 : index
    %c0_134 = arith.constant 0 : index
    %c0_135 = arith.constant 0 : index
    %244 = vector.load %arg26[%c1_133, %c0_134, %c0_135] : memref<2x512x256xbf16, #tpu.memory_space<vmem>>, vector<1x512x256xbf16>
    %245 = vector.shape_cast %244 : vector<1x512x256xbf16> to vector<512x256xbf16>
    %c1_136 = arith.constant 1 : index
    %c0_137 = arith.constant 0 : index
    %c0_138 = arith.constant 0 : index
    %246 = vector.load %arg14[%c1_136, %c0_137, %c0_138] : memref<2x1x256xf32, #tpu.memory_space<vmem>>, vector<1x1x256xf32>
    %247 = vector.shape_cast %246 : vector<1x1x256xf32> to vector<1x256xf32>
    %c1_139 = arith.constant 1 : index
    %c0_140 = arith.constant 0 : index
    %c0_141 = arith.constant 0 : index
    %248 = vector.load %arg20[%c1_139, %c0_140, %c0_141] : memref<2x1x256xf32, #tpu.memory_space<vmem>>, vector<1x1x256xf32>
    %249 = vector.shape_cast %248 : vector<1x1x256xf32> to vector<1x256xf32>
    %c1_142 = arith.constant 1 : index
    %c0_143 = arith.constant 0 : index
    %c0_144 = arith.constant 0 : index
    %250 = vector.load %arg19[%c1_142, %c0_143, %c0_144] : memref<2x1x256xf32, #tpu.memory_space<vmem>>, vector<1x1x256xf32>
    %251 = vector.shape_cast %250 : vector<1x1x256xf32> to vector<1x256xf32>
    %252 = arith.addf %186, %235 : vector<2x256xf32>
    %cst_145 = arith.constant dense<0.000000e+00> : vector<2xf32>
    %253 = vector.multi_reduction <add>, %252, %cst_145 [1] : vector<2x256xf32> to vector<2xf32>
    %254 = vector.shape_cast %253 : vector<2xf32> to vector<2x1xf32>
    %cst_146 = arith.constant 2.560000e+02 : f32
    %255 = vector.broadcast %cst_146 : f32 to vector<2x1xf32>
    %256 = arith.divf %254, %255 : vector<2x1xf32>
    %257 = vector.broadcast %256 : vector<2x1xf32> to vector<2x256xf32>
    %258 = arith.subf %252, %257 : vector<2x256xf32>
    %259 = arith.mulf %258, %258 : vector<2x256xf32>
    %cst_147 = arith.constant dense<0.000000e+00> : vector<2xf32>
    %260 = vector.multi_reduction <add>, %259, %cst_147 [1] : vector<2x256xf32> to vector<2xf32>
    %261 = vector.shape_cast %260 : vector<2xf32> to vector<2x1xf32>
    %cst_148 = arith.constant 2.560000e+02 : f32
    %262 = vector.broadcast %cst_148 : f32 to vector<2x1xf32>
    %263 = arith.divf %261, %262 : vector<2x1xf32>
    %cst_149 = arith.constant 9.99999974E-6 : f32
    %264 = vector.broadcast %cst_149 : f32 to vector<2x1xf32>
    %265 = arith.addf %263, %264 : vector<2x1xf32>
    %266 = math.rsqrt %265 : vector<2x1xf32>
    %267 = vector.broadcast %266 : vector<2x1xf32> to vector<2x256xf32>
    %268 = arith.mulf %258, %267 : vector<2x256xf32>
    %269 = vector.broadcast %237 : vector<1x256xf32> to vector<2x256xf32>
    %270 = arith.mulf %268, %269 : vector<2x256xf32>
    %271 = vector.broadcast %239 : vector<1x256xf32> to vector<2x256xf32>
    %272 = arith.addf %270, %271 : vector<2x256xf32>
    %273 = arith.truncf %272 : vector<2x256xf32> to vector<2x256xbf16>
    %cst_150 = arith.constant dense<0.000000e+00> : vector<2x512xf32>
    %274 = tpu.matmul %273, %241, %cst_150 {dimension_numbers = #tpu.dot_dimension_numbers<[1], [0], [0], [1], [0, 0, 1, 1], [], []>} : vector<2x256xbf16>, vector<256x512xbf16>, vector<2x512xf32> -> vector<2x512xf32>
    %275 = vector.broadcast %243 : vector<1x512xf32> to vector<2x512xf32>
    %276 = arith.addf %274, %275 : vector<2x512xf32>
    %cst_151 = arith.constant 0.000000e+00 : f32
    %277 = vector.broadcast %cst_151 : f32 to vector<2x512xf32>
    %278 = arith.maximumf %276, %277 : vector<2x512xf32>
    %279 = arith.truncf %278 : vector<2x512xf32> to vector<2x512xbf16>
    %cst_152 = arith.constant dense<0.000000e+00> : vector<2x256xf32>
    %280 = tpu.matmul %279, %245, %cst_152 {dimension_numbers = #tpu.dot_dimension_numbers<[1], [0], [0], [1], [0, 0, 1, 1], [], []>} : vector<2x512xbf16>, vector<512x256xbf16>, vector<2x256xf32> -> vector<2x256xf32>
    %281 = vector.broadcast %247 : vector<1x256xf32> to vector<2x256xf32>
    %282 = arith.addf %280, %281 : vector<2x256xf32>
    %283 = arith.addf %272, %282 : vector<2x256xf32>
    %cst_153 = arith.constant dense<0.000000e+00> : vector<2xf32>
    %284 = vector.multi_reduction <add>, %283, %cst_153 [1] : vector<2x256xf32> to vector<2xf32>
    %285 = vector.shape_cast %284 : vector<2xf32> to vector<2x1xf32>
    %cst_154 = arith.constant 2.560000e+02 : f32
    %286 = vector.broadcast %cst_154 : f32 to vector<2x1xf32>
    %287 = arith.divf %285, %286 : vector<2x1xf32>
    %288 = vector.broadcast %287 : vector<2x1xf32> to vector<2x256xf32>
    %289 = arith.subf %283, %288 : vector<2x256xf32>
    %290 = arith.mulf %289, %289 : vector<2x256xf32>
    %cst_155 = arith.constant dense<0.000000e+00> : vector<2xf32>
    %291 = vector.multi_reduction <add>, %290, %cst_155 [1] : vector<2x256xf32> to vector<2xf32>
    %292 = vector.shape_cast %291 : vector<2xf32> to vector<2x1xf32>
    %cst_156 = arith.constant 2.560000e+02 : f32
    %293 = vector.broadcast %cst_156 : f32 to vector<2x1xf32>
    %294 = arith.divf %292, %293 : vector<2x1xf32>
    %cst_157 = arith.constant 9.99999974E-6 : f32
    %295 = vector.broadcast %cst_157 : f32 to vector<2x1xf32>
    %296 = arith.addf %294, %295 : vector<2x1xf32>
    %297 = math.rsqrt %296 : vector<2x1xf32>
    %298 = vector.broadcast %297 : vector<2x1xf32> to vector<2x256xf32>
    %299 = arith.mulf %289, %298 : vector<2x256xf32>
    %300 = vector.broadcast %249 : vector<1x256xf32> to vector<2x256xf32>
    %301 = arith.mulf %299, %300 : vector<2x256xf32>
    %302 = vector.broadcast %251 : vector<1x256xf32> to vector<2x256xf32>
    %303 = arith.addf %301, %302 : vector<2x256xf32>
    %c0_158 = arith.constant 0 : index
    %c0_159 = arith.constant 0 : index
    %c0_160 = arith.constant 0 : index
    %304 = vector.load %arg38[%c0_158, %c0_159, %c0_160] : memref<2x256x256xbf16, #tpu.memory_space<vmem>>, vector<1x256x256xbf16>
    %305 = vector.shape_cast %304 : vector<1x256x256xbf16> to vector<256x256xbf16>
    %c0_161 = arith.constant 0 : index
    %c0_162 = arith.constant 0 : index
    %c0_163 = arith.constant 0 : index
    %306 = vector.load %arg37[%c0_161, %c0_162, %c0_163] : memref<2x1x256xf32, #tpu.memory_space<vmem>>, vector<1x1x256xf32>
    %307 = vector.shape_cast %306 : vector<1x1x256xf32> to vector<1x256xf32>
    %308 = arith.truncf %19 : vector<2x256xf32> to vector<2x256xbf16>
    %cst_164 = arith.constant dense<0.000000e+00> : vector<2x256xf32>
    %309 = tpu.matmul %308, %305, %cst_164 {dimension_numbers = #tpu.dot_dimension_numbers<[1], [0], [0], [1], [0, 0, 1, 1], [], []>} : vector<2x256xbf16>, vector<256x256xbf16>, vector<2x256xf32> -> vector<2x256xf32>
    %310 = vector.broadcast %307 : vector<1x256xf32> to vector<2x256xf32>
    %311 = arith.addf %309, %310 : vector<2x256xf32>
    %c0_165 = arith.constant 0 : index
    %c0_166 = arith.constant 0 : index
    %c0_167 = arith.constant 0 : index
    %312 = vector.load %arg34[%c0_165, %c0_166, %c0_167] : memref<2x1x256xf32, #tpu.memory_space<vmem>>, vector<1x1x256xf32>
    %313 = vector.shape_cast %312 : vector<1x1x256xf32> to vector<1x256xf32>
    %c0_168 = arith.constant 0 : index
    %c0_169 = arith.constant 0 : index
    %c0_170 = arith.constant 0 : index
    %314 = vector.load %arg33[%c0_168, %c0_169, %c0_170] : memref<2x1x256xf32, #tpu.memory_space<vmem>>, vector<1x1x256xf32>
    %315 = vector.shape_cast %314 : vector<1x1x256xf32> to vector<1x256xf32>
    %c0_171 = arith.constant 0 : index
    %c0_172 = arith.constant 0 : index
    %c0_173 = arith.constant 0 : index
    %316 = vector.load %arg39[%c0_171, %c0_172, %c0_173] : memref<2x256x512xbf16, #tpu.memory_space<vmem>>, vector<1x256x512xbf16>
    %317 = vector.shape_cast %316 : vector<1x256x512xbf16> to vector<256x512xbf16>
    %c0_174 = arith.constant 0 : index
    %c0_175 = arith.constant 0 : index
    %c0_176 = arith.constant 0 : index
    %318 = vector.load %arg29[%c0_174, %c0_175, %c0_176] : memref<2x1x512xf32, #tpu.memory_space<vmem>>, vector<1x1x512xf32>
    %319 = vector.shape_cast %318 : vector<1x1x512xf32> to vector<1x512xf32>
    %c0_177 = arith.constant 0 : index
    %c0_178 = arith.constant 0 : index
    %c0_179 = arith.constant 0 : index
    %320 = vector.load %arg40[%c0_177, %c0_178, %c0_179] : memref<2x512x256xbf16, #tpu.memory_space<vmem>>, vector<1x512x256xbf16>
    %321 = vector.shape_cast %320 : vector<1x512x256xbf16> to vector<512x256xbf16>
    %c0_180 = arith.constant 0 : index
    %c0_181 = arith.constant 0 : index
    %c0_182 = arith.constant 0 : index
    %322 = vector.load %arg30[%c0_180, %c0_181, %c0_182] : memref<2x1x256xf32, #tpu.memory_space<vmem>>, vector<1x1x256xf32>
    %323 = vector.shape_cast %322 : vector<1x1x256xf32> to vector<1x256xf32>
    %c0_183 = arith.constant 0 : index
    %c0_184 = arith.constant 0 : index
    %c0_185 = arith.constant 0 : index
    %324 = vector.load %arg36[%c0_183, %c0_184, %c0_185] : memref<2x1x256xf32, #tpu.memory_space<vmem>>, vector<1x1x256xf32>
    %325 = vector.shape_cast %324 : vector<1x1x256xf32> to vector<1x256xf32>
    %c0_186 = arith.constant 0 : index
    %c0_187 = arith.constant 0 : index
    %c0_188 = arith.constant 0 : index
    %326 = vector.load %arg35[%c0_186, %c0_187, %c0_188] : memref<2x1x256xf32, #tpu.memory_space<vmem>>, vector<1x1x256xf32>
    %327 = vector.shape_cast %326 : vector<1x1x256xf32> to vector<1x256xf32>
    %328 = arith.addf %19, %311 : vector<2x256xf32>
    %cst_189 = arith.constant dense<0.000000e+00> : vector<2xf32>
    %329 = vector.multi_reduction <add>, %328, %cst_189 [1] : vector<2x256xf32> to vector<2xf32>
    %330 = vector.shape_cast %329 : vector<2xf32> to vector<2x1xf32>
    %cst_190 = arith.constant 2.560000e+02 : f32
    %331 = vector.broadcast %cst_190 : f32 to vector<2x1xf32>
    %332 = arith.divf %330, %331 : vector<2x1xf32>
    %333 = vector.broadcast %332 : vector<2x1xf32> to vector<2x256xf32>
    %334 = arith.subf %328, %333 : vector<2x256xf32>
    %335 = arith.mulf %334, %334 : vector<2x256xf32>
    %cst_191 = arith.constant dense<0.000000e+00> : vector<2xf32>
    %336 = vector.multi_reduction <add>, %335, %cst_191 [1] : vector<2x256xf32> to vector<2xf32>
    %337 = vector.shape_cast %336 : vector<2xf32> to vector<2x1xf32>
    %cst_192 = arith.constant 2.560000e+02 : f32
    %338 = vector.broadcast %cst_192 : f32 to vector<2x1xf32>
    %339 = arith.divf %337, %338 : vector<2x1xf32>
    %cst_193 = arith.constant 9.99999974E-6 : f32
    %340 = vector.broadcast %cst_193 : f32 to vector<2x1xf32>
    %341 = arith.addf %339, %340 : vector<2x1xf32>
    %342 = math.rsqrt %341 : vector<2x1xf32>
    %343 = vector.broadcast %342 : vector<2x1xf32> to vector<2x256xf32>
    %344 = arith.mulf %334, %343 : vector<2x256xf32>
    %345 = vector.broadcast %313 : vector<1x256xf32> to vector<2x256xf32>
    %346 = arith.mulf %344, %345 : vector<2x256xf32>
    %347 = vector.broadcast %315 : vector<1x256xf32> to vector<2x256xf32>
    %348 = arith.addf %346, %347 : vector<2x256xf32>
    %349 = arith.truncf %348 : vector<2x256xf32> to vector<2x256xbf16>
    %cst_194 = arith.constant dense<0.000000e+00> : vector<2x512xf32>
    %350 = tpu.matmul %349, %317, %cst_194 {dimension_numbers = #tpu.dot_dimension_numbers<[1], [0], [0], [1], [0, 0, 1, 1], [], []>} : vector<2x256xbf16>, vector<256x512xbf16>, vector<2x512xf32> -> vector<2x512xf32>
    %351 = vector.broadcast %319 : vector<1x512xf32> to vector<2x512xf32>
    %352 = arith.addf %350, %351 : vector<2x512xf32>
    %cst_195 = arith.constant 0.000000e+00 : f32
    %353 = vector.broadcast %cst_195 : f32 to vector<2x512xf32>
    %354 = arith.maximumf %352, %353 : vector<2x512xf32>
    %355 = arith.truncf %354 : vector<2x512xf32> to vector<2x512xbf16>
    %cst_196 = arith.constant dense<0.000000e+00> : vector<2x256xf32>
    %356 = tpu.matmul %355, %321, %cst_196 {dimension_numbers = #tpu.dot_dimension_numbers<[1], [0], [0], [1], [0, 0, 1, 1], [], []>} : vector<2x512xbf16>, vector<512x256xbf16>, vector<2x256xf32> -> vector<2x256xf32>
    %357 = vector.broadcast %323 : vector<1x256xf32> to vector<2x256xf32>
    %358 = arith.addf %356, %357 : vector<2x256xf32>
    %359 = arith.addf %348, %358 : vector<2x256xf32>
    %cst_197 = arith.constant dense<0.000000e+00> : vector<2xf32>
    %360 = vector.multi_reduction <add>, %359, %cst_197 [1] : vector<2x256xf32> to vector<2xf32>
    %361 = vector.shape_cast %360 : vector<2xf32> to vector<2x1xf32>
    %cst_198 = arith.constant 2.560000e+02 : f32
    %362 = vector.broadcast %cst_198 : f32 to vector<2x1xf32>
    %363 = arith.divf %361, %362 : vector<2x1xf32>
    %364 = vector.broadcast %363 : vector<2x1xf32> to vector<2x256xf32>
    %365 = arith.subf %359, %364 : vector<2x256xf32>
    %366 = arith.mulf %365, %365 : vector<2x256xf32>
    %cst_199 = arith.constant dense<0.000000e+00> : vector<2xf32>
    %367 = vector.multi_reduction <add>, %366, %cst_199 [1] : vector<2x256xf32> to vector<2xf32>
    %368 = vector.shape_cast %367 : vector<2xf32> to vector<2x1xf32>
    %cst_200 = arith.constant 2.560000e+02 : f32
    %369 = vector.broadcast %cst_200 : f32 to vector<2x1xf32>
    %370 = arith.divf %368, %369 : vector<2x1xf32>
    %cst_201 = arith.constant 9.99999974E-6 : f32
    %371 = vector.broadcast %cst_201 : f32 to vector<2x1xf32>
    %372 = arith.addf %370, %371 : vector<2x1xf32>
    %373 = math.rsqrt %372 : vector<2x1xf32>
    %374 = vector.broadcast %373 : vector<2x1xf32> to vector<2x256xf32>
    %375 = arith.mulf %365, %374 : vector<2x256xf32>
    %376 = vector.broadcast %325 : vector<1x256xf32> to vector<2x256xf32>
    %377 = arith.mulf %375, %376 : vector<2x256xf32>
    %378 = vector.broadcast %327 : vector<1x256xf32> to vector<2x256xf32>
    %379 = arith.addf %377, %378 : vector<2x256xf32>
    %c1_202 = arith.constant 1 : index
    %c0_203 = arith.constant 0 : index
    %c0_204 = arith.constant 0 : index
    %380 = vector.load %arg38[%c1_202, %c0_203, %c0_204] : memref<2x256x256xbf16, #tpu.memory_space<vmem>>, vector<1x256x256xbf16>
    %381 = vector.shape_cast %380 : vector<1x256x256xbf16> to vector<256x256xbf16>
    %c1_205 = arith.constant 1 : index
    %c0_206 = arith.constant 0 : index
    %c0_207 = arith.constant 0 : index
    %382 = vector.load %arg37[%c1_205, %c0_206, %c0_207] : memref<2x1x256xf32, #tpu.memory_space<vmem>>, vector<1x1x256xf32>
    %383 = vector.shape_cast %382 : vector<1x1x256xf32> to vector<1x256xf32>
    %384 = arith.truncf %379 : vector<2x256xf32> to vector<2x256xbf16>
    %cst_208 = arith.constant dense<0.000000e+00> : vector<2x256xf32>
    %385 = tpu.matmul %384, %381, %cst_208 {dimension_numbers = #tpu.dot_dimension_numbers<[1], [0], [0], [1], [0, 0, 1, 1], [], []>} : vector<2x256xbf16>, vector<256x256xbf16>, vector<2x256xf32> -> vector<2x256xf32>
    %386 = vector.broadcast %383 : vector<1x256xf32> to vector<2x256xf32>
    %387 = arith.addf %385, %386 : vector<2x256xf32>
    %c1_209 = arith.constant 1 : index
    %c0_210 = arith.constant 0 : index
    %c0_211 = arith.constant 0 : index
    %388 = vector.load %arg34[%c1_209, %c0_210, %c0_211] : memref<2x1x256xf32, #tpu.memory_space<vmem>>, vector<1x1x256xf32>
    %389 = vector.shape_cast %388 : vector<1x1x256xf32> to vector<1x256xf32>
    %c1_212 = arith.constant 1 : index
    %c0_213 = arith.constant 0 : index
    %c0_214 = arith.constant 0 : index
    %390 = vector.load %arg33[%c1_212, %c0_213, %c0_214] : memref<2x1x256xf32, #tpu.memory_space<vmem>>, vector<1x1x256xf32>
    %391 = vector.shape_cast %390 : vector<1x1x256xf32> to vector<1x256xf32>
    %c1_215 = arith.constant 1 : index
    %c0_216 = arith.constant 0 : index
    %c0_217 = arith.constant 0 : index
    %392 = vector.load %arg39[%c1_215, %c0_216, %c0_217] : memref<2x256x512xbf16, #tpu.memory_space<vmem>>, vector<1x256x512xbf16>
    %393 = vector.shape_cast %392 : vector<1x256x512xbf16> to vector<256x512xbf16>
    %c1_218 = arith.constant 1 : index
    %c0_219 = arith.constant 0 : index
    %c0_220 = arith.constant 0 : index
    %394 = vector.load %arg29[%c1_218, %c0_219, %c0_220] : memref<2x1x512xf32, #tpu.memory_space<vmem>>, vector<1x1x512xf32>
    %395 = vector.shape_cast %394 : vector<1x1x512xf32> to vector<1x512xf32>
    %c1_221 = arith.constant 1 : index
    %c0_222 = arith.constant 0 : index
    %c0_223 = arith.constant 0 : index
    %396 = vector.load %arg40[%c1_221, %c0_222, %c0_223] : memref<2x512x256xbf16, #tpu.memory_space<vmem>>, vector<1x512x256xbf16>
    %397 = vector.shape_cast %396 : vector<1x512x256xbf16> to vector<512x256xbf16>
    %c1_224 = arith.constant 1 : index
    %c0_225 = arith.constant 0 : index
    %c0_226 = arith.constant 0 : index
    %398 = vector.load %arg30[%c1_224, %c0_225, %c0_226] : memref<2x1x256xf32, #tpu.memory_space<vmem>>, vector<1x1x256xf32>
    %399 = vector.shape_cast %398 : vector<1x1x256xf32> to vector<1x256xf32>
    %c1_227 = arith.constant 1 : index
    %c0_228 = arith.constant 0 : index
    %c0_229 = arith.constant 0 : index
    %400 = vector.load %arg36[%c1_227, %c0_228, %c0_229] : memref<2x1x256xf32, #tpu.memory_space<vmem>>, vector<1x1x256xf32>
    %401 = vector.shape_cast %400 : vector<1x1x256xf32> to vector<1x256xf32>
    %c1_230 = arith.constant 1 : index
    %c0_231 = arith.constant 0 : index
    %c0_232 = arith.constant 0 : index
    %402 = vector.load %arg35[%c1_230, %c0_231, %c0_232] : memref<2x1x256xf32, #tpu.memory_space<vmem>>, vector<1x1x256xf32>
    %403 = vector.shape_cast %402 : vector<1x1x256xf32> to vector<1x256xf32>
    %404 = arith.addf %379, %387 : vector<2x256xf32>
    %cst_233 = arith.constant dense<0.000000e+00> : vector<2xf32>
    %405 = vector.multi_reduction <add>, %404, %cst_233 [1] : vector<2x256xf32> to vector<2xf32>
    %406 = vector.shape_cast %405 : vector<2xf32> to vector<2x1xf32>
    %cst_234 = arith.constant 2.560000e+02 : f32
    %407 = vector.broadcast %cst_234 : f32 to vector<2x1xf32>
    %408 = arith.divf %406, %407 : vector<2x1xf32>
    %409 = vector.broadcast %408 : vector<2x1xf32> to vector<2x256xf32>
    %410 = arith.subf %404, %409 : vector<2x256xf32>
    %411 = arith.mulf %410, %410 : vector<2x256xf32>
    %cst_235 = arith.constant dense<0.000000e+00> : vector<2xf32>
    %412 = vector.multi_reduction <add>, %411, %cst_235 [1] : vector<2x256xf32> to vector<2xf32>
    %413 = vector.shape_cast %412 : vector<2xf32> to vector<2x1xf32>
    %cst_236 = arith.constant 2.560000e+02 : f32
    %414 = vector.broadcast %cst_236 : f32 to vector<2x1xf32>
    %415 = arith.divf %413, %414 : vector<2x1xf32>
    %cst_237 = arith.constant 9.99999974E-6 : f32
    %416 = vector.broadcast %cst_237 : f32 to vector<2x1xf32>
    %417 = arith.addf %415, %416 : vector<2x1xf32>
    %418 = math.rsqrt %417 : vector<2x1xf32>
    %419 = vector.broadcast %418 : vector<2x1xf32> to vector<2x256xf32>
    %420 = arith.mulf %410, %419 : vector<2x256xf32>
    %421 = vector.broadcast %389 : vector<1x256xf32> to vector<2x256xf32>
    %422 = arith.mulf %420, %421 : vector<2x256xf32>
    %423 = vector.broadcast %391 : vector<1x256xf32> to vector<2x256xf32>
    %424 = arith.addf %422, %423 : vector<2x256xf32>
    %425 = arith.truncf %424 : vector<2x256xf32> to vector<2x256xbf16>
    %cst_238 = arith.constant dense<0.000000e+00> : vector<2x512xf32>
    %426 = tpu.matmul %425, %393, %cst_238 {dimension_numbers = #tpu.dot_dimension_numbers<[1], [0], [0], [1], [0, 0, 1, 1], [], []>} : vector<2x256xbf16>, vector<256x512xbf16>, vector<2x512xf32> -> vector<2x512xf32>
    %427 = vector.broadcast %395 : vector<1x512xf32> to vector<2x512xf32>
    %428 = arith.addf %426, %427 : vector<2x512xf32>
    %cst_239 = arith.constant 0.000000e+00 : f32
    %429 = vector.broadcast %cst_239 : f32 to vector<2x512xf32>
    %430 = arith.maximumf %428, %429 : vector<2x512xf32>
    %431 = arith.truncf %430 : vector<2x512xf32> to vector<2x512xbf16>
    %cst_240 = arith.constant dense<0.000000e+00> : vector<2x256xf32>
    %432 = tpu.matmul %431, %397, %cst_240 {dimension_numbers = #tpu.dot_dimension_numbers<[1], [0], [0], [1], [0, 0, 1, 1], [], []>} : vector<2x512xbf16>, vector<512x256xbf16>, vector<2x256xf32> -> vector<2x256xf32>
    %433 = vector.broadcast %399 : vector<1x256xf32> to vector<2x256xf32>
    %434 = arith.addf %432, %433 : vector<2x256xf32>
    %435 = arith.addf %424, %434 : vector<2x256xf32>
    %cst_241 = arith.constant dense<0.000000e+00> : vector<2xf32>
    %436 = vector.multi_reduction <add>, %435, %cst_241 [1] : vector<2x256xf32> to vector<2xf32>
    %437 = vector.shape_cast %436 : vector<2xf32> to vector<2x1xf32>
    %cst_242 = arith.constant 2.560000e+02 : f32
    %438 = vector.broadcast %cst_242 : f32 to vector<2x1xf32>
    %439 = arith.divf %437, %438 : vector<2x1xf32>
    %440 = vector.broadcast %439 : vector<2x1xf32> to vector<2x256xf32>
    %441 = arith.subf %435, %440 : vector<2x256xf32>
    %442 = arith.mulf %441, %441 : vector<2x256xf32>
    %cst_243 = arith.constant dense<0.000000e+00> : vector<2xf32>
    %443 = vector.multi_reduction <add>, %442, %cst_243 [1] : vector<2x256xf32> to vector<2xf32>
    %444 = vector.shape_cast %443 : vector<2xf32> to vector<2x1xf32>
    %cst_244 = arith.constant 2.560000e+02 : f32
    %445 = vector.broadcast %cst_244 : f32 to vector<2x1xf32>
    %446 = arith.divf %444, %445 : vector<2x1xf32>
    %cst_245 = arith.constant 9.99999974E-6 : f32
    %447 = vector.broadcast %cst_245 : f32 to vector<2x1xf32>
    %448 = arith.addf %446, %447 : vector<2x1xf32>
    %449 = math.rsqrt %448 : vector<2x1xf32>
    %450 = vector.broadcast %449 : vector<2x1xf32> to vector<2x256xf32>
    %451 = arith.mulf %441, %450 : vector<2x256xf32>
    %452 = vector.broadcast %401 : vector<1x256xf32> to vector<2x256xf32>
    %453 = arith.mulf %451, %452 : vector<2x256xf32>
    %454 = vector.broadcast %403 : vector<1x256xf32> to vector<2x256xf32>
    %455 = arith.addf %453, %454 : vector<2x256xf32>
    %c0_246 = arith.constant 0 : index
    %c0_247 = arith.constant 0 : index
    %456 = vector.load %arg28[%c0_246, %c0_247] : memref<256x1xbf16, #tpu.memory_space<vmem>>, vector<256x1xbf16>
    %c0_248 = arith.constant 0 : index
    %c0_249 = arith.constant 0 : index
    %457 = vector.load %arg27[%c0_248, %c0_249] : memref<1x1xf32, #tpu.memory_space<vmem>>, vector<1x1xf32>
    %458 = arith.truncf %455 : vector<2x256xf32> to vector<2x256xbf16>
    %cst_250 = arith.constant dense<0.000000e+00> : vector<2x1xf32>
    %459 = tpu.matmul %458, %456, %cst_250 {dimension_numbers = #tpu.dot_dimension_numbers<[1], [0], [0], [1], [0, 0, 1, 1], [], []>} : vector<2x256xbf16>, vector<256x1xbf16>, vector<2x1xf32> -> vector<2x1xf32>
    %460 = vector.broadcast %457 : vector<1x1xf32> to vector<2x1xf32>
    %461 = arith.addf %459, %460 : vector<2x1xf32>
    %cst_251 = arith.constant dense<0xFF800000> : vector<1xf32>
    %462 = vector.multi_reduction <maximumf>, %461, %cst_251 [0] : vector<2x1xf32> to vector<1xf32>
    %463 = vector.shape_cast %462 : vector<1xf32> to vector<1x1xf32>
    %464 = vector.broadcast %463 : vector<1x1xf32> to vector<2x1xf32>
    %465 = arith.subf %461, %464 : vector<2x1xf32>
    %466 = math.exp %465 : vector<2x1xf32>
    %cst_252 = arith.constant dense<0.000000e+00> : vector<1xf32>
    %467 = vector.multi_reduction <add>, %466, %cst_252 [0] : vector<2x1xf32> to vector<1xf32>
    %468 = vector.shape_cast %467 : vector<1xf32> to vector<1x1xf32>
    %469 = tpu.reciprocal %468 {approx = true} : vector<1x1xf32> -> vector<1x1xf32>
    %470 = vector.broadcast %469 : vector<1x1xf32> to vector<2x1xf32>
    %471 = arith.mulf %466, %470 : vector<2x1xf32>
    %472 = vector.broadcast %471 : vector<2x1xf32> to vector<2x256xf32>
    %473 = arith.mulf %472, %455 : vector<2x256xf32>
    %cst_253 = arith.constant dense<0.000000e+00> : vector<256xf32>
    %474 = vector.multi_reduction <add>, %473, %cst_253 [0] : vector<2x256xf32> to vector<256xf32>
    %475 = vector.shape_cast %474 : vector<256xf32> to vector<1x256xf32>
    %476 = arith.truncf %303 : vector<2x256xf32> to vector<2x256xbf16>
    %c0_254 = arith.constant 0 : index
    %c0_255 = arith.constant 0 : index
    %477 = vector.load %arg42[%c0_254, %c0_255] : memref<256x256xbf16, #tpu.memory_space<vmem>>, vector<256x256xbf16>
    %cst_256 = arith.constant dense<0.000000e+00> : vector<2x256xf32>
    %478 = tpu.matmul %476, %477, %cst_256 {dimension_numbers = #tpu.dot_dimension_numbers<[1], [0], [0], [1], [0, 0, 1, 1], [], []>} : vector<2x256xbf16>, vector<256x256xbf16>, vector<2x256xf32> -> vector<2x256xf32>
    %479 = arith.truncf %475 : vector<1x256xf32> to vector<1x256xbf16>
    %c0_257 = arith.constant 0 : index
    %c0_258 = arith.constant 0 : index
    %480 = vector.load %arg43[%c0_257, %c0_258] : memref<256x256xbf16, #tpu.memory_space<vmem>>, vector<256x256xbf16>
    %cst_259 = arith.constant dense<0.000000e+00> : vector<1x256xf32>
    %481 = tpu.matmul %479, %480, %cst_259 {dimension_numbers = #tpu.dot_dimension_numbers<[1], [0], [0], [1], [0, 0, 1, 1], [], []>} : vector<1x256xbf16>, vector<256x256xbf16>, vector<1x256xf32> -> vector<1x256xf32>
    %482 = vector.broadcast %481 : vector<1x256xf32> to vector<2x256xf32>
    %483 = arith.addf %478, %482 : vector<2x256xf32>
    %c0_260 = arith.constant 0 : index
    %c0_261 = arith.constant 0 : index
    %484 = vector.load %arg41[%c0_260, %c0_261] : memref<1x256xf32, #tpu.memory_space<vmem>>, vector<1x256xf32>
    %485 = vector.broadcast %484 : vector<1x256xf32> to vector<2x256xf32>
    %486 = arith.addf %483, %485 : vector<2x256xf32>
    %cst_262 = arith.constant 0.000000e+00 : f32
    %487 = vector.broadcast %cst_262 : f32 to vector<2x256xf32>
    %488 = arith.maximumf %486, %487 : vector<2x256xf32>
    %c0_263 = arith.constant 0 : index
    %c0_264 = arith.constant 0 : index
    %489 = vector.load %arg45[%c0_263, %c0_264] : memref<256x256xbf16, #tpu.memory_space<vmem>>, vector<256x256xbf16>
    %c0_265 = arith.constant 0 : index
    %c0_266 = arith.constant 0 : index
    %490 = vector.load %arg44[%c0_265, %c0_266] : memref<1x256xf32, #tpu.memory_space<vmem>>, vector<1x256xf32>
    %491 = arith.truncf %488 : vector<2x256xf32> to vector<2x256xbf16>
    %cst_267 = arith.constant dense<0.000000e+00> : vector<2x256xf32>
    %492 = tpu.matmul %491, %489, %cst_267 {dimension_numbers = #tpu.dot_dimension_numbers<[1], [0], [0], [1], [0, 0, 1, 1], [], []>} : vector<2x256xbf16>, vector<256x256xbf16>, vector<2x256xf32> -> vector<2x256xf32>
    %493 = vector.broadcast %490 : vector<1x256xf32> to vector<2x256xf32>
    %494 = arith.addf %492, %493 : vector<2x256xf32>
    %cst_268 = arith.constant 0.000000e+00 : f32
    %495 = vector.broadcast %cst_268 : f32 to vector<2x256xf32>
    %496 = arith.maximumf %494, %495 : vector<2x256xf32>
    %c0_269 = arith.constant 0 : index
    %c0_270 = arith.constant 0 : index
    %497 = vector.load %arg6[%c0_269, %c0_270] : memref<256x1xbf16, #tpu.memory_space<vmem>>, vector<256x1xbf16>
    %c0_271 = arith.constant 0 : index
    %c0_272 = arith.constant 0 : index
    %498 = vector.load %arg5[%c0_271, %c0_272] : memref<1x1xf32, #tpu.memory_space<vmem>>, vector<1x1xf32>
    %499 = arith.truncf %496 : vector<2x256xf32> to vector<2x256xbf16>
    %cst_273 = arith.constant dense<0.000000e+00> : vector<2x1xf32>
    %500 = tpu.matmul %499, %497, %cst_273 {dimension_numbers = #tpu.dot_dimension_numbers<[1], [0], [0], [1], [0, 0, 1, 1], [], []>} : vector<2x256xbf16>, vector<256x1xbf16>, vector<2x1xf32> -> vector<2x1xf32>
    %501 = vector.broadcast %498 : vector<1x1xf32> to vector<2x1xf32>
    %502 = arith.addf %500, %501 : vector<2x1xf32>
    %cst_274 = arith.constant 0.000000e+00 : f32
    %503 = vector.broadcast %cst_274 : f32 to vector<2x1xf32>
    %504 = arith.subf %503, %502 : vector<2x1xf32>
    %505 = math.exp %504 : vector<2x1xf32>
    %cst_275 = arith.constant 1.000000e+00 : f32
    %506 = vector.broadcast %cst_275 : f32 to vector<2x1xf32>
    %507 = arith.addf %506, %505 : vector<2x1xf32>
    %cst_276 = arith.constant 1.000000e+00 : f32
    %508 = vector.broadcast %cst_276 : f32 to vector<2x1xf32>
    %509 = arith.divf %508, %507 : vector<2x1xf32>
    %c0_277 = arith.constant 0 : index
    %c0_278 = arith.constant 0 : index
    %510 = vector.load %arg46[%c0_277, %c0_278] : memref<2x1xf32, #tpu.memory_space<vmem>>, vector<2x1xf32>
    tpu.vector_store %arg46[%c0_277, %c0_278], %509 {strides = array<i32>} : memref<2x1xf32, #tpu.memory_space<vmem>>, vector<2x1xf32>,
    return
  }
}

</mosaic_0001>

<llo_original>
// kernel: tile.9
$region0: #{tile.9}
  %s0 = inlined_call_operand.vmem [shape: f32[2,10,10], index: 0, kind: input, shape index: {}]
  %s1 = inlined_call_operand.vmem [shape: f32[20,10], index: 1, kind: output, shape index: {}]
  $region1: #{tile.9} parent=0
    #allocation0 [shape = 'u8[40960]{0}', space=vmem, size = 0xa000, scoped, tag = 'scoped mem for input reshape']
    %s3 = sshllo.u32 0, 2
    %s4 = smul.addr 2, 9
    %s5 = scalar_lea.vmem %s0, %s4
    %v6 = vld [vmem:[%s5] sm:%s3]
    %s7 = scalar_lea.vmem [#allocation0], 72
    %8 = vst [vmem:[%s7] sm:%s3] %v6
    %s9 = smul.addr 2, 8
    %s10 = scalar_lea.vmem %s0, %s9
    %v11 = vld [vmem:[%s10] sm:%s3]
    %s12 = scalar_lea.vmem [#allocation0], 64
    %13 = vst [vmem:[%s12] sm:%s3] %v11
    %s14 = smul.addr 2, 7
    %s15 = scalar_lea.vmem %s0, %s14
    %v16 = vld [vmem:[%s15] sm:%s3]
    %s17 = scalar_lea.vmem [#allocation0], 56
    %18 = vst [vmem:[%s17] sm:%s3] %v16
    %s19 = smul.addr 2, 6
    %s20 = scalar_lea.vmem %s0, %s19
    %v21 = vld [vmem:[%s20] sm:%s3]
    %s22 = scalar_lea.vmem [#allocation0], 48
    %23 = vst [vmem:[%s22] sm:%s3] %v21
    %s24 = smul.addr 2, 5
    %s25 = scalar_lea.vmem %s0, %s24
    %v26 = vld [vmem:[%s25] sm:%s3]
    %s27 = scalar_lea.vmem [#allocation0], 40
    %28 = vst [vmem:[%s27] sm:%s3] %v26
    %s29 = smul.addr 2, 4
    %s30 = scalar_lea.vmem %s0, %s29
    %v31 = vld [vmem:[%s30] sm:%s3]
    %s32 = scalar_lea.vmem [#allocation0], 32
    %33 = vst [vmem:[%s32] sm:%s3] %v31
    %s34 = smul.addr 2, 3
    %s35 = scalar_lea.vmem %s0, %s34
    %v36 = vld [vmem:[%s35] sm:%s3]
    %s37 = scalar_lea.vmem [#allocation0], 24
    %38 = vst [vmem:[%s37] sm:%s3] %v36
    %s39 = smul.addr 2, 2
    %s40 = scalar_lea.vmem %s0, %s39
    %v41 = vld [vmem:[%s40] sm:%s3]
    %s42 = scalar_lea.vmem [#allocation0], 16
    %43 = vst [vmem:[%s42] sm:%s3] %v41
    %s44 = scalar_lea.vmem %s0, 2
    %v45 = vld [vmem:[%s44] sm:%s3]
    %s46 = scalar_lea.vmem [#allocation0], 8
    %47 = vst [vmem:[%s46] sm:%s3] %v45
    %v48 = vld [vmem:[%s0] sm:%s3]
    %49 = vst [vmem:[#allocation0] sm:%s3] %v48
    %v50 = vld [vmem:[#allocation0] ss:$8 sm:$0xf]
    %v51 = vld [vmem:[#allocation0] ss:$8 sm:$0xf0]
    %vm52 = vcmask 1047556
    %v53 = vsel %vm52, %v51, %v50
    %vm54 = vcmask 80896
    %55 = vst.msk [vmem:[%s1] sm:$0xff] %vm54, %v53
    %s56 = scalar_lea.vmem [#allocation0], 64
    %s57 = smov 3
    %v58 = vld [vmem:[%s56] ss:$8 sm:%s57]
    %vm59 = vcmask 80896
    %s60 = scalar_lea.vmem %s1, 8
    %61 = vst.msk [vmem:[%s60] sm:$0x3] %vm59, %v58
    %s62 = scalar_lea.vmem [#allocation0], 1
    %v63 = vld [vmem:[%s62] ss:$8 sm:$0xf]
    %s64 = scalar_lea.vmem [#allocation0], 1
    %v65 = vld [vmem:[%s64] ss:$8 sm:$0xf0]
    %vm66 = vcmask 1047556
    %v67 = vsel %vm66, %v65, %v63
    %68 = vrot.lane.b32.xlu0 %v67, 10
    %v69 = vpop.permute.xlu0 %68
    %vm70 = vcmask 162896
    %71 = vst.msk [vmem:[%s1] sm:$0xff] %vm70, %v69
    %s72 = scalar_lea.vmem [#allocation0], 65
    %s73 = smov 3
    %v74 = vld [vmem:[%s72] ss:$8 sm:%s73]
    %75 = vrot.lane.b32.xlu0 %v74, 10
    %v76 = vpop.permute.xlu0 %75
    %vm77 = vcmask 162896
    %s78 = scalar_lea.vmem %s1, 8
    %79 = vst.msk [vmem:[%s78] sm:$0x3] %vm77, %v76

// kernel: mcat_surv_forward.1
$region0: #{mcat_surv_forward.1}
  #allocation0 [shape = 'u32[]', space=smem, size = 0x4, offset = 0x4, fixed_abs, tag = 'smem constant byte address 0x4 - core index']
  #allocation1 [shape = 'u32[144,128]{1,0:T(1,128)}', space=vmem, size = 0x12000, scoped, tag = 'internal scratch']
  #allocation2 [shape = 'f32[1,1]{1,0:T(1,128)S(1)}', space=vmem, size = 0x200, scoped, tag = 'scoped memory for mcat_surv_forward.1']
  #allocation3 [shape = 'f32[1,1]{1,0:T(1,128)S(1)}', space=vmem, size = 0x200, scoped, tag = 'scoped memory for mcat_surv_forward.1']
  %s0 = inlined_call_operand.smem [shape: u32[48], index: -1, kind: input, shape index: {}]
  %s1 = sld [smem:[%s0]]
  %s2 = scalar_lea.smem %s0, 1
  %s3 = sld [smem:[%s2]]
  %s4 = scalar_lea.smem %s0, 2
  %s5 = sld [smem:[%s4]]
  %s6 = scalar_lea.smem %s0, 3
  %s7 = sld [smem:[%s6]]
  %s8 = scalar_lea.smem %s0, 4
  %s9 = sld [smem:[%s8]]
  %s10 = scalar_lea.smem %s0, 5
  %s11 = sld [smem:[%s10]]
  %s12 = scalar_lea.smem %s0, 6
  %s13 = sld [smem:[%s12]]
  %s14 = scalar_lea.smem %s0, 7
  %s15 = sld [smem:[%s14]]
  %s16 = scalar_lea.smem %s0, 8
  %s17 = sld [smem:[%s16]]
  %s18 = scalar_lea.smem %s0, 9
  %s19 = sld [smem:[%s18]]
  %s20 = scalar_lea.smem %s0, 10
  %s21 = sld [smem:[%s20]]
  %s22 = scalar_lea.smem %s0, 11
  %s23 = sld [smem:[%s22]]
  %s24 = scalar_lea.smem %s0, 12
  %s25 = sld [smem:[%s24]]
  %s26 = scalar_lea.smem %s0, 13
  %s27 = sld [smem:[%s26]]
  %s28 = scalar_lea.smem %s0, 14
  %s29 = sld [smem:[%s28]]
  %s30 = scalar_lea.smem %s0, 15
  %s31 = sld [smem:[%s30]]
  %s32 = scalar_lea.smem %s0, 16
  %s33 = sld [smem:[%s32]]
  %s34 = scalar_lea.smem %s0, 17
  %s35 = sld [smem:[%s34]]
  %s36 = scalar_lea.smem %s0, 18
  %s37 = sld [smem:[%s36]]
  %s38 = scalar_lea.smem %s0, 19
  %s39 = sld [smem:[%s38]]
  %s40 = scalar_lea.smem %s0, 20
  %s41 = sld [smem:[%s40]]
  %s42 = scalar_lea.smem %s0, 21
  %s43 = sld [smem:[%s42]]
  %s44 = scalar_lea.smem %s0, 22
  %s45 = sld [smem:[%s44]]
  %s46 = scalar_lea.smem %s0, 23
  %s47 = sld [smem:[%s46]]
  %s48 = scalar_lea.smem %s0, 24
  %s49 = sld [smem:[%s48]]
  %s50 = scalar_lea.smem %s0, 25
  %s51 = sld [smem:[%s50]]
  %s52 = scalar_lea.smem %s0, 26
  %s53 = sld [smem:[%s52]]
  %s54 = scalar_lea.smem %s0, 27
  %s55 = sld [smem:[%s54]]
  %s56 = scalar_lea.smem %s0, 28
  %s57 = sld [smem:[%s56]]
  %s58 = scalar_lea.smem %s0, 29
  %s59 = sld [smem:[%s58]]
  %s60 = scalar_lea.smem %s0, 30
  %s61 = sld [smem:[%s60]]
  %s62 = scalar_lea.smem %s0, 31
  %s63 = sld [smem:[%s62]]
  %s64 = scalar_lea.smem %s0, 32
  %s65 = sld [smem:[%s64]]
  %s66 = scalar_lea.smem %s0, 33
  %s67 = sld [smem:[%s66]]
  %s68 = scalar_lea.smem %s0, 34
  %s69 = sld [smem:[%s68]]
  %s70 = scalar_lea.smem %s0, 35
  %s71 = sld [smem:[%s70]]
  %s72 = scalar_lea.smem %s0, 36
  %s73 = sld [smem:[%s72]]
  %s74 = scalar_lea.smem %s0, 37
  %s75 = sld [smem:[%s74]]
  %s76 = scalar_lea.smem %s0, 38
  %s77 = sld [smem:[%s76]]
  %s78 = scalar_lea.smem %s0, 39
  %s79 = sld [smem:[%s78]]
  %s80 = scalar_lea.smem %s0, 40
  %s81 = sld [smem:[%s80]]
  %s82 = scalar_lea.smem %s0, 41
  %s83 = sld [smem:[%s82]]
  %s84 = scalar_lea.smem %s0, 42
  %s85 = sld [smem:[%s84]]
  %s86 = scalar_lea.smem %s0, 43
  %s87 = sld [smem:[%s86]]
  %s88 = scalar_lea.smem %s0, 44
  %s89 = sld [smem:[%s88]]
  %s90 = scalar_lea.smem %s0, 45
  %s91 = sld [smem:[%s90]]
  %s92 = scalar_lea.smem %s0, 46
  %s93 = sld [smem:[%s92]]
  %s94 = scalar_lea.smem %s0, 47
  %s95 = sld [smem:[%s94]]
  %96 = xla_tuple %s93, %s95
  %s97 = sld [smem:[#allocation0]]
  $region202: #{mcat_surv_forward.1} parent=0
    _
  %s99 = ssub.s32 1, %s97
  %s100 = scalar_select 0, %s99, %s97
  %v101 = vstv %s11
  %102 = vst [vmem:[#allocation2] sm:$0x1] %v101
  %v103 = vstv %s55
  %104 = vst [vmem:[#allocation3] sm:$0x1] %v103
  $region1: #{mcat_surv_forward.1} parent=0
    #allocation4 [shape = 'u8[1024]{0}', space=vmem, size = 0x400, scoped, tag = 'output window, operand 1, single buffered']
    #allocation5 [shape = 's32[1]{0}', space=sflag, size = 0x4, scoped, tag = 'scoped memory for mcat_surv_forward.1']
    %105 = vsyncpa [#allocation5], 0
    // Predicated region
    $region2: #{mcat_surv_forward.1} parent=1 // pred_check
      _
    $region3: #{mcat_surv_forward.1} parent=1 // pred_check_branch
      %107 = sbr.rel (0) target = $region5
    $region4: #{mcat_surv_forward.1} parent=1 // pred_region
      _
    $region5: #{mcat_surv_forward.1} parent=1 // pred_fallthru
      _
    // Predicated region
    $region6: #{mcat_surv_forward.1} parent=1 // pred_check
      _
    $region7: #{mcat_surv_forward.1} parent=1 // pred_check_branch
      %109 = sbr.rel (0) target = $region9
    $region8: #{mcat_surv_forward.1} parent=1 // pred_region
      _
    $region9: #{mcat_surv_forward.1} parent=1 // pred_fallthru
      _
    // Predicated region
    $region10: #{mcat_surv_forward.1} parent=1 // pred_check
      _
    $region11: #{mcat_surv_forward.1} parent=1 // pred_check_branch
      %111 = sbr.rel (0) target = $region13
    $region12: #{mcat_surv_forward.1} parent=1 // pred_region
      _
    $region13: #{mcat_surv_forward.1} parent=1 // pred_fallthru
      _
    // Predicated region
    $region14: #{mcat_surv_forward.1} parent=1 // pred_check
      _
    $region15: #{mcat_surv_forward.1} parent=1 // pred_check_branch
      %113 = sbr.rel (0) target = $region17
    $region16: #{mcat_surv_forward.1} parent=1 // pred_region
      _
    $region17: #{mcat_surv_forward.1} parent=1 // pred_fallthru
      _
    // Predicated region
    $region18: #{mcat_surv_forward.1} parent=1 // pred_check
      _
    $region19: #{mcat_surv_forward.1} parent=1 // pred_check_branch
      %115 = sbr.rel (0) target = $region21
    $region20: #{mcat_surv_forward.1} parent=1 // pred_region
      _
    $region21: #{mcat_surv_forward.1} parent=1 // pred_fallthru
      _
    // Predicated region
    $region22: #{mcat_surv_forward.1} parent=1 // pred_check
      _
    $region23: #{mcat_surv_forward.1} parent=1 // pred_check_branch
      %117 = sbr.rel (0) target = $region25
    $region24: #{mcat_surv_forward.1} parent=1 // pred_region
      _
    $region25: #{mcat_surv_forward.1} parent=1 // pred_fallthru
      _
    // Predicated region
    $region26: #{mcat_surv_forward.1} parent=1 // pred_check
      _
    $region27: #{mcat_surv_forward.1} parent=1 // pred_check_branch
      %119 = sbr.rel (0) target = $region29
    $region28: #{mcat_surv_forward.1} parent=1 // pred_region
      _
    $region29: #{mcat_surv_forward.1} parent=1 // pred_fallthru
      _
    // Predicated region
    $region30: #{mcat_surv_forward.1} parent=1 // pred_check
      _
    $region31: #{mcat_surv_forward.1} parent=1 // pred_check_branch
      %121 = sbr.rel (0) target = $region33
    $region32: #{mcat_surv_forward.1} parent=1 // pred_region
      _
    $region33: #{mcat_surv_forward.1} parent=1 // pred_fallthru
      _
    // Predicated region
    $region34: #{mcat_surv_forward.1} parent=1 // pred_check
      _
    $region35: #{mcat_surv_forward.1} parent=1 // pred_check_branch
      %123 = sbr.rel (0) target = $region37
    $region36: #{mcat_surv_forward.1} parent=1 // pred_region
      _
    $region37: #{mcat_surv_forward.1} parent=1 // pred_fallthru
      _
    // Predicated region
    $region38: #{mcat_surv_forward.1} parent=1 // pred_check
      _
    $region39: #{mcat_surv_forward.1} parent=1 // pred_check_branch
      %125 = sbr.rel (0) target = $region41
    $region40: #{mcat_surv_forward.1} parent=1 // pred_region
      _
    $region41: #{mcat_surv_forward.1} parent=1 // pred_fallthru
      _
    // Predicated region
    $region42: #{mcat_surv_forward.1} parent=1 // pred_check
      _
    $region43: #{mcat_surv_forward.1} parent=1 // pred_check_branch
      %127 = sbr.rel (0) target = $region45
    $region44: #{mcat_surv_forward.1} parent=1 // pred_region
      _
    $region45: #{mcat_surv_forward.1} parent=1 // pred_fallthru
      _
    // Predicated region
    $region46: #{mcat_surv_forward.1} parent=1 // pred_check
      _
    $region47: #{mcat_surv_forward.1} parent=1 // pred_check_branch
      %129 = sbr.rel (0) target = $region49
    $region48: #{mcat_surv_forward.1} parent=1 // pred_region
      _
    $region49: #{mcat_surv_forward.1} parent=1 // pred_fallthru
      _
    // Predicated region
    $region50: #{mcat_surv_forward.1} parent=1 // pred_check
      _
    $region51: #{mcat_surv_forward.1} parent=1 // pred_check_branch
      %131 = sbr.rel (0) target = $region53
    $region52: #{mcat_surv_forward.1} parent=1 // pred_region
      _
    $region53: #{mcat_surv_forward.1} parent=1 // pred_fallthru
      _
    // Predicated region
    $region54: #{mcat_surv_forward.1} parent=1 // pred_check
      _
    $region55: #{mcat_surv_forward.1} parent=1 // pred_check_branch
      %133 = sbr.rel (0) target = $region57
    $region56: #{mcat_surv_forward.1} parent=1 // pred_region
      _
    $region57: #{mcat_surv_forward.1} parent=1 // pred_fallthru
      _
    // Predicated region
    $region58: #{mcat_surv_forward.1} parent=1 // pred_check
      _
    $region59: #{mcat_surv_forward.1} parent=1 // pred_check_branch
      %135 = sbr.rel (0) target = $region61
    $region60: #{mcat_surv_forward.1} parent=1 // pred_region
      _
    $region61: #{mcat_surv_forward.1} parent=1 // pred_fallthru
      _
    // Predicated region
    $region62: #{mcat_surv_forward.1} parent=1 // pred_check
      _
    $region63: #{mcat_surv_forward.1} parent=1 // pred_check_branch
      %137 = sbr.rel (0) target = $region65
    $region64: #{mcat_surv_forward.1} parent=1 // pred_region
      _
    $region65: #{mcat_surv_forward.1} parent=1 // pred_fallthru
      _
    // Predicated region
    $region66: #{mcat_surv_forward.1} parent=1 // pred_check
      _
    $region67: #{mcat_surv_forward.1} parent=1 // pred_check_branch
      %139 = sbr.rel (0) target = $region69
    $region68: #{mcat_surv_forward.1} parent=1 // pred_region
      _
    $region69: #{mcat_surv_forward.1} parent=1 // pred_fallthru
      _
    // Predicated region
    $region70: #{mcat_surv_forward.1} parent=1 // pred_check
      _
    $region71: #{mcat_surv_forward.1} parent=1 // pred_check_branch
      %141 = sbr.rel (0) target = $region73
    $region72: #{mcat_surv_forward.1} parent=1 // pred_region
      _
    $region73: #{mcat_surv_forward.1} parent=1 // pred_fallthru
      _
    // Predicated region
    $region74: #{mcat_surv_forward.1} parent=1 // pred_check
      _
    $region75: #{mcat_surv_forward.1} parent=1 // pred_check_branch
      %143 = sbr.rel (0) target = $region77
    $region76: #{mcat_surv_forward.1} parent=1 // pred_region
      _
    $region77: #{mcat_surv_forward.1} parent=1 // pred_fallthru
      _
    // Predicated region
    $region78: #{mcat_surv_forward.1} parent=1 // pred_check
      _
    $region79: #{mcat_surv_forward.1} parent=1 // pred_check_branch
      %145 = sbr.rel (0) target = $region81
    $region80: #{mcat_surv_forward.1} parent=1 // pred_region
      _
    $region81: #{mcat_surv_forward.1} parent=1 // pred_fallthru
      _
    // Predicated region
    $region82: #{mcat_surv_forward.1} parent=1 // pred_check
      _
    $region83: #{mcat_surv_forward.1} parent=1 // pred_check_branch
      %147 = sbr.rel (0) target = $region85
    $region84: #{mcat_surv_forward.1} parent=1 // pred_region
      _
    $region85: #{mcat_surv_forward.1} parent=1 // pred_fallthru
      _
    // Predicated region
    $region86: #{mcat_surv_forward.1} parent=1 // pred_check
      _
    $region87: #{mcat_surv_forward.1} parent=1 // pred_check_branch
      %149 = sbr.rel (0) target = $region89
    $region88: #{mcat_surv_forward.1} parent=1 // pred_region
      _
    $region89: #{mcat_surv_forward.1} parent=1 // pred_fallthru
      _
    // Predicated region
    $region90: #{mcat_surv_forward.1} parent=1 // pred_check
      _
    $region91: #{mcat_surv_forward.1} parent=1 // pred_check_branch
      %151 = sbr.rel (0) target = $region93
    $region92: #{mcat_surv_forward.1} parent=1 // pred_region
      _
    $region93: #{mcat_surv_forward.1} parent=1 // pred_fallthru
      _
    // Predicated region
    $region94: #{mcat_surv_forward.1} parent=1 // pred_check
      _
    $region95: #{mcat_surv_forward.1} parent=1 // pred_check_branch
      %153 = sbr.rel (0) target = $region97
    $region96: #{mcat_surv_forward.1} parent=1 // pred_region
      _
    $region97: #{mcat_surv_forward.1} parent=1 // pred_fallthru
      _
    // Predicated region
    $region98: #{mcat_surv_forward.1} parent=1 // pred_check
      _
    $region99: #{mcat_surv_forward.1} parent=1 // pred_check_branch
      %155 = sbr.rel (0) target = $region101
    $region100: #{mcat_surv_forward.1} parent=1 // pred_region
      _
    $region101: #{mcat_surv_forward.1} parent=1 // pred_fallthru
      _
    // Predicated region
    $region102: #{mcat_surv_forward.1} parent=1 // pred_check
      _
    $region103: #{mcat_surv_forward.1} parent=1 // pred_check_branch
      %157 = sbr.rel (0) target = $region105
    $region104: #{mcat_surv_forward.1} parent=1 // pred_region
      _
    $region105: #{mcat_surv_forward.1} parent=1 // pred_fallthru
      _
    // Predicated region
    $region106: #{mcat_surv_forward.1} parent=1 // pred_check
      _
    $region107: #{mcat_surv_forward.1} parent=1 // pred_check_branch
      %159 = sbr.rel (0) target = $region109
    $region108: #{mcat_surv_forward.1} parent=1 // pred_region
      _
    $region109: #{mcat_surv_forward.1} parent=1 // pred_fallthru
      _
    // Predicated region
    $region110: #{mcat_surv_forward.1} parent=1 // pred_check
      _
    $region111: #{mcat_surv_forward.1} parent=1 // pred_check_branch
      %161 = sbr.rel (0) target = $region113
    $region112: #{mcat_surv_forward.1} parent=1 // pred_region
      _
    $region113: #{mcat_surv_forward.1} parent=1 // pred_fallthru
      _
    // Predicated region
    $region114: #{mcat_surv_forward.1} parent=1 // pred_check
      _
    $region115: #{mcat_surv_forward.1} parent=1 // pred_check_branch
      %163 = sbr.rel (0) target = $region117
    $region116: #{mcat_surv_forward.1} parent=1 // pred_region
      _
    $region117: #{mcat_surv_forward.1} parent=1 // pred_fallthru
      _
    // Predicated region
    $region118: #{mcat_surv_forward.1} parent=1 // pred_check
      _
    $region119: #{mcat_surv_forward.1} parent=1 // pred_check_branch
      %165 = sbr.rel (0) target = $region121
    $region120: #{mcat_surv_forward.1} parent=1 // pred_region
      _
    $region121: #{mcat_surv_forward.1} parent=1 // pred_fallthru
      _
    // Predicated region
    $region122: #{mcat_surv_forward.1} parent=1 // pred_check
      _
    $region123: #{mcat_surv_forward.1} parent=1 // pred_check_branch
      %167 = sbr.rel (0) target = $region125
    $region124: #{mcat_surv_forward.1} parent=1 // pred_region
      _
    $region125: #{mcat_surv_forward.1} parent=1 // pred_fallthru
      _
    // Predicated region
    $region126: #{mcat_surv_forward.1} parent=1 // pred_check
      _
    $region127: #{mcat_surv_forward.1} parent=1 // pred_check_branch
      %169 = sbr.rel (0) target = $region129
    $region128: #{mcat_surv_forward.1} parent=1 // pred_region
      _
    $region129: #{mcat_surv_forward.1} parent=1 // pred_fallthru
      _
    // Predicated region
    $region130: #{mcat_surv_forward.1} parent=1 // pred_check
      _
    $region131: #{mcat_surv_forward.1} parent=1 // pred_check_branch
      %171 = sbr.rel (0) target = $region133
    $region132: #{mcat_surv_forward.1} parent=1 // pred_region
      _
    $region133: #{mcat_surv_forward.1} parent=1 // pred_fallthru
      _
    // Predicated region
    $region134: #{mcat_surv_forward.1} parent=1 // pred_check
      _
    $region135: #{mcat_surv_forward.1} parent=1 // pred_check_branch
      %173 = sbr.rel (0) target = $region137
    $region136: #{mcat_surv_forward.1} parent=1 // pred_region
      _
    $region137: #{mcat_surv_forward.1} parent=1 // pred_fallthru
      _
    // Predicated region
    $region138: #{mcat_surv_forward.1} parent=1 // pred_check
      _
    $region139: #{mcat_surv_forward.1} parent=1 // pred_check_branch
      %175 = sbr.rel (0) target = $region141
    $region140: #{mcat_surv_forward.1} parent=1 // pred_region
      _
    $region141: #{mcat_surv_forward.1} parent=1 // pred_fallthru
      _
    // Predicated region
    $region142: #{mcat_surv_forward.1} parent=1 // pred_check
      _
    $region143: #{mcat_surv_forward.1} parent=1 // pred_check_branch
      %177 = sbr.rel (0) target = $region145
    $region144: #{mcat_surv_forward.1} parent=1 // pred_region
      _
    $region145: #{mcat_surv_forward.1} parent=1 // pred_fallthru
      _
    // Predicated region
    $region146: #{mcat_surv_forward.1} parent=1 // pred_check
      _
    $region147: #{mcat_surv_forward.1} parent=1 // pred_check_branch
      %179 = sbr.rel (0) target = $region149
    $region148: #{mcat_surv_forward.1} parent=1 // pred_region
      _
    $region149: #{mcat_surv_forward.1} parent=1 // pred_fallthru
      _
    // Predicated region
    $region150: #{mcat_surv_forward.1} parent=1 // pred_check
      _
    $region151: #{mcat_surv_forward.1} parent=1 // pred_check_branch
      %181 = sbr.rel (0) target = $region153
    $region152: #{mcat_surv_forward.1} parent=1 // pred_region
      _
    $region153: #{mcat_surv_forward.1} parent=1 // pred_fallthru
      _
    // Predicated region
    $region154: #{mcat_surv_forward.1} parent=1 // pred_check
      _
    $region155: #{mcat_surv_forward.1} parent=1 // pred_check_branch
      %183 = sbr.rel (0) target = $region157
    $region156: #{mcat_surv_forward.1} parent=1 // pred_region
      _
    $region157: #{mcat_surv_forward.1} parent=1 // pred_fallthru
      _
    // Predicated region
    $region158: #{mcat_surv_forward.1} parent=1 // pred_check
      _
    $region159: #{mcat_surv_forward.1} parent=1 // pred_check_branch
      %185 = sbr.rel (0) target = $region161
    $region160: #{mcat_surv_forward.1} parent=1 // pred_region
      _
    $region161: #{mcat_surv_forward.1} parent=1 // pred_fallthru
      _
    // Predicated region
    $region162: #{mcat_surv_forward.1} parent=1 // pred_check
      _
    $region163: #{mcat_surv_forward.1} parent=1 // pred_check_branch
      %187 = sbr.rel (0) target = $region165
    $region164: #{mcat_surv_forward.1} parent=1 // pred_region
      _
    $region165: #{mcat_surv_forward.1} parent=1 // pred_fallthru
      _
    // Predicated region
    $region166: #{mcat_surv_forward.1} parent=1 // pred_check
      _
    $region167: #{mcat_surv_forward.1} parent=1 // pred_check_branch
      %189 = sbr.rel (0) target = $region169
    $region168: #{mcat_surv_forward.1} parent=1 // pred_region
      _
    $region169: #{mcat_surv_forward.1} parent=1 // pred_fallthru
      _
    // Predicated region
    $region170: #{mcat_surv_forward.1} parent=1 // pred_check
      _
    $region171: #{mcat_surv_forward.1} parent=1 // pred_check_branch
      %191 = sbr.rel (0) target = $region173
    $region172: #{mcat_surv_forward.1} parent=1 // pred_region
      _
    $region173: #{mcat_surv_forward.1} parent=1 // pred_fallthru
      _
    // Predicated region
    $region174: #{mcat_surv_forward.1} parent=1 // pred_check
      _
    $region175: #{mcat_surv_forward.1} parent=1 // pred_check_branch
      %193 = sbr.rel (0) target = $region177
    $region176: #{mcat_surv_forward.1} parent=1 // pred_region
      _
    $region177: #{mcat_surv_forward.1} parent=1 // pred_fallthru
      _
    // Predicated region
    $region178: #{mcat_surv_forward.1} parent=1 // pred_check
      _
    $region179: #{mcat_surv_forward.1} parent=1 // pred_check_branch
      %195 = sbr.rel (0) target = $region181
    $region180: #{mcat_surv_forward.1} parent=1 // pred_region
      _
    $region181: #{mcat_surv_forward.1} parent=1 // pred_fallthru
      _
    // Predicated region
    $region182: #{mcat_surv_forward.1} parent=1 // pred_check
      _
    $region183: #{mcat_surv_forward.1} parent=1 // pred_check_branch
      %197 = sbr.rel (0) target = $region185
    $region184: #{mcat_surv_forward.1} parent=1 // pred_region
      _
    $region185: #{mcat_surv_forward.1} parent=1 // pred_fallthru
      _
    %v199 = vld [vmem:[%s7] sm:$0xff]
    %v200 = vld [vmem:[%s7 + $0x8] sm:$0xff]
    %v201 = vld [vmem:[%s7 + $0x10] sm:$0xff]
    %v202 = vld [vmem:[%s7 + $0x18] sm:$0xff]
    %v203 = vld [vmem:[%s7 + $0x20] sm:$0xff]
    %v204 = vld [vmem:[%s7 + $0x28] sm:$0xff]
    %v205 = vld [vmem:[%s7 + $0x30] sm:$0xff]
    %v206 = vld [vmem:[%s7 + $0x38] sm:$0xff]
    %v207 = vld [vmem:[%s7 + $0x40] sm:$0xff]
    %v208 = vld [vmem:[%s7 + $0x48] sm:$0xff]
    %v209 = vld [vmem:[%s7 + $0x50] sm:$0xff]
    %v210 = vld [vmem:[%s7 + $0x58] sm:$0xff]
    %v211 = vld [vmem:[%s7 + $0x60] sm:$0xff]
    %v212 = vld [vmem:[%s7 + $0x68] sm:$0xff]
    %v213 = vld [vmem:[%s7 + $0x70] sm:$0xff]
    %v214 = vld [vmem:[%s7 + $0x78] sm:$0xff]
    %v215 = vld [vmem:[%s7 + $0x80] sm:$0xff]
    %v216 = vld [vmem:[%s7 + $0x88] sm:$0xff]
    %v217 = vld [vmem:[%s7 + $0x90] sm:$0xff]
    %v218 = vld [vmem:[%s7 + $0x98] sm:$0xff]
    %v219 = vld [vmem:[%s7 + $0xa0] sm:$0xff]
    %v220 = vld [vmem:[%s7 + $0xa8] sm:$0xff]
    %v221 = vld [vmem:[%s7 + $0xb0] sm:$0xff]
    %v222 = vld [vmem:[%s7 + $0xb8] sm:$0xff]
    %v223 = vld [vmem:[%s7 + $0xc0] sm:$0xff]
    %v224 = vld [vmem:[%s7 + $0xc8] sm:$0xff]
    %v225 = vld [vmem:[%s7 + $0xd0] sm:$0xff]
    %v226 = vld [vmem:[%s7 + $0xd8] sm:$0xff]
    %v227 = vld [vmem:[%s7 + $0xe0] sm:$0xff]
    %v228 = vld [vmem:[%s7 + $0xe8] sm:$0xff]
    %v229 = vld [vmem:[%s7 + $0xf0] sm:$0xff]
    %v230 = vld [vmem:[%s7 + $0xf8] sm:$0xff]
    %v231 = vld [vmem:[%s9] sm:$0xff]
    %v232 = vld [vmem:[%s9 + $0x8] sm:$0xff]
    %v233 = vld [vmem:[%s1] sm:$0xff]
    %v234 = vld [vmem:[%s1 + $0x8] sm:$0xff]
    %v235 = vld [vmem:[%s1 + $0x10] sm:$0xff]
    %v236 = vld [vmem:[%s1 + $0x18] sm:$0xff]
    %v237 = vld [vmem:[%s1 + $0x20] sm:$0xf]
    %v238 = vld [vmem:[%s1 + $0x28] sm:$0xf]
    %v239 = vld [vmem:[%s33] sm:$0xff]
    %v240 = vld [vmem:[%s33 + $0x8] sm:$0xff]
    %v241 = vld [vmem:[%s33 + $0x10] sm:$0xff]
    %v242 = vld [vmem:[%s33 + $0x18] sm:$0xff]
    %v243 = vld [vmem:[%s33 + $0x20] sm:$0xff]
    %v244 = vld [vmem:[%s33 + $0x28] sm:$0xff]
    %v245 = vld [vmem:[%s33 + $0x30] sm:$0xff]
    %v246 = vld [vmem:[%s33 + $0x38] sm:$0xff]
    %v247 = vld [vmem:[%s33 + $0x40] sm:$0xff]
    %v248 = vld [vmem:[%s33 + $0x48] sm:$0xff]
    %v249 = vld [vmem:[%s33 + $0x50] sm:$0xff]
    %v250 = vld [vmem:[%s33 + $0x58] sm:$0xff]
    %v251 = vld [vmem:[%s33 + $0x60] sm:$0xff]
    %v252 = vld [vmem:[%s33 + $0x68] sm:$0xff]
    %v253 = vld [vmem:[%s33 + $0x70] sm:$0xff]
    %v254 = vld [vmem:[%s33 + $0x78] sm:$0xff]
    %v255 = vld [vmem:[%s33 + $0x80] sm:$0xff]
    %v256 = vld [vmem:[%s33 + $0x88] sm:$0xff]
    %v257 = vld [vmem:[%s33 + $0x90] sm:$0xff]
    %v258 = vld [vmem:[%s33 + $0x98] sm:$0xff]
    %v259 = vld [vmem:[%s33 + $0xa0] sm:$0xff]
    %v260 = vld [vmem:[%s33 + $0xa8] sm:$0xff]
    %v261 = vld [vmem:[%s33 + $0xb0] sm:$0xff]
    %v262 = vld [vmem:[%s33 + $0xb8] sm:$0xff]
    %v263 = vld [vmem:[%s33 + $0xc0] sm:$0xff]
    %v264 = vld [vmem:[%s33 + $0xc8] sm:$0xff]
    %v265 = vld [vmem:[%s33 + $0xd0] sm:$0xff]
    %v266 = vld [vmem:[%s33 + $0xd8] sm:$0xff]
    %v267 = vld [vmem:[%s33 + $0xe0] sm:$0xff]
    %v268 = vld [vmem:[%s33 + $0xe8] sm:$0xff]
    %v269 = vld [vmem:[%s33 + $0xf0] sm:$0xff]
    %v270 = vld [vmem:[%s33 + $0xf8] sm:$0xff]
    %v271 = vld [vmem:[%s31] sm:$0x3]
    %v272 = vpack.c.bf16 %v235, %v233
    %v273 = vpack.c.bf16 %v236, %v234
    %v274 = vpack.c.bf16 %v237, %v237
    %v275 = vpack.c.bf16 %v238, %v238
    %v277 = vlaneseq
    %v278 = vshrl.u32 %v277, 7
    %v279 = vsub.s32 0, %v278
    %v280 = vrot.slane %v271, %v279
    %v281 = vlaneseq
    %v282 = vshrl.u32 %v281, 7
    %v283 = vsub.s32 1, %v282
    %v284 = vrot.slane %v271, %v283
    %v319 = vunpack.c.l.b16 %v239
    %v320 = vunpack.c.h.b16 %v239
    %v321 = vunpack.c.l.b16 %v240
    %v322 = vunpack.c.h.b16 %v240
    %v323 = vunpack.c.l.b16 %v241
    %v324 = vunpack.c.h.b16 %v241
    %v325 = vunpack.c.l.b16 %v242
    %v326 = vunpack.c.h.b16 %v242
    %v327 = vunpack.c.l.b16 %v243
    %v328 = vunpack.c.h.b16 %v243
    %v329 = vunpack.c.l.b16 %v244
    %v330 = vunpack.c.h.b16 %v244
    %v331 = vunpack.c.l.b16 %v245
    %v332 = vunpack.c.h.b16 %v245
    %v333 = vunpack.c.l.b16 %v246
    %v334 = vunpack.c.h.b16 %v246
    %v335 = vunpack.c.l.b16 %v247
    %v336 = vunpack.c.h.b16 %v247
    %v337 = vunpack.c.l.b16 %v248
    %v338 = vunpack.c.h.b16 %v248
    %v339 = vunpack.c.l.b16 %v249
    %v340 = vunpack.c.h.b16 %v249
    %v341 = vunpack.c.l.b16 %v250
    %v342 = vunpack.c.h.b16 %v250
    %v343 = vunpack.c.l.b16 %v251
    %v344 = vunpack.c.h.b16 %v251
    %v345 = vunpack.c.l.b16 %v252
    %v346 = vunpack.c.h.b16 %v252
    %v347 = vunpack.c.l.b16 %v253
    %v348 = vunpack.c.h.b16 %v253
    %v349 = vunpack.c.l.b16 %v254
    %v350 = vunpack.c.h.b16 %v254
    %v351 = vunpack.c.l.b16 %v255
    %v352 = vunpack.c.h.b16 %v255
    %v353 = vunpack.c.l.b16 %v256
    %v354 = vunpack.c.h.b16 %v256
    %v355 = vunpack.c.l.b16 %v257
    %v356 = vunpack.c.h.b16 %v257
    %v357 = vunpack.c.l.b16 %v258
    %v358 = vunpack.c.h.b16 %v258
    %v359 = vunpack.c.l.b16 %v259
    %v360 = vunpack.c.h.b16 %v259
    %v361 = vunpack.c.l.b16 %v260
    %v362 = vunpack.c.h.b16 %v260
    %v363 = vunpack.c.l.b16 %v261
    %v364 = vunpack.c.h.b16 %v261
    %v365 = vunpack.c.l.b16 %v262
    %v366 = vunpack.c.h.b16 %v262
    %v367 = vunpack.c.l.b16 %v263
    %v368 = vunpack.c.h.b16 %v263
    %v369 = vunpack.c.l.b16 %v264
    %v370 = vunpack.c.h.b16 %v264
    %v371 = vunpack.c.l.b16 %v265
    %v372 = vunpack.c.h.b16 %v265
    %v373 = vunpack.c.l.b16 %v266
    %v374 = vunpack.c.h.b16 %v266
    %v375 = vunpack.c.l.b16 %v267
    %v376 = vunpack.c.h.b16 %v267
    %v377 = vunpack.c.l.b16 %v268
    %v378 = vunpack.c.h.b16 %v268
    %v379 = vunpack.c.l.b16 %v269
    %v380 = vunpack.c.h.b16 %v269
    %v381 = vunpack.c.l.b16 %v270
    %v382 = vunpack.c.h.b16 %v270
    %v383 = vpack.c.b16 %v321, %v319
    %v384 = vpack.c.b16 %v322, %v320
    %v385 = vpack.c.b16 %v325, %v323
    %v386 = vpack.c.b16 %v326, %v324
    %v387 = vpack.c.b16 %v329, %v327
    %v388 = vpack.c.b16 %v330, %v328
    %v389 = vpack.c.b16 %v333, %v331
    %v390 = vpack.c.b16 %v334, %v332
    %v391 = vpack.c.b16 %v337, %v335
    %v392 = vpack.c.b16 %v338, %v336
    %v393 = vpack.c.b16 %v341, %v339
    %v394 = vpack.c.b16 %v342, %v340
    %v395 = vpack.c.b16 %v345, %v343
    %v396 = vpack.c.b16 %v346, %v344
    %v397 = vpack.c.b16 %v349, %v347
    %v398 = vpack.c.b16 %v350, %v348
    %v399 = vpack.c.b16 %v353, %v351
    %v400 = vpack.c.b16 %v354, %v352
    %v401 = vpack.c.b16 %v357, %v355
    %v402 = vpack.c.b16 %v358, %v356
    %v403 = vpack.c.b16 %v361, %v359
    %v404 = vpack.c.b16 %v362, %v360
    %v405 = vpack.c.b16 %v365, %v363
    %v406 = vpack.c.b16 %v366, %v364
    %v407 = vpack.c.b16 %v369, %v367
    %v408 = vpack.c.b16 %v370, %v368
    %v409 = vpack.c.b16 %v373, %v371
    %v410 = vpack.c.b16 %v374, %v372
    %v411 = vpack.c.b16 %v377, %v375
    %v412 = vpack.c.b16 %v378, %v376
    %v413 = vpack.c.b16 %v381, %v379
    %v414 = vpack.c.b16 %v382, %v380
    %447 = vmatprep.subr.bf16.mxu0 %v384
    %448 = vmatpush1.bf16.msra.mxu0 %v383
    %449 = vmatprep.subr.bf16.mxu0 %v386
    %450 = vmatpush1.bf16.msra.mxu0 %v385
    %451 = vmatprep.subr.bf16.mxu0 %v388
    %452 = vmatpush1.bf16.msra.mxu0 %v387
    %453 = vmatprep.subr.bf16.mxu0 %v390
    %454 = vmatpush1.bf16.msra.mxu0 %v389
    %455 = vmatprep.subr.bf16.mxu0 %v392
    %456 = vmatpush1.bf16.msra.mxu0 %v391
    %457 = vmatprep.subr.bf16.mxu0 %v394
    %458 = vmatpush1.bf16.msra.mxu0 %v393
    %459 = vmatprep.subr.bf16.mxu0 %v396
    %460 = vmatpush1.bf16.msra.mxu0 %v395
    %461 = vmatprep.subr.bf16.mxu0 %v398
    %462 = vmatpush1.bf16.msra.mxu0 %v397
    %463 = vmatprep.subr.bf16.mxu0 %v400
    %464 = vmatpush1.bf16.msra.mxu0 %v399
    %465 = vmatprep.subr.bf16.mxu0 %v402
    %466 = vmatpush1.bf16.msra.mxu0 %v401
    %467 = vmatprep.subr.bf16.mxu0 %v404
    %468 = vmatpush1.bf16.msra.mxu0 %v403
    %469 = vmatprep.subr.bf16.mxu0 %v406
    %470 = vmatpush1.bf16.msra.mxu0 %v405
    %471 = vmatprep.subr.bf16.mxu0 %v408
    %472 = vmatpush1.bf16.msra.mxu0 %v407
    %473 = vmatprep.subr.bf16.mxu0 %v410
    %474 = vmatpush1.bf16.msra.mxu0 %v409
    %475 = vmatprep.subr.bf16.mxu0 %v412
    %476 = vmatpush1.bf16.msra.mxu0 %v411
    %477 = vmatprep.subr.bf16.mxu0 %v414
    %478 = vmatpush1.bf16.msra.mxu0 %v413
    %479 = vmatprep.mubr.bf16.mxu0 %v273
    %480 = vmatmul.mubr.bf16.gmra.mrb[0].mxu0 %v272
    %v481 = vpop.f32.mrb[0].mxu0
    %v482 = vadd.f32 %v280, %v481
    %v483 = vpop.f32.mrb[0].mxu0
    %v484 = vadd.f32 %v284, %v483
    %v485 = vpop.f32.mrb[0].mxu0
    %v486 = vadd.f32 %v280, %v485
    %v487 = vpop.f32.mrb[0].mxu0
    %v488 = vadd.f32 %v284, %v487
    %489 = vmatprep.mubr.bf16.mxu0 %v275
    %490 = vmatmul.mubr.bf16.gmra.mrb[0].mxu0 %v274
    %v491 = vpop.f32.mrb[0].mxu0
    %v492 = vadd.f32 %v280, %v491
    %v493 = vpop.f32.mrb[0].mxu0
    %v494 = vadd.f32 %v284, %v493
    %v495 = vpop.f32.mrb[0].mxu0
    %v496 = vpop.f32.mrb[0].mxu0
    %497 = vdwg.mxu0
    %v498 = vmax.f32 %v482, 0.0
    %v499 = vmax.f32 %v484, 0.0
    %v500 = vmax.f32 %v486, 0.0
    %v501 = vmax.f32 %v488, 0.0
    %v502 = vmax.f32 %v492, 0.0
    %v503 = vmax.f32 %v494, 0.0
    %v504 = vld [vmem:[%s3] sm:$0xf]
    %v505 = vld [vmem:[%s65] sm:$0xff]
    %v506 = vld [vmem:[%s65 + $0x8] sm:$0xff]
    %v507 = vld [vmem:[%s65 + $0x10] sm:$0xff]
    %v508 = vld [vmem:[%s65 + $0x18] sm:$0xff]
    %v509 = vld [vmem:[%s65 + $0x20] sm:$0xff]
    %v510 = vld [vmem:[%s65 + $0x28] sm:$0xff]
    %v511 = vld [vmem:[%s65 + $0x30] sm:$0xff]
    %v512 = vld [vmem:[%s65 + $0x38] sm:$0xff]
    %v513 = vld [vmem:[%s65 + $0x40] sm:$0xff]
    %v514 = vld [vmem:[%s65 + $0x48] sm:$0xff]
    %v515 = vld [vmem:[%s65 + $0x50] sm:$0xff]
    %v516 = vld [vmem:[%s65 + $0x58] sm:$0xff]
    %v517 = vld [vmem:[%s65 + $0x60] sm:$0xff]
    %v518 = vld [vmem:[%s65 + $0x68] sm:$0xff]
    %v519 = vld [vmem:[%s65 + $0x70] sm:$0xff]
    %v520 = vld [vmem:[%s65 + $0x78] sm:$0xff]
    %v521 = vld [vmem:[%s65 + $0x80] sm:$0xff]
    %v522 = vld [vmem:[%s65 + $0x88] sm:$0xff]
    %v523 = vld [vmem:[%s65 + $0x90] sm:$0xff]
    %v524 = vld [vmem:[%s65 + $0x98] sm:$0xff]
    %v525 = vld [vmem:[%s65 + $0xa0] sm:$0xff]
    %v526 = vld [vmem:[%s65 + $0xa8] sm:$0xff]
    %v527 = vld [vmem:[%s65 + $0xb0] sm:$0xff]
    %v528 = vld [vmem:[%s65 + $0xb8] sm:$0xff]
    %v529 = vld [vmem:[%s65 + $0xc0] sm:$0xff]
    %v530 = vld [vmem:[%s65 + $0xc8] sm:$0xff]
    %v531 = vld [vmem:[%s65 + $0xd0] sm:$0xff]
    %v532 = vld [vmem:[%s65 + $0xd8] sm:$0xff]
    %v533 = vld [vmem:[%s65 + $0xe0] sm:$0xff]
    %v534 = vld [vmem:[%s65 + $0xe8] sm:$0xff]
    %v535 = vld [vmem:[%s65 + $0xf0] sm:$0xff]
    %v536 = vld [vmem:[%s65 + $0xf8] sm:$0xff]
    %v537 = vld [vmem:[%s63] sm:$0x3]
    %v540 = vunpack.c.l.s4 1983009808
    %v541 = vunpack.c.0.s8 %v540
    %v542 = vlaneseq
    %v543 = vshrl.u32 %v542, 7
    %v544 = vsub.s32 %v541, %v543
    %v545 = vrot.slane %v504, %v544
    %v546 = vcombine.high %v545, %v545
    %v549 = vpack.c.bf16 %v545, %v545
    %v550 = vpack.c.bf16 %v546, %v546
    %v552 = vlaneseq
    %v553 = vshrl.u32 %v552, 7
    %v554 = vsub.s32 0, %v553
    %v555 = vrot.slane %v537, %v554
    %v556 = vlaneseq
    %v557 = vshrl.u32 %v556, 7
    %v558 = vsub.s32 1, %v557
    %v559 = vrot.slane %v537, %v558
    %v594 = vunpack.c.l.b16 %v505
    %v595 = vunpack.c.h.b16 %v505
    %v596 = vunpack.c.l.b16 %v506
    %v597 = vunpack.c.h.b16 %v506
    %v598 = vunpack.c.l.b16 %v507
    %v599 = vunpack.c.h.b16 %v507
    %v600 = vunpack.c.l.b16 %v508
    %v601 = vunpack.c.h.b16 %v508
    %v602 = vunpack.c.l.b16 %v509
    %v603 = vunpack.c.h.b16 %v509
    %v604 = vunpack.c.l.b16 %v510
    %v605 = vunpack.c.h.b16 %v510
    %v606 = vunpack.c.l.b16 %v511
    %v607 = vunpack.c.h.b16 %v511
    %v608 = vunpack.c.l.b16 %v512
    %v609 = vunpack.c.h.b16 %v512
    %v610 = vunpack.c.l.b16 %v513
    %v611 = vunpack.c.h.b16 %v513
    %v612 = vunpack.c.l.b16 %v514
    %v613 = vunpack.c.h.b16 %v514
    %v614 = vunpack.c.l.b16 %v515
    %v615 = vunpack.c.h.b16 %v515
    %v616 = vunpack.c.l.b16 %v516
    %v617 = vunpack.c.h.b16 %v516
    %v618 = vunpack.c.l.b16 %v517
    %v619 = vunpack.c.h.b16 %v517
    %v620 = vunpack.c.l.b16 %v518
    %v621 = vunpack.c.h.b16 %v518
    %v622 = vunpack.c.l.b16 %v519
    %v623 = vunpack.c.h.b16 %v519
    %v624 = vunpack.c.l.b16 %v520
    %v625 = vunpack.c.h.b16 %v520
    %v626 = vunpack.c.l.b16 %v521
    %v627 = vunpack.c.h.b16 %v521
    %v628 = vunpack.c.l.b16 %v522
    %v629 = vunpack.c.h.b16 %v522
    %v630 = vunpack.c.l.b16 %v523
    %v631 = vunpack.c.h.b16 %v523
    %v632 = vunpack.c.l.b16 %v524
    %v633 = vunpack.c.h.b16 %v524
    %v634 = vunpack.c.l.b16 %v525
    %v635 = vunpack.c.h.b16 %v525
    %v636 = vunpack.c.l.b16 %v526
    %v637 = vunpack.c.h.b16 %v526
    %v638 = vunpack.c.l.b16 %v527
    %v639 = vunpack.c.h.b16 %v527
    %v640 = vunpack.c.l.b16 %v528
    %v641 = vunpack.c.h.b16 %v528
    %v642 = vunpack.c.l.b16 %v529
    %v643 = vunpack.c.h.b16 %v529
    %v644 = vunpack.c.l.b16 %v530
    %v645 = vunpack.c.h.b16 %v530
    %v646 = vunpack.c.l.b16 %v531
    %v647 = vunpack.c.h.b16 %v531
    %v648 = vunpack.c.l.b16 %v532
    %v649 = vunpack.c.h.b16 %v532
    %v650 = vunpack.c.l.b16 %v533
    %v651 = vunpack.c.h.b16 %v533
    %v652 = vunpack.c.l.b16 %v534
    %v653 = vunpack.c.h.b16 %v534
    %v654 = vunpack.c.l.b16 %v535
    %v655 = vunpack.c.h.b16 %v535
    %v656 = vunpack.c.l.b16 %v536
    %v657 = vunpack.c.h.b16 %v536
    %v658 = vpack.c.b16 %v596, %v594
    %v659 = vpack.c.b16 %v597, %v595
    %v660 = vpack.c.b16 %v600, %v598
    %v661 = vpack.c.b16 %v601, %v599
    %v662 = vpack.c.b16 %v604, %v602
    %v663 = vpack.c.b16 %v605, %v603
    %v664 = vpack.c.b16 %v608, %v606
    %v665 = vpack.c.b16 %v609, %v607
    %v666 = vpack.c.b16 %v612, %v610
    %v667 = vpack.c.b16 %v613, %v611
    %v668 = vpack.c.b16 %v616, %v614
    %v669 = vpack.c.b16 %v617, %v615
    %v670 = vpack.c.b16 %v620, %v618
    %v671 = vpack.c.b16 %v621, %v619
    %v672 = vpack.c.b16 %v624, %v622
    %v673 = vpack.c.b16 %v625, %v623
    %v674 = vpack.c.b16 %v628, %v626
    %v675 = vpack.c.b16 %v629, %v627
    %v676 = vpack.c.b16 %v632, %v630
    %v677 = vpack.c.b16 %v633, %v631
    %v678 = vpack.c.b16 %v636, %v634
    %v679 = vpack.c.b16 %v637, %v635
    %v680 = vpack.c.b16 %v640, %v638
    %v681 = vpack.c.b16 %v641, %v639
    %v682 = vpack.c.b16 %v644, %v642
    %v683 = vpack.c.b16 %v645, %v643
    %v684 = vpack.c.b16 %v648, %v646
    %v685 = vpack.c.b16 %v649, %v647
    %v686 = vpack.c.b16 %v652, %v650
    %v687 = vpack.c.b16 %v653, %v651
    %v688 = vpack.c.b16 %v656, %v654
    %v689 = vpack.c.b16 %v657, %v655
    %722 = vmatprep.subr.bf16.mxu0 %v659
    %723 = vmatpush1.bf16.msra.mxu0 %v658
    %724 = vmatprep.subr.bf16.mxu0 %v661
    %725 = vmatpush1.bf16.msra.mxu0 %v660
    %726 = vmatprep.subr.bf16.mxu0 %v663
    %727 = vmatpush1.bf16.msra.mxu0 %v662
    %728 = vmatprep.subr.bf16.mxu0 %v665
    %729 = vmatpush1.bf16.msra.mxu0 %v664
    %730 = vmatprep.subr.bf16.mxu0 %v667
    %731 = vmatpush1.bf16.msra.mxu0 %v666
    %732 = vmatprep.subr.bf16.mxu0 %v669
    %733 = vmatpush1.bf16.msra.mxu0 %v668
    %734 = vmatprep.subr.bf16.mxu0 %v671
    %735 = vmatpush1.bf16.msra.mxu0 %v670
    %736 = vmatprep.subr.bf16.mxu0 %v673
    %737 = vmatpush1.bf16.msra.mxu0 %v672
    %738 = vmatprep.subr.bf16.mxu0 %v675
    %739 = vmatpush1.bf16.msra.mxu0 %v674
    %740 = vmatprep.subr.bf16.mxu0 %v677
    %741 = vmatpush1.bf16.msra.mxu0 %v676
    %742 = vmatprep.subr.bf16.mxu0 %v679
    %743 = vmatpush1.bf16.msra.mxu0 %v678
    %744 = vmatprep.subr.bf16.mxu0 %v681
    %745 = vmatpush1.bf16.msra.mxu0 %v680
    %746 = vmatprep.subr.bf16.mxu0 %v683
    %747 = vmatpush1.bf16.msra.mxu0 %v682
    %748 = vmatprep.subr.bf16.mxu0 %v685
    %749 = vmatpush1.bf16.msra.mxu0 %v684
    %750 = vmatprep.subr.bf16.mxu0 %v687
    %751 = vmatpush1.bf16.msra.mxu0 %v686
    %752 = vmatprep.subr.bf16.mxu0 %v689
    %753 = vmatpush1.bf16.msra.mxu0 %v688
    %754 = vmatprep.mubr.bf16.mxu0 %v550
    %755 = vmatmul.mubr.bf16.gmra.mrb[0].mxu0 %v549
    %v756 = vpop.f32.mrb[0].mxu0
    %v757 = vadd.f32 %v555, %v756
    %v758 = vpop.f32.mrb[0].mxu0
    %v759 = vadd.f32 %v559, %v758
    %v760 = vpop.f32.mrb[0].mxu0
    %v761 = vpop.f32.mrb[0].mxu0
    %762 = vdwg.mxu0
    %v763 = vmax.f32 %v757, 0.0
    %v764 = vmax.f32 %v759, 0.0
    %v765 = vld [vmem:[%s25] sm:$0xff]
    %v766 = vld [vmem:[%s25 + $0x8] sm:$0xff]
    %v767 = vld [vmem:[%s25 + $0x10] sm:$0xff]
    %v768 = vld [vmem:[%s25 + $0x18] sm:$0xff]
    %v769 = vld [vmem:[%s25 + $0x20] sm:$0xff]
    %v770 = vld [vmem:[%s25 + $0x28] sm:$0xff]
    %v771 = vld [vmem:[%s25 + $0x30] sm:$0xff]
    %v772 = vld [vmem:[%s25 + $0x38] sm:$0xff]
    %v773 = vld [vmem:[%s25 + $0x40] sm:$0xff]
    %v774 = vld [vmem:[%s25 + $0x48] sm:$0xff]
    %v775 = vld [vmem:[%s25 + $0x50] sm:$0xff]
    %v776 = vld [vmem:[%s25 + $0x58] sm:$0xff]
    %v777 = vld [vmem:[%s25 + $0x60] sm:$0xff]
    %v778 = vld [vmem:[%s25 + $0x68] sm:$0xff]
    %v779 = vld [vmem:[%s25 + $0x70] sm:$0xff]
    %v780 = vld [vmem:[%s25 + $0x78] sm:$0xff]
    %v781 = vld [vmem:[%s25 + $0x80] sm:$0xff]
    %v782 = vld [vmem:[%s25 + $0x88] sm:$0xff]
    %v783 = vld [vmem:[%s25 + $0x90] sm:$0xff]
    %v784 = vld [vmem:[%s25 + $0x98] sm:$0xff]
    %v785 = vld [vmem:[%s25 + $0xa0] sm:$0xff]
    %v786 = vld [vmem:[%s25 + $0xa8] sm:$0xff]
    %v787 = vld [vmem:[%s25 + $0xb0] sm:$0xff]
    %v788 = vld [vmem:[%s25 + $0xb8] sm:$0xff]
    %v789 = vld [vmem:[%s25 + $0xc0] sm:$0xff]
    %v790 = vld [vmem:[%s25 + $0xc8] sm:$0xff]
    %v791 = vld [vmem:[%s25 + $0xd0] sm:$0xff]
    %v792 = vld [vmem:[%s25 + $0xd8] sm:$0xff]
    %v793 = vld [vmem:[%s25 + $0xe0] sm:$0xff]
    %v794 = vld [vmem:[%s25 + $0xe8] sm:$0xff]
    %v795 = vld [vmem:[%s25 + $0xf0] sm:$0xff]
    %v796 = vld [vmem:[%s25 + $0xf8] sm:$0xff]
    %v797 = vld [vmem:[%s23] sm:$0x3]
    %v798 = vpack.c.bf16 %v763, %v763
    %v799 = vpack.c.bf16 %v764, %v764
    %v801 = vlaneseq
    %v802 = vshrl.u32 %v801, 7
    %v803 = vsub.s32 0, %v802
    %v804 = vrot.slane %v797, %v803
    %v805 = vlaneseq
    %v806 = vshrl.u32 %v805, 7
    %v807 = vsub.s32 1, %v806
    %v808 = vrot.slane %v797, %v807
    %v843 = vunpack.c.l.b16 %v765
    %v844 = vunpack.c.h.b16 %v765
    %v845 = vunpack.c.l.b16 %v766
    %v846 = vunpack.c.h.b16 %v766
    %v847 = vunpack.c.l.b16 %v767
    %v848 = vunpack.c.h.b16 %v767
    %v849 = vunpack.c.l.b16 %v768
    %v850 = vunpack.c.h.b16 %v768
    %v851 = vunpack.c.l.b16 %v769
    %v852 = vunpack.c.h.b16 %v769
    %v853 = vunpack.c.l.b16 %v770
    %v854 = vunpack.c.h.b16 %v770
    %v855 = vunpack.c.l.b16 %v771
    %v856 = vunpack.c.h.b16 %v771
    %v857 = vunpack.c.l.b16 %v772
    %v858 = vunpack.c.h.b16 %v772
    %v859 = vunpack.c.l.b16 %v773
    %v860 = vunpack.c.h.b16 %v773
    %v861 = vunpack.c.l.b16 %v774
    %v862 = vunpack.c.h.b16 %v774
    %v863 = vunpack.c.l.b16 %v775
    %v864 = vunpack.c.h.b16 %v775
    %v865 = vunpack.c.l.b16 %v776
    %v866 = vunpack.c.h.b16 %v776
    %v867 = vunpack.c.l.b16 %v777
    %v868 = vunpack.c.h.b16 %v777
    %v869 = vunpack.c.l.b16 %v778
    %v870 = vunpack.c.h.b16 %v778
    %v871 = vunpack.c.l.b16 %v779
    %v872 = vunpack.c.h.b16 %v779
    %v873 = vunpack.c.l.b16 %v780
    %v874 = vunpack.c.h.b16 %v780
    %v875 = vunpack.c.l.b16 %v781
    %v876 = vunpack.c.h.b16 %v781
    %v877 = vunpack.c.l.b16 %v782
    %v878 = vunpack.c.h.b16 %v782
    %v879 = vunpack.c.l.b16 %v783
    %v880 = vunpack.c.h.b16 %v783
    %v881 = vunpack.c.l.b16 %v784
    %v882 = vunpack.c.h.b16 %v784
    %v883 = vunpack.c.l.b16 %v785
    %v884 = vunpack.c.h.b16 %v785
    %v885 = vunpack.c.l.b16 %v786
    %v886 = vunpack.c.h.b16 %v786
    %v887 = vunpack.c.l.b16 %v787
    %v888 = vunpack.c.h.b16 %v787
    %v889 = vunpack.c.l.b16 %v788
    %v890 = vunpack.c.h.b16 %v788
    %v891 = vunpack.c.l.b16 %v789
    %v892 = vunpack.c.h.b16 %v789
    %v893 = vunpack.c.l.b16 %v790
    %v894 = vunpack.c.h.b16 %v790
    %v895 = vunpack.c.l.b16 %v791
    %v896 = vunpack.c.h.b16 %v791
    %v897 = vunpack.c.l.b16 %v792
    %v898 = vunpack.c.h.b16 %v792
    %v899 = vunpack.c.l.b16 %v793
    %v900 = vunpack.c.h.b16 %v793
    %v901 = vunpack.c.l.b16 %v794
    %v902 = vunpack.c.h.b16 %v794
    %v903 = vunpack.c.l.b16 %v795
    %v904 = vunpack.c.h.b16 %v795
    %v905 = vunpack.c.l.b16 %v796
    %v906 = vunpack.c.h.b16 %v796
    %v907 = vpack.c.b16 %v845, %v843
    %v908 = vpack.c.b16 %v846, %v844
    %v909 = vpack.c.b16 %v849, %v847
    %v910 = vpack.c.b16 %v850, %v848
    %v911 = vpack.c.b16 %v853, %v851
    %v912 = vpack.c.b16 %v854, %v852
    %v913 = vpack.c.b16 %v857, %v855
    %v914 = vpack.c.b16 %v858, %v856
    %v915 = vpack.c.b16 %v861, %v859
    %v916 = vpack.c.b16 %v862, %v860
    %v917 = vpack.c.b16 %v865, %v863
    %v918 = vpack.c.b16 %v866, %v864
    %v919 = vpack.c.b16 %v869, %v867
    %v920 = vpack.c.b16 %v870, %v868
    %v921 = vpack.c.b16 %v873, %v871
    %v922 = vpack.c.b16 %v874, %v872
    %v923 = vpack.c.b16 %v877, %v875
    %v924 = vpack.c.b16 %v878, %v876
    %v925 = vpack.c.b16 %v881, %v879
    %v926 = vpack.c.b16 %v882, %v880
    %v927 = vpack.c.b16 %v885, %v883
    %v928 = vpack.c.b16 %v886, %v884
    %v929 = vpack.c.b16 %v889, %v887
    %v930 = vpack.c.b16 %v890, %v888
    %v931 = vpack.c.b16 %v893, %v891
    %v932 = vpack.c.b16 %v894, %v892
    %v933 = vpack.c.b16 %v897, %v895
    %v934 = vpack.c.b16 %v898, %v896
    %v935 = vpack.c.b16 %v901, %v899
    %v936 = vpack.c.b16 %v902, %v900
    %v937 = vpack.c.b16 %v905, %v903
    %v938 = vpack.c.b16 %v906, %v904
    %971 = vmatprep.subr.bf16.mxu0 %v908
    %972 = vmatpush1.bf16.msra.mxu0 %v907
    %973 = vmatprep.subr.bf16.mxu0 %v910
    %974 = vmatpush1.bf16.msra.mxu0 %v909
    %975 = vmatprep.subr.bf16.mxu0 %v912
    %976 = vmatpush1.bf16.msra.mxu0 %v911
    %977 = vmatprep.subr.bf16.mxu0 %v914
    %978 = vmatpush1.bf16.msra.mxu0 %v913
    %979 = vmatprep.subr.bf16.mxu0 %v916
    %980 = vmatpush1.bf16.msra.mxu0 %v915
    %981 = vmatprep.subr.bf16.mxu0 %v918
    %982 = vmatpush1.bf16.msra.mxu0 %v917
    %983 = vmatprep.subr.bf16.mxu0 %v920
    %984 = vmatpush1.bf16.msra.mxu0 %v919
    %985 = vmatprep.subr.bf16.mxu0 %v922
    %986 = vmatpush1.bf16.msra.mxu0 %v921
    %987 = vmatprep.subr.bf16.mxu0 %v924
    %988 = vmatpush1.bf16.msra.mxu0 %v923
    %989 = vmatprep.subr.bf16.mxu0 %v926
    %990 = vmatpush1.bf16.msra.mxu0 %v925
    %991 = vmatprep.subr.bf16.mxu0 %v928
    %992 = vmatpush1.bf16.msra.mxu0 %v927
    %993 = vmatprep.subr.bf16.mxu0 %v930
    %994 = vmatpush1.bf16.msra.mxu0 %v929
    %995 = vmatprep.subr.bf16.mxu0 %v932
    %996 = vmatpush1.bf16.msra.mxu0 %v931
    %997 = vmatprep.subr.bf16.mxu0 %v934
    %998 = vmatpush1.bf16.msra.mxu0 %v933
    %999 = vmatprep.subr.bf16.mxu0 %v936
    %1000 = vmatpush1.bf16.msra.mxu0 %v935
    %1001 = vmatprep.subr.bf16.mxu0 %v938
    %1002 = vmatpush1.bf16.msra.mxu0 %v937
    %1003 = vmatprep.mubr.bf16.mxu0 %v799
    %1004 = vmatmul.mubr.bf16.gmra.mrb[0].mxu0 %v798
    %v1005 = vpop.f32.mrb[0].mxu0
    %v1006 = vadd.f32 %v804, %v1005
    %v1007 = vpop.f32.mrb[0].mxu0
    %v1008 = vadd.f32 %v808, %v1007
    %v1009 = vpop.f32.mrb[0].mxu0
    %v1010 = vpop.f32.mrb[0].mxu0
    %1011 = vdwg.mxu0
    %v1012 = vld [vmem:[%s17] sm:$0xff]
    %v1013 = vld [vmem:[%s17 + $0x8] sm:$0xff]
    %v1014 = vld [vmem:[%s17 + $0x10] sm:$0xff]
    %v1015 = vld [vmem:[%s17 + $0x18] sm:$0xff]
    %v1016 = vld [vmem:[%s17 + $0x20] sm:$0xff]
    %v1017 = vld [vmem:[%s17 + $0x28] sm:$0xff]
    %v1018 = vld [vmem:[%s17 + $0x30] sm:$0xff]
    %v1019 = vld [vmem:[%s17 + $0x38] sm:$0xff]
    %v1020 = vld [vmem:[%s17 + $0x40] sm:$0xff]
    %v1021 = vld [vmem:[%s17 + $0x48] sm:$0xff]
    %v1022 = vld [vmem:[%s17 + $0x50] sm:$0xff]
    %v1023 = vld [vmem:[%s17 + $0x58] sm:$0xff]
    %v1024 = vld [vmem:[%s17 + $0x60] sm:$0xff]
    %v1025 = vld [vmem:[%s17 + $0x68] sm:$0xff]
    %v1026 = vld [vmem:[%s17 + $0x70] sm:$0xff]
    %v1027 = vld [vmem:[%s17 + $0x78] sm:$0xff]
    %v1028 = vld [vmem:[%s17 + $0x80] sm:$0xff]
    %v1029 = vld [vmem:[%s17 + $0x88] sm:$0xff]
    %v1030 = vld [vmem:[%s17 + $0x90] sm:$0xff]
    %v1031 = vld [vmem:[%s17 + $0x98] sm:$0xff]
    %v1032 = vld [vmem:[%s17 + $0xa0] sm:$0xff]
    %v1033 = vld [vmem:[%s17 + $0xa8] sm:$0xff]
    %v1034 = vld [vmem:[%s17 + $0xb0] sm:$0xff]
    %v1035 = vld [vmem:[%s17 + $0xb8] sm:$0xff]
    %v1036 = vld [vmem:[%s17 + $0xc0] sm:$0xff]
    %v1037 = vld [vmem:[%s17 + $0xc8] sm:$0xff]
    %v1038 = vld [vmem:[%s17 + $0xd0] sm:$0xff]
    %v1039 = vld [vmem:[%s17 + $0xd8] sm:$0xff]
    %v1040 = vld [vmem:[%s17 + $0xe0] sm:$0xff]
    %v1041 = vld [vmem:[%s17 + $0xe8] sm:$0xff]
    %v1042 = vld [vmem:[%s17 + $0xf0] sm:$0xff]
    %v1043 = vld [vmem:[%s17 + $0xf8] sm:$0xff]
    %v1044 = vld [vmem:[%s17 + $0x100] sm:$0xff]
    %v1045 = vld [vmem:[%s17 + $0x108] sm:$0xff]
    %v1046 = vld [vmem:[%s17 + $0x110] sm:$0xff]
    %v1047 = vld [vmem:[%s17 + $0x118] sm:$0xff]
    %v1048 = vld [vmem:[%s17 + $0x120] sm:$0xff]
    %v1049 = vld [vmem:[%s17 + $0x128] sm:$0xff]
    %v1050 = vld [vmem:[%s17 + $0x130] sm:$0xff]
    %v1051 = vld [vmem:[%s17 + $0x138] sm:$0xff]
    %v1052 = vld [vmem:[%s17 + $0x140] sm:$0xff]
    %v1053 = vld [vmem:[%s17 + $0x148] sm:$0xff]
    %v1054 = vld [vmem:[%s17 + $0x150] sm:$0xff]
    %v1055 = vld [vmem:[%s17 + $0x158] sm:$0xff]
    %v1056 = vld [vmem:[%s17 + $0x160] sm:$0xff]
    %v1057 = vld [vmem:[%s17 + $0x168] sm:$0xff]
    %v1058 = vld [vmem:[%s17 + $0x170] sm:$0xff]
    %v1059 = vld [vmem:[%s17 + $0x178] sm:$0xff]
    %v1060 = vld [vmem:[%s17 + $0x180] sm:$0xff]
    %v1061 = vld [vmem:[%s17 + $0x188] sm:$0xff]
    %v1062 = vld [vmem:[%s17 + $0x190] sm:$0xff]
    %v1063 = vld [vmem:[%s17 + $0x198] sm:$0xff]
    %v1064 = vld [vmem:[%s17 + $0x1a0] sm:$0xff]
    %v1065 = vld [vmem:[%s17 + $0x1a8] sm:$0xff]
    %v1066 = vld [vmem:[%s17 + $0x1b0] sm:$0xff]
    %v1067 = vld [vmem:[%s17 + $0x1b8] sm:$0xff]
    %v1068 = vld [vmem:[%s17 + $0x1c0] sm:$0xff]
    %v1069 = vld [vmem:[%s17 + $0x1c8] sm:$0xff]
    %v1070 = vld [vmem:[%s17 + $0x1d0] sm:$0xff]
    %v1071 = vld [vmem:[%s17 + $0x1d8] sm:$0xff]
    %v1072 = vld [vmem:[%s17 + $0x1e0] sm:$0xff]
    %v1073 = vld [vmem:[%s17 + $0x1e8] sm:$0xff]
    %v1074 = vld [vmem:[%s17 + $0x1f0] sm:$0xff]
    %v1075 = vld [vmem:[%s17 + $0x1f8] sm:$0xff]
    %v1076 = vld [vmem:[%s15] sm:$0xf]
    %v1077 = vpack.c.bf16 %v500, %v498
    %v1078 = vpack.c.bf16 %v501, %v499
    %v1079 = vpack.c.bf16 %v502, %v502
    %v1080 = vpack.c.bf16 %v503, %v503
    %v1082 = vlaneseq
    %v1083 = vshrl.u32 %v1082, 7
    %v1084 = vsub.s32 0, %v1083
    %v1085 = vrot.slane %v1076, %v1084
    %v1086 = vlaneseq
    %v1087 = vshrl.u32 %v1086, 7
    %v1088 = vsub.s32 1, %v1087
    %v1089 = vrot.slane %v1076, %v1088
    %v1090 = vlaneseq
    %v1091 = vshrl.u32 %v1090, 7
    %v1092 = vsub.s32 2, %v1091
    %v1093 = vrot.slane %v1076, %v1092
    %v1094 = vlaneseq
    %v1095 = vshrl.u32 %v1094, 7
    %v1096 = vsub.s32 3, %v1095
    %v1097 = vrot.slane %v1076, %v1096
    %v1166 = vunpack.c.l.b16 %v1012
    %v1167 = vunpack.c.h.b16 %v1012
    %v1168 = vunpack.c.l.b16 %v1013
    %v1169 = vunpack.c.h.b16 %v1013
    %v1170 = vunpack.c.l.b16 %v1014
    %v1171 = vunpack.c.h.b16 %v1014
    %v1172 = vunpack.c.l.b16 %v1015
    %v1173 = vunpack.c.h.b16 %v1015
    %v1174 = vunpack.c.l.b16 %v1016
    %v1175 = vunpack.c.h.b16 %v1016
    %v1176 = vunpack.c.l.b16 %v1017
    %v1177 = vunpack.c.h.b16 %v1017
    %v1178 = vunpack.c.l.b16 %v1018
    %v1179 = vunpack.c.h.b16 %v1018
    %v1180 = vunpack.c.l.b16 %v1019
    %v1181 = vunpack.c.h.b16 %v1019
    %v1182 = vunpack.c.l.b16 %v1020
    %v1183 = vunpack.c.h.b16 %v1020
    %v1184 = vunpack.c.l.b16 %v1021
    %v1185 = vunpack.c.h.b16 %v1021
    %v1186 = vunpack.c.l.b16 %v1022
    %v1187 = vunpack.c.h.b16 %v1022
    %v1188 = vunpack.c.l.b16 %v1023
    %v1189 = vunpack.c.h.b16 %v1023
    %v1190 = vunpack.c.l.b16 %v1024
    %v1191 = vunpack.c.h.b16 %v1024
    %v1192 = vunpack.c.l.b16 %v1025
    %v1193 = vunpack.c.h.b16 %v1025
    %v1194 = vunpack.c.l.b16 %v1026
    %v1195 = vunpack.c.h.b16 %v1026
    %v1196 = vunpack.c.l.b16 %v1027
    %v1197 = vunpack.c.h.b16 %v1027
    %v1198 = vunpack.c.l.b16 %v1028
    %v1199 = vunpack.c.h.b16 %v1028
    %v1200 = vunpack.c.l.b16 %v1029
    %v1201 = vunpack.c.h.b16 %v1029
    %v1202 = vunpack.c.l.b16 %v1030
    %v1203 = vunpack.c.h.b16 %v1030
    %v1204 = vunpack.c.l.b16 %v1031
    %v1205 = vunpack.c.h.b16 %v1031
    %v1206 = vunpack.c.l.b16 %v1032
    %v1207 = vunpack.c.h.b16 %v1032
    %v1208 = vunpack.c.l.b16 %v1033
    %v1209 = vunpack.c.h.b16 %v1033
    %v1210 = vunpack.c.l.b16 %v1034
    %v1211 = vunpack.c.h.b16 %v1034
    %v1212 = vunpack.c.l.b16 %v1035
    %v1213 = vunpack.c.h.b16 %v1035
    %v1214 = vunpack.c.l.b16 %v1036
    %v1215 = vunpack.c.h.b16 %v1036
    %v1216 = vunpack.c.l.b16 %v1037
    %v1217 = vunpack.c.h.b16 %v1037
    %v1218 = vunpack.c.l.b16 %v1038
    %v1219 = vunpack.c.h.b16 %v1038
    %v1220 = vunpack.c.l.b16 %v1039
    %v1221 = vunpack.c.h.b16 %v1039
    %v1222 = vunpack.c.l.b16 %v1040
    %v1223 = vunpack.c.h.b16 %v1040
    %v1224 = vunpack.c.l.b16 %v1041
    %v1225 = vunpack.c.h.b16 %v1041
    %v1226 = vunpack.c.l.b16 %v1042
    %v1227 = vunpack.c.h.b16 %v1042
    %v1228 = vunpack.c.l.b16 %v1043
    %v1229 = vunpack.c.h.b16 %v1043
    %v1230 = vunpack.c.l.b16 %v1044
    %v1231 = vunpack.c.h.b16 %v1044
    %v1232 = vunpack.c.l.b16 %v1045
    %v1233 = vunpack.c.h.b16 %v1045
    %v1234 = vunpack.c.l.b16 %v1046
    %v1235 = vunpack.c.h.b16 %v1046
    %v1236 = vunpack.c.l.b16 %v1047
    %v1237 = vunpack.c.h.b16 %v1047
    %v1238 = vunpack.c.l.b16 %v1048
    %v1239 = vunpack.c.h.b16 %v1048
    %v1240 = vunpack.c.l.b16 %v1049
    %v1241 = vunpack.c.h.b16 %v1049
    %v1242 = vunpack.c.l.b16 %v1050
    %v1243 = vunpack.c.h.b16 %v1050
    %v1244 = vunpack.c.l.b16 %v1051
    %v1245 = vunpack.c.h.b16 %v1051
    %v1246 = vunpack.c.l.b16 %v1052
    %v1247 = vunpack.c.h.b16 %v1052
    %v1248 = vunpack.c.l.b16 %v1053
    %v1249 = vunpack.c.h.b16 %v1053
    %v1250 = vunpack.c.l.b16 %v1054
    %v1251 = vunpack.c.h.b16 %v1054
    %v1252 = vunpack.c.l.b16 %v1055
    %v1253 = vunpack.c.h.b16 %v1055
    %v1254 = vunpack.c.l.b16 %v1056
    %v1255 = vunpack.c.h.b16 %v1056
    %v1256 = vunpack.c.l.b16 %v1057
    %v1257 = vunpack.c.h.b16 %v1057
    %v1258 = vunpack.c.l.b16 %v1058
    %v1259 = vunpack.c.h.b16 %v1058
    %v1260 = vunpack.c.l.b16 %v1059
    %v1261 = vunpack.c.h.b16 %v1059
    %v1262 = vunpack.c.l.b16 %v1060
    %v1263 = vunpack.c.h.b16 %v1060
    %v1264 = vunpack.c.l.b16 %v1061
    %v1265 = vunpack.c.h.b16 %v1061
    %v1266 = vunpack.c.l.b16 %v1062
    %v1267 = vunpack.c.h.b16 %v1062
    %v1268 = vunpack.c.l.b16 %v1063
    %v1269 = vunpack.c.h.b16 %v1063
    %v1270 = vunpack.c.l.b16 %v1064
    %v1271 = vunpack.c.h.b16 %v1064
    %v1272 = vunpack.c.l.b16 %v1065
    %v1273 = vunpack.c.h.b16 %v1065
    %v1274 = vunpack.c.l.b16 %v1066
    %v1275 = vunpack.c.h.b16 %v1066
    %v1276 = vunpack.c.l.b16 %v1067
    %v1277 = vunpack.c.h.b16 %v1067
    %v1278 = vunpack.c.l.b16 %v1068
    %v1279 = vunpack.c.h.b16 %v1068
    %v1280 = vunpack.c.l.b16 %v1069
    %v1281 = vunpack.c.h.b16 %v1069
    %v1282 = vunpack.c.l.b16 %v1070
    %v1283 = vunpack.c.h.b16 %v1070
    %v1284 = vunpack.c.l.b16 %v1071
    %v1285 = vunpack.c.h.b16 %v1071
    %v1286 = vunpack.c.l.b16 %v1072
    %v1287 = vunpack.c.h.b16 %v1072
    %v1288 = vunpack.c.l.b16 %v1073
    %v1289 = vunpack.c.h.b16 %v1073
    %v1290 = vunpack.c.l.b16 %v1074
    %v1291 = vunpack.c.h.b16 %v1074
    %v1292 = vunpack.c.l.b16 %v1075
    %v1293 = vunpack.c.h.b16 %v1075
    %v1294 = vpack.c.b16 %v1170, %v1166
    %v1295 = vpack.c.b16 %v1171, %v1167
    %v1296 = vpack.c.b16 %v1172, %v1168
    %v1297 = vpack.c.b16 %v1173, %v1169
    %v1298 = vpack.c.b16 %v1178, %v1174
    %v1299 = vpack.c.b16 %v1179, %v1175
    %v1300 = vpack.c.b16 %v1180, %v1176
    %v1301 = vpack.c.b16 %v1181, %v1177
    %v1302 = vpack.c.b16 %v1186, %v1182
    %v1303 = vpack.c.b16 %v1187, %v1183
    %v1304 = vpack.c.b16 %v1188, %v1184
    %v1305 = vpack.c.b16 %v1189, %v1185
    %v1306 = vpack.c.b16 %v1194, %v1190
    %v1307 = vpack.c.b16 %v1195, %v1191
    %v1308 = vpack.c.b16 %v1196, %v1192
    %v1309 = vpack.c.b16 %v1197, %v1193
    %v1310 = vpack.c.b16 %v1202, %v1198
    %v1311 = vpack.c.b16 %v1203, %v1199
    %v1312 = vpack.c.b16 %v1204, %v1200
    %v1313 = vpack.c.b16 %v1205, %v1201
    %v1314 = vpack.c.b16 %v1210, %v1206
    %v1315 = vpack.c.b16 %v1211, %v1207
    %v1316 = vpack.c.b16 %v1212, %v1208
    %v1317 = vpack.c.b16 %v1213, %v1209
    %v1318 = vpack.c.b16 %v1218, %v1214
    %v1319 = vpack.c.b16 %v1219, %v1215
    %v1320 = vpack.c.b16 %v1220, %v1216
    %v1321 = vpack.c.b16 %v1221, %v1217
    %v1322 = vpack.c.b16 %v1226, %v1222
    %v1323 = vpack.c.b16 %v1227, %v1223
    %v1324 = vpack.c.b16 %v1228, %v1224
    %v1325 = vpack.c.b16 %v1229, %v1225
    %v1326 = vpack.c.b16 %v1234, %v1230
    %v1327 = vpack.c.b16 %v1235, %v1231
    %v1328 = vpack.c.b16 %v1236, %v1232
    %v1329 = vpack.c.b16 %v1237, %v1233
    %v1330 = vpack.c.b16 %v1242, %v1238
    %v1331 = vpack.c.b16 %v1243, %v1239
    %v1332 = vpack.c.b16 %v1244, %v1240
    %v1333 = vpack.c.b16 %v1245, %v1241
    %v1334 = vpack.c.b16 %v1250, %v1246
    %v1335 = vpack.c.b16 %v1251, %v1247
    %v1336 = vpack.c.b16 %v1252, %v1248
    %v1337 = vpack.c.b16 %v1253, %v1249
    %v1338 = vpack.c.b16 %v1258, %v1254
    %v1339 = vpack.c.b16 %v1259, %v1255
    %v1340 = vpack.c.b16 %v1260, %v1256
    %v1341 = vpack.c.b16 %v1261, %v1257
    %v1342 = vpack.c.b16 %v1266, %v1262
    %v1343 = vpack.c.b16 %v1267, %v1263
    %v1344 = vpack.c.b16 %v1268, %v1264
    %v1345 = vpack.c.b16 %v1269, %v1265
    %v1346 = vpack.c.b16 %v1274, %v1270
    %v1347 = vpack.c.b16 %v1275, %v1271
    %v1348 = vpack.c.b16 %v1276, %v1272
    %v1349 = vpack.c.b16 %v1277, %v1273
    %v1350 = vpack.c.b16 %v1282, %v1278
    %v1351 = vpack.c.b16 %v1283, %v1279
    %v1352 = vpack.c.b16 %v1284, %v1280
    %v1353 = vpack.c.b16 %v1285, %v1281
    %v1354 = vpack.c.b16 %v1290, %v1286
    %v1355 = vpack.c.b16 %v1291, %v1287
    %v1356 = vpack.c.b16 %v1292, %v1288
    %v1357 = vpack.c.b16 %v1293, %v1289
    %1422 = vmatprep.subr.bf16.mxu0 %v1295
    %1423 = vmatpush1.bf16.msra.mxu0 %v1294
    %1424 = vmatprep.subr.bf16.mxu0 %v1299
    %1425 = vmatpush1.bf16.msra.mxu0 %v1298
    %1426 = vmatprep.subr.bf16.mxu0 %v1303
    %1427 = vmatpush1.bf16.msra.mxu0 %v1302
    %1428 = vmatprep.subr.bf16.mxu0 %v1307
    %1429 = vmatpush1.bf16.msra.mxu0 %v1306
    %1430 = vmatprep.subr.bf16.mxu0 %v1311
    %1431 = vmatpush1.bf16.msra.mxu0 %v1310
    %1432 = vmatprep.subr.bf16.mxu0 %v1315
    %1433 = vmatpush1.bf16.msra.mxu0 %v1314
    %1434 = vmatprep.subr.bf16.mxu0 %v1319
    %1435 = vmatpush1.bf16.msra.mxu0 %v1318
    %1436 = vmatprep.subr.bf16.mxu0 %v1323
    %1437 = vmatpush1.bf16.msra.mxu0 %v1322
    %1438 = vmatprep.subr.bf16.mxu0 %v1327
    %1439 = vmatpush1.bf16.msra.mxu0 %v1326
    %1440 = vmatprep.subr.bf16.mxu0 %v1331
    %1441 = vmatpush1.bf16.msra.mxu0 %v1330
    %1442 = vmatprep.subr.bf16.mxu0 %v1335
    %1443 = vmatpush1.bf16.msra.mxu0 %v1334
    %1444 = vmatprep.subr.bf16.mxu0 %v1339
    %1445 = vmatpush1.bf16.msra.mxu0 %v1338
    %1446 = vmatprep.subr.bf16.mxu0 %v1343
    %1447 = vmatpush1.bf16.msra.mxu0 %v1342
    %1448 = vmatprep.subr.bf16.mxu0 %v1347
    %1449 = vmatpush1.bf16.msra.mxu0 %v1346
    %1450 = vmatprep.subr.bf16.mxu0 %v1351
    %1451 = vmatpush1.bf16.msra.mxu0 %v1350
    %1452 = vmatprep.subr.bf16.mxu0 %v1355
    %1453 = vmatpush1.bf16.msra.mxu0 %v1354
    %1454 = vmatprep.mubr.bf16.mxu0 %v1078
    %1455 = vmatmul.mubr.bf16.gmra.mrb[0].mxu0 %v1077
    %v1456 = vpop.f32.mrb[0].mxu0
    %v1457 = vadd.f32 %v1085, %v1456
    %v1458 = vpop.f32.mrb[0].mxu0
    %v1459 = vadd.f32 %v1089, %v1458
    %v1460 = vpop.f32.mrb[0].mxu0
    %v1461 = vadd.f32 %v1085, %v1460
    %v1462 = vpop.f32.mrb[0].mxu0
    %v1463 = vadd.f32 %v1089, %v1462
    %1464 = vmatprep.mubr.bf16.mxu0 %v1080
    %1465 = vmatmul.mubr.bf16.gmra.mrb[0].mxu0 %v1079
    %v1466 = vpop.f32.mrb[0].mxu0
    %v1467 = vadd.f32 %v1085, %v1466
    %v1468 = vpop.f32.mrb[0].mxu0
    %v1469 = vadd.f32 %v1089, %v1468
    %v1470 = vpop.f32.mrb[0].mxu0
    %v1471 = vpop.f32.mrb[0].mxu0
    %1472 = vdwg.mxu0
    %1473 = vmatprep.subr.bf16.mxu0 %v1297
    %1474 = vmatpush1.bf16.msra.mxu0 %v1296
    %1475 = vmatprep.subr.bf16.mxu0 %v1301
    %1476 = vmatpush1.bf16.msra.mxu0 %v1300
    %1477 = vmatprep.subr.bf16.mxu0 %v1305
    %1478 = vmatpush1.bf16.msra.mxu0 %v1304
    %1479 = vmatprep.subr.bf16.mxu0 %v1309
    %1480 = vmatpush1.bf16.msra.mxu0 %v1308
    %1481 = vmatprep.subr.bf16.mxu0 %v1313
    %1482 = vmatpush1.bf16.msra.mxu0 %v1312
    %1483 = vmatprep.subr.bf16.mxu0 %v1317
    %1484 = vmatpush1.bf16.msra.mxu0 %v1316
    %1485 = vmatprep.subr.bf16.mxu0 %v1321
    %1486 = vmatpush1.bf16.msra.mxu0 %v1320
    %1487 = vmatprep.subr.bf16.mxu0 %v1325
    %1488 = vmatpush1.bf16.msra.mxu0 %v1324
    %1489 = vmatprep.subr.bf16.mxu0 %v1329
    %1490 = vmatpush1.bf16.msra.mxu0 %v1328
    %1491 = vmatprep.subr.bf16.mxu0 %v1333
    %1492 = vmatpush1.bf16.msra.mxu0 %v1332
    %1493 = vmatprep.subr.bf16.mxu0 %v1337
    %1494 = vmatpush1.bf16.msra.mxu0 %v1336
    %1495 = vmatprep.subr.bf16.mxu0 %v1341
    %1496 = vmatpush1.bf16.msra.mxu0 %v1340
    %1497 = vmatprep.subr.bf16.mxu0 %v1345
    %1498 = vmatpush1.bf16.msra.mxu0 %v1344
    %1499 = vmatprep.subr.bf16.mxu0 %v1349
    %1500 = vmatpush1.bf16.msra.mxu0 %v1348
    %1501 = vmatprep.subr.bf16.mxu0 %v1353
    %1502 = vmatpush1.bf16.msra.mxu0 %v1352
    %1503 = vmatprep.subr.bf16.mxu0 %v1357
    %1504 = vmatpush1.bf16.msra.mxu0 %v1356
    %1505 = vmatprep.mubr.bf16.mxu0 %v1078
    %1506 = vmatmul.mubr.bf16.gmra.mrb[0].mxu0 %v1077
    %v1507 = vpop.f32.mrb[0].mxu0
    %v1508 = vadd.f32 %v1093, %v1507
    %v1509 = vpop.f32.mrb[0].mxu0
    %v1510 = vadd.f32 %v1097, %v1509
    %v1511 = vpop.f32.mrb[0].mxu0
    %v1512 = vadd.f32 %v1093, %v1511
    %v1513 = vpop.f32.mrb[0].mxu0
    %v1514 = vadd.f32 %v1097, %v1513
    %1515 = vmatprep.mubr.bf16.mxu0 %v1080
    %1516 = vmatmul.mubr.bf16.gmra.mrb[0].mxu0 %v1079
    %v1517 = vpop.f32.mrb[0].mxu0
    %v1518 = vadd.f32 %v1093, %v1517
    %v1519 = vpop.f32.mrb[0].mxu0
    %v1520 = vadd.f32 %v1097, %v1519
    %v1521 = vpop.f32.mrb[0].mxu0
    %v1522 = vpop.f32.mrb[0].mxu0
    %1523 = vdwg.mxu0
    %1524 = vmatprep.subr.mxu0 %v1459
    %1525 = vmatpush1.xpose.msra.mxu0 %v1457
    %1526 = vmatprep.subr.mxu0 %v1463
    %1527 = vmatpush1.xpose.msra.mxu0 %v1461
    %1528 = vmatprep.subr.mxu0 %v1469
    %1529 = vmatpush1.xpose.msra.mxu0 %v1467
    %1530 = vmatprep.subr.mxu0 0.0
    %1531 = vmatpush1.xpose.msra.mxu0 0.0
    %1532 = vmatprep.subr.mxu0 0.0
    %1533 = vmatpush1.xpose.msra.mxu0 0.0
    %1534 = vmatprep.subr.mxu0 0.0
    %1535 = vmatpush1.xpose.msra.mxu0 0.0
    %1536 = vmatprep.subr.mxu0 0.0
    %1537 = vmatpush1.xpose.msra.mxu0 0.0
    %1538 = vmatprep.subr.mxu0 0.0
    %1539 = vmatpush1.xpose.msra.mxu0 0.0
    %1540 = vmatprep.subr.mxu0 0.0
    %1541 = vmatpush1.xpose.msra.mxu0 0.0
    %1542 = vmatprep.subr.mxu0 0.0
    %1543 = vmatpush1.xpose.msra.mxu0 0.0
    %1544 = vmatprep.subr.mxu0 0.0
    %1545 = vmatpush1.xpose.msra.mxu0 0.0
    %1546 = vmatprep.subr.mxu0 0.0
    %1547 = vmatpush1.xpose.msra.mxu0 0.0
    %1548 = vmatprep.subr.mxu0 0.0
    %1549 = vmatpush1.xpose.msra.mxu0 0.0
    %1550 = vmatprep.subr.mxu0 0.0
    %1551 = vmatpush1.xpose.msra.mxu0 0.0
    %1552 = vmatprep.subr.mxu0 0.0
    %1553 = vmatpush1.xpose.msra.mxu0 0.0
    %1554 = vmatprep.subr.mxu0 0.0
    %1555 = vmatpush1.xpose.msra.mxu0 0.0
    %1556 = vmatprep.subr.mxu0 0.0
    %1557 = vmatpush1.xpose.msra.mxu0 0.0
    %1558 = vmatprep.subr.mxu0 0.0
    %1559 = vmatpush1.xpose.msra.mxu0 0.0
    %1560 = vmatprep.subr.mxu0 0.0
    %1561 = vmatpush1.xpose.msra.mxu0 0.0
    %1562 = vmatprep.subr.mxu0 0.0
    %1563 = vmatpush1.xpose.msra.mxu0 0.0
    %1564 = vmatprep.subr.mxu0 0.0
    %1565 = vmatpush1.xpose.msra.mxu0 0.0
    %1566 = vmatprep.subr.mxu0 0.0
    %1567 = vmatpush1.xpose.msra.mxu0 0.0
    %1568 = vmatprep.subr.mxu0 0.0
    %1569 = vmatpush1.xpose.msra.mxu0 0.0
    %1570 = vmatprep.subr.mxu0 0.0
    %1571 = vmatpush1.xpose.msra.mxu0 0.0
    %1572 = vmatprep.subr.mxu0 0.0
    %1573 = vmatpush1.xpose.msra.mxu0 0.0
    %1574 = vmatprep.subr.mxu0 0.0
    %1575 = vmatpush1.xpose.msra.mxu0 0.0
    %1576 = vmatprep.subr.mxu0 0.0
    %1577 = vmatpush1.xpose.msra.mxu0 0.0
    %1578 = vmatprep.subr.mxu0 0.0
    %1579 = vmatpush1.xpose.msra.mxu0 0.0
    %1580 = vmatprep.subr.mxu0 0.0
    %1581 = vmatpush1.xpose.msra.mxu0 0.0
    %1582 = vmatprep.subr.mxu0 0.0
    %1583 = vmatpush1.xpose.msra.mxu0 0.0
    %1584 = vmatprep.subr.mxu0 0.0
    %1585 = vmatpush1.xpose.msra.mxu0 0.0
    %1586 = vmatprep.subr.mxu0 0.0
    %1587 = vmatpush1.xpose.msra.mxu0 0.0
    %1588 = vmatprep.mubr.f32.mxu0 %v1008
    %1589 = vmatmul.mubr.f32.gmra.mrb[0].mxu0 %v1006
    %v1590 = vpop.f32.mrb[0].mxu0
    %v1591 = vadd.f32 0.0, %v1590
    %v1592 = vpop.f32.mrb[0].mxu0
    %1593 = vdwg.mxu0
    %v1594 = vmul.f32 %v1591, 0.0625
    %v1595 = vlaneseq
    %v1596 = vshrl.u32 %v1595, 7
    %v1597 = vlaneseq
    %v1598 = vand.u32 %v1597, 127
    %v1599 = vmul.u32 %v1596, 10
    %vm1600 = vcmp.ge.s32.totalorder %v1598, %v1599
    %v1601 = vadd.s32 %v1596, 1
    %v1602 = vmul.u32 %v1601, 10
    %vm1603 = vcmp.lt.s32.totalorder %v1598, %v1602
    %vm1604 = vmand %vm1600, %vm1603
    %v1605 = vsel %vm1604, %v1594, -1e+30
    %vm1606 = vcmask 156672
    %v1607 = vsel %vm1606, %v1605, -inf
    %1608 = vmax.xlane.f32.xlu0 %v1607
    %v1609 = vpop.xlane.xlu0 %1608
    %v1610 = vsub.f32 %v1605, %v1609
    %v1611 = vmul.f32 %v1610, 1.442695
    %v1612 = vpow.pop %v1611
    %v1613 = vsel %vm1606, %v1612, 0.0
    %1614 = vadd.xlane.f32.xlu0 %v1613
    %v1615 = vpop.xlane.xlu0 %1614
    %v1616 = vrcp.pop %v1615
    %v1617 = vmul.f32 %v1612, %v1616
    %v1618 = vld [vmem:[%s5] sm:$0xff]
    %v1619 = vld [vmem:[%s5 + $0x8] sm:$0xff]
    %v1620 = vld [vmem:[%s5 + $0x10] sm:$0xf]
    %vm1621 = vcmask 162816
    %v1623 = vsel %vm1621, %v1617, 0
    %vm1625 = vcmask 1043456
    %v1627 = vsel %vm1625, %v1620, 0
    %1629 = vmatprep.subr.mxu0 0.0
    %1630 = vmatpush1.msra.mxu0 %v1618
    %1631 = vmatprep.subr.mxu0 0.0
    %1632 = vmatpush1.msra.mxu0 %v1619
    %1633 = vmatprep.subr.mxu0 0.0
    %1634 = vmatpush1.msra.mxu0 %v1627
    %1635 = vmatprep.subr.mxu0 0.0
    %1636 = vmatpush1.msra.mxu0 0.0
    %1637 = vmatprep.subr.mxu0 0.0
    %1638 = vmatpush1.msra.mxu0 0.0
    %1639 = vmatprep.subr.mxu0 0.0
    %1640 = vmatpush1.msra.mxu0 0.0
    %1641 = vmatprep.subr.mxu0 0.0
    %1642 = vmatpush1.msra.mxu0 0.0
    %1643 = vmatprep.subr.mxu0 0.0
    %1644 = vmatpush1.msra.mxu0 0.0
    %1645 = vmatprep.subr.mxu0 0.0
    %1646 = vmatpush1.msra.mxu0 0.0
    %1647 = vmatprep.subr.mxu0 0.0
    %1648 = vmatpush1.msra.mxu0 0.0
    %1649 = vmatprep.subr.mxu0 0.0
    %1650 = vmatpush1.msra.mxu0 0.0
    %1651 = vmatprep.subr.mxu0 0.0
    %1652 = vmatpush1.msra.mxu0 0.0
    %1653 = vmatprep.subr.mxu0 0.0
    %1654 = vmatpush1.msra.mxu0 0.0
    %1655 = vmatprep.subr.mxu0 0.0
    %1656 = vmatpush1.msra.mxu0 0.0
    %1657 = vmatprep.subr.mxu0 0.0
    %1658 = vmatpush1.msra.mxu0 0.0
    %1659 = vmatprep.subr.mxu0 0.0
    %1660 = vmatpush1.msra.mxu0 0.0
    %1661 = vmatprep.subr.mxu0 0.0
    %1662 = vmatpush1.msra.mxu0 0.0
    %1663 = vmatprep.subr.mxu0 0.0
    %1664 = vmatpush1.msra.mxu0 0.0
    %1665 = vmatprep.subr.mxu0 0.0
    %1666 = vmatpush1.msra.mxu0 0.0
    %1667 = vmatprep.subr.mxu0 0.0
    %1668 = vmatpush1.msra.mxu0 0.0
    %1669 = vmatprep.subr.mxu0 0.0
    %1670 = vmatpush1.msra.mxu0 0.0
    %1671 = vmatprep.subr.mxu0 0.0
    %1672 = vmatpush1.msra.mxu0 0.0
    %1673 = vmatprep.subr.mxu0 0.0
    %1674 = vmatpush1.msra.mxu0 0.0
    %1675 = vmatprep.subr.mxu0 0.0
    %1676 = vmatpush1.msra.mxu0 0.0
    %1677 = vmatprep.subr.mxu0 0.0
    %1678 = vmatpush1.msra.mxu0 0.0
    %1679 = vmatprep.subr.mxu0 0.0
    %1680 = vmatpush1.msra.mxu0 0.0
    %1681 = vmatprep.subr.mxu0 0.0
    %1682 = vmatpush1.msra.mxu0 0.0
    %1683 = vmatprep.subr.mxu0 0.0
    %1684 = vmatpush1.msra.mxu0 0.0
    %1685 = vmatprep.subr.mxu0 0.0
    %1686 = vmatpush1.msra.mxu0 0.0
    %1687 = vmatprep.subr.mxu0 0.0
    %1688 = vmatpush1.msra.mxu0 0.0
    %1689 = vmatprep.subr.mxu0 0.0
    %1690 = vmatpush1.msra.mxu0 0.0
    %1691 = vmatprep.subr.mxu0 0.0
    %1692 = vmatpush1.msra.mxu0 0.0
    %1693 = vmatprep.mubr.f32.mxu0 0.0
    %1694 = vmatmul.mubr.f32.gmra.mrb[0].mxu0 %v1623
    %v1695 = vpop.f32.mrb[0].mxu0
    %v1696 = vadd.f32 0.0, %v1695
    %v1697 = vpop.f32.mrb[0].mxu0
    %1698 = vdwg.mxu0
    %vm1699 = vcmask 74752
    %1700 = vst.msk [vmem:[#allocation4] sm:$0x3] %vm1699, %v1696
    %v1702 = vsel %vm1625, %v1518, 0
    %v1705 = vsel %vm1625, %v1520, 0
    %1707 = vmatprep.subr.mxu0 %v1510
    %1708 = vmatpush1.msra.mxu0 %v1508
    %1709 = vmatprep.subr.mxu0 %v1514
    %1710 = vmatpush1.msra.mxu0 %v1512
    %1711 = vmatprep.subr.mxu0 %v1705
    %1712 = vmatpush1.msra.mxu0 %v1702
    %1713 = vmatprep.subr.mxu0 0.0
    %1714 = vmatpush1.msra.mxu0 0.0
    %1715 = vmatprep.subr.mxu0 0.0
    %1716 = vmatpush1.msra.mxu0 0.0
    %1717 = vmatprep.subr.mxu0 0.0
    %1718 = vmatpush1.msra.mxu0 0.0
    %1719 = vmatprep.subr.mxu0 0.0
    %1720 = vmatpush1.msra.mxu0 0.0
    %1721 = vmatprep.subr.mxu0 0.0
    %1722 = vmatpush1.msra.mxu0 0.0
    %1723 = vmatprep.subr.mxu0 0.0
    %1724 = vmatpush1.msra.mxu0 0.0
    %1725 = vmatprep.subr.mxu0 0.0
    %1726 = vmatpush1.msra.mxu0 0.0
    %1727 = vmatprep.subr.mxu0 0.0
    %1728 = vmatpush1.msra.mxu0 0.0
    %1729 = vmatprep.subr.mxu0 0.0
    %1730 = vmatpush1.msra.mxu0 0.0
    %1731 = vmatprep.subr.mxu0 0.0
    %1732 = vmatpush1.msra.mxu0 0.0
    %1733 = vmatprep.subr.mxu0 0.0
    %1734 = vmatpush1.msra.mxu0 0.0
    %1735 = vmatprep.subr.mxu0 0.0
    %1736 = vmatpush1.msra.mxu0 0.0
    %1737 = vmatprep.subr.mxu0 0.0
    %1738 = vmatpush1.msra.mxu0 0.0
    %1739 = vmatprep.subr.mxu0 0.0
    %1740 = vmatpush1.msra.mxu0 0.0
    %1741 = vmatprep.subr.mxu0 0.0
    %1742 = vmatpush1.msra.mxu0 0.0
    %1743 = vmatprep.subr.mxu0 0.0
    %1744 = vmatpush1.msra.mxu0 0.0
    %1745 = vmatprep.subr.mxu0 0.0
    %1746 = vmatpush1.msra.mxu0 0.0
    %1747 = vmatprep.subr.mxu0 0.0
    %1748 = vmatpush1.msra.mxu0 0.0
    %1749 = vmatprep.subr.mxu0 0.0
    %1750 = vmatpush1.msra.mxu0 0.0
    %1751 = vmatprep.subr.mxu0 0.0
    %1752 = vmatpush1.msra.mxu0 0.0
    %1753 = vmatprep.subr.mxu0 0.0
    %1754 = vmatpush1.msra.mxu0 0.0
    %1755 = vmatprep.subr.mxu0 0.0
    %1756 = vmatpush1.msra.mxu0 0.0
    %1757 = vmatprep.subr.mxu0 0.0
    %1758 = vmatpush1.msra.mxu0 0.0
    %1759 = vmatprep.subr.mxu0 0.0
    %1760 = vmatpush1.msra.mxu0 0.0
    %1761 = vmatprep.subr.mxu0 0.0
    %1762 = vmatpush1.msra.mxu0 0.0
    %1763 = vmatprep.subr.mxu0 0.0
    %1764 = vmatpush1.msra.mxu0 0.0
    %1765 = vmatprep.subr.mxu0 0.0
    %1766 = vmatpush1.msra.mxu0 0.0
    %1767 = vmatprep.subr.mxu0 0.0
    %1768 = vmatpush1.msra.mxu0 0.0
    %1769 = vmatprep.subr.mxu0 0.0
    %1770 = vmatpush1.msra.mxu0 0.0
    %1771 = vmatprep.mubr.f32.mxu0 0.0
    %1772 = vmatmul.mubr.f32.gmra.mrb[0].mxu0 %v1623
    %v1773 = vpop.f32.mrb[0].mxu0
    %v1774 = vadd.f32 0.0, %v1773
    %v1775 = vpop.f32.mrb[0].mxu0
    %v1776 = vadd.f32 0.0, %v1775
    %1777 = vdwg.mxu0
    %v1778 = vld [vmem:[%s21] sm:$0xff]
    %v1779 = vld [vmem:[%s21 + $0x8] sm:$0xff]
    %v1780 = vld [vmem:[%s21 + $0x10] sm:$0xff]
    %v1781 = vld [vmem:[%s21 + $0x18] sm:$0xff]
    %v1782 = vld [vmem:[%s21 + $0x20] sm:$0xff]
    %v1783 = vld [vmem:[%s21 + $0x28] sm:$0xff]
    %v1784 = vld [vmem:[%s21 + $0x30] sm:$0xff]
    %v1785 = vld [vmem:[%s21 + $0x38] sm:$0xff]
    %v1786 = vld [vmem:[%s21 + $0x40] sm:$0xff]
    %v1787 = vld [vmem:[%s21 + $0x48] sm:$0xff]
    %v1788 = vld [vmem:[%s21 + $0x50] sm:$0xff]
    %v1789 = vld [vmem:[%s21 + $0x58] sm:$0xff]
    %v1790 = vld [vmem:[%s21 + $0x60] sm:$0xff]
    %v1791 = vld [vmem:[%s21 + $0x68] sm:$0xff]
    %v1792 = vld [vmem:[%s21 + $0x70] sm:$0xff]
    %v1793 = vld [vmem:[%s21 + $0x78] sm:$0xff]
    %v1794 = vld [vmem:[%s21 + $0x80] sm:$0xff]
    %v1795 = vld [vmem:[%s21 + $0x88] sm:$0xff]
    %v1796 = vld [vmem:[%s21 + $0x90] sm:$0xff]
    %v1797 = vld [vmem:[%s21 + $0x98] sm:$0xff]
    %v1798 = vld [vmem:[%s21 + $0xa0] sm:$0xff]
    %v1799 = vld [vmem:[%s21 + $0xa8] sm:$0xff]
    %v1800 = vld [vmem:[%s21 + $0xb0] sm:$0xff]
    %v1801 = vld [vmem:[%s21 + $0xb8] sm:$0xff]
    %v1802 = vld [vmem:[%s21 + $0xc0] sm:$0xff]
    %v1803 = vld [vmem:[%s21 + $0xc8] sm:$0xff]
    %v1804 = vld [vmem:[%s21 + $0xd0] sm:$0xff]
    %v1805 = vld [vmem:[%s21 + $0xd8] sm:$0xff]
    %v1806 = vld [vmem:[%s21 + $0xe0] sm:$0xff]
    %v1807 = vld [vmem:[%s21 + $0xe8] sm:$0xff]
    %v1808 = vld [vmem:[%s21 + $0xf0] sm:$0xff]
    %v1809 = vld [vmem:[%s21 + $0xf8] sm:$0xff]
    %v1810 = vld [vmem:[%s19] sm:$0x3]
    %v1811 = vpack.c.bf16 %v1774, %v1774
    %v1812 = vpack.c.bf16 %v1776, %v1776
    %v1814 = vlaneseq
    %v1815 = vshrl.u32 %v1814, 7
    %v1816 = vsub.s32 0, %v1815
    %v1817 = vrot.slane %v1810, %v1816
    %v1818 = vlaneseq
    %v1819 = vshrl.u32 %v1818, 7
    %v1820 = vsub.s32 1, %v1819
    %v1821 = vrot.slane %v1810, %v1820
    %v1856 = vunpack.c.l.b16 %v1778
    %v1857 = vunpack.c.h.b16 %v1778
    %v1858 = vunpack.c.l.b16 %v1779
    %v1859 = vunpack.c.h.b16 %v1779
    %v1860 = vunpack.c.l.b16 %v1780
    %v1861 = vunpack.c.h.b16 %v1780
    %v1862 = vunpack.c.l.b16 %v1781
    %v1863 = vunpack.c.h.b16 %v1781
    %v1864 = vunpack.c.l.b16 %v1782
    %v1865 = vunpack.c.h.b16 %v1782
    %v1866 = vunpack.c.l.b16 %v1783
    %v1867 = vunpack.c.h.b16 %v1783
    %v1868 = vunpack.c.l.b16 %v1784
    %v1869 = vunpack.c.h.b16 %v1784
    %v1870 = vunpack.c.l.b16 %v1785
    %v1871 = vunpack.c.h.b16 %v1785
    %v1872 = vunpack.c.l.b16 %v1786
    %v1873 = vunpack.c.h.b16 %v1786
    %v1874 = vunpack.c.l.b16 %v1787
    %v1875 = vunpack.c.h.b16 %v1787
    %v1876 = vunpack.c.l.b16 %v1788
    %v1877 = vunpack.c.h.b16 %v1788
    %v1878 = vunpack.c.l.b16 %v1789
    %v1879 = vunpack.c.h.b16 %v1789
    %v1880 = vunpack.c.l.b16 %v1790
    %v1881 = vunpack.c.h.b16 %v1790
    %v1882 = vunpack.c.l.b16 %v1791
    %v1883 = vunpack.c.h.b16 %v1791
    %v1884 = vunpack.c.l.b16 %v1792
    %v1885 = vunpack.c.h.b16 %v1792
    %v1886 = vunpack.c.l.b16 %v1793
    %v1887 = vunpack.c.h.b16 %v1793
    %v1888 = vunpack.c.l.b16 %v1794
    %v1889 = vunpack.c.h.b16 %v1794
    %v1890 = vunpack.c.l.b16 %v1795
    %v1891 = vunpack.c.h.b16 %v1795
    %v1892 = vunpack.c.l.b16 %v1796
    %v1893 = vunpack.c.h.b16 %v1796
    %v1894 = vunpack.c.l.b16 %v1797
    %v1895 = vunpack.c.h.b16 %v1797
    %v1896 = vunpack.c.l.b16 %v1798
    %v1897 = vunpack.c.h.b16 %v1798
    %v1898 = vunpack.c.l.b16 %v1799
    %v1899 = vunpack.c.h.b16 %v1799
    %v1900 = vunpack.c.l.b16 %v1800
    %v1901 = vunpack.c.h.b16 %v1800
    %v1902 = vunpack.c.l.b16 %v1801
    %v1903 = vunpack.c.h.b16 %v1801
    %v1904 = vunpack.c.l.b16 %v1802
    %v1905 = vunpack.c.h.b16 %v1802
    %v1906 = vunpack.c.l.b16 %v1803
    %v1907 = vunpack.c.h.b16 %v1803
    %v1908 = vunpack.c.l.b16 %v1804
    %v1909 = vunpack.c.h.b16 %v1804
    %v1910 = vunpack.c.l.b16 %v1805
    %v1911 = vunpack.c.h.b16 %v1805
    %v1912 = vunpack.c.l.b16 %v1806
    %v1913 = vunpack.c.h.b16 %v1806
    %v1914 = vunpack.c.l.b16 %v1807
    %v1915 = vunpack.c.h.b16 %v1807
    %v1916 = vunpack.c.l.b16 %v1808
    %v1917 = vunpack.c.h.b16 %v1808
    %v1918 = vunpack.c.l.b16 %v1809
    %v1919 = vunpack.c.h.b16 %v1809
    %v1920 = vpack.c.b16 %v1858, %v1856
    %v1921 = vpack.c.b16 %v1859, %v1857
    %v1922 = vpack.c.b16 %v1862, %v1860
    %v1923 = vpack.c.b16 %v1863, %v1861
    %v1924 = vpack.c.b16 %v1866, %v1864
    %v1925 = vpack.c.b16 %v1867, %v1865
    %v1926 = vpack.c.b16 %v1870, %v1868
    %v1927 = vpack.c.b16 %v1871, %v1869
    %v1928 = vpack.c.b16 %v1874, %v1872
    %v1929 = vpack.c.b16 %v1875, %v1873
    %v1930 = vpack.c.b16 %v1878, %v1876
    %v1931 = vpack.c.b16 %v1879, %v1877
    %v1932 = vpack.c.b16 %v1882, %v1880
    %v1933 = vpack.c.b16 %v1883, %v1881
    %v1934 = vpack.c.b16 %v1886, %v1884
    %v1935 = vpack.c.b16 %v1887, %v1885
    %v1936 = vpack.c.b16 %v1890, %v1888
    %v1937 = vpack.c.b16 %v1891, %v1889
    %v1938 = vpack.c.b16 %v1894, %v1892
    %v1939 = vpack.c.b16 %v1895, %v1893
    %v1940 = vpack.c.b16 %v1898, %v1896
    %v1941 = vpack.c.b16 %v1899, %v1897
    %v1942 = vpack.c.b16 %v1902, %v1900
    %v1943 = vpack.c.b16 %v1903, %v1901
    %v1944 = vpack.c.b16 %v1906, %v1904
    %v1945 = vpack.c.b16 %v1907, %v1905
    %v1946 = vpack.c.b16 %v1910, %v1908
    %v1947 = vpack.c.b16 %v1911, %v1909
    %v1948 = vpack.c.b16 %v1914, %v1912
    %v1949 = vpack.c.b16 %v1915, %v1913
    %v1950 = vpack.c.b16 %v1918, %v1916
    %v1951 = vpack.c.b16 %v1919, %v1917
    %1984 = vmatprep.subr.bf16.mxu0 %v1921
    %1985 = vmatpush1.bf16.msra.mxu0 %v1920
    %1986 = vmatprep.subr.bf16.mxu0 %v1923
    %1987 = vmatpush1.bf16.msra.mxu0 %v1922
    %1988 = vmatprep.subr.bf16.mxu0 %v1925
    %1989 = vmatpush1.bf16.msra.mxu0 %v1924
    %1990 = vmatprep.subr.bf16.mxu0 %v1927
    %1991 = vmatpush1.bf16.msra.mxu0 %v1926
    %1992 = vmatprep.subr.bf16.mxu0 %v1929
    %1993 = vmatpush1.bf16.msra.mxu0 %v1928
    %1994 = vmatprep.subr.bf16.mxu0 %v1931
    %1995 = vmatpush1.bf16.msra.mxu0 %v1930
    %1996 = vmatprep.subr.bf16.mxu0 %v1933
    %1997 = vmatpush1.bf16.msra.mxu0 %v1932
    %1998 = vmatprep.subr.bf16.mxu0 %v1935
    %1999 = vmatpush1.bf16.msra.mxu0 %v1934
    %2000 = vmatprep.subr.bf16.mxu0 %v1937
    %2001 = vmatpush1.bf16.msra.mxu0 %v1936
    %2002 = vmatprep.subr.bf16.mxu0 %v1939
    %2003 = vmatpush1.bf16.msra.mxu0 %v1938
    %2004 = vmatprep.subr.bf16.mxu0 %v1941
    %2005 = vmatpush1.bf16.msra.mxu0 %v1940
    %2006 = vmatprep.subr.bf16.mxu0 %v1943
    %2007 = vmatpush1.bf16.msra.mxu0 %v1942
    %2008 = vmatprep.subr.bf16.mxu0 %v1945
    %2009 = vmatpush1.bf16.msra.mxu0 %v1944
    %2010 = vmatprep.subr.bf16.mxu0 %v1947
    %2011 = vmatpush1.bf16.msra.mxu0 %v1946
    %2012 = vmatprep.subr.bf16.mxu0 %v1949
    %2013 = vmatpush1.bf16.msra.mxu0 %v1948
    %2014 = vmatprep.subr.bf16.mxu0 %v1951
    %2015 = vmatpush1.bf16.msra.mxu0 %v1950
    %2016 = vmatprep.mubr.bf16.mxu0 %v1812
    %2017 = vmatmul.mubr.bf16.gmra.mrb[0].mxu0 %v1811
    %v2018 = vpop.f32.mrb[0].mxu0
    %v2019 = vadd.f32 %v1817, %v2018
    %v2020 = vpop.f32.mrb[0].mxu0
    %v2021 = vadd.f32 %v1821, %v2020
    %v2022 = vpop.f32.mrb[0].mxu0
    %v2023 = vpop.f32.mrb[0].mxu0
    %2024 = vdwg.mxu0
    %v2025 = vld [vmem:[%s49] sm:$0xff]
    %v2026 = vld [vmem:[%s49 + $0x8] sm:$0xff]
    %v2027 = vld [vmem:[%s49 + $0x10] sm:$0xff]
    %v2028 = vld [vmem:[%s49 + $0x18] sm:$0xff]
    %v2029 = vld [vmem:[%s49 + $0x20] sm:$0xff]
    %v2030 = vld [vmem:[%s49 + $0x28] sm:$0xff]
    %v2031 = vld [vmem:[%s49 + $0x30] sm:$0xff]
    %v2032 = vld [vmem:[%s49 + $0x38] sm:$0xff]
    %v2033 = vld [vmem:[%s49 + $0x40] sm:$0xff]
    %v2034 = vld [vmem:[%s49 + $0x48] sm:$0xff]
    %v2035 = vld [vmem:[%s49 + $0x50] sm:$0xff]
    %v2036 = vld [vmem:[%s49 + $0x58] sm:$0xff]
    %v2037 = vld [vmem:[%s49 + $0x60] sm:$0xff]
    %v2038 = vld [vmem:[%s49 + $0x68] sm:$0xff]
    %v2039 = vld [vmem:[%s49 + $0x70] sm:$0xff]
    %v2040 = vld [vmem:[%s49 + $0x78] sm:$0xff]
    %v2041 = vld [vmem:[%s49 + $0x80] sm:$0xff]
    %v2042 = vld [vmem:[%s49 + $0x88] sm:$0xff]
    %v2043 = vld [vmem:[%s49 + $0x90] sm:$0xff]
    %v2044 = vld [vmem:[%s49 + $0x98] sm:$0xff]
    %v2045 = vld [vmem:[%s49 + $0xa0] sm:$0xff]
    %v2046 = vld [vmem:[%s49 + $0xa8] sm:$0xff]
    %v2047 = vld [vmem:[%s49 + $0xb0] sm:$0xff]
    %v2048 = vld [vmem:[%s49 + $0xb8] sm:$0xff]
    %v2049 = vld [vmem:[%s49 + $0xc0] sm:$0xff]
    %v2050 = vld [vmem:[%s49 + $0xc8] sm:$0xff]
    %v2051 = vld [vmem:[%s49 + $0xd0] sm:$0xff]
    %v2052 = vld [vmem:[%s49 + $0xd8] sm:$0xff]
    %v2053 = vld [vmem:[%s49 + $0xe0] sm:$0xff]
    %v2054 = vld [vmem:[%s49 + $0xe8] sm:$0xff]
    %v2055 = vld [vmem:[%s49 + $0xf0] sm:$0xff]
    %v2056 = vld [vmem:[%s49 + $0xf8] sm:$0xff]
    %v2057 = vld [vmem:[%s49 + $0x100] sm:$0xff]
    %v2058 = vld [vmem:[%s49 + $0x108] sm:$0xff]
    %v2059 = vld [vmem:[%s49 + $0x110] sm:$0xff]
    %v2060 = vld [vmem:[%s49 + $0x118] sm:$0xff]
    %v2061 = vld [vmem:[%s49 + $0x120] sm:$0xff]
    %v2062 = vld [vmem:[%s49 + $0x128] sm:$0xff]
    %v2063 = vld [vmem:[%s49 + $0x130] sm:$0xff]
    %v2064 = vld [vmem:[%s49 + $0x138] sm:$0xff]
    %v2065 = vld [vmem:[%s49 + $0x140] sm:$0xff]
    %v2066 = vld [vmem:[%s49 + $0x148] sm:$0xff]
    %v2067 = vld [vmem:[%s49 + $0x150] sm:$0xff]
    %v2068 = vld [vmem:[%s49 + $0x158] sm:$0xff]
    %v2069 = vld [vmem:[%s49 + $0x160] sm:$0xff]
    %v2070 = vld [vmem:[%s49 + $0x168] sm:$0xff]
    %v2071 = vld [vmem:[%s49 + $0x170] sm:$0xff]
    %v2072 = vld [vmem:[%s49 + $0x178] sm:$0xff]
    %v2073 = vld [vmem:[%s49 + $0x180] sm:$0xff]
    %v2074 = vld [vmem:[%s49 + $0x188] sm:$0xff]
    %v2075 = vld [vmem:[%s49 + $0x190] sm:$0xff]
    %v2076 = vld [vmem:[%s49 + $0x198] sm:$0xff]
    %v2077 = vld [vmem:[%s49 + $0x1a0] sm:$0xff]
    %v2078 = vld [vmem:[%s49 + $0x1a8] sm:$0xff]
    %v2079 = vld [vmem:[%s49 + $0x1b0] sm:$0xff]
    %v2080 = vld [vmem:[%s49 + $0x1b8] sm:$0xff]
    %v2081 = vld [vmem:[%s49 + $0x1c0] sm:$0xff]
    %v2082 = vld [vmem:[%s49 + $0x1c8] sm:$0xff]
    %v2083 = vld [vmem:[%s49 + $0x1d0] sm:$0xff]
    %v2084 = vld [vmem:[%s49 + $0x1d8] sm:$0xff]
    %v2085 = vld [vmem:[%s49 + $0x1e0] sm:$0xff]
    %v2086 = vld [vmem:[%s49 + $0x1e8] sm:$0xff]
    %v2087 = vld [vmem:[%s49 + $0x1f0] sm:$0xff]
    %v2088 = vld [vmem:[%s49 + $0x1f8] sm:$0xff]
    %v2089 = vld [vmem:[%s49 + $0x200] sm:$0xff]
    %v2090 = vld [vmem:[%s49 + $0x208] sm:$0xff]
    %v2091 = vld [vmem:[%s49 + $0x210] sm:$0xff]
    %v2092 = vld [vmem:[%s49 + $0x218] sm:$0xff]
    %v2093 = vld [vmem:[%s49 + $0x220] sm:$0xff]
    %v2094 = vld [vmem:[%s49 + $0x228] sm:$0xff]
    %v2095 = vld [vmem:[%s49 + $0x230] sm:$0xff]
    %v2096 = vld [vmem:[%s49 + $0x238] sm:$0xff]
    %v2097 = vld [vmem:[%s49 + $0x240] sm:$0xff]
    %v2098 = vld [vmem:[%s49 + $0x248] sm:$0xff]
    %v2099 = vld [vmem:[%s49 + $0x250] sm:$0xff]
    %v2100 = vld [vmem:[%s49 + $0x258] sm:$0xff]
    %v2101 = vld [vmem:[%s49 + $0x260] sm:$0xff]
    %v2102 = vld [vmem:[%s49 + $0x268] sm:$0xff]
    %v2103 = vld [vmem:[%s49 + $0x270] sm:$0xff]
    %v2104 = vld [vmem:[%s49 + $0x278] sm:$0xff]
    %v2105 = vld [vmem:[%s49 + $0x280] sm:$0xff]
    %v2106 = vld [vmem:[%s49 + $0x288] sm:$0xff]
    %v2107 = vld [vmem:[%s49 + $0x290] sm:$0xff]
    %v2108 = vld [vmem:[%s49 + $0x298] sm:$0xff]
    %v2109 = vld [vmem:[%s49 + $0x2a0] sm:$0xff]
    %v2110 = vld [vmem:[%s49 + $0x2a8] sm:$0xff]
    %v2111 = vld [vmem:[%s49 + $0x2b0] sm:$0xff]
    %v2112 = vld [vmem:[%s49 + $0x2b8] sm:$0xff]
    %v2113 = vld [vmem:[%s49 + $0x2c0] sm:$0xff]
    %v2114 = vld [vmem:[%s49 + $0x2c8] sm:$0xff]
    %v2115 = vld [vmem:[%s49 + $0x2d0] sm:$0xff]
    %v2116 = vld [vmem:[%s49 + $0x2d8] sm:$0xff]
    %v2117 = vld [vmem:[%s49 + $0x2e0] sm:$0xff]
    %v2118 = vld [vmem:[%s49 + $0x2e8] sm:$0xff]
    %v2119 = vld [vmem:[%s49 + $0x2f0] sm:$0xff]
    %v2120 = vld [vmem:[%s49 + $0x2f8] sm:$0xff]
    %v2121 = vld [vmem:[%s47] sm:$0x3f]
    %v2122 = vpack.c.bf16 %v2019, %v2019
    %v2123 = vpack.c.bf16 %v2021, %v2021
    %v2125 = vlaneseq
    %v2126 = vshrl.u32 %v2125, 7
    %v2127 = vsub.s32 0, %v2126
    %v2128 = vrot.slane %v2121, %v2127
    %v2129 = vlaneseq
    %v2130 = vshrl.u32 %v2129, 7
    %v2131 = vsub.s32 1, %v2130
    %v2132 = vrot.slane %v2121, %v2131
    %v2133 = vlaneseq
    %v2134 = vshrl.u32 %v2133, 7
    %v2135 = vsub.s32 2, %v2134
    %v2136 = vrot.slane %v2121, %v2135
    %v2137 = vlaneseq
    %v2138 = vshrl.u32 %v2137, 7
    %v2139 = vsub.s32 3, %v2138
    %v2140 = vrot.slane %v2121, %v2139
    %v2141 = vlaneseq
    %v2142 = vshrl.u32 %v2141, 7
    %v2143 = vsub.s32 4, %v2142
    %v2144 = vrot.slane %v2121, %v2143
    %v2145 = vlaneseq
    %v2146 = vshrl.u32 %v2145, 7
    %v2147 = vsub.s32 5, %v2146
    %v2148 = vrot.slane %v2121, %v2147
    %v2251 = vunpack.c.l.b16 %v2025
    %v2252 = vunpack.c.h.b16 %v2025
    %v2253 = vunpack.c.l.b16 %v2026
    %v2254 = vunpack.c.h.b16 %v2026
    %v2255 = vunpack.c.l.b16 %v2027
    %v2256 = vunpack.c.h.b16 %v2027
    %v2257 = vunpack.c.l.b16 %v2028
    %v2258 = vunpack.c.h.b16 %v2028
    %v2259 = vunpack.c.l.b16 %v2029
    %v2260 = vunpack.c.h.b16 %v2029
    %v2261 = vunpack.c.l.b16 %v2030
    %v2262 = vunpack.c.h.b16 %v2030
    %v2263 = vunpack.c.l.b16 %v2031
    %v2264 = vunpack.c.h.b16 %v2031
    %v2265 = vunpack.c.l.b16 %v2032
    %v2266 = vunpack.c.h.b16 %v2032
    %v2267 = vunpack.c.l.b16 %v2033
    %v2268 = vunpack.c.h.b16 %v2033
    %v2269 = vunpack.c.l.b16 %v2034
    %v2270 = vunpack.c.h.b16 %v2034
    %v2271 = vunpack.c.l.b16 %v2035
    %v2272 = vunpack.c.h.b16 %v2035
    %v2273 = vunpack.c.l.b16 %v2036
    %v2274 = vunpack.c.h.b16 %v2036
    %v2275 = vunpack.c.l.b16 %v2037
    %v2276 = vunpack.c.h.b16 %v2037
    %v2277 = vunpack.c.l.b16 %v2038
    %v2278 = vunpack.c.h.b16 %v2038
    %v2279 = vunpack.c.l.b16 %v2039
    %v2280 = vunpack.c.h.b16 %v2039
    %v2281 = vunpack.c.l.b16 %v2040
    %v2282 = vunpack.c.h.b16 %v2040
    %v2283 = vunpack.c.l.b16 %v2041
    %v2284 = vunpack.c.h.b16 %v2041
    %v2285 = vunpack.c.l.b16 %v2042
    %v2286 = vunpack.c.h.b16 %v2042
    %v2287 = vunpack.c.l.b16 %v2043
    %v2288 = vunpack.c.h.b16 %v2043
    %v2289 = vunpack.c.l.b16 %v2044
    %v2290 = vunpack.c.h.b16 %v2044
    %v2291 = vunpack.c.l.b16 %v2045
    %v2292 = vunpack.c.h.b16 %v2045
    %v2293 = vunpack.c.l.b16 %v2046
    %v2294 = vunpack.c.h.b16 %v2046
    %v2295 = vunpack.c.l.b16 %v2047
    %v2296 = vunpack.c.h.b16 %v2047
    %v2297 = vunpack.c.l.b16 %v2048
    %v2298 = vunpack.c.h.b16 %v2048
    %v2299 = vunpack.c.l.b16 %v2049
    %v2300 = vunpack.c.h.b16 %v2049
    %v2301 = vunpack.c.l.b16 %v2050
    %v2302 = vunpack.c.h.b16 %v2050
    %v2303 = vunpack.c.l.b16 %v2051
    %v2304 = vunpack.c.h.b16 %v2051
    %v2305 = vunpack.c.l.b16 %v2052
    %v2306 = vunpack.c.h.b16 %v2052
    %v2307 = vunpack.c.l.b16 %v2053
    %v2308 = vunpack.c.h.b16 %v2053
    %v2309 = vunpack.c.l.b16 %v2054
    %v2310 = vunpack.c.h.b16 %v2054
    %v2311 = vunpack.c.l.b16 %v2055
    %v2312 = vunpack.c.h.b16 %v2055
    %v2313 = vunpack.c.l.b16 %v2056
    %v2314 = vunpack.c.h.b16 %v2056
    %v2315 = vunpack.c.l.b16 %v2057
    %v2316 = vunpack.c.h.b16 %v2057
    %v2317 = vunpack.c.l.b16 %v2058
    %v2318 = vunpack.c.h.b16 %v2058
    %v2319 = vunpack.c.l.b16 %v2059
    %v2320 = vunpack.c.h.b16 %v2059
    %v2321 = vunpack.c.l.b16 %v2060
    %v2322 = vunpack.c.h.b16 %v2060
    %v2323 = vunpack.c.l.b16 %v2061
    %v2324 = vunpack.c.h.b16 %v2061
    %v2325 = vunpack.c.l.b16 %v2062
    %v2326 = vunpack.c.h.b16 %v2062
    %v2327 = vunpack.c.l.b16 %v2063
    %v2328 = vunpack.c.h.b16 %v2063
    %v2329 = vunpack.c.l.b16 %v2064
    %v2330 = vunpack.c.h.b16 %v2064
    %v2331 = vunpack.c.l.b16 %v2065
    %v2332 = vunpack.c.h.b16 %v2065
    %v2333 = vunpack.c.l.b16 %v2066
    %v2334 = vunpack.c.h.b16 %v2066
    %v2335 = vunpack.c.l.b16 %v2067
    %v2336 = vunpack.c.h.b16 %v2067
    %v2337 = vunpack.c.l.b16 %v2068
    %v2338 = vunpack.c.h.b16 %v2068
    %v2339 = vunpack.c.l.b16 %v2069
    %v2340 = vunpack.c.h.b16 %v2069
    %v2341 = vunpack.c.l.b16 %v2070
    %v2342 = vunpack.c.h.b16 %v2070
    %v2343 = vunpack.c.l.b16 %v2071
    %v2344 = vunpack.c.h.b16 %v2071
    %v2345 = vunpack.c.l.b16 %v2072
    %v2346 = vunpack.c.h.b16 %v2072
    %v2347 = vunpack.c.l.b16 %v2073
    %v2348 = vunpack.c.h.b16 %v2073
    %v2349 = vunpack.c.l.b16 %v2074
    %v2350 = vunpack.c.h.b16 %v2074
    %v2351 = vunpack.c.l.b16 %v2075
    %v2352 = vunpack.c.h.b16 %v2075
    %v2353 = vunpack.c.l.b16 %v2076
    %v2354 = vunpack.c.h.b16 %v2076
    %v2355 = vunpack.c.l.b16 %v2077
    %v2356 = vunpack.c.h.b16 %v2077
    %v2357 = vunpack.c.l.b16 %v2078
    %v2358 = vunpack.c.h.b16 %v2078
    %v2359 = vunpack.c.l.b16 %v2079
    %v2360 = vunpack.c.h.b16 %v2079
    %v2361 = vunpack.c.l.b16 %v2080
    %v2362 = vunpack.c.h.b16 %v2080
    %v2363 = vunpack.c.l.b16 %v2081
    %v2364 = vunpack.c.h.b16 %v2081
    %v2365 = vunpack.c.l.b16 %v2082
    %v2366 = vunpack.c.h.b16 %v2082
    %v2367 = vunpack.c.l.b16 %v2083
    %v2368 = vunpack.c.h.b16 %v2083
    %v2369 = vunpack.c.l.b16 %v2084
    %v2370 = vunpack.c.h.b16 %v2084
    %v2371 = vunpack.c.l.b16 %v2085
    %v2372 = vunpack.c.h.b16 %v2085
    %v2373 = vunpack.c.l.b16 %v2086
    %v2374 = vunpack.c.h.b16 %v2086
    %v2375 = vunpack.c.l.b16 %v2087
    %v2376 = vunpack.c.h.b16 %v2087
    %v2377 = vunpack.c.l.b16 %v2088
    %v2378 = vunpack.c.h.b16 %v2088
    %v2379 = vunpack.c.l.b16 %v2089
    %v2380 = vunpack.c.h.b16 %v2089
    %v2381 = vunpack.c.l.b16 %v2090
    %v2382 = vunpack.c.h.b16 %v2090
    %v2383 = vunpack.c.l.b16 %v2091
    %v2384 = vunpack.c.h.b16 %v2091
    %v2385 = vunpack.c.l.b16 %v2092
    %v2386 = vunpack.c.h.b16 %v2092
    %v2387 = vunpack.c.l.b16 %v2093
    %v2388 = vunpack.c.h.b16 %v2093
    %v2389 = vunpack.c.l.b16 %v2094
    %v2390 = vunpack.c.h.b16 %v2094
    %v2391 = vunpack.c.l.b16 %v2095
    %v2392 = vunpack.c.h.b16 %v2095
    %v2393 = vunpack.c.l.b16 %v2096
    %v2394 = vunpack.c.h.b16 %v2096
    %v2395 = vunpack.c.l.b16 %v2097
    %v2396 = vunpack.c.h.b16 %v2097
    %v2397 = vunpack.c.l.b16 %v2098
    %v2398 = vunpack.c.h.b16 %v2098
    %v2399 = vunpack.c.l.b16 %v2099
    %v2400 = vunpack.c.h.b16 %v2099
    %v2401 = vunpack.c.l.b16 %v2100
    %v2402 = vunpack.c.h.b16 %v2100
    %v2403 = vunpack.c.l.b16 %v2101
    %v2404 = vunpack.c.h.b16 %v2101
    %v2405 = vunpack.c.l.b16 %v2102
    %v2406 = vunpack.c.h.b16 %v2102
    %v2407 = vunpack.c.l.b16 %v2103
    %v2408 = vunpack.c.h.b16 %v2103
    %v2409 = vunpack.c.l.b16 %v2104
    %v2410 = vunpack.c.h.b16 %v2104
    %v2411 = vunpack.c.l.b16 %v2105
    %v2412 = vunpack.c.h.b16 %v2105
    %v2413 = vunpack.c.l.b16 %v2106
    %v2414 = vunpack.c.h.b16 %v2106
    %v2415 = vunpack.c.l.b16 %v2107
    %v2416 = vunpack.c.h.b16 %v2107
    %v2417 = vunpack.c.l.b16 %v2108
    %v2418 = vunpack.c.h.b16 %v2108
    %v2419 = vunpack.c.l.b16 %v2109
    %v2420 = vunpack.c.h.b16 %v2109
    %v2421 = vunpack.c.l.b16 %v2110
    %v2422 = vunpack.c.h.b16 %v2110
    %v2423 = vunpack.c.l.b16 %v2111
    %v2424 = vunpack.c.h.b16 %v2111
    %v2425 = vunpack.c.l.b16 %v2112
    %v2426 = vunpack.c.h.b16 %v2112
    %v2427 = vunpack.c.l.b16 %v2113
    %v2428 = vunpack.c.h.b16 %v2113
    %v2429 = vunpack.c.l.b16 %v2114
    %v2430 = vunpack.c.h.b16 %v2114
    %v2431 = vunpack.c.l.b16 %v2115
    %v2432 = vunpack.c.h.b16 %v2115
    %v2433 = vunpack.c.l.b16 %v2116
    %v2434 = vunpack.c.h.b16 %v2116
    %v2435 = vunpack.c.l.b16 %v2117
    %v2436 = vunpack.c.h.b16 %v2117
    %v2437 = vunpack.c.l.b16 %v2118
    %v2438 = vunpack.c.h.b16 %v2118
    %v2439 = vunpack.c.l.b16 %v2119
    %v2440 = vunpack.c.h.b16 %v2119
    %v2441 = vunpack.c.l.b16 %v2120
    %v2442 = vunpack.c.h.b16 %v2120
    %v2443 = vpack.c.b16 %v2257, %v2251
    %v2444 = vpack.c.b16 %v2258, %v2252
    %v2445 = vpack.c.b16 %v2259, %v2253
    %v2446 = vpack.c.b16 %v2260, %v2254
    %v2447 = vpack.c.b16 %v2261, %v2255
    %v2448 = vpack.c.b16 %v2262, %v2256
    %v2449 = vpack.c.b16 %v2269, %v2263
    %v2450 = vpack.c.b16 %v2270, %v2264
    %v2451 = vpack.c.b16 %v2271, %v2265
    %v2452 = vpack.c.b16 %v2272, %v2266
    %v2453 = vpack.c.b16 %v2273, %v2267
    %v2454 = vpack.c.b16 %v2274, %v2268
    %v2455 = vpack.c.b16 %v2281, %v2275
    %v2456 = vpack.c.b16 %v2282, %v2276
    %v2457 = vpack.c.b16 %v2283, %v2277
    %v2458 = vpack.c.b16 %v2284, %v2278
    %v2459 = vpack.c.b16 %v2285, %v2279
    %v2460 = vpack.c.b16 %v2286, %v2280
    %v2461 = vpack.c.b16 %v2293, %v2287
    %v2462 = vpack.c.b16 %v2294, %v2288
    %v2463 = vpack.c.b16 %v2295, %v2289
    %v2464 = vpack.c.b16 %v2296, %v2290
    %v2465 = vpack.c.b16 %v2297, %v2291
    %v2466 = vpack.c.b16 %v2298, %v2292
    %v2467 = vpack.c.b16 %v2305, %v2299
    %v2468 = vpack.c.b16 %v2306, %v2300
    %v2469 = vpack.c.b16 %v2307, %v2301
    %v2470 = vpack.c.b16 %v2308, %v2302
    %v2471 = vpack.c.b16 %v2309, %v2303
    %v2472 = vpack.c.b16 %v2310, %v2304
    %v2473 = vpack.c.b16 %v2317, %v2311
    %v2474 = vpack.c.b16 %v2318, %v2312
    %v2475 = vpack.c.b16 %v2319, %v2313
    %v2476 = vpack.c.b16 %v2320, %v2314
    %v2477 = vpack.c.b16 %v2321, %v2315
    %v2478 = vpack.c.b16 %v2322, %v2316
    %v2479 = vpack.c.b16 %v2329, %v2323
    %v2480 = vpack.c.b16 %v2330, %v2324
    %v2481 = vpack.c.b16 %v2331, %v2325
    %v2482 = vpack.c.b16 %v2332, %v2326
    %v2483 = vpack.c.b16 %v2333, %v2327
    %v2484 = vpack.c.b16 %v2334, %v2328
    %v2485 = vpack.c.b16 %v2341, %v2335
    %v2486 = vpack.c.b16 %v2342, %v2336
    %v2487 = vpack.c.b16 %v2343, %v2337
    %v2488 = vpack.c.b16 %v2344, %v2338
    %v2489 = vpack.c.b16 %v2345, %v2339
    %v2490 = vpack.c.b16 %v2346, %v2340
    %v2491 = vpack.c.b16 %v2353, %v2347
    %v2492 = vpack.c.b16 %v2354, %v2348
    %v2493 = vpack.c.b16 %v2355, %v2349
    %v2494 = vpack.c.b16 %v2356, %v2350
    %v2495 = vpack.c.b16 %v2357, %v2351
    %v2496 = vpack.c.b16 %v2358, %v2352
    %v2497 = vpack.c.b16 %v2365, %v2359
    %v2498 = vpack.c.b16 %v2366, %v2360
    %v2499 = vpack.c.b16 %v2367, %v2361
    %v2500 = vpack.c.b16 %v2368, %v2362
    %v2501 = vpack.c.b16 %v2369, %v2363
    %v2502 = vpack.c.b16 %v2370, %v2364
    %v2503 = vpack.c.b16 %v2377, %v2371
    %v2504 = vpack.c.b16 %v2378, %v2372
    %v2505 = vpack.c.b16 %v2379, %v2373
    %v2506 = vpack.c.b16 %v2380, %v2374
    %v2507 = vpack.c.b16 %v2381, %v2375
    %v2508 = vpack.c.b16 %v2382, %v2376
    %v2509 = vpack.c.b16 %v2389, %v2383
    %v2510 = vpack.c.b16 %v2390, %v2384
    %v2511 = vpack.c.b16 %v2391, %v2385
    %v2512 = vpack.c.b16 %v2392, %v2386
    %v2513 = vpack.c.b16 %v2393, %v2387
    %v2514 = vpack.c.b16 %v2394, %v2388
    %v2515 = vpack.c.b16 %v2401, %v2395
    %v2516 = vpack.c.b16 %v2402, %v2396
    %v2517 = vpack.c.b16 %v2403, %v2397
    %v2518 = vpack.c.b16 %v2404, %v2398
    %v2519 = vpack.c.b16 %v2405, %v2399
    %v2520 = vpack.c.b16 %v2406, %v2400
    %v2521 = vpack.c.b16 %v2413, %v2407
    %v2522 = vpack.c.b16 %v2414, %v2408
    %v2523 = vpack.c.b16 %v2415, %v2409
    %v2524 = vpack.c.b16 %v2416, %v2410
    %v2525 = vpack.c.b16 %v2417, %v2411
    %v2526 = vpack.c.b16 %v2418, %v2412
    %v2527 = vpack.c.b16 %v2425, %v2419
    %v2528 = vpack.c.b16 %v2426, %v2420
    %v2529 = vpack.c.b16 %v2427, %v2421
    %v2530 = vpack.c.b16 %v2428, %v2422
    %v2531 = vpack.c.b16 %v2429, %v2423
    %v2532 = vpack.c.b16 %v2430, %v2424
    %v2533 = vpack.c.b16 %v2437, %v2431
    %v2534 = vpack.c.b16 %v2438, %v2432
    %v2535 = vpack.c.b16 %v2439, %v2433
    %v2536 = vpack.c.b16 %v2440, %v2434
    %v2537 = vpack.c.b16 %v2441, %v2435
    %v2538 = vpack.c.b16 %v2442, %v2436
    %2635 = vmatprep.subr.bf16.mxu0 %v2444
    %2636 = vmatpush1.bf16.msra.mxu0 %v2443
    %2637 = vmatprep.subr.bf16.mxu0 %v2450
    %2638 = vmatpush1.bf16.msra.mxu0 %v2449
    %2639 = vmatprep.subr.bf16.mxu0 %v2456
    %2640 = vmatpush1.bf16.msra.mxu0 %v2455
    %2641 = vmatprep.subr.bf16.mxu0 %v2462
    %2642 = vmatpush1.bf16.msra.mxu0 %v2461
    %2643 = vmatprep.subr.bf16.mxu0 %v2468
    %2644 = vmatpush1.bf16.msra.mxu0 %v2467
    %2645 = vmatprep.subr.bf16.mxu0 %v2474
    %2646 = vmatpush1.bf16.msra.mxu0 %v2473
    %2647 = vmatprep.subr.bf16.mxu0 %v2480
    %2648 = vmatpush1.bf16.msra.mxu0 %v2479
    %2649 = vmatprep.subr.bf16.mxu0 %v2486
    %2650 = vmatpush1.bf16.msra.mxu0 %v2485
    %2651 = vmatprep.subr.bf16.mxu0 %v2492
    %2652 = vmatpush1.bf16.msra.mxu0 %v2491
    %2653 = vmatprep.subr.bf16.mxu0 %v2498
    %2654 = vmatpush1.bf16.msra.mxu0 %v2497
    %2655 = vmatprep.subr.bf16.mxu0 %v2504
    %2656 = vmatpush1.bf16.msra.mxu0 %v2503
    %2657 = vmatprep.subr.bf16.mxu0 %v2510
    %2658 = vmatpush1.bf16.msra.mxu0 %v2509
    %2659 = vmatprep.subr.bf16.mxu0 %v2516
    %2660 = vmatpush1.bf16.msra.mxu0 %v2515
    %2661 = vmatprep.subr.bf16.mxu0 %v2522
    %2662 = vmatpush1.bf16.msra.mxu0 %v2521
    %2663 = vmatprep.subr.bf16.mxu0 %v2528
    %2664 = vmatpush1.bf16.msra.mxu0 %v2527
    %2665 = vmatprep.subr.bf16.mxu0 %v2534
    %2666 = vmatpush1.bf16.msra.mxu0 %v2533
    %2667 = vmatprep.mubr.bf16.mxu0 %v2123
    %2668 = vmatmul.mubr.bf16.gmra.mrb[0].mxu0 %v2122
    %v2669 = vpop.f32.mrb[0].mxu0
    %v2670 = vadd.f32 %v2128, %v2669
    %v2671 = vpop.f32.mrb[0].mxu0
    %v2672 = vadd.f32 %v2132, %v2671
    %v2673 = vpop.f32.mrb[0].mxu0
    %v2674 = vpop.f32.mrb[0].mxu0
    %2675 = vdwg.mxu0
    %2676 = vmatprep.subr.bf16.mxu0 %v2446
    %2677 = vmatpush1.bf16.msra.mxu0 %v2445
    %2678 = vmatprep.subr.bf16.mxu0 %v2452
    %2679 = vmatpush1.bf16.msra.mxu0 %v2451
    %2680 = vmatprep.subr.bf16.mxu0 %v2458
    %2681 = vmatpush1.bf16.msra.mxu0 %v2457
    %2682 = vmatprep.subr.bf16.mxu0 %v2464
    %2683 = vmatpush1.bf16.msra.mxu0 %v2463
    %2684 = vmatprep.subr.bf16.mxu0 %v2470
    %2685 = vmatpush1.bf16.msra.mxu0 %v2469
    %2686 = vmatprep.subr.bf16.mxu0 %v2476
    %2687 = vmatpush1.bf16.msra.mxu0 %v2475
    %2688 = vmatprep.subr.bf16.mxu0 %v2482
    %2689 = vmatpush1.bf16.msra.mxu0 %v2481
    %2690 = vmatprep.subr.bf16.mxu0 %v2488
    %2691 = vmatpush1.bf16.msra.mxu0 %v2487
    %2692 = vmatprep.subr.bf16.mxu0 %v2494
    %2693 = vmatpush1.bf16.msra.mxu0 %v2493
    %2694 = vmatprep.subr.bf16.mxu0 %v2500
    %2695 = vmatpush1.bf16.msra.mxu0 %v2499
    %2696 = vmatprep.subr.bf16.mxu0 %v2506
    %2697 = vmatpush1.bf16.msra.mxu0 %v2505
    %2698 = vmatprep.subr.bf16.mxu0 %v2512
    %2699 = vmatpush1.bf16.msra.mxu0 %v2511
    %2700 = vmatprep.subr.bf16.mxu0 %v2518
    %2701 = vmatpush1.bf16.msra.mxu0 %v2517
    %2702 = vmatprep.subr.bf16.mxu0 %v2524
    %2703 = vmatpush1.bf16.msra.mxu0 %v2523
    %2704 = vmatprep.subr.bf16.mxu0 %v2530
    %2705 = vmatpush1.bf16.msra.mxu0 %v2529
    %2706 = vmatprep.subr.bf16.mxu0 %v2536
    %2707 = vmatpush1.bf16.msra.mxu0 %v2535
    %2708 = vmatprep.mubr.bf16.mxu0 %v2123
    %2709 = vmatmul.mubr.bf16.gmra.mrb[0].mxu0 %v2122
    %v2710 = vpop.f32.mrb[0].mxu0
    %v2711 = vadd.f32 %v2136, %v2710
    %v2712 = vpop.f32.mrb[0].mxu0
    %v2713 = vadd.f32 %v2140, %v2712
    %v2714 = vpop.f32.mrb[0].mxu0
    %v2715 = vpop.f32.mrb[0].mxu0
    %2716 = vdwg.mxu0
    %2717 = vmatprep.subr.bf16.mxu0 %v2448
    %2718 = vmatpush1.bf16.msra.mxu0 %v2447
    %2719 = vmatprep.subr.bf16.mxu0 %v2454
    %2720 = vmatpush1.bf16.msra.mxu0 %v2453
    %2721 = vmatprep.subr.bf16.mxu0 %v2460
    %2722 = vmatpush1.bf16.msra.mxu0 %v2459
    %2723 = vmatprep.subr.bf16.mxu0 %v2466
    %2724 = vmatpush1.bf16.msra.mxu0 %v2465
    %2725 = vmatprep.subr.bf16.mxu0 %v2472
    %2726 = vmatpush1.bf16.msra.mxu0 %v2471
    %2727 = vmatprep.subr.bf16.mxu0 %v2478
    %2728 = vmatpush1.bf16.msra.mxu0 %v2477
    %2729 = vmatprep.subr.bf16.mxu0 %v2484
    %2730 = vmatpush1.bf16.msra.mxu0 %v2483
    %2731 = vmatprep.subr.bf16.mxu0 %v2490
    %2732 = vmatpush1.bf16.msra.mxu0 %v2489
    %2733 = vmatprep.subr.bf16.mxu0 %v2496
    %2734 = vmatpush1.bf16.msra.mxu0 %v2495
    %2735 = vmatprep.subr.bf16.mxu0 %v2502
    %2736 = vmatpush1.bf16.msra.mxu0 %v2501
    %2737 = vmatprep.subr.bf16.mxu0 %v2508
    %2738 = vmatpush1.bf16.msra.mxu0 %v2507
    %2739 = vmatprep.subr.bf16.mxu0 %v2514
    %2740 = vmatpush1.bf16.msra.mxu0 %v2513
    %2741 = vmatprep.subr.bf16.mxu0 %v2520
    %2742 = vmatpush1.bf16.msra.mxu0 %v2519
    %2743 = vmatprep.subr.bf16.mxu0 %v2526
    %2744 = vmatpush1.bf16.msra.mxu0 %v2525
    %2745 = vmatprep.subr.bf16.mxu0 %v2532
    %2746 = vmatpush1.bf16.msra.mxu0 %v2531
    %2747 = vmatprep.subr.bf16.mxu0 %v2538
    %2748 = vmatpush1.bf16.msra.mxu0 %v2537
    %2749 = vmatprep.mubr.bf16.mxu0 %v2123
    %2750 = vmatmul.mubr.bf16.gmra.mrb[0].mxu0 %v2122
    %v2751 = vpop.f32.mrb[0].mxu0
    %v2752 = vadd.f32 %v2144, %v2751
    %v2753 = vpop.f32.mrb[0].mxu0
    %v2754 = vadd.f32 %v2148, %v2753
    %v2755 = vpop.f32.mrb[0].mxu0
    %v2756 = vpop.f32.mrb[0].mxu0
    %2757 = vdwg.mxu0
    %v2758 = vlaneseq
    %v2759 = vshrl.u32 %v2758, 7
    %v2760 = vsub.s32 0, %v2759
    %v2761 = vrot.slane %v2711, %v2760
    %v2762 = vlaneseq
    %v2763 = vshrl.u32 %v2762, 7
    %v2764 = vsub.s32 0, %v2763
    %v2765 = vrot.slane %v2713, %v2764
    %v2766 = vmul.f32 %v2670, %v2761
    %v2767 = vmul.f32 %v2672, %v2765
    %2768 = vmatprep.subr.mxu0 0.0
    %2769 = vmatpush1.msra.mxu0 %v199
    %2770 = vmatprep.subr.mxu0 0.0
    %2771 = vmatpush1.msra.mxu0 %v200
    %2772 = vmatprep.subr.mxu0 0.0
    %2773 = vmatpush1.msra.mxu0 %v201
    %2774 = vmatprep.subr.mxu0 0.0
    %2775 = vmatpush1.msra.mxu0 %v202
    %2776 = vmatprep.subr.mxu0 0.0
    %2777 = vmatpush1.msra.mxu0 %v203
    %2778 = vmatprep.subr.mxu0 0.0
    %2779 = vmatpush1.msra.mxu0 %v204
    %2780 = vmatprep.subr.mxu0 0.0
    %2781 = vmatpush1.msra.mxu0 %v205
    %2782 = vmatprep.subr.mxu0 0.0
    %2783 = vmatpush1.msra.mxu0 %v206
    %2784 = vmatprep.subr.mxu0 0.0
    %2785 = vmatpush1.msra.mxu0 %v207
    %2786 = vmatprep.subr.mxu0 0.0
    %2787 = vmatpush1.msra.mxu0 %v208
    %2788 = vmatprep.subr.mxu0 0.0
    %2789 = vmatpush1.msra.mxu0 %v209
    %2790 = vmatprep.subr.mxu0 0.0
    %2791 = vmatpush1.msra.mxu0 %v210
    %2792 = vmatprep.subr.mxu0 0.0
    %2793 = vmatpush1.msra.mxu0 %v211
    %2794 = vmatprep.subr.mxu0 0.0
    %2795 = vmatpush1.msra.mxu0 %v212
    %2796 = vmatprep.subr.mxu0 0.0
    %2797 = vmatpush1.msra.mxu0 %v213
    %2798 = vmatprep.subr.mxu0 0.0
    %2799 = vmatpush1.msra.mxu0 %v214
    %2800 = vmatprep.subr.mxu0 0.0
    %2801 = vmatpush1.msra.mxu0 %v215
    %2802 = vmatprep.subr.mxu0 0.0
    %2803 = vmatpush1.msra.mxu0 %v216
    %2804 = vmatprep.subr.mxu0 0.0
    %2805 = vmatpush1.msra.mxu0 %v217
    %2806 = vmatprep.subr.mxu0 0.0
    %2807 = vmatpush1.msra.mxu0 %v218
    %2808 = vmatprep.subr.mxu0 0.0
    %2809 = vmatpush1.msra.mxu0 %v219
    %2810 = vmatprep.subr.mxu0 0.0
    %2811 = vmatpush1.msra.mxu0 %v220
    %2812 = vmatprep.subr.mxu0 0.0
    %2813 = vmatpush1.msra.mxu0 %v221
    %2814 = vmatprep.subr.mxu0 0.0
    %2815 = vmatpush1.msra.mxu0 %v222
    %2816 = vmatprep.subr.mxu0 0.0
    %2817 = vmatpush1.msra.mxu0 %v223
    %2818 = vmatprep.subr.mxu0 0.0
    %2819 = vmatpush1.msra.mxu0 %v224
    %2820 = vmatprep.subr.mxu0 0.0
    %2821 = vmatpush1.msra.mxu0 %v225
    %2822 = vmatprep.subr.mxu0 0.0
    %2823 = vmatpush1.msra.mxu0 %v226
    %2824 = vmatprep.subr.mxu0 0.0
    %2825 = vmatpush1.msra.mxu0 %v227
    %2826 = vmatprep.subr.mxu0 0.0
    %2827 = vmatpush1.msra.mxu0 %v228
    %2828 = vmatprep.subr.mxu0 0.0
    %2829 = vmatpush1.msra.mxu0 %v229
    %2830 = vmatprep.subr.mxu0 0.0
    %2831 = vmatpush1.msra.mxu0 %v230
    %2832 = vmatprep.mubr.f32.mxu0 %v2767
    %2833 = vmatmul.mubr.f32.gmra.mrb[0].mxu0 %v2766
    %v2834 = vpop.f32.mrb[0].mxu0
    %v2835 = vadd.f32 0.0, %v2834
    %v2836 = vpop.f32.mrb[0].mxu0
    %2837 = vdwg.mxu0
    %v2838 = vmul.f32 %v2835, 0.17677669
    %v2839 = vlaneseq
    %v2840 = vshrl.u32 %v2839, 7
    %v2841 = vsub.s32 1, %v2840
    %v2842 = vrot.slane %v2711, %v2841
    %v2843 = vlaneseq
    %v2844 = vshrl.u32 %v2843, 7
    %v2845 = vsub.s32 1, %v2844
    %v2846 = vrot.slane %v2713, %v2845
    %v2847 = vmul.f32 %v2670, %v2842
    %v2848 = vmul.f32 %v2672, %v2846
    %2849 = vmatprep.subr.mxu0 0.0
    %2850 = vmatpush1.msra.mxu0 %v199
    %2851 = vmatprep.subr.mxu0 0.0
    %2852 = vmatpush1.msra.mxu0 %v200
    %2853 = vmatprep.subr.mxu0 0.0
    %2854 = vmatpush1.msra.mxu0 %v201
    %2855 = vmatprep.subr.mxu0 0.0
    %2856 = vmatpush1.msra.mxu0 %v202
    %2857 = vmatprep.subr.mxu0 0.0
    %2858 = vmatpush1.msra.mxu0 %v203
    %2859 = vmatprep.subr.mxu0 0.0
    %2860 = vmatpush1.msra.mxu0 %v204
    %2861 = vmatprep.subr.mxu0 0.0
    %2862 = vmatpush1.msra.mxu0 %v205
    %2863 = vmatprep.subr.mxu0 0.0
    %2864 = vmatpush1.msra.mxu0 %v206
    %2865 = vmatprep.subr.mxu0 0.0
    %2866 = vmatpush1.msra.mxu0 %v207
    %2867 = vmatprep.subr.mxu0 0.0
    %2868 = vmatpush1.msra.mxu0 %v208
    %2869 = vmatprep.subr.mxu0 0.0
    %2870 = vmatpush1.msra.mxu0 %v209
    %2871 = vmatprep.subr.mxu0 0.0
    %2872 = vmatpush1.msra.mxu0 %v210
    %2873 = vmatprep.subr.mxu0 0.0
    %2874 = vmatpush1.msra.mxu0 %v211
    %2875 = vmatprep.subr.mxu0 0.0
    %2876 = vmatpush1.msra.mxu0 %v212
    %2877 = vmatprep.subr.mxu0 0.0
    %2878 = vmatpush1.msra.mxu0 %v213
    %2879 = vmatprep.subr.mxu0 0.0
    %2880 = vmatpush1.msra.mxu0 %v214
    %2881 = vmatprep.subr.mxu0 0.0
    %2882 = vmatpush1.msra.mxu0 %v215
    %2883 = vmatprep.subr.mxu0 0.0
    %2884 = vmatpush1.msra.mxu0 %v216
    %2885 = vmatprep.subr.mxu0 0.0
    %2886 = vmatpush1.msra.mxu0 %v217
    %2887 = vmatprep.subr.mxu0 0.0
    %2888 = vmatpush1.msra.mxu0 %v218
    %2889 = vmatprep.subr.mxu0 0.0
    %2890 = vmatpush1.msra.mxu0 %v219
    %2891 = vmatprep.subr.mxu0 0.0
    %2892 = vmatpush1.msra.mxu0 %v220
    %2893 = vmatprep.subr.mxu0 0.0
    %2894 = vmatpush1.msra.mxu0 %v221
    %2895 = vmatprep.subr.mxu0 0.0
    %2896 = vmatpush1.msra.mxu0 %v222
    %2897 = vmatprep.subr.mxu0 0.0
    %2898 = vmatpush1.msra.mxu0 %v223
    %2899 = vmatprep.subr.mxu0 0.0
    %2900 = vmatpush1.msra.mxu0 %v224
    %2901 = vmatprep.subr.mxu0 0.0
    %2902 = vmatpush1.msra.mxu0 %v225
    %2903 = vmatprep.subr.mxu0 0.0
    %2904 = vmatpush1.msra.mxu0 %v226
    %2905 = vmatprep.subr.mxu0 0.0
    %2906 = vmatpush1.msra.mxu0 %v227
    %2907 = vmatprep.subr.mxu0 0.0
    %2908 = vmatpush1.msra.mxu0 %v228
    %2909 = vmatprep.subr.mxu0 0.0
    %2910 = vmatpush1.msra.mxu0 %v229
    %2911 = vmatprep.subr.mxu0 0.0
    %2912 = vmatpush1.msra.mxu0 %v230
    %2913 = vmatprep.mubr.f32.mxu0 %v2848
    %2914 = vmatmul.mubr.f32.gmra.mrb[0].mxu0 %v2847
    %v2915 = vpop.f32.mrb[0].mxu0
    %v2916 = vadd.f32 0.0, %v2915
    %v2917 = vpop.f32.mrb[0].mxu0
    %2918 = vdwg.mxu0
    %v2919 = vmul.f32 %v2916, 0.17677669
    %v2920 = vmax.f32 %v2838, %v2919
    %v2921 = vsub.f32 %v2838, %v2920
    %v2922 = vmul.f32 %v2921, 1.442695
    %v2923 = vpow.pop %v2922
    %v2924 = vsub.f32 %v2919, %v2920
    %v2925 = vmul.f32 %v2924, 1.442695
    %v2926 = vpow.pop %v2925
    %v2927 = vadd.f32 %v2923, %v2926
    %v2928 = vrcp.pop %v2927
    %v2929 = vmul.f32 %v2923, %v2928
    %vm2930 = vcmask 64512
    %v2932 = vsel %vm2930, %v2929, 0
    %2934 = vmatprep.subr.mxu0 %v232
    %2935 = vmatpush1.msra.mxu0 %v231
    %2936 = vmatprep.subr.mxu0 0.0
    %2937 = vmatpush1.msra.mxu0 0.0
    %2938 = vmatprep.subr.mxu0 0.0
    %2939 = vmatpush1.msra.mxu0 0.0
    %2940 = vmatprep.subr.mxu0 0.0
    %2941 = vmatpush1.msra.mxu0 0.0
    %2942 = vmatprep.subr.mxu0 0.0
    %2943 = vmatpush1.msra.mxu0 0.0
    %2944 = vmatprep.subr.mxu0 0.0
    %2945 = vmatpush1.msra.mxu0 0.0
    %2946 = vmatprep.subr.mxu0 0.0
    %2947 = vmatpush1.msra.mxu0 0.0
    %2948 = vmatprep.subr.mxu0 0.0
    %2949 = vmatpush1.msra.mxu0 0.0
    %2950 = vmatprep.subr.mxu0 0.0
    %2951 = vmatpush1.msra.mxu0 0.0
    %2952 = vmatprep.subr.mxu0 0.0
    %2953 = vmatpush1.msra.mxu0 0.0
    %2954 = vmatprep.subr.mxu0 0.0
    %2955 = vmatpush1.msra.mxu0 0.0
    %2956 = vmatprep.subr.mxu0 0.0
    %2957 = vmatpush1.msra.mxu0 0.0
    %2958 = vmatprep.subr.mxu0 0.0
    %2959 = vmatpush1.msra.mxu0 0.0
    %2960 = vmatprep.subr.mxu0 0.0
    %2961 = vmatpush1.msra.mxu0 0.0
    %2962 = vmatprep.subr.mxu0 0.0
    %2963 = vmatpush1.msra.mxu0 0.0
    %2964 = vmatprep.subr.mxu0 0.0
    %2965 = vmatpush1.msra.mxu0 0.0
    %2966 = vmatprep.subr.mxu0 0.0
    %2967 = vmatpush1.msra.mxu0 0.0
    %2968 = vmatprep.subr.mxu0 0.0
    %2969 = vmatpush1.msra.mxu0 0.0
    %2970 = vmatprep.subr.mxu0 0.0
    %2971 = vmatpush1.msra.mxu0 0.0
    %2972 = vmatprep.subr.mxu0 0.0
    %2973 = vmatpush1.msra.mxu0 0.0
    %2974 = vmatprep.subr.mxu0 0.0
    %2975 = vmatpush1.msra.mxu0 0.0
    %2976 = vmatprep.subr.mxu0 0.0
    %2977 = vmatpush1.msra.mxu0 0.0
    %2978 = vmatprep.subr.mxu0 0.0
    %2979 = vmatpush1.msra.mxu0 0.0
    %2980 = vmatprep.subr.mxu0 0.0
    %2981 = vmatpush1.msra.mxu0 0.0
    %2982 = vmatprep.subr.mxu0 0.0
    %2983 = vmatpush1.msra.mxu0 0.0
    %2984 = vmatprep.subr.mxu0 0.0
    %2985 = vmatpush1.msra.mxu0 0.0
    %2986 = vmatprep.subr.mxu0 0.0
    %2987 = vmatpush1.msra.mxu0 0.0
    %2988 = vmatprep.subr.mxu0 0.0
    %2989 = vmatpush1.msra.mxu0 0.0
    %2990 = vmatprep.subr.mxu0 0.0
    %2991 = vmatpush1.msra.mxu0 0.0
    %2992 = vmatprep.subr.mxu0 0.0
    %2993 = vmatpush1.msra.mxu0 0.0
    %2994 = vmatprep.subr.mxu0 0.0
    %2995 = vmatpush1.msra.mxu0 0.0
    %2996 = vmatprep.subr.mxu0 0.0
    %2997 = vmatpush1.msra.mxu0 0.0
    %2998 = vmatprep.mubr.f32.mxu0 0.0
    %2999 = vmatmul.mubr.f32.gmra.mrb[0].mxu0 %v2932
    %v3000 = vpop.f32.mrb[0].mxu0
    %v3001 = vadd.f32 0.0, %v3000
    %v3002 = vpop.f32.mrb[0].mxu0
    %v3003 = vadd.f32 0.0, %v3002
    %3004 = vdwg.mxu0
    %v3005 = vlaneseq
    %v3006 = vshrl.u32 %v3005, 7
    %v3007 = vsub.s32 0, %v3006
    %v3008 = vrot.slane %v2752, %v3007
    %v3009 = vlaneseq
    %v3010 = vshrl.u32 %v3009, 7
    %v3011 = vsub.s32 0, %v3010
    %v3012 = vrot.slane %v2754, %v3011
    %v3013 = vmul.f32 %v3001, %v3008
    %v3014 = vmul.f32 %v3003, %v3012
    %v3015 = vmul.f32 %v2926, %v2928
    %v3017 = vsel %vm2930, %v3015, 0
    %3019 = vmatprep.subr.mxu0 %v232
    %3020 = vmatpush1.msra.mxu0 %v231
    %3021 = vmatprep.subr.mxu0 0.0
    %3022 = vmatpush1.msra.mxu0 0.0
    %3023 = vmatprep.subr.mxu0 0.0
    %3024 = vmatpush1.msra.mxu0 0.0
    %3025 = vmatprep.subr.mxu0 0.0
    %3026 = vmatpush1.msra.mxu0 0.0
    %3027 = vmatprep.subr.mxu0 0.0
    %3028 = vmatpush1.msra.mxu0 0.0
    %3029 = vmatprep.subr.mxu0 0.0
    %3030 = vmatpush1.msra.mxu0 0.0
    %3031 = vmatprep.subr.mxu0 0.0
    %3032 = vmatpush1.msra.mxu0 0.0
    %3033 = vmatprep.subr.mxu0 0.0
    %3034 = vmatpush1.msra.mxu0 0.0
    %3035 = vmatprep.subr.mxu0 0.0
    %3036 = vmatpush1.msra.mxu0 0.0
    %3037 = vmatprep.subr.mxu0 0.0
    %3038 = vmatpush1.msra.mxu0 0.0
    %3039 = vmatprep.subr.mxu0 0.0
    %3040 = vmatpush1.msra.mxu0 0.0
    %3041 = vmatprep.subr.mxu0 0.0
    %3042 = vmatpush1.msra.mxu0 0.0
    %3043 = vmatprep.subr.mxu0 0.0
    %3044 = vmatpush1.msra.mxu0 0.0
    %3045 = vmatprep.subr.mxu0 0.0
    %3046 = vmatpush1.msra.mxu0 0.0
    %3047 = vmatprep.subr.mxu0 0.0
    %3048 = vmatpush1.msra.mxu0 0.0
    %3049 = vmatprep.subr.mxu0 0.0
    %3050 = vmatpush1.msra.mxu0 0.0
    %3051 = vmatprep.subr.mxu0 0.0
    %3052 = vmatpush1.msra.mxu0 0.0
    %3053 = vmatprep.subr.mxu0 0.0
    %3054 = vmatpush1.msra.mxu0 0.0
    %3055 = vmatprep.subr.mxu0 0.0
    %3056 = vmatpush1.msra.mxu0 0.0
    %3057 = vmatprep.subr.mxu0 0.0
    %3058 = vmatpush1.msra.mxu0 0.0
    %3059 = vmatprep.subr.mxu0 0.0
    %3060 = vmatpush1.msra.mxu0 0.0
    %3061 = vmatprep.subr.mxu0 0.0
    %3062 = vmatpush1.msra.mxu0 0.0
    %3063 = vmatprep.subr.mxu0 0.0
    %3064 = vmatpush1.msra.mxu0 0.0
    %3065 = vmatprep.subr.mxu0 0.0
    %3066 = vmatpush1.msra.mxu0 0.0
    %3067 = vmatprep.subr.mxu0 0.0
    %3068 = vmatpush1.msra.mxu0 0.0
    %3069 = vmatprep.subr.mxu0 0.0
    %3070 = vmatpush1.msra.mxu0 0.0
    %3071 = vmatprep.subr.mxu0 0.0
    %3072 = vmatpush1.msra.mxu0 0.0
    %3073 = vmatprep.subr.mxu0 0.0
    %3074 = vmatpush1.msra.mxu0 0.0
    %3075 = vmatprep.subr.mxu0 0.0
    %3076 = vmatpush1.msra.mxu0 0.0
    %3077 = vmatprep.subr.mxu0 0.0
    %3078 = vmatpush1.msra.mxu0 0.0
    %3079 = vmatprep.subr.mxu0 0.0
    %3080 = vmatpush1.msra.mxu0 0.0
    %3081 = vmatprep.subr.mxu0 0.0
    %3082 = vmatpush1.msra.mxu0 0.0
    %3083 = vmatprep.mubr.f32.mxu0 0.0
    %3084 = vmatmul.mubr.f32.gmra.mrb[0].mxu0 %v3017
    %v3085 = vpop.f32.mrb[0].mxu0
    %v3086 = vadd.f32 0.0, %v3085
    %v3087 = vpop.f32.mrb[0].mxu0
    %v3088 = vadd.f32 0.0, %v3087
    %3089 = vdwg.mxu0
    %v3090 = vlaneseq
    %v3091 = vshrl.u32 %v3090, 7
    %v3092 = vsub.s32 1, %v3091
    %v3093 = vrot.slane %v2752, %v3092
    %v3094 = vlaneseq
    %v3095 = vshrl.u32 %v3094, 7
    %v3096 = vsub.s32 1, %v3095
    %v3097 = vrot.slane %v2754, %v3096
    %v3098 = vmul.f32 %v3086, %v3093
    %v3099 = vmul.f32 %v3088, %v3097
    %v3100 = vadd.f32 %v3013, %v3098
    %v3101 = vadd.f32 %v3014, %v3099
    %v3102 = vld [vmem:[%s45] sm:$0xff]
    %v3103 = vld [vmem:[%s45 + $0x8] sm:$0xff]
    %v3104 = vld [vmem:[%s45 + $0x10] sm:$0xff]
    %v3105 = vld [vmem:[%s45 + $0x18] sm:$0xff]
    %v3106 = vld [vmem:[%s45 + $0x20] sm:$0xff]
    %v3107 = vld [vmem:[%s45 + $0x28] sm:$0xff]
    %v3108 = vld [vmem:[%s45 + $0x30] sm:$0xff]
    %v3109 = vld [vmem:[%s45 + $0x38] sm:$0xff]
    %v3110 = vld [vmem:[%s45 + $0x40] sm:$0xff]
    %v3111 = vld [vmem:[%s45 + $0x48] sm:$0xff]
    %v3112 = vld [vmem:[%s45 + $0x50] sm:$0xff]
    %v3113 = vld [vmem:[%s45 + $0x58] sm:$0xff]
    %v3114 = vld [vmem:[%s45 + $0x60] sm:$0xff]
    %v3115 = vld [vmem:[%s45 + $0x68] sm:$0xff]
    %v3116 = vld [vmem:[%s45 + $0x70] sm:$0xff]
    %v3117 = vld [vmem:[%s45 + $0x78] sm:$0xff]
    %v3118 = vld [vmem:[%s45 + $0x80] sm:$0xff]
    %v3119 = vld [vmem:[%s45 + $0x88] sm:$0xff]
    %v3120 = vld [vmem:[%s45 + $0x90] sm:$0xff]
    %v3121 = vld [vmem:[%s45 + $0x98] sm:$0xff]
    %v3122 = vld [vmem:[%s45 + $0xa0] sm:$0xff]
    %v3123 = vld [vmem:[%s45 + $0xa8] sm:$0xff]
    %v3124 = vld [vmem:[%s45 + $0xb0] sm:$0xff]
    %v3125 = vld [vmem:[%s45 + $0xb8] sm:$0xff]
    %v3126 = vld [vmem:[%s45 + $0xc0] sm:$0xff]
    %v3127 = vld [vmem:[%s45 + $0xc8] sm:$0xff]
    %v3128 = vld [vmem:[%s45 + $0xd0] sm:$0xff]
    %v3129 = vld [vmem:[%s45 + $0xd8] sm:$0xff]
    %v3130 = vld [vmem:[%s45 + $0xe0] sm:$0xff]
    %v3131 = vld [vmem:[%s45 + $0xe8] sm:$0xff]
    %v3132 = vld [vmem:[%s45 + $0xf0] sm:$0xff]
    %v3133 = vld [vmem:[%s45 + $0xf8] sm:$0xff]
    %v3134 = vld [vmem:[%s43] sm:$0x3]
    %v3135 = vpack.c.bf16 %v3100, %v3100
    %v3136 = vpack.c.bf16 %v3101, %v3101
    %v3138 = vlaneseq
    %v3139 = vshrl.u32 %v3138, 7
    %v3140 = vsub.s32 0, %v3139
    %v3141 = vrot.slane %v3134, %v3140
    %v3142 = vlaneseq
    %v3143 = vshrl.u32 %v3142, 7
    %v3144 = vsub.s32 1, %v3143
    %v3145 = vrot.slane %v3134, %v3144
    %v3180 = vunpack.c.l.b16 %v3102
    %v3181 = vunpack.c.h.b16 %v3102
    %v3182 = vunpack.c.l.b16 %v3103
    %v3183 = vunpack.c.h.b16 %v3103
    %v3184 = vunpack.c.l.b16 %v3104
    %v3185 = vunpack.c.h.b16 %v3104
    %v3186 = vunpack.c.l.b16 %v3105
    %v3187 = vunpack.c.h.b16 %v3105
    %v3188 = vunpack.c.l.b16 %v3106
    %v3189 = vunpack.c.h.b16 %v3106
    %v3190 = vunpack.c.l.b16 %v3107
    %v3191 = vunpack.c.h.b16 %v3107
    %v3192 = vunpack.c.l.b16 %v3108
    %v3193 = vunpack.c.h.b16 %v3108
    %v3194 = vunpack.c.l.b16 %v3109
    %v3195 = vunpack.c.h.b16 %v3109
    %v3196 = vunpack.c.l.b16 %v3110
    %v3197 = vunpack.c.h.b16 %v3110
    %v3198 = vunpack.c.l.b16 %v3111
    %v3199 = vunpack.c.h.b16 %v3111
    %v3200 = vunpack.c.l.b16 %v3112
    %v3201 = vunpack.c.h.b16 %v3112
    %v3202 = vunpack.c.l.b16 %v3113
    %v3203 = vunpack.c.h.b16 %v3113
    %v3204 = vunpack.c.l.b16 %v3114
    %v3205 = vunpack.c.h.b16 %v3114
    %v3206 = vunpack.c.l.b16 %v3115
    %v3207 = vunpack.c.h.b16 %v3115
    %v3208 = vunpack.c.l.b16 %v3116
    %v3209 = vunpack.c.h.b16 %v3116
    %v3210 = vunpack.c.l.b16 %v3117
    %v3211 = vunpack.c.h.b16 %v3117
    %v3212 = vunpack.c.l.b16 %v3118
    %v3213 = vunpack.c.h.b16 %v3118
    %v3214 = vunpack.c.l.b16 %v3119
    %v3215 = vunpack.c.h.b16 %v3119
    %v3216 = vunpack.c.l.b16 %v3120
    %v3217 = vunpack.c.h.b16 %v3120
    %v3218 = vunpack.c.l.b16 %v3121
    %v3219 = vunpack.c.h.b16 %v3121
    %v3220 = vunpack.c.l.b16 %v3122
    %v3221 = vunpack.c.h.b16 %v3122
    %v3222 = vunpack.c.l.b16 %v3123
    %v3223 = vunpack.c.h.b16 %v3123
    %v3224 = vunpack.c.l.b16 %v3124
    %v3225 = vunpack.c.h.b16 %v3124
    %v3226 = vunpack.c.l.b16 %v3125
    %v3227 = vunpack.c.h.b16 %v3125
    %v3228 = vunpack.c.l.b16 %v3126
    %v3229 = vunpack.c.h.b16 %v3126
    %v3230 = vunpack.c.l.b16 %v3127
    %v3231 = vunpack.c.h.b16 %v3127
    %v3232 = vunpack.c.l.b16 %v3128
    %v3233 = vunpack.c.h.b16 %v3128
    %v3234 = vunpack.c.l.b16 %v3129
    %v3235 = vunpack.c.h.b16 %v3129
    %v3236 = vunpack.c.l.b16 %v3130
    %v3237 = vunpack.c.h.b16 %v3130
    %v3238 = vunpack.c.l.b16 %v3131
    %v3239 = vunpack.c.h.b16 %v3131
    %v3240 = vunpack.c.l.b16 %v3132
    %v3241 = vunpack.c.h.b16 %v3132
    %v3242 = vunpack.c.l.b16 %v3133
    %v3243 = vunpack.c.h.b16 %v3133
    %v3244 = vpack.c.b16 %v3182, %v3180
    %v3245 = vpack.c.b16 %v3183, %v3181
    %v3246 = vpack.c.b16 %v3186, %v3184
    %v3247 = vpack.c.b16 %v3187, %v3185
    %v3248 = vpack.c.b16 %v3190, %v3188
    %v3249 = vpack.c.b16 %v3191, %v3189
    %v3250 = vpack.c.b16 %v3194, %v3192
    %v3251 = vpack.c.b16 %v3195, %v3193
    %v3252 = vpack.c.b16 %v3198, %v3196
    %v3253 = vpack.c.b16 %v3199, %v3197
    %v3254 = vpack.c.b16 %v3202, %v3200
    %v3255 = vpack.c.b16 %v3203, %v3201
    %v3256 = vpack.c.b16 %v3206, %v3204
    %v3257 = vpack.c.b16 %v3207, %v3205
    %v3258 = vpack.c.b16 %v3210, %v3208
    %v3259 = vpack.c.b16 %v3211, %v3209
    %v3260 = vpack.c.b16 %v3214, %v3212
    %v3261 = vpack.c.b16 %v3215, %v3213
    %v3262 = vpack.c.b16 %v3218, %v3216
    %v3263 = vpack.c.b16 %v3219, %v3217
    %v3264 = vpack.c.b16 %v3222, %v3220
    %v3265 = vpack.c.b16 %v3223, %v3221
    %v3266 = vpack.c.b16 %v3226, %v3224
    %v3267 = vpack.c.b16 %v3227, %v3225
    %v3268 = vpack.c.b16 %v3230, %v3228
    %v3269 = vpack.c.b16 %v3231, %v3229
    %v3270 = vpack.c.b16 %v3234, %v3232
    %v3271 = vpack.c.b16 %v3235, %v3233
    %v3272 = vpack.c.b16 %v3238, %v3236
    %v3273 = vpack.c.b16 %v3239, %v3237
    %v3274 = vpack.c.b16 %v3242, %v3240
    %v3275 = vpack.c.b16 %v3243, %v3241
    %3308 = vmatprep.subr.bf16.mxu0 %v3245
    %3309 = vmatpush1.bf16.msra.mxu0 %v3244
    %3310 = vmatprep.subr.bf16.mxu0 %v3247
    %3311 = vmatpush1.bf16.msra.mxu0 %v3246
    %3312 = vmatprep.subr.bf16.mxu0 %v3249
    %3313 = vmatpush1.bf16.msra.mxu0 %v3248
    %3314 = vmatprep.subr.bf16.mxu0 %v3251
    %3315 = vmatpush1.bf16.msra.mxu0 %v3250
    %3316 = vmatprep.subr.bf16.mxu0 %v3253
    %3317 = vmatpush1.bf16.msra.mxu0 %v3252
    %3318 = vmatprep.subr.bf16.mxu0 %v3255
    %3319 = vmatpush1.bf16.msra.mxu0 %v3254
    %3320 = vmatprep.subr.bf16.mxu0 %v3257
    %3321 = vmatpush1.bf16.msra.mxu0 %v3256
    %3322 = vmatprep.subr.bf16.mxu0 %v3259
    %3323 = vmatpush1.bf16.msra.mxu0 %v3258
    %3324 = vmatprep.subr.bf16.mxu0 %v3261
    %3325 = vmatpush1.bf16.msra.mxu0 %v3260
    %3326 = vmatprep.subr.bf16.mxu0 %v3263
    %3327 = vmatpush1.bf16.msra.mxu0 %v3262
    %3328 = vmatprep.subr.bf16.mxu0 %v3265
    %3329 = vmatpush1.bf16.msra.mxu0 %v3264
    %3330 = vmatprep.subr.bf16.mxu0 %v3267
    %3331 = vmatpush1.bf16.msra.mxu0 %v3266
    %3332 = vmatprep.subr.bf16.mxu0 %v3269
    %3333 = vmatpush1.bf16.msra.mxu0 %v3268
    %3334 = vmatprep.subr.bf16.mxu0 %v3271
    %3335 = vmatpush1.bf16.msra.mxu0 %v3270
    %3336 = vmatprep.subr.bf16.mxu0 %v3273
    %3337 = vmatpush1.bf16.msra.mxu0 %v3272
    %3338 = vmatprep.subr.bf16.mxu0 %v3275
    %3339 = vmatpush1.bf16.msra.mxu0 %v3274
    %3340 = vmatprep.mubr.bf16.mxu0 %v3136
    %3341 = vmatmul.mubr.bf16.gmra.mrb[0].mxu0 %v3135
    %v3342 = vpop.f32.mrb[0].mxu0
    %v3343 = vadd.f32 %v3141, %v3342
    %v3344 = vpop.f32.mrb[0].mxu0
    %v3345 = vadd.f32 %v3145, %v3344
    %v3346 = vpop.f32.mrb[0].mxu0
    %v3347 = vpop.f32.mrb[0].mxu0
    %3348 = vdwg.mxu0
    %v3349 = vld [vmem:[%s37] sm:$0x3]
    %v3350 = vld [vmem:[%s35] sm:$0x3]
    %v3351 = vld [vmem:[%s51] sm:$0xff]
    %v3352 = vld [vmem:[%s51 + $0x8] sm:$0xff]
    %v3353 = vld [vmem:[%s51 + $0x10] sm:$0xff]
    %v3354 = vld [vmem:[%s51 + $0x18] sm:$0xff]
    %v3355 = vld [vmem:[%s51 + $0x20] sm:$0xff]
    %v3356 = vld [vmem:[%s51 + $0x28] sm:$0xff]
    %v3357 = vld [vmem:[%s51 + $0x30] sm:$0xff]
    %v3358 = vld [vmem:[%s51 + $0x38] sm:$0xff]
    %v3359 = vld [vmem:[%s51 + $0x40] sm:$0xff]
    %v3360 = vld [vmem:[%s51 + $0x48] sm:$0xff]
    %v3361 = vld [vmem:[%s51 + $0x50] sm:$0xff]
    %v3362 = vld [vmem:[%s51 + $0x58] sm:$0xff]
    %v3363 = vld [vmem:[%s51 + $0x60] sm:$0xff]
    %v3364 = vld [vmem:[%s51 + $0x68] sm:$0xff]
    %v3365 = vld [vmem:[%s51 + $0x70] sm:$0xff]
    %v3366 = vld [vmem:[%s51 + $0x78] sm:$0xff]
    %v3367 = vld [vmem:[%s51 + $0x80] sm:$0xff]
    %v3368 = vld [vmem:[%s51 + $0x88] sm:$0xff]
    %v3369 = vld [vmem:[%s51 + $0x90] sm:$0xff]
    %v3370 = vld [vmem:[%s51 + $0x98] sm:$0xff]
    %v3371 = vld [vmem:[%s51 + $0xa0] sm:$0xff]
    %v3372 = vld [vmem:[%s51 + $0xa8] sm:$0xff]
    %v3373 = vld [vmem:[%s51 + $0xb0] sm:$0xff]
    %v3374 = vld [vmem:[%s51 + $0xb8] sm:$0xff]
    %v3375 = vld [vmem:[%s51 + $0xc0] sm:$0xff]
    %v3376 = vld [vmem:[%s51 + $0xc8] sm:$0xff]
    %v3377 = vld [vmem:[%s51 + $0xd0] sm:$0xff]
    %v3378 = vld [vmem:[%s51 + $0xd8] sm:$0xff]
    %v3379 = vld [vmem:[%s51 + $0xe0] sm:$0xff]
    %v3380 = vld [vmem:[%s51 + $0xe8] sm:$0xff]
    %v3381 = vld [vmem:[%s51 + $0xf0] sm:$0xff]
    %v3382 = vld [vmem:[%s51 + $0xf8] sm:$0xff]
    %v3383 = vld [vmem:[%s51 + $0x100] sm:$0xff]
    %v3384 = vld [vmem:[%s51 + $0x108] sm:$0xff]
    %v3385 = vld [vmem:[%s51 + $0x110] sm:$0xff]
    %v3386 = vld [vmem:[%s51 + $0x118] sm:$0xff]
    %v3387 = vld [vmem:[%s51 + $0x120] sm:$0xff]
    %v3388 = vld [vmem:[%s51 + $0x128] sm:$0xff]
    %v3389 = vld [vmem:[%s51 + $0x130] sm:$0xff]
    %v3390 = vld [vmem:[%s51 + $0x138] sm:$0xff]
    %v3391 = vld [vmem:[%s51 + $0x140] sm:$0xff]
    %v3392 = vld [vmem:[%s51 + $0x148] sm:$0xff]
    %v3393 = vld [vmem:[%s51 + $0x150] sm:$0xff]
    %v3394 = vld [vmem:[%s51 + $0x158] sm:$0xff]
    %v3395 = vld [vmem:[%s51 + $0x160] sm:$0xff]
    %v3396 = vld [vmem:[%s51 + $0x168] sm:$0xff]
    %v3397 = vld [vmem:[%s51 + $0x170] sm:$0xff]
    %v3398 = vld [vmem:[%s51 + $0x178] sm:$0xff]
    %v3399 = vld [vmem:[%s51 + $0x180] sm:$0xff]
    %v3400 = vld [vmem:[%s51 + $0x188] sm:$0xff]
    %v3401 = vld [vmem:[%s51 + $0x190] sm:$0xff]
    %v3402 = vld [vmem:[%s51 + $0x198] sm:$0xff]
    %v3403 = vld [vmem:[%s51 + $0x1a0] sm:$0xff]
    %v3404 = vld [vmem:[%s51 + $0x1a8] sm:$0xff]
    %v3405 = vld [vmem:[%s51 + $0x1b0] sm:$0xff]
    %v3406 = vld [vmem:[%s51 + $0x1b8] sm:$0xff]
    %v3407 = vld [vmem:[%s51 + $0x1c0] sm:$0xff]
    %v3408 = vld [vmem:[%s51 + $0x1c8] sm:$0xff]
    %v3409 = vld [vmem:[%s51 + $0x1d0] sm:$0xff]
    %v3410 = vld [vmem:[%s51 + $0x1d8] sm:$0xff]
    %v3411 = vld [vmem:[%s51 + $0x1e0] sm:$0xff]
    %v3412 = vld [vmem:[%s51 + $0x1e8] sm:$0xff]
    %v3413 = vld [vmem:[%s51 + $0x1f0] sm:$0xff]
    %v3414 = vld [vmem:[%s51 + $0x1f8] sm:$0xff]
    %v3415 = vld [vmem:[%s27] sm:$0xf]
    %v3416 = vld [vmem:[%s53] sm:$0xff]
    %v3417 = vld [vmem:[%s53 + $0x8] sm:$0xff]
    %v3418 = vld [vmem:[%s53 + $0x10] sm:$0xff]
    %v3419 = vld [vmem:[%s53 + $0x18] sm:$0xff]
    %v3420 = vld [vmem:[%s53 + $0x20] sm:$0xff]
    %v3421 = vld [vmem:[%s53 + $0x28] sm:$0xff]
    %v3422 = vld [vmem:[%s53 + $0x30] sm:$0xff]
    %v3423 = vld [vmem:[%s53 + $0x38] sm:$0xff]
    %v3424 = vld [vmem:[%s53 + $0x40] sm:$0xff]
    %v3425 = vld [vmem:[%s53 + $0x48] sm:$0xff]
    %v3426 = vld [vmem:[%s53 + $0x50] sm:$0xff]
    %v3427 = vld [vmem:[%s53 + $0x58] sm:$0xff]
    %v3428 = vld [vmem:[%s53 + $0x60] sm:$0xff]
    %v3429 = vld [vmem:[%s53 + $0x68] sm:$0xff]
    %v3430 = vld [vmem:[%s53 + $0x70] sm:$0xff]
    %v3431 = vld [vmem:[%s53 + $0x78] sm:$0xff]
    %v3432 = vld [vmem:[%s53 + $0x80] sm:$0xff]
    %v3433 = vld [vmem:[%s53 + $0x88] sm:$0xff]
    %v3434 = vld [vmem:[%s53 + $0x90] sm:$0xff]
    %v3435 = vld [vmem:[%s53 + $0x98] sm:$0xff]
    %v3436 = vld [vmem:[%s53 + $0xa0] sm:$0xff]
    %v3437 = vld [vmem:[%s53 + $0xa8] sm:$0xff]
    %v3438 = vld [vmem:[%s53 + $0xb0] sm:$0xff]
    %v3439 = vld [vmem:[%s53 + $0xb8] sm:$0xff]
    %v3440 = vld [vmem:[%s53 + $0xc0] sm:$0xff]
    %v3441 = vld [vmem:[%s53 + $0xc8] sm:$0xff]
    %v3442 = vld [vmem:[%s53 + $0xd0] sm:$0xff]
    %v3443 = vld [vmem:[%s53 + $0xd8] sm:$0xff]
    %v3444 = vld [vmem:[%s53 + $0xe0] sm:$0xff]
    %v3445 = vld [vmem:[%s53 + $0xe8] sm:$0xff]
    %v3446 = vld [vmem:[%s53 + $0xf0] sm:$0xff]
    %v3447 = vld [vmem:[%s53 + $0xf8] sm:$0xff]
    %v3448 = vld [vmem:[%s53 + $0x100] sm:$0xff]
    %v3449 = vld [vmem:[%s53 + $0x108] sm:$0xff]
    %v3450 = vld [vmem:[%s53 + $0x110] sm:$0xff]
    %v3451 = vld [vmem:[%s53 + $0x118] sm:$0xff]
    %v3452 = vld [vmem:[%s53 + $0x120] sm:$0xff]
    %v3453 = vld [vmem:[%s53 + $0x128] sm:$0xff]
    %v3454 = vld [vmem:[%s53 + $0x130] sm:$0xff]
    %v3455 = vld [vmem:[%s53 + $0x138] sm:$0xff]
    %v3456 = vld [vmem:[%s53 + $0x140] sm:$0xff]
    %v3457 = vld [vmem:[%s53 + $0x148] sm:$0xff]
    %v3458 = vld [vmem:[%s53 + $0x150] sm:$0xff]
    %v3459 = vld [vmem:[%s53 + $0x158] sm:$0xff]
    %v3460 = vld [vmem:[%s53 + $0x160] sm:$0xff]
    %v3461 = vld [vmem:[%s53 + $0x168] sm:$0xff]
    %v3462 = vld [vmem:[%s53 + $0x170] sm:$0xff]
    %v3463 = vld [vmem:[%s53 + $0x178] sm:$0xff]
    %v3464 = vld [vmem:[%s53 + $0x180] sm:$0xff]
    %v3465 = vld [vmem:[%s53 + $0x188] sm:$0xff]
    %v3466 = vld [vmem:[%s53 + $0x190] sm:$0xff]
    %v3467 = vld [vmem:[%s53 + $0x198] sm:$0xff]
    %v3468 = vld [vmem:[%s53 + $0x1a0] sm:$0xff]
    %v3469 = vld [vmem:[%s53 + $0x1a8] sm:$0xff]
    %v3470 = vld [vmem:[%s53 + $0x1b0] sm:$0xff]
    %v3471 = vld [vmem:[%s53 + $0x1b8] sm:$0xff]
    %v3472 = vld [vmem:[%s53 + $0x1c0] sm:$0xff]
    %v3473 = vld [vmem:[%s53 + $0x1c8] sm:$0xff]
    %v3474 = vld [vmem:[%s53 + $0x1d0] sm:$0xff]
    %v3475 = vld [vmem:[%s53 + $0x1d8] sm:$0xff]
    %v3476 = vld [vmem:[%s53 + $0x1e0] sm:$0xff]
    %v3477 = vld [vmem:[%s53 + $0x1e8] sm:$0xff]
    %v3478 = vld [vmem:[%s53 + $0x1f0] sm:$0xff]
    %v3479 = vld [vmem:[%s53 + $0x1f8] sm:$0xff]
    %v3480 = vld [vmem:[%s29] sm:$0x3]
    %v3481 = vld [vmem:[%s41] sm:$0x3]
    %v3482 = vld [vmem:[%s39] sm:$0x3]
    %v3483 = vadd.f32 %v2019, %v3343
    %v3484 = vadd.f32 %v2021, %v3345
    %vm3485 = vcmask 1041408
    %v3486 = vsel %vm3485, %v3483, 0.0
    %v3487 = vsel %vm3485, %v3484, 0.0
    %v3488 = vadd.f32 %v3486, %v3487
    %3489 = vadd.xlane.f32.xlu0 %v3488
    %v3490 = vpop.xlane.xlu0 %3489
    %v3491 = vrcp.pop 256.0
    %v3492 = vmul.f32 %v3490, %v3491
    %v3493 = vsub.f32 %v3483, %v3492
    %v3494 = vsub.f32 %v3484, %v3492
    %v3495 = vmul.f32 %v3493, %v3493
    %v3496 = vmul.f32 %v3494, %v3494
    %v3497 = vsel %vm3485, %v3495, 0.0
    %v3498 = vsel %vm3485, %v3496, 0.0
    %v3499 = vadd.f32 %v3497, %v3498
    %3500 = vadd.xlane.f32.xlu0 %v3499
    %v3501 = vpop.xlane.xlu0 %3500
    %v3502 = vmul.f32 %v3501, %v3491
    %v3503 = vadd.f32 %v3502, 1e-05
    %v3504 = vrsqrt.pop %v3503
    %v3505 = vmul.f32 %v3493, %v3504
    %v3506 = vmul.f32 %v3494, %v3504
    %v3508 = vlaneseq
    %v3509 = vshrl.u32 %v3508, 7
    %v3510 = vsub.s32 0, %v3509
    %v3511 = vrot.slane %v3349, %v3510
    %v3512 = vlaneseq
    %v3513 = vshrl.u32 %v3512, 7
    %v3514 = vsub.s32 1, %v3513
    %v3515 = vrot.slane %v3349, %v3514
    %v3518 = vmul.f32 %v3505, %v3511
    %v3519 = vmul.f32 %v3506, %v3515
    %v3521 = vlaneseq
    %v3522 = vshrl.u32 %v3521, 7
    %v3523 = vsub.s32 0, %v3522
    %v3524 = vrot.slane %v3350, %v3523
    %v3525 = vlaneseq
    %v3526 = vshrl.u32 %v3525, 7
    %v3527 = vsub.s32 1, %v3526
    %v3528 = vrot.slane %v3350, %v3527
    %v3531 = vadd.f32 %v3518, %v3524
    %v3532 = vadd.f32 %v3519, %v3528
    %v3533 = vpack.c.bf16 %v3531, %v3531
    %v3534 = vpack.c.bf16 %v3532, %v3532
    %v3536 = vlaneseq
    %v3537 = vshrl.u32 %v3536, 7
    %v3538 = vsub.s32 0, %v3537
    %v3539 = vrot.slane %v3415, %v3538
    %v3540 = vlaneseq
    %v3541 = vshrl.u32 %v3540, 7
    %v3542 = vsub.s32 1, %v3541
    %v3543 = vrot.slane %v3415, %v3542
    %v3544 = vlaneseq
    %v3545 = vshrl.u32 %v3544, 7
    %v3546 = vsub.s32 2, %v3545
    %v3547 = vrot.slane %v3415, %v3546
    %v3548 = vlaneseq
    %v3549 = vshrl.u32 %v3548, 7
    %v3550 = vsub.s32 3, %v3549
    %v3551 = vrot.slane %v3415, %v3550
    %v3620 = vunpack.c.l.b16 %v3351
    %v3621 = vunpack.c.h.b16 %v3351
    %v3622 = vunpack.c.l.b16 %v3352
    %v3623 = vunpack.c.h.b16 %v3352
    %v3624 = vunpack.c.l.b16 %v3353
    %v3625 = vunpack.c.h.b16 %v3353
    %v3626 = vunpack.c.l.b16 %v3354
    %v3627 = vunpack.c.h.b16 %v3354
    %v3628 = vunpack.c.l.b16 %v3355
    %v3629 = vunpack.c.h.b16 %v3355
    %v3630 = vunpack.c.l.b16 %v3356
    %v3631 = vunpack.c.h.b16 %v3356
    %v3632 = vunpack.c.l.b16 %v3357
    %v3633 = vunpack.c.h.b16 %v3357
    %v3634 = vunpack.c.l.b16 %v3358
    %v3635 = vunpack.c.h.b16 %v3358
    %v3636 = vunpack.c.l.b16 %v3359
    %v3637 = vunpack.c.h.b16 %v3359
    %v3638 = vunpack.c.l.b16 %v3360
    %v3639 = vunpack.c.h.b16 %v3360
    %v3640 = vunpack.c.l.b16 %v3361
    %v3641 = vunpack.c.h.b16 %v3361
    %v3642 = vunpack.c.l.b16 %v3362
    %v3643 = vunpack.c.h.b16 %v3362
    %v3644 = vunpack.c.l.b16 %v3363
    %v3645 = vunpack.c.h.b16 %v3363
    %v3646 = vunpack.c.l.b16 %v3364
    %v3647 = vunpack.c.h.b16 %v3364
    %v3648 = vunpack.c.l.b16 %v3365
    %v3649 = vunpack.c.h.b16 %v3365
    %v3650 = vunpack.c.l.b16 %v3366
    %v3651 = vunpack.c.h.b16 %v3366
    %v3652 = vunpack.c.l.b16 %v3367
    %v3653 = vunpack.c.h.b16 %v3367
    %v3654 = vunpack.c.l.b16 %v3368
    %v3655 = vunpack.c.h.b16 %v3368
    %v3656 = vunpack.c.l.b16 %v3369
    %v3657 = vunpack.c.h.b16 %v3369
    %v3658 = vunpack.c.l.b16 %v3370
    %v3659 = vunpack.c.h.b16 %v3370
    %v3660 = vunpack.c.l.b16 %v3371
    %v3661 = vunpack.c.h.b16 %v3371
    %v3662 = vunpack.c.l.b16 %v3372
    %v3663 = vunpack.c.h.b16 %v3372
    %v3664 = vunpack.c.l.b16 %v3373
    %v3665 = vunpack.c.h.b16 %v3373
    %v3666 = vunpack.c.l.b16 %v3374
    %v3667 = vunpack.c.h.b16 %v3374
    %v3668 = vunpack.c.l.b16 %v3375
    %v3669 = vunpack.c.h.b16 %v3375
    %v3670 = vunpack.c.l.b16 %v3376
    %v3671 = vunpack.c.h.b16 %v3376
    %v3672 = vunpack.c.l.b16 %v3377
    %v3673 = vunpack.c.h.b16 %v3377
    %v3674 = vunpack.c.l.b16 %v3378
    %v3675 = vunpack.c.h.b16 %v3378
    %v3676 = vunpack.c.l.b16 %v3379
    %v3677 = vunpack.c.h.b16 %v3379
    %v3678 = vunpack.c.l.b16 %v3380
    %v3679 = vunpack.c.h.b16 %v3380
    %v3680 = vunpack.c.l.b16 %v3381
    %v3681 = vunpack.c.h.b16 %v3381
    %v3682 = vunpack.c.l.b16 %v3382
    %v3683 = vunpack.c.h.b16 %v3382
    %v3684 = vunpack.c.l.b16 %v3383
    %v3685 = vunpack.c.h.b16 %v3383
    %v3686 = vunpack.c.l.b16 %v3384
    %v3687 = vunpack.c.h.b16 %v3384
    %v3688 = vunpack.c.l.b16 %v3385
    %v3689 = vunpack.c.h.b16 %v3385
    %v3690 = vunpack.c.l.b16 %v3386
    %v3691 = vunpack.c.h.b16 %v3386
    %v3692 = vunpack.c.l.b16 %v3387
    %v3693 = vunpack.c.h.b16 %v3387
    %v3694 = vunpack.c.l.b16 %v3388
    %v3695 = vunpack.c.h.b16 %v3388
    %v3696 = vunpack.c.l.b16 %v3389
    %v3697 = vunpack.c.h.b16 %v3389
    %v3698 = vunpack.c.l.b16 %v3390
    %v3699 = vunpack.c.h.b16 %v3390
    %v3700 = vunpack.c.l.b16 %v3391
    %v3701 = vunpack.c.h.b16 %v3391
    %v3702 = vunpack.c.l.b16 %v3392
    %v3703 = vunpack.c.h.b16 %v3392
    %v3704 = vunpack.c.l.b16 %v3393
    %v3705 = vunpack.c.h.b16 %v3393
    %v3706 = vunpack.c.l.b16 %v3394
    %v3707 = vunpack.c.h.b16 %v3394
    %v3708 = vunpack.c.l.b16 %v3395
    %v3709 = vunpack.c.h.b16 %v3395
    %v3710 = vunpack.c.l.b16 %v3396
    %v3711 = vunpack.c.h.b16 %v3396
    %v3712 = vunpack.c.l.b16 %v3397
    %v3713 = vunpack.c.h.b16 %v3397
    %v3714 = vunpack.c.l.b16 %v3398
    %v3715 = vunpack.c.h.b16 %v3398
    %v3716 = vunpack.c.l.b16 %v3399
    %v3717 = vunpack.c.h.b16 %v3399
    %v3718 = vunpack.c.l.b16 %v3400
    %v3719 = vunpack.c.h.b16 %v3400
    %v3720 = vunpack.c.l.b16 %v3401
    %v3721 = vunpack.c.h.b16 %v3401
    %v3722 = vunpack.c.l.b16 %v3402
    %v3723 = vunpack.c.h.b16 %v3402
    %v3724 = vunpack.c.l.b16 %v3403
    %v3725 = vunpack.c.h.b16 %v3403
    %v3726 = vunpack.c.l.b16 %v3404
    %v3727 = vunpack.c.h.b16 %v3404
    %v3728 = vunpack.c.l.b16 %v3405
    %v3729 = vunpack.c.h.b16 %v3405
    %v3730 = vunpack.c.l.b16 %v3406
    %v3731 = vunpack.c.h.b16 %v3406
    %v3732 = vunpack.c.l.b16 %v3407
    %v3733 = vunpack.c.h.b16 %v3407
    %v3734 = vunpack.c.l.b16 %v3408
    %v3735 = vunpack.c.h.b16 %v3408
    %v3736 = vunpack.c.l.b16 %v3409
    %v3737 = vunpack.c.h.b16 %v3409
    %v3738 = vunpack.c.l.b16 %v3410
    %v3739 = vunpack.c.h.b16 %v3410
    %v3740 = vunpack.c.l.b16 %v3411
    %v3741 = vunpack.c.h.b16 %v3411
    %v3742 = vunpack.c.l.b16 %v3412
    %v3743 = vunpack.c.h.b16 %v3412
    %v3744 = vunpack.c.l.b16 %v3413
    %v3745 = vunpack.c.h.b16 %v3413
    %v3746 = vunpack.c.l.b16 %v3414
    %v3747 = vunpack.c.h.b16 %v3414
    %v3748 = vpack.c.b16 %v3624, %v3620
    %v3749 = vpack.c.b16 %v3625, %v3621
    %v3750 = vpack.c.b16 %v3626, %v3622
    %v3751 = vpack.c.b16 %v3627, %v3623
    %v3752 = vpack.c.b16 %v3632, %v3628
    %v3753 = vpack.c.b16 %v3633, %v3629
    %v3754 = vpack.c.b16 %v3634, %v3630
    %v3755 = vpack.c.b16 %v3635, %v3631
    %v3756 = vpack.c.b16 %v3640, %v3636
    %v3757 = vpack.c.b16 %v3641, %v3637
    %v3758 = vpack.c.b16 %v3642, %v3638
    %v3759 = vpack.c.b16 %v3643, %v3639
    %v3760 = vpack.c.b16 %v3648, %v3644
    %v3761 = vpack.c.b16 %v3649, %v3645
    %v3762 = vpack.c.b16 %v3650, %v3646
    %v3763 = vpack.c.b16 %v3651, %v3647
    %v3764 = vpack.c.b16 %v3656, %v3652
    %v3765 = vpack.c.b16 %v3657, %v3653
    %v3766 = vpack.c.b16 %v3658, %v3654
    %v3767 = vpack.c.b16 %v3659, %v3655
    %v3768 = vpack.c.b16 %v3664, %v3660
    %v3769 = vpack.c.b16 %v3665, %v3661
    %v3770 = vpack.c.b16 %v3666, %v3662
    %v3771 = vpack.c.b16 %v3667, %v3663
    %v3772 = vpack.c.b16 %v3672, %v3668
    %v3773 = vpack.c.b16 %v3673, %v3669
    %v3774 = vpack.c.b16 %v3674, %v3670
    %v3775 = vpack.c.b16 %v3675, %v3671
    %v3776 = vpack.c.b16 %v3680, %v3676
    %v3777 = vpack.c.b16 %v3681, %v3677
    %v3778 = vpack.c.b16 %v3682, %v3678
    %v3779 = vpack.c.b16 %v3683, %v3679
    %v3780 = vpack.c.b16 %v3688, %v3684
    %v3781 = vpack.c.b16 %v3689, %v3685
    %v3782 = vpack.c.b16 %v3690, %v3686
    %v3783 = vpack.c.b16 %v3691, %v3687
    %v3784 = vpack.c.b16 %v3696, %v3692
    %v3785 = vpack.c.b16 %v3697, %v3693
    %v3786 = vpack.c.b16 %v3698, %v3694
    %v3787 = vpack.c.b16 %v3699, %v3695
    %v3788 = vpack.c.b16 %v3704, %v3700
    %v3789 = vpack.c.b16 %v3705, %v3701
    %v3790 = vpack.c.b16 %v3706, %v3702
    %v3791 = vpack.c.b16 %v3707, %v3703
    %v3792 = vpack.c.b16 %v3712, %v3708
    %v3793 = vpack.c.b16 %v3713, %v3709
    %v3794 = vpack.c.b16 %v3714, %v3710
    %v3795 = vpack.c.b16 %v3715, %v3711
    %v3796 = vpack.c.b16 %v3720, %v3716
    %v3797 = vpack.c.b16 %v3721, %v3717
    %v3798 = vpack.c.b16 %v3722, %v3718
    %v3799 = vpack.c.b16 %v3723, %v3719
    %v3800 = vpack.c.b16 %v3728, %v3724
    %v3801 = vpack.c.b16 %v3729, %v3725
    %v3802 = vpack.c.b16 %v3730, %v3726
    %v3803 = vpack.c.b16 %v3731, %v3727
    %v3804 = vpack.c.b16 %v3736, %v3732
    %v3805 = vpack.c.b16 %v3737, %v3733
    %v3806 = vpack.c.b16 %v3738, %v3734
    %v3807 = vpack.c.b16 %v3739, %v3735
    %v3808 = vpack.c.b16 %v3744, %v3740
    %v3809 = vpack.c.b16 %v3745, %v3741
    %v3810 = vpack.c.b16 %v3746, %v3742
    %v3811 = vpack.c.b16 %v3747, %v3743
    %3876 = vmatprep.subr.bf16.mxu0 %v3749
    %3877 = vmatpush1.bf16.msra.mxu0 %v3748
    %3878 = vmatprep.subr.bf16.mxu0 %v3753
    %3879 = vmatpush1.bf16.msra.mxu0 %v3752
    %3880 = vmatprep.subr.bf16.mxu0 %v3757
    %3881 = vmatpush1.bf16.msra.mxu0 %v3756
    %3882 = vmatprep.subr.bf16.mxu0 %v3761
    %3883 = vmatpush1.bf16.msra.mxu0 %v3760
    %3884 = vmatprep.subr.bf16.mxu0 %v3765
    %3885 = vmatpush1.bf16.msra.mxu0 %v3764
    %3886 = vmatprep.subr.bf16.mxu0 %v3769
    %3887 = vmatpush1.bf16.msra.mxu0 %v3768
    %3888 = vmatprep.subr.bf16.mxu0 %v3773
    %3889 = vmatpush1.bf16.msra.mxu0 %v3772
    %3890 = vmatprep.subr.bf16.mxu0 %v3777
    %3891 = vmatpush1.bf16.msra.mxu0 %v3776
    %3892 = vmatprep.subr.bf16.mxu0 %v3781
    %3893 = vmatpush1.bf16.msra.mxu0 %v3780
    %3894 = vmatprep.subr.bf16.mxu0 %v3785
    %3895 = vmatpush1.bf16.msra.mxu0 %v3784
    %3896 = vmatprep.subr.bf16.mxu0 %v3789
    %3897 = vmatpush1.bf16.msra.mxu0 %v3788
    %3898 = vmatprep.subr.bf16.mxu0 %v3793
    %3899 = vmatpush1.bf16.msra.mxu0 %v3792
    %3900 = vmatprep.subr.bf16.mxu0 %v3797
    %3901 = vmatpush1.bf16.msra.mxu0 %v3796
    %3902 = vmatprep.subr.bf16.mxu0 %v3801
    %3903 = vmatpush1.bf16.msra.mxu0 %v3800
    %3904 = vmatprep.subr.bf16.mxu0 %v3805
    %3905 = vmatpush1.bf16.msra.mxu0 %v3804
    %3906 = vmatprep.subr.bf16.mxu0 %v3809
    %3907 = vmatpush1.bf16.msra.mxu0 %v3808
    %3908 = vmatprep.mubr.bf16.mxu0 %v3534
    %3909 = vmatmul.mubr.bf16.gmra.mrb[0].mxu0 %v3533
    %v3910 = vpop.f32.mrb[0].mxu0
    %v3911 = vadd.f32 %v3539, %v3910
    %v3912 = vpop.f32.mrb[0].mxu0
    %v3913 = vadd.f32 %v3543, %v3912
    %v3914 = vpop.f32.mrb[0].mxu0
    %v3915 = vpop.f32.mrb[0].mxu0
    %3916 = vdwg.mxu0
    %3917 = vmatprep.subr.bf16.mxu0 %v3751
    %3918 = vmatpush1.bf16.msra.mxu0 %v3750
    %3919 = vmatprep.subr.bf16.mxu0 %v3755
    %3920 = vmatpush1.bf16.msra.mxu0 %v3754
    %3921 = vmatprep.subr.bf16.mxu0 %v3759
    %3922 = vmatpush1.bf16.msra.mxu0 %v3758
    %3923 = vmatprep.subr.bf16.mxu0 %v3763
    %3924 = vmatpush1.bf16.msra.mxu0 %v3762
    %3925 = vmatprep.subr.bf16.mxu0 %v3767
    %3926 = vmatpush1.bf16.msra.mxu0 %v3766
    %3927 = vmatprep.subr.bf16.mxu0 %v3771
    %3928 = vmatpush1.bf16.msra.mxu0 %v3770
    %3929 = vmatprep.subr.bf16.mxu0 %v3775
    %3930 = vmatpush1.bf16.msra.mxu0 %v3774
    %3931 = vmatprep.subr.bf16.mxu0 %v3779
    %3932 = vmatpush1.bf16.msra.mxu0 %v3778
    %3933 = vmatprep.subr.bf16.mxu0 %v3783
    %3934 = vmatpush1.bf16.msra.mxu0 %v3782
    %3935 = vmatprep.subr.bf16.mxu0 %v3787
    %3936 = vmatpush1.bf16.msra.mxu0 %v3786
    %3937 = vmatprep.subr.bf16.mxu0 %v3791
    %3938 = vmatpush1.bf16.msra.mxu0 %v3790
    %3939 = vmatprep.subr.bf16.mxu0 %v3795
    %3940 = vmatpush1.bf16.msra.mxu0 %v3794
    %3941 = vmatprep.subr.bf16.mxu0 %v3799
    %3942 = vmatpush1.bf16.msra.mxu0 %v3798
    %3943 = vmatprep.subr.bf16.mxu0 %v3803
    %3944 = vmatpush1.bf16.msra.mxu0 %v3802
    %3945 = vmatprep.subr.bf16.mxu0 %v3807
    %3946 = vmatpush1.bf16.msra.mxu0 %v3806
    %3947 = vmatprep.subr.bf16.mxu0 %v3811
    %3948 = vmatpush1.bf16.msra.mxu0 %v3810
    %3949 = vmatprep.mubr.bf16.mxu0 %v3534
    %3950 = vmatmul.mubr.bf16.gmra.mrb[0].mxu0 %v3533
    %v3951 = vpop.f32.mrb[0].mxu0
    %v3952 = vadd.f32 %v3547, %v3951
    %v3953 = vpop.f32.mrb[0].mxu0
    %v3954 = vadd.f32 %v3551, %v3953
    %v3955 = vpop.f32.mrb[0].mxu0
    %v3956 = vpop.f32.mrb[0].mxu0
    %3957 = vdwg.mxu0
    %v3958 = vmax.f32 %v3911, 0.0
    %v3959 = vmax.f32 %v3913, 0.0
    %v3960 = vmax.f32 %v3952, 0.0
    %v3961 = vmax.f32 %v3954, 0.0
    %v3962 = vpack.c.bf16 %v3958, %v3958
    %v3963 = vpack.c.bf16 %v3959, %v3959
    %v3964 = vpack.c.bf16 %v3960, %v3960
    %v3965 = vpack.c.bf16 %v3961, %v3961
    %v3967 = vlaneseq
    %v3968 = vshrl.u32 %v3967, 7
    %v3969 = vsub.s32 0, %v3968
    %v3970 = vrot.slane %v3480, %v3969
    %v3971 = vlaneseq
    %v3972 = vshrl.u32 %v3971, 7
    %v3973 = vsub.s32 1, %v3972
    %v3974 = vrot.slane %v3480, %v3973
    %v4041 = vunpack.c.l.b16 %v3416
    %v4042 = vunpack.c.h.b16 %v3416
    %v4043 = vunpack.c.l.b16 %v3417
    %v4044 = vunpack.c.h.b16 %v3417
    %v4045 = vunpack.c.l.b16 %v3418
    %v4046 = vunpack.c.h.b16 %v3418
    %v4047 = vunpack.c.l.b16 %v3419
    %v4048 = vunpack.c.h.b16 %v3419
    %v4049 = vunpack.c.l.b16 %v3420
    %v4050 = vunpack.c.h.b16 %v3420
    %v4051 = vunpack.c.l.b16 %v3421
    %v4052 = vunpack.c.h.b16 %v3421
    %v4053 = vunpack.c.l.b16 %v3422
    %v4054 = vunpack.c.h.b16 %v3422
    %v4055 = vunpack.c.l.b16 %v3423
    %v4056 = vunpack.c.h.b16 %v3423
    %v4057 = vunpack.c.l.b16 %v3424
    %v4058 = vunpack.c.h.b16 %v3424
    %v4059 = vunpack.c.l.b16 %v3425
    %v4060 = vunpack.c.h.b16 %v3425
    %v4061 = vunpack.c.l.b16 %v3426
    %v4062 = vunpack.c.h.b16 %v3426
    %v4063 = vunpack.c.l.b16 %v3427
    %v4064 = vunpack.c.h.b16 %v3427
    %v4065 = vunpack.c.l.b16 %v3428
    %v4066 = vunpack.c.h.b16 %v3428
    %v4067 = vunpack.c.l.b16 %v3429
    %v4068 = vunpack.c.h.b16 %v3429
    %v4069 = vunpack.c.l.b16 %v3430
    %v4070 = vunpack.c.h.b16 %v3430
    %v4071 = vunpack.c.l.b16 %v3431
    %v4072 = vunpack.c.h.b16 %v3431
    %v4073 = vunpack.c.l.b16 %v3432
    %v4074 = vunpack.c.h.b16 %v3432
    %v4075 = vunpack.c.l.b16 %v3433
    %v4076 = vunpack.c.h.b16 %v3433
    %v4077 = vunpack.c.l.b16 %v3434
    %v4078 = vunpack.c.h.b16 %v3434
    %v4079 = vunpack.c.l.b16 %v3435
    %v4080 = vunpack.c.h.b16 %v3435
    %v4081 = vunpack.c.l.b16 %v3436
    %v4082 = vunpack.c.h.b16 %v3436
    %v4083 = vunpack.c.l.b16 %v3437
    %v4084 = vunpack.c.h.b16 %v3437
    %v4085 = vunpack.c.l.b16 %v3438
    %v4086 = vunpack.c.h.b16 %v3438
    %v4087 = vunpack.c.l.b16 %v3439
    %v4088 = vunpack.c.h.b16 %v3439
    %v4089 = vunpack.c.l.b16 %v3440
    %v4090 = vunpack.c.h.b16 %v3440
    %v4091 = vunpack.c.l.b16 %v3441
    %v4092 = vunpack.c.h.b16 %v3441
    %v4093 = vunpack.c.l.b16 %v3442
    %v4094 = vunpack.c.h.b16 %v3442
    %v4095 = vunpack.c.l.b16 %v3443
    %v4096 = vunpack.c.h.b16 %v3443
    %v4097 = vunpack.c.l.b16 %v3444
    %v4098 = vunpack.c.h.b16 %v3444
    %v4099 = vunpack.c.l.b16 %v3445
    %v4100 = vunpack.c.h.b16 %v3445
    %v4101 = vunpack.c.l.b16 %v3446
    %v4102 = vunpack.c.h.b16 %v3446
    %v4103 = vunpack.c.l.b16 %v3447
    %v4104 = vunpack.c.h.b16 %v3447
    %v4105 = vunpack.c.l.b16 %v3448
    %v4106 = vunpack.c.h.b16 %v3448
    %v4107 = vunpack.c.l.b16 %v3449
    %v4108 = vunpack.c.h.b16 %v3449
    %v4109 = vunpack.c.l.b16 %v3450
    %v4110 = vunpack.c.h.b16 %v3450
    %v4111 = vunpack.c.l.b16 %v3451
    %v4112 = vunpack.c.h.b16 %v3451
    %v4113 = vunpack.c.l.b16 %v3452
    %v4114 = vunpack.c.h.b16 %v3452
    %v4115 = vunpack.c.l.b16 %v3453
    %v4116 = vunpack.c.h.b16 %v3453
    %v4117 = vunpack.c.l.b16 %v3454
    %v4118 = vunpack.c.h.b16 %v3454
    %v4119 = vunpack.c.l.b16 %v3455
    %v4120 = vunpack.c.h.b16 %v3455
    %v4121 = vunpack.c.l.b16 %v3456
    %v4122 = vunpack.c.h.b16 %v3456
    %v4123 = vunpack.c.l.b16 %v3457
    %v4124 = vunpack.c.h.b16 %v3457
    %v4125 = vunpack.c.l.b16 %v3458
    %v4126 = vunpack.c.h.b16 %v3458
    %v4127 = vunpack.c.l.b16 %v3459
    %v4128 = vunpack.c.h.b16 %v3459
    %v4129 = vunpack.c.l.b16 %v3460
    %v4130 = vunpack.c.h.b16 %v3460
    %v4131 = vunpack.c.l.b16 %v3461
    %v4132 = vunpack.c.h.b16 %v3461
    %v4133 = vunpack.c.l.b16 %v3462
    %v4134 = vunpack.c.h.b16 %v3462
    %v4135 = vunpack.c.l.b16 %v3463
    %v4136 = vunpack.c.h.b16 %v3463
    %v4137 = vunpack.c.l.b16 %v3464
    %v4138 = vunpack.c.h.b16 %v3464
    %v4139 = vunpack.c.l.b16 %v3465
    %v4140 = vunpack.c.h.b16 %v3465
    %v4141 = vunpack.c.l.b16 %v3466
    %v4142 = vunpack.c.h.b16 %v3466
    %v4143 = vunpack.c.l.b16 %v3467
    %v4144 = vunpack.c.h.b16 %v3467
    %v4145 = vunpack.c.l.b16 %v3468
    %v4146 = vunpack.c.h.b16 %v3468
    %v4147 = vunpack.c.l.b16 %v3469
    %v4148 = vunpack.c.h.b16 %v3469
    %v4149 = vunpack.c.l.b16 %v3470
    %v4150 = vunpack.c.h.b16 %v3470
    %v4151 = vunpack.c.l.b16 %v3471
    %v4152 = vunpack.c.h.b16 %v3471
    %v4153 = vunpack.c.l.b16 %v3472
    %v4154 = vunpack.c.h.b16 %v3472
    %v4155 = vunpack.c.l.b16 %v3473
    %v4156 = vunpack.c.h.b16 %v3473
    %v4157 = vunpack.c.l.b16 %v3474
    %v4158 = vunpack.c.h.b16 %v3474
    %v4159 = vunpack.c.l.b16 %v3475
    %v4160 = vunpack.c.h.b16 %v3475
    %v4161 = vunpack.c.l.b16 %v3476
    %v4162 = vunpack.c.h.b16 %v3476
    %v4163 = vunpack.c.l.b16 %v3477
    %v4164 = vunpack.c.h.b16 %v3477
    %v4165 = vunpack.c.l.b16 %v3478
    %v4166 = vunpack.c.h.b16 %v3478
    %v4167 = vunpack.c.l.b16 %v3479
    %v4168 = vunpack.c.h.b16 %v3479
    %v4169 = vpack.c.b16 %v4043, %v4041
    %v4170 = vpack.c.b16 %v4044, %v4042
    %v4171 = vpack.c.b16 %v4047, %v4045
    %v4172 = vpack.c.b16 %v4048, %v4046
    %v4173 = vpack.c.b16 %v4051, %v4049
    %v4174 = vpack.c.b16 %v4052, %v4050
    %v4175 = vpack.c.b16 %v4055, %v4053
    %v4176 = vpack.c.b16 %v4056, %v4054
    %v4177 = vpack.c.b16 %v4059, %v4057
    %v4178 = vpack.c.b16 %v4060, %v4058
    %v4179 = vpack.c.b16 %v4063, %v4061
    %v4180 = vpack.c.b16 %v4064, %v4062
    %v4181 = vpack.c.b16 %v4067, %v4065
    %v4182 = vpack.c.b16 %v4068, %v4066
    %v4183 = vpack.c.b16 %v4071, %v4069
    %v4184 = vpack.c.b16 %v4072, %v4070
    %v4185 = vpack.c.b16 %v4075, %v4073
    %v4186 = vpack.c.b16 %v4076, %v4074
    %v4187 = vpack.c.b16 %v4079, %v4077
    %v4188 = vpack.c.b16 %v4080, %v4078
    %v4189 = vpack.c.b16 %v4083, %v4081
    %v4190 = vpack.c.b16 %v4084, %v4082
    %v4191 = vpack.c.b16 %v4087, %v4085
    %v4192 = vpack.c.b16 %v4088, %v4086
    %v4193 = vpack.c.b16 %v4091, %v4089
    %v4194 = vpack.c.b16 %v4092, %v4090
    %v4195 = vpack.c.b16 %v4095, %v4093
    %v4196 = vpack.c.b16 %v4096, %v4094
    %v4197 = vpack.c.b16 %v4099, %v4097
    %v4198 = vpack.c.b16 %v4100, %v4098
    %v4199 = vpack.c.b16 %v4103, %v4101
    %v4200 = vpack.c.b16 %v4104, %v4102
    %v4201 = vpack.c.b16 %v4107, %v4105
    %v4202 = vpack.c.b16 %v4108, %v4106
    %v4203 = vpack.c.b16 %v4111, %v4109
    %v4204 = vpack.c.b16 %v4112, %v4110
    %v4205 = vpack.c.b16 %v4115, %v4113
    %v4206 = vpack.c.b16 %v4116, %v4114
    %v4207 = vpack.c.b16 %v4119, %v4117
    %v4208 = vpack.c.b16 %v4120, %v4118
    %v4209 = vpack.c.b16 %v4123, %v4121
    %v4210 = vpack.c.b16 %v4124, %v4122
    %v4211 = vpack.c.b16 %v4127, %v4125
    %v4212 = vpack.c.b16 %v4128, %v4126
    %v4213 = vpack.c.b16 %v4131, %v4129
    %v4214 = vpack.c.b16 %v4132, %v4130
    %v4215 = vpack.c.b16 %v4135, %v4133
    %v4216 = vpack.c.b16 %v4136, %v4134
    %v4217 = vpack.c.b16 %v4139, %v4137
    %v4218 = vpack.c.b16 %v4140, %v4138
    %v4219 = vpack.c.b16 %v4143, %v4141
    %v4220 = vpack.c.b16 %v4144, %v4142
    %v4221 = vpack.c.b16 %v4147, %v4145
    %v4222 = vpack.c.b16 %v4148, %v4146
    %v4223 = vpack.c.b16 %v4151, %v4149
    %v4224 = vpack.c.b16 %v4152, %v4150
    %v4225 = vpack.c.b16 %v4155, %v4153
    %v4226 = vpack.c.b16 %v4156, %v4154
    %v4227 = vpack.c.b16 %v4159, %v4157
    %v4228 = vpack.c.b16 %v4160, %v4158
    %v4229 = vpack.c.b16 %v4163, %v4161
    %v4230 = vpack.c.b16 %v4164, %v4162
    %v4231 = vpack.c.b16 %v4167, %v4165
    %v4232 = vpack.c.b16 %v4168, %v4166
    %4297 = vmatprep.subr.bf16.mxu0 %v4170
    %4298 = vmatpush1.bf16.msra.mxu0 %v4169
    %4299 = vmatprep.subr.bf16.mxu0 %v4172
    %4300 = vmatpush1.bf16.msra.mxu0 %v4171
    %4301 = vmatprep.subr.bf16.mxu0 %v4174
    %4302 = vmatpush1.bf16.msra.mxu0 %v4173
    %4303 = vmatprep.subr.bf16.mxu0 %v4176
    %4304 = vmatpush1.bf16.msra.mxu0 %v4175
    %4305 = vmatprep.subr.bf16.mxu0 %v4178
    %4306 = vmatpush1.bf16.msra.mxu0 %v4177
    %4307 = vmatprep.subr.bf16.mxu0 %v4180
    %4308 = vmatpush1.bf16.msra.mxu0 %v4179
    %4309 = vmatprep.subr.bf16.mxu0 %v4182
    %4310 = vmatpush1.bf16.msra.mxu0 %v4181
    %4311 = vmatprep.subr.bf16.mxu0 %v4184
    %4312 = vmatpush1.bf16.msra.mxu0 %v4183
    %4313 = vmatprep.subr.bf16.mxu0 %v4186
    %4314 = vmatpush1.bf16.msra.mxu0 %v4185
    %4315 = vmatprep.subr.bf16.mxu0 %v4188
    %4316 = vmatpush1.bf16.msra.mxu0 %v4187
    %4317 = vmatprep.subr.bf16.mxu0 %v4190
    %4318 = vmatpush1.bf16.msra.mxu0 %v4189
    %4319 = vmatprep.subr.bf16.mxu0 %v4192
    %4320 = vmatpush1.bf16.msra.mxu0 %v4191
    %4321 = vmatprep.subr.bf16.mxu0 %v4194
    %4322 = vmatpush1.bf16.msra.mxu0 %v4193
    %4323 = vmatprep.subr.bf16.mxu0 %v4196
    %4324 = vmatpush1.bf16.msra.mxu0 %v4195
    %4325 = vmatprep.subr.bf16.mxu0 %v4198
    %4326 = vmatpush1.bf16.msra.mxu0 %v4197
    %4327 = vmatprep.subr.bf16.mxu0 %v4200
    %4328 = vmatpush1.bf16.msra.mxu0 %v4199
    %4329 = vmatprep.mubr.bf16.mxu0 %v3963
    %4330 = vmatmul.mubr.bf16.gmra.mrb[0].mxu0 %v3962
    %v4331 = vpop.f32.mrb[0].mxu0
    %v4332 = vadd.f32 %v3970, %v4331
    %v4333 = vpop.f32.mrb[0].mxu0
    %v4334 = vadd.f32 %v3974, %v4333
    %v4335 = vpop.f32.mrb[0].mxu0
    %v4336 = vpop.f32.mrb[0].mxu0
    %4337 = vdwg.mxu0
    %4338 = vmatprep.subr.bf16.mxu0 %v4202
    %4339 = vmatpush1.bf16.msra.mxu0 %v4201
    %4340 = vmatprep.subr.bf16.mxu0 %v4204
    %4341 = vmatpush1.bf16.msra.mxu0 %v4203
    %4342 = vmatprep.subr.bf16.mxu0 %v4206
    %4343 = vmatpush1.bf16.msra.mxu0 %v4205
    %4344 = vmatprep.subr.bf16.mxu0 %v4208
    %4345 = vmatpush1.bf16.msra.mxu0 %v4207
    %4346 = vmatprep.subr.bf16.mxu0 %v4210
    %4347 = vmatpush1.bf16.msra.mxu0 %v4209
    %4348 = vmatprep.subr.bf16.mxu0 %v4212
    %4349 = vmatpush1.bf16.msra.mxu0 %v4211
    %4350 = vmatprep.subr.bf16.mxu0 %v4214
    %4351 = vmatpush1.bf16.msra.mxu0 %v4213
    %4352 = vmatprep.subr.bf16.mxu0 %v4216
    %4353 = vmatpush1.bf16.msra.mxu0 %v4215
    %4354 = vmatprep.subr.bf16.mxu0 %v4218
    %4355 = vmatpush1.bf16.msra.mxu0 %v4217
    %4356 = vmatprep.subr.bf16.mxu0 %v4220
    %4357 = vmatpush1.bf16.msra.mxu0 %v4219
    %4358 = vmatprep.subr.bf16.mxu0 %v4222
    %4359 = vmatpush1.bf16.msra.mxu0 %v4221
    %4360 = vmatprep.subr.bf16.mxu0 %v4224
    %4361 = vmatpush1.bf16.msra.mxu0 %v4223
    %4362 = vmatprep.subr.bf16.mxu0 %v4226
    %4363 = vmatpush1.bf16.msra.mxu0 %v4225
    %4364 = vmatprep.subr.bf16.mxu0 %v4228
    %4365 = vmatpush1.bf16.msra.mxu0 %v4227
    %4366 = vmatprep.subr.bf16.mxu0 %v4230
    %4367 = vmatpush1.bf16.msra.mxu0 %v4229
    %4368 = vmatprep.subr.bf16.mxu0 %v4232
    %4369 = vmatpush1.bf16.msra.mxu0 %v4231
    %4370 = vmatprep.mubr.bf16.mxu0 %v3965
    %4371 = vmatmul.mubr.bf16.gmra.mrb[0].mxu0 %v3964
    %v4372 = vpop.f32.mrb[0].mxu0
    %v4373 = vadd.f32 %v4332, %v4372
    %v4374 = vpop.f32.mrb[0].mxu0
    %v4375 = vadd.f32 %v4334, %v4374
    %v4376 = vpop.f32.mrb[0].mxu0
    %v4377 = vpop.f32.mrb[0].mxu0
    %4378 = vdwg.mxu0
    %v4379 = vadd.f32 %v3531, %v4373
    %v4380 = vadd.f32 %v3532, %v4375
    %v4381 = vsel %vm3485, %v4379, 0.0
    %v4382 = vsel %vm3485, %v4380, 0.0
    %v4383 = vadd.f32 %v4381, %v4382
    %4384 = vadd.xlane.f32.xlu0 %v4383
    %v4385 = vpop.xlane.xlu0 %4384
    %v4386 = vmul.f32 %v4385, %v3491
    %v4387 = vsub.f32 %v4379, %v4386
    %v4388 = vsub.f32 %v4380, %v4386
    %v4389 = vmul.f32 %v4387, %v4387
    %v4390 = vmul.f32 %v4388, %v4388
    %v4391 = vsel %vm3485, %v4389, 0.0
    %v4392 = vsel %vm3485, %v4390, 0.0
    %v4393 = vadd.f32 %v4391, %v4392
    %4394 = vadd.xlane.f32.xlu0 %v4393
    %v4395 = vpop.xlane.xlu0 %4394
    %v4396 = vmul.f32 %v4395, %v3491
    %v4397 = vadd.f32 %v4396, 1e-05
    %v4398 = vrsqrt.pop %v4397
    %v4399 = vmul.f32 %v4387, %v4398
    %v4400 = vmul.f32 %v4388, %v4398
    %v4402 = vlaneseq
    %v4403 = vshrl.u32 %v4402, 7
    %v4404 = vsub.s32 0, %v4403
    %v4405 = vrot.slane %v3481, %v4404
    %v4406 = vlaneseq
    %v4407 = vshrl.u32 %v4406, 7
    %v4408 = vsub.s32 1, %v4407
    %v4409 = vrot.slane %v3481, %v4408
    %v4412 = vmul.f32 %v4399, %v4405
    %v4413 = vmul.f32 %v4400, %v4409
    %v4415 = vlaneseq
    %v4416 = vshrl.u32 %v4415, 7
    %v4417 = vsub.s32 0, %v4416
    %v4418 = vrot.slane %v3482, %v4417
    %v4419 = vlaneseq
    %v4420 = vshrl.u32 %v4419, 7
    %v4421 = vsub.s32 1, %v4420
    %v4422 = vrot.slane %v3482, %v4421
    %v4425 = vadd.f32 %v4412, %v4418
    %v4426 = vadd.f32 %v4413, %v4422
    %s4427 = scalar_lea.vmem %s49, 768
    %v4428 = vld [vmem:[%s4427] sm:$0xff]
    %v4429 = vld [vmem:[%s4427 + $0x8] sm:$0xff]
    %v4430 = vld [vmem:[%s4427 + $0x10] sm:$0xff]
    %v4431 = vld [vmem:[%s4427 + $0x18] sm:$0xff]
    %v4432 = vld [vmem:[%s4427 + $0x20] sm:$0xff]
    %v4433 = vld [vmem:[%s4427 + $0x28] sm:$0xff]
    %v4434 = vld [vmem:[%s4427 + $0x30] sm:$0xff]
    %v4435 = vld [vmem:[%s4427 + $0x38] sm:$0xff]
    %v4436 = vld [vmem:[%s4427 + $0x40] sm:$0xff]
    %v4437 = vld [vmem:[%s4427 + $0x48] sm:$0xff]
    %v4438 = vld [vmem:[%s4427 + $0x50] sm:$0xff]
    %v4439 = vld [vmem:[%s4427 + $0x58] sm:$0xff]
    %v4440 = vld [vmem:[%s4427 + $0x60] sm:$0xff]
    %v4441 = vld [vmem:[%s4427 + $0x68] sm:$0xff]
    %v4442 = vld [vmem:[%s4427 + $0x70] sm:$0xff]
    %v4443 = vld [vmem:[%s4427 + $0x78] sm:$0xff]
    %v4444 = vld [vmem:[%s4427 + $0x80] sm:$0xff]
    %v4445 = vld [vmem:[%s4427 + $0x88] sm:$0xff]
    %v4446 = vld [vmem:[%s4427 + $0x90] sm:$0xff]
    %v4447 = vld [vmem:[%s4427 + $0x98] sm:$0xff]
    %v4448 = vld [vmem:[%s4427 + $0xa0] sm:$0xff]
    %v4449 = vld [vmem:[%s4427 + $0xa8] sm:$0xff]
    %v4450 = vld [vmem:[%s4427 + $0xb0] sm:$0xff]
    %v4451 = vld [vmem:[%s4427 + $0xb8] sm:$0xff]
    %v4452 = vld [vmem:[%s4427 + $0xc0] sm:$0xff]
    %v4453 = vld [vmem:[%s4427 + $0xc8] sm:$0xff]
    %v4454 = vld [vmem:[%s4427 + $0xd0] sm:$0xff]
    %v4455 = vld [vmem:[%s4427 + $0xd8] sm:$0xff]
    %v4456 = vld [vmem:[%s4427 + $0xe0] sm:$0xff]
    %v4457 = vld [vmem:[%s4427 + $0xe8] sm:$0xff]
    %v4458 = vld [vmem:[%s4427 + $0xf0] sm:$0xff]
    %v4459 = vld [vmem:[%s4427 + $0xf8] sm:$0xff]
    %v4460 = vld [vmem:[%s4427 + $0x100] sm:$0xff]
    %v4461 = vld [vmem:[%s4427 + $0x108] sm:$0xff]
    %v4462 = vld [vmem:[%s4427 + $0x110] sm:$0xff]
    %v4463 = vld [vmem:[%s4427 + $0x118] sm:$0xff]
    %v4464 = vld [vmem:[%s4427 + $0x120] sm:$0xff]
    %v4465 = vld [vmem:[%s4427 + $0x128] sm:$0xff]
    %v4466 = vld [vmem:[%s4427 + $0x130] sm:$0xff]
    %v4467 = vld [vmem:[%s4427 + $0x138] sm:$0xff]
    %v4468 = vld [vmem:[%s4427 + $0x140] sm:$0xff]
    %v4469 = vld [vmem:[%s4427 + $0x148] sm:$0xff]
    %v4470 = vld [vmem:[%s4427 + $0x150] sm:$0xff]
    %v4471 = vld [vmem:[%s4427 + $0x158] sm:$0xff]
    %v4472 = vld [vmem:[%s4427 + $0x160] sm:$0xff]
    %v4473 = vld [vmem:[%s4427 + $0x168] sm:$0xff]
    %v4474 = vld [vmem:[%s4427 + $0x170] sm:$0xff]
    %v4475 = vld [vmem:[%s4427 + $0x178] sm:$0xff]
    %v4476 = vld [vmem:[%s4427 + $0x180] sm:$0xff]
    %v4477 = vld [vmem:[%s4427 + $0x188] sm:$0xff]
    %v4478 = vld [vmem:[%s4427 + $0x190] sm:$0xff]
    %v4479 = vld [vmem:[%s4427 + $0x198] sm:$0xff]
    %v4480 = vld [vmem:[%s4427 + $0x1a0] sm:$0xff]
    %v4481 = vld [vmem:[%s4427 + $0x1a8] sm:$0xff]
    %v4482 = vld [vmem:[%s4427 + $0x1b0] sm:$0xff]
    %v4483 = vld [vmem:[%s4427 + $0x1b8] sm:$0xff]
    %v4484 = vld [vmem:[%s4427 + $0x1c0] sm:$0xff]
    %v4485 = vld [vmem:[%s4427 + $0x1c8] sm:$0xff]
    %v4486 = vld [vmem:[%s4427 + $0x1d0] sm:$0xff]
    %v4487 = vld [vmem:[%s4427 + $0x1d8] sm:$0xff]
    %v4488 = vld [vmem:[%s4427 + $0x1e0] sm:$0xff]
    %v4489 = vld [vmem:[%s4427 + $0x1e8] sm:$0xff]
    %v4490 = vld [vmem:[%s4427 + $0x1f0] sm:$0xff]
    %v4491 = vld [vmem:[%s4427 + $0x1f8] sm:$0xff]
    %v4492 = vld [vmem:[%s4427 + $0x200] sm:$0xff]
    %v4493 = vld [vmem:[%s4427 + $0x208] sm:$0xff]
    %v4494 = vld [vmem:[%s4427 + $0x210] sm:$0xff]
    %v4495 = vld [vmem:[%s4427 + $0x218] sm:$0xff]
    %v4496 = vld [vmem:[%s4427 + $0x220] sm:$0xff]
    %v4497 = vld [vmem:[%s4427 + $0x228] sm:$0xff]
    %v4498 = vld [vmem:[%s4427 + $0x230] sm:$0xff]
    %v4499 = vld [vmem:[%s4427 + $0x238] sm:$0xff]
    %v4500 = vld [vmem:[%s4427 + $0x240] sm:$0xff]
    %v4501 = vld [vmem:[%s4427 + $0x248] sm:$0xff]
    %v4502 = vld [vmem:[%s4427 + $0x250] sm:$0xff]
    %v4503 = vld [vmem:[%s4427 + $0x258] sm:$0xff]
    %v4504 = vld [vmem:[%s4427 + $0x260] sm:$0xff]
    %v4505 = vld [vmem:[%s4427 + $0x268] sm:$0xff]
    %v4506 = vld [vmem:[%s4427 + $0x270] sm:$0xff]
    %v4507 = vld [vmem:[%s4427 + $0x278] sm:$0xff]
    %v4508 = vld [vmem:[%s4427 + $0x280] sm:$0xff]
    %v4509 = vld [vmem:[%s4427 + $0x288] sm:$0xff]
    %v4510 = vld [vmem:[%s4427 + $0x290] sm:$0xff]
    %v4511 = vld [vmem:[%s4427 + $0x298] sm:$0xff]
    %v4512 = vld [vmem:[%s4427 + $0x2a0] sm:$0xff]
    %v4513 = vld [vmem:[%s4427 + $0x2a8] sm:$0xff]
    %v4514 = vld [vmem:[%s4427 + $0x2b0] sm:$0xff]
    %v4515 = vld [vmem:[%s4427 + $0x2b8] sm:$0xff]
    %v4516 = vld [vmem:[%s4427 + $0x2c0] sm:$0xff]
    %v4517 = vld [vmem:[%s4427 + $0x2c8] sm:$0xff]
    %v4518 = vld [vmem:[%s4427 + $0x2d0] sm:$0xff]
    %v4519 = vld [vmem:[%s4427 + $0x2d8] sm:$0xff]
    %v4520 = vld [vmem:[%s4427 + $0x2e0] sm:$0xff]
    %v4521 = vld [vmem:[%s4427 + $0x2e8] sm:$0xff]
    %v4522 = vld [vmem:[%s4427 + $0x2f0] sm:$0xff]
    %v4523 = vld [vmem:[%s4427 + $0x2f8] sm:$0xff]
    %s4524 = scalar_lea.vmem %s47, 6
    %v4525 = vld [vmem:[%s4524] sm:$0x3f]
    %v4526 = vpack.c.bf16 %v4425, %v4425
    %v4527 = vpack.c.bf16 %v4426, %v4426
    %v4529 = vlaneseq
    %v4530 = vshrl.u32 %v4529, 7
    %v4531 = vsub.s32 0, %v4530
    %v4532 = vrot.slane %v4525, %v4531
    %v4533 = vlaneseq
    %v4534 = vshrl.u32 %v4533, 7
    %v4535 = vsub.s32 1, %v4534
    %v4536 = vrot.slane %v4525, %v4535
    %v4537 = vlaneseq
    %v4538 = vshrl.u32 %v4537, 7
    %v4539 = vsub.s32 2, %v4538
    %v4540 = vrot.slane %v4525, %v4539
    %v4541 = vlaneseq
    %v4542 = vshrl.u32 %v4541, 7
    %v4543 = vsub.s32 3, %v4542
    %v4544 = vrot.slane %v4525, %v4543
    %v4545 = vlaneseq
    %v4546 = vshrl.u32 %v4545, 7
    %v4547 = vsub.s32 4, %v4546
    %v4548 = vrot.slane %v4525, %v4547
    %v4549 = vlaneseq
    %v4550 = vshrl.u32 %v4549, 7
    %v4551 = vsub.s32 5, %v4550
    %v4552 = vrot.slane %v4525, %v4551
    %v4655 = vunpack.c.l.b16 %v4428
    %v4656 = vunpack.c.h.b16 %v4428
    %v4657 = vunpack.c.l.b16 %v4429
    %v4658 = vunpack.c.h.b16 %v4429
    %v4659 = vunpack.c.l.b16 %v4430
    %v4660 = vunpack.c.h.b16 %v4430
    %v4661 = vunpack.c.l.b16 %v4431
    %v4662 = vunpack.c.h.b16 %v4431
    %v4663 = vunpack.c.l.b16 %v4432
    %v4664 = vunpack.c.h.b16 %v4432
    %v4665 = vunpack.c.l.b16 %v4433
    %v4666 = vunpack.c.h.b16 %v4433
    %v4667 = vunpack.c.l.b16 %v4434
    %v4668 = vunpack.c.h.b16 %v4434
    %v4669 = vunpack.c.l.b16 %v4435
    %v4670 = vunpack.c.h.b16 %v4435
    %v4671 = vunpack.c.l.b16 %v4436
    %v4672 = vunpack.c.h.b16 %v4436
    %v4673 = vunpack.c.l.b16 %v4437
    %v4674 = vunpack.c.h.b16 %v4437
    %v4675 = vunpack.c.l.b16 %v4438
    %v4676 = vunpack.c.h.b16 %v4438
    %v4677 = vunpack.c.l.b16 %v4439
    %v4678 = vunpack.c.h.b16 %v4439
    %v4679 = vunpack.c.l.b16 %v4440
    %v4680 = vunpack.c.h.b16 %v4440
    %v4681 = vunpack.c.l.b16 %v4441
    %v4682 = vunpack.c.h.b16 %v4441
    %v4683 = vunpack.c.l.b16 %v4442
    %v4684 = vunpack.c.h.b16 %v4442
    %v4685 = vunpack.c.l.b16 %v4443
    %v4686 = vunpack.c.h.b16 %v4443
    %v4687 = vunpack.c.l.b16 %v4444
    %v4688 = vunpack.c.h.b16 %v4444
    %v4689 = vunpack.c.l.b16 %v4445
    %v4690 = vunpack.c.h.b16 %v4445
    %v4691 = vunpack.c.l.b16 %v4446
    %v4692 = vunpack.c.h.b16 %v4446
    %v4693 = vunpack.c.l.b16 %v4447
    %v4694 = vunpack.c.h.b16 %v4447
    %v4695 = vunpack.c.l.b16 %v4448
    %v4696 = vunpack.c.h.b16 %v4448
    %v4697 = vunpack.c.l.b16 %v4449
    %v4698 = vunpack.c.h.b16 %v4449
    %v4699 = vunpack.c.l.b16 %v4450
    %v4700 = vunpack.c.h.b16 %v4450
    %v4701 = vunpack.c.l.b16 %v4451
    %v4702 = vunpack.c.h.b16 %v4451
    %v4703 = vunpack.c.l.b16 %v4452
    %v4704 = vunpack.c.h.b16 %v4452
    %v4705 = vunpack.c.l.b16 %v4453
    %v4706 = vunpack.c.h.b16 %v4453
    %v4707 = vunpack.c.l.b16 %v4454
    %v4708 = vunpack.c.h.b16 %v4454
    %v4709 = vunpack.c.l.b16 %v4455
    %v4710 = vunpack.c.h.b16 %v4455
    %v4711 = vunpack.c.l.b16 %v4456
    %v4712 = vunpack.c.h.b16 %v4456
    %v4713 = vunpack.c.l.b16 %v4457
    %v4714 = vunpack.c.h.b16 %v4457
    %v4715 = vunpack.c.l.b16 %v4458
    %v4716 = vunpack.c.h.b16 %v4458
    %v4717 = vunpack.c.l.b16 %v4459
    %v4718 = vunpack.c.h.b16 %v4459
    %v4719 = vunpack.c.l.b16 %v4460
    %v4720 = vunpack.c.h.b16 %v4460
    %v4721 = vunpack.c.l.b16 %v4461
    %v4722 = vunpack.c.h.b16 %v4461
    %v4723 = vunpack.c.l.b16 %v4462
    %v4724 = vunpack.c.h.b16 %v4462
    %v4725 = vunpack.c.l.b16 %v4463
    %v4726 = vunpack.c.h.b16 %v4463
    %v4727 = vunpack.c.l.b16 %v4464
    %v4728 = vunpack.c.h.b16 %v4464
    %v4729 = vunpack.c.l.b16 %v4465
    %v4730 = vunpack.c.h.b16 %v4465
    %v4731 = vunpack.c.l.b16 %v4466
    %v4732 = vunpack.c.h.b16 %v4466
    %v4733 = vunpack.c.l.b16 %v4467
    %v4734 = vunpack.c.h.b16 %v4467
    %v4735 = vunpack.c.l.b16 %v4468
    %v4736 = vunpack.c.h.b16 %v4468
    %v4737 = vunpack.c.l.b16 %v4469
    %v4738 = vunpack.c.h.b16 %v4469
    %v4739 = vunpack.c.l.b16 %v4470
    %v4740 = vunpack.c.h.b16 %v4470
    %v4741 = vunpack.c.l.b16 %v4471
    %v4742 = vunpack.c.h.b16 %v4471
    %v4743 = vunpack.c.l.b16 %v4472
    %v4744 = vunpack.c.h.b16 %v4472
    %v4745 = vunpack.c.l.b16 %v4473
    %v4746 = vunpack.c.h.b16 %v4473
    %v4747 = vunpack.c.l.b16 %v4474
    %v4748 = vunpack.c.h.b16 %v4474
    %v4749 = vunpack.c.l.b16 %v4475
    %v4750 = vunpack.c.h.b16 %v4475
    %v4751 = vunpack.c.l.b16 %v4476
    %v4752 = vunpack.c.h.b16 %v4476
    %v4753 = vunpack.c.l.b16 %v4477
    %v4754 = vunpack.c.h.b16 %v4477
    %v4755 = vunpack.c.l.b16 %v4478
    %v4756 = vunpack.c.h.b16 %v4478
    %v4757 = vunpack.c.l.b16 %v4479
    %v4758 = vunpack.c.h.b16 %v4479
    %v4759 = vunpack.c.l.b16 %v4480
    %v4760 = vunpack.c.h.b16 %v4480
    %v4761 = vunpack.c.l.b16 %v4481
    %v4762 = vunpack.c.h.b16 %v4481
    %v4763 = vunpack.c.l.b16 %v4482
    %v4764 = vunpack.c.h.b16 %v4482
    %v4765 = vunpack.c.l.b16 %v4483
    %v4766 = vunpack.c.h.b16 %v4483
    %v4767 = vunpack.c.l.b16 %v4484
    %v4768 = vunpack.c.h.b16 %v4484
    %v4769 = vunpack.c.l.b16 %v4485
    %v4770 = vunpack.c.h.b16 %v4485
    %v4771 = vunpack.c.l.b16 %v4486
    %v4772 = vunpack.c.h.b16 %v4486
    %v4773 = vunpack.c.l.b16 %v4487
    %v4774 = vunpack.c.h.b16 %v4487
    %v4775 = vunpack.c.l.b16 %v4488
    %v4776 = vunpack.c.h.b16 %v4488
    %v4777 = vunpack.c.l.b16 %v4489
    %v4778 = vunpack.c.h.b16 %v4489
    %v4779 = vunpack.c.l.b16 %v4490
    %v4780 = vunpack.c.h.b16 %v4490
    %v4781 = vunpack.c.l.b16 %v4491
    %v4782 = vunpack.c.h.b16 %v4491
    %v4783 = vunpack.c.l.b16 %v4492
    %v4784 = vunpack.c.h.b16 %v4492
    %v4785 = vunpack.c.l.b16 %v4493
    %v4786 = vunpack.c.h.b16 %v4493
    %v4787 = vunpack.c.l.b16 %v4494
    %v4788 = vunpack.c.h.b16 %v4494
    %v4789 = vunpack.c.l.b16 %v4495
    %v4790 = vunpack.c.h.b16 %v4495
    %v4791 = vunpack.c.l.b16 %v4496
    %v4792 = vunpack.c.h.b16 %v4496
    %v4793 = vunpack.c.l.b16 %v4497
    %v4794 = vunpack.c.h.b16 %v4497
    %v4795 = vunpack.c.l.b16 %v4498
    %v4796 = vunpack.c.h.b16 %v4498
    %v4797 = vunpack.c.l.b16 %v4499
    %v4798 = vunpack.c.h.b16 %v4499
    %v4799 = vunpack.c.l.b16 %v4500
    %v4800 = vunpack.c.h.b16 %v4500
    %v4801 = vunpack.c.l.b16 %v4501
    %v4802 = vunpack.c.h.b16 %v4501
    %v4803 = vunpack.c.l.b16 %v4502
    %v4804 = vunpack.c.h.b16 %v4502
    %v4805 = vunpack.c.l.b16 %v4503
    %v4806 = vunpack.c.h.b16 %v4503
    %v4807 = vunpack.c.l.b16 %v4504
    %v4808 = vunpack.c.h.b16 %v4504
    %v4809 = vunpack.c.l.b16 %v4505
    %v4810 = vunpack.c.h.b16 %v4505
    %v4811 = vunpack.c.l.b16 %v4506
    %v4812 = vunpack.c.h.b16 %v4506
    %v4813 = vunpack.c.l.b16 %v4507
    %v4814 = vunpack.c.h.b16 %v4507
    %v4815 = vunpack.c.l.b16 %v4508
    %v4816 = vunpack.c.h.b16 %v4508
    %v4817 = vunpack.c.l.b16 %v4509
    %v4818 = vunpack.c.h.b16 %v4509
    %v4819 = vunpack.c.l.b16 %v4510
    %v4820 = vunpack.c.h.b16 %v4510
    %v4821 = vunpack.c.l.b16 %v4511
    %v4822 = vunpack.c.h.b16 %v4511
    %v4823 = vunpack.c.l.b16 %v4512
    %v4824 = vunpack.c.h.b16 %v4512
    %v4825 = vunpack.c.l.b16 %v4513
    %v4826 = vunpack.c.h.b16 %v4513
    %v4827 = vunpack.c.l.b16 %v4514
    %v4828 = vunpack.c.h.b16 %v4514
    %v4829 = vunpack.c.l.b16 %v4515
    %v4830 = vunpack.c.h.b16 %v4515
    %v4831 = vunpack.c.l.b16 %v4516
    %v4832 = vunpack.c.h.b16 %v4516
    %v4833 = vunpack.c.l.b16 %v4517
    %v4834 = vunpack.c.h.b16 %v4517
    %v4835 = vunpack.c.l.b16 %v4518
    %v4836 = vunpack.c.h.b16 %v4518
    %v4837 = vunpack.c.l.b16 %v4519
    %v4838 = vunpack.c.h.b16 %v4519
    %v4839 = vunpack.c.l.b16 %v4520
    %v4840 = vunpack.c.h.b16 %v4520
    %v4841 = vunpack.c.l.b16 %v4521
    %v4842 = vunpack.c.h.b16 %v4521
    %v4843 = vunpack.c.l.b16 %v4522
    %v4844 = vunpack.c.h.b16 %v4522
    %v4845 = vunpack.c.l.b16 %v4523
    %v4846 = vunpack.c.h.b16 %v4523
    %v4847 = vpack.c.b16 %v4661, %v4655
    %v4848 = vpack.c.b16 %v4662, %v4656
    %v4849 = vpack.c.b16 %v4663, %v4657
    %v4850 = vpack.c.b16 %v4664, %v4658
    %v4851 = vpack.c.b16 %v4665, %v4659
    %v4852 = vpack.c.b16 %v4666, %v4660
    %v4853 = vpack.c.b16 %v4673, %v4667
    %v4854 = vpack.c.b16 %v4674, %v4668
    %v4855 = vpack.c.b16 %v4675, %v4669
    %v4856 = vpack.c.b16 %v4676, %v4670
    %v4857 = vpack.c.b16 %v4677, %v4671
    %v4858 = vpack.c.b16 %v4678, %v4672
    %v4859 = vpack.c.b16 %v4685, %v4679
    %v4860 = vpack.c.b16 %v4686, %v4680
    %v4861 = vpack.c.b16 %v4687, %v4681
    %v4862 = vpack.c.b16 %v4688, %v4682
    %v4863 = vpack.c.b16 %v4689, %v4683
    %v4864 = vpack.c.b16 %v4690, %v4684
    %v4865 = vpack.c.b16 %v4697, %v4691
    %v4866 = vpack.c.b16 %v4698, %v4692
    %v4867 = vpack.c.b16 %v4699, %v4693
    %v4868 = vpack.c.b16 %v4700, %v4694
    %v4869 = vpack.c.b16 %v4701, %v4695
    %v4870 = vpack.c.b16 %v4702, %v4696
    %v4871 = vpack.c.b16 %v4709, %v4703
    %v4872 = vpack.c.b16 %v4710, %v4704
    %v4873 = vpack.c.b16 %v4711, %v4705
    %v4874 = vpack.c.b16 %v4712, %v4706
    %v4875 = vpack.c.b16 %v4713, %v4707
    %v4876 = vpack.c.b16 %v4714, %v4708
    %v4877 = vpack.c.b16 %v4721, %v4715
    %v4878 = vpack.c.b16 %v4722, %v4716
    %v4879 = vpack.c.b16 %v4723, %v4717
    %v4880 = vpack.c.b16 %v4724, %v4718
    %v4881 = vpack.c.b16 %v4725, %v4719
    %v4882 = vpack.c.b16 %v4726, %v4720
    %v4883 = vpack.c.b16 %v4733, %v4727
    %v4884 = vpack.c.b16 %v4734, %v4728
    %v4885 = vpack.c.b16 %v4735, %v4729
    %v4886 = vpack.c.b16 %v4736, %v4730
    %v4887 = vpack.c.b16 %v4737, %v4731
    %v4888 = vpack.c.b16 %v4738, %v4732
    %v4889 = vpack.c.b16 %v4745, %v4739
    %v4890 = vpack.c.b16 %v4746, %v4740
    %v4891 = vpack.c.b16 %v4747, %v4741
    %v4892 = vpack.c.b16 %v4748, %v4742
    %v4893 = vpack.c.b16 %v4749, %v4743
    %v4894 = vpack.c.b16 %v4750, %v4744
    %v4895 = vpack.c.b16 %v4757, %v4751
    %v4896 = vpack.c.b16 %v4758, %v4752
    %v4897 = vpack.c.b16 %v4759, %v4753
    %v4898 = vpack.c.b16 %v4760, %v4754
    %v4899 = vpack.c.b16 %v4761, %v4755
    %v4900 = vpack.c.b16 %v4762, %v4756
    %v4901 = vpack.c.b16 %v4769, %v4763
    %v4902 = vpack.c.b16 %v4770, %v4764
    %v4903 = vpack.c.b16 %v4771, %v4765
    %v4904 = vpack.c.b16 %v4772, %v4766
    %v4905 = vpack.c.b16 %v4773, %v4767
    %v4906 = vpack.c.b16 %v4774, %v4768
    %v4907 = vpack.c.b16 %v4781, %v4775
    %v4908 = vpack.c.b16 %v4782, %v4776
    %v4909 = vpack.c.b16 %v4783, %v4777
    %v4910 = vpack.c.b16 %v4784, %v4778
    %v4911 = vpack.c.b16 %v4785, %v4779
    %v4912 = vpack.c.b16 %v4786, %v4780
    %v4913 = vpack.c.b16 %v4793, %v4787
    %v4914 = vpack.c.b16 %v4794, %v4788
    %v4915 = vpack.c.b16 %v4795, %v4789
    %v4916 = vpack.c.b16 %v4796, %v4790
    %v4917 = vpack.c.b16 %v4797, %v4791
    %v4918 = vpack.c.b16 %v4798, %v4792
    %v4919 = vpack.c.b16 %v4805, %v4799
    %v4920 = vpack.c.b16 %v4806, %v4800
    %v4921 = vpack.c.b16 %v4807, %v4801
    %v4922 = vpack.c.b16 %v4808, %v4802
    %v4923 = vpack.c.b16 %v4809, %v4803
    %v4924 = vpack.c.b16 %v4810, %v4804
    %v4925 = vpack.c.b16 %v4817, %v4811
    %v4926 = vpack.c.b16 %v4818, %v4812
    %v4927 = vpack.c.b16 %v4819, %v4813
    %v4928 = vpack.c.b16 %v4820, %v4814
    %v4929 = vpack.c.b16 %v4821, %v4815
    %v4930 = vpack.c.b16 %v4822, %v4816
    %v4931 = vpack.c.b16 %v4829, %v4823
    %v4932 = vpack.c.b16 %v4830, %v4824
    %v4933 = vpack.c.b16 %v4831, %v4825
    %v4934 = vpack.c.b16 %v4832, %v4826
    %v4935 = vpack.c.b16 %v4833, %v4827
    %v4936 = vpack.c.b16 %v4834, %v4828
    %v4937 = vpack.c.b16 %v4841, %v4835
    %v4938 = vpack.c.b16 %v4842, %v4836
    %v4939 = vpack.c.b16 %v4843, %v4837
    %v4940 = vpack.c.b16 %v4844, %v4838
    %v4941 = vpack.c.b16 %v4845, %v4839
    %v4942 = vpack.c.b16 %v4846, %v4840
    %5039 = vmatprep.subr.bf16.mxu0 %v4848
    %5040 = vmatpush1.bf16.msra.mxu0 %v4847
    %5041 = vmatprep.subr.bf16.mxu0 %v4854
    %5042 = vmatpush1.bf16.msra.mxu0 %v4853
    %5043 = vmatprep.subr.bf16.mxu0 %v4860
    %5044 = vmatpush1.bf16.msra.mxu0 %v4859
    %5045 = vmatprep.subr.bf16.mxu0 %v4866
    %5046 = vmatpush1.bf16.msra.mxu0 %v4865
    %5047 = vmatprep.subr.bf16.mxu0 %v4872
    %5048 = vmatpush1.bf16.msra.mxu0 %v4871
    %5049 = vmatprep.subr.bf16.mxu0 %v4878
    %5050 = vmatpush1.bf16.msra.mxu0 %v4877
    %5051 = vmatprep.subr.bf16.mxu0 %v4884
    %5052 = vmatpush1.bf16.msra.mxu0 %v4883
    %5053 = vmatprep.subr.bf16.mxu0 %v4890
    %5054 = vmatpush1.bf16.msra.mxu0 %v4889
    %5055 = vmatprep.subr.bf16.mxu0 %v4896
    %5056 = vmatpush1.bf16.msra.mxu0 %v4895
    %5057 = vmatprep.subr.bf16.mxu0 %v4902
    %5058 = vmatpush1.bf16.msra.mxu0 %v4901
    %5059 = vmatprep.subr.bf16.mxu0 %v4908
    %5060 = vmatpush1.bf16.msra.mxu0 %v4907
    %5061 = vmatprep.subr.bf16.mxu0 %v4914
    %5062 = vmatpush1.bf16.msra.mxu0 %v4913
    %5063 = vmatprep.subr.bf16.mxu0 %v4920
    %5064 = vmatpush1.bf16.msra.mxu0 %v4919
    %5065 = vmatprep.subr.bf16.mxu0 %v4926
    %5066 = vmatpush1.bf16.msra.mxu0 %v4925
    %5067 = vmatprep.subr.bf16.mxu0 %v4932
    %5068 = vmatpush1.bf16.msra.mxu0 %v4931
    %5069 = vmatprep.subr.bf16.mxu0 %v4938
    %5070 = vmatpush1.bf16.msra.mxu0 %v4937
    %5071 = vmatprep.mubr.bf16.mxu0 %v4527
    %5072 = vmatmul.mubr.bf16.gmra.mrb[0].mxu0 %v4526
    %v5073 = vpop.f32.mrb[0].mxu0
    %v5074 = vadd.f32 %v4532, %v5073
    %v5075 = vpop.f32.mrb[0].mxu0
    %v5076 = vadd.f32 %v4536, %v5075
    %v5077 = vpop.f32.mrb[0].mxu0
    %v5078 = vpop.f32.mrb[0].mxu0
    %5079 = vdwg.mxu0
    %5080 = vmatprep.subr.bf16.mxu0 %v4850
    %5081 = vmatpush1.bf16.msra.mxu0 %v4849
    %5082 = vmatprep.subr.bf16.mxu0 %v4856
    %5083 = vmatpush1.bf16.msra.mxu0 %v4855
    %5084 = vmatprep.subr.bf16.mxu0 %v4862
    %5085 = vmatpush1.bf16.msra.mxu0 %v4861
    %5086 = vmatprep.subr.bf16.mxu0 %v4868
    %5087 = vmatpush1.bf16.msra.mxu0 %v4867
    %5088 = vmatprep.subr.bf16.mxu0 %v4874
    %5089 = vmatpush1.bf16.msra.mxu0 %v4873
    %5090 = vmatprep.subr.bf16.mxu0 %v4880
    %5091 = vmatpush1.bf16.msra.mxu0 %v4879
    %5092 = vmatprep.subr.bf16.mxu0 %v4886
    %5093 = vmatpush1.bf16.msra.mxu0 %v4885
    %5094 = vmatprep.subr.bf16.mxu0 %v4892
    %5095 = vmatpush1.bf16.msra.mxu0 %v4891
    %5096 = vmatprep.subr.bf16.mxu0 %v4898
    %5097 = vmatpush1.bf16.msra.mxu0 %v4897
    %5098 = vmatprep.subr.bf16.mxu0 %v4904
    %5099 = vmatpush1.bf16.msra.mxu0 %v4903
    %5100 = vmatprep.subr.bf16.mxu0 %v4910
    %5101 = vmatpush1.bf16.msra.mxu0 %v4909
    %5102 = vmatprep.subr.bf16.mxu0 %v4916
    %5103 = vmatpush1.bf16.msra.mxu0 %v4915
    %5104 = vmatprep.subr.bf16.mxu0 %v4922
    %5105 = vmatpush1.bf16.msra.mxu0 %v4921
    %5106 = vmatprep.subr.bf16.mxu0 %v4928
    %5107 = vmatpush1.bf16.msra.mxu0 %v4927
    %5108 = vmatprep.subr.bf16.mxu0 %v4934
    %5109 = vmatpush1.bf16.msra.mxu0 %v4933
    %5110 = vmatprep.subr.bf16.mxu0 %v4940
    %5111 = vmatpush1.bf16.msra.mxu0 %v4939
    %5112 = vmatprep.mubr.bf16.mxu0 %v4527
    %5113 = vmatmul.mubr.bf16.gmra.mrb[0].mxu0 %v4526
    %v5114 = vpop.f32.mrb[0].mxu0
    %v5115 = vadd.f32 %v4540, %v5114
    %v5116 = vpop.f32.mrb[0].mxu0
    %v5117 = vadd.f32 %v4544, %v5116
    %v5118 = vpop.f32.mrb[0].mxu0
    %v5119 = vpop.f32.mrb[0].mxu0
    %5120 = vdwg.mxu0
    %5121 = vmatprep.subr.bf16.mxu0 %v4852
    %5122 = vmatpush1.bf16.msra.mxu0 %v4851
    %5123 = vmatprep.subr.bf16.mxu0 %v4858
    %5124 = vmatpush1.bf16.msra.mxu0 %v4857
    %5125 = vmatprep.subr.bf16.mxu0 %v4864
    %5126 = vmatpush1.bf16.msra.mxu0 %v4863
    %5127 = vmatprep.subr.bf16.mxu0 %v4870
    %5128 = vmatpush1.bf16.msra.mxu0 %v4869
    %5129 = vmatprep.subr.bf16.mxu0 %v4876
    %5130 = vmatpush1.bf16.msra.mxu0 %v4875
    %5131 = vmatprep.subr.bf16.mxu0 %v4882
    %5132 = vmatpush1.bf16.msra.mxu0 %v4881
    %5133 = vmatprep.subr.bf16.mxu0 %v4888
    %5134 = vmatpush1.bf16.msra.mxu0 %v4887
    %5135 = vmatprep.subr.bf16.mxu0 %v4894
    %5136 = vmatpush1.bf16.msra.mxu0 %v4893
    %5137 = vmatprep.subr.bf16.mxu0 %v4900
    %5138 = vmatpush1.bf16.msra.mxu0 %v4899
    %5139 = vmatprep.subr.bf16.mxu0 %v4906
    %5140 = vmatpush1.bf16.msra.mxu0 %v4905
    %5141 = vmatprep.subr.bf16.mxu0 %v4912
    %5142 = vmatpush1.bf16.msra.mxu0 %v4911
    %5143 = vmatprep.subr.bf16.mxu0 %v4918
    %5144 = vmatpush1.bf16.msra.mxu0 %v4917
    %5145 = vmatprep.subr.bf16.mxu0 %v4924
    %5146 = vmatpush1.bf16.msra.mxu0 %v4923
    %5147 = vmatprep.subr.bf16.mxu0 %v4930
    %5148 = vmatpush1.bf16.msra.mxu0 %v4929
    %5149 = vmatprep.subr.bf16.mxu0 %v4936
    %5150 = vmatpush1.bf16.msra.mxu0 %v4935
    %5151 = vmatprep.subr.bf16.mxu0 %v4942
    %5152 = vmatpush1.bf16.msra.mxu0 %v4941
    %5153 = vmatprep.mubr.bf16.mxu0 %v4527
    %5154 = vmatmul.mubr.bf16.gmra.mrb[0].mxu0 %v4526
    %v5155 = vpop.f32.mrb[0].mxu0
    %v5156 = vadd.f32 %v4548, %v5155
    %v5157 = vpop.f32.mrb[0].mxu0
    %v5158 = vadd.f32 %v4552, %v5157
    %v5159 = vpop.f32.mrb[0].mxu0
    %v5160 = vpop.f32.mrb[0].mxu0
    %5161 = vdwg.mxu0
    %v5162 = vlaneseq
    %v5163 = vshrl.u32 %v5162, 7
    %v5164 = vsub.s32 0, %v5163
    %v5165 = vrot.slane %v5115, %v5164
    %v5166 = vlaneseq
    %v5167 = vshrl.u32 %v5166, 7
    %v5168 = vsub.s32 0, %v5167
    %v5169 = vrot.slane %v5117, %v5168
    %v5170 = vmul.f32 %v5074, %v5165
    %v5171 = vmul.f32 %v5076, %v5169
    %5172 = vmatprep.subr.mxu0 0.0
    %5173 = vmatpush1.msra.mxu0 %v199
    %5174 = vmatprep.subr.mxu0 0.0
    %5175 = vmatpush1.msra.mxu0 %v200
    %5176 = vmatprep.subr.mxu0 0.0
    %5177 = vmatpush1.msra.mxu0 %v201
    %5178 = vmatprep.subr.mxu0 0.0
    %5179 = vmatpush1.msra.mxu0 %v202
    %5180 = vmatprep.subr.mxu0 0.0
    %5181 = vmatpush1.msra.mxu0 %v203
    %5182 = vmatprep.subr.mxu0 0.0
    %5183 = vmatpush1.msra.mxu0 %v204
    %5184 = vmatprep.subr.mxu0 0.0
    %5185 = vmatpush1.msra.mxu0 %v205
    %5186 = vmatprep.subr.mxu0 0.0
    %5187 = vmatpush1.msra.mxu0 %v206
    %5188 = vmatprep.subr.mxu0 0.0
    %5189 = vmatpush1.msra.mxu0 %v207
    %5190 = vmatprep.subr.mxu0 0.0
    %5191 = vmatpush1.msra.mxu0 %v208
    %5192 = vmatprep.subr.mxu0 0.0
    %5193 = vmatpush1.msra.mxu0 %v209
    %5194 = vmatprep.subr.mxu0 0.0
    %5195 = vmatpush1.msra.mxu0 %v210
    %5196 = vmatprep.subr.mxu0 0.0
    %5197 = vmatpush1.msra.mxu0 %v211
    %5198 = vmatprep.subr.mxu0 0.0
    %5199 = vmatpush1.msra.mxu0 %v212
    %5200 = vmatprep.subr.mxu0 0.0
    %5201 = vmatpush1.msra.mxu0 %v213
    %5202 = vmatprep.subr.mxu0 0.0
    %5203 = vmatpush1.msra.mxu0 %v214
    %5204 = vmatprep.subr.mxu0 0.0
    %5205 = vmatpush1.msra.mxu0 %v215
    %5206 = vmatprep.subr.mxu0 0.0
    %5207 = vmatpush1.msra.mxu0 %v216
    %5208 = vmatprep.subr.mxu0 0.0
    %5209 = vmatpush1.msra.mxu0 %v217
    %5210 = vmatprep.subr.mxu0 0.0
    %5211 = vmatpush1.msra.mxu0 %v218
    %5212 = vmatprep.subr.mxu0 0.0
    %5213 = vmatpush1.msra.mxu0 %v219
    %5214 = vmatprep.subr.mxu0 0.0
    %5215 = vmatpush1.msra.mxu0 %v220
    %5216 = vmatprep.subr.mxu0 0.0
    %5217 = vmatpush1.msra.mxu0 %v221
    %5218 = vmatprep.subr.mxu0 0.0
    %5219 = vmatpush1.msra.mxu0 %v222
    %5220 = vmatprep.subr.mxu0 0.0
    %5221 = vmatpush1.msra.mxu0 %v223
    %5222 = vmatprep.subr.mxu0 0.0
    %5223 = vmatpush1.msra.mxu0 %v224
    %5224 = vmatprep.subr.mxu0 0.0
    %5225 = vmatpush1.msra.mxu0 %v225
    %5226 = vmatprep.subr.mxu0 0.0
    %5227 = vmatpush1.msra.mxu0 %v226
    %5228 = vmatprep.subr.mxu0 0.0
    %5229 = vmatpush1.msra.mxu0 %v227
    %5230 = vmatprep.subr.mxu0 0.0
    %5231 = vmatpush1.msra.mxu0 %v228
    %5232 = vmatprep.subr.mxu0 0.0
    %5233 = vmatpush1.msra.mxu0 %v229
    %5234 = vmatprep.subr.mxu0 0.0
    %5235 = vmatpush1.msra.mxu0 %v230
    %5236 = vmatprep.mubr.f32.mxu0 %v5171
    %5237 = vmatmul.mubr.f32.gmra.mrb[0].mxu0 %v5170
    %v5238 = vpop.f32.mrb[0].mxu0
    %v5239 = vadd.f32 0.0, %v5238
    %v5240 = vpop.f32.mrb[0].mxu0
    %5241 = vdwg.mxu0
    %v5242 = vmul.f32 %v5239, 0.17677669
    %v5243 = vlaneseq
    %v5244 = vshrl.u32 %v5243, 7
    %v5245 = vsub.s32 1, %v5244
    %v5246 = vrot.slane %v5115, %v5245
    %v5247 = vlaneseq
    %v5248 = vshrl.u32 %v5247, 7
    %v5249 = vsub.s32 1, %v5248
    %v5250 = vrot.slane %v5117, %v5249
    %v5251 = vmul.f32 %v5074, %v5246
    %v5252 = vmul.f32 %v5076, %v5250
    %5253 = vmatprep.subr.mxu0 0.0
    %5254 = vmatpush1.msra.mxu0 %v199
    %5255 = vmatprep.subr.mxu0 0.0
    %5256 = vmatpush1.msra.mxu0 %v200
    %5257 = vmatprep.subr.mxu0 0.0
    %5258 = vmatpush1.msra.mxu0 %v201
    %5259 = vmatprep.subr.mxu0 0.0
    %5260 = vmatpush1.msra.mxu0 %v202
    %5261 = vmatprep.subr.mxu0 0.0
    %5262 = vmatpush1.msra.mxu0 %v203
    %5263 = vmatprep.subr.mxu0 0.0
    %5264 = vmatpush1.msra.mxu0 %v204
    %5265 = vmatprep.subr.mxu0 0.0
    %5266 = vmatpush1.msra.mxu0 %v205
    %5267 = vmatprep.subr.mxu0 0.0
    %5268 = vmatpush1.msra.mxu0 %v206
    %5269 = vmatprep.subr.mxu0 0.0
    %5270 = vmatpush1.msra.mxu0 %v207
    %5271 = vmatprep.subr.mxu0 0.0
    %5272 = vmatpush1.msra.mxu0 %v208
    %5273 = vmatprep.subr.mxu0 0.0
    %5274 = vmatpush1.msra.mxu0 %v209
    %5275 = vmatprep.subr.mxu0 0.0
    %5276 = vmatpush1.msra.mxu0 %v210
    %5277 = vmatprep.subr.mxu0 0.0
    %5278 = vmatpush1.msra.mxu0 %v211
    %5279 = vmatprep.subr.mxu0 0.0
    %5280 = vmatpush1.msra.mxu0 %v212
    %5281 = vmatprep.subr.mxu0 0.0
    %5282 = vmatpush1.msra.mxu0 %v213
    %5283 = vmatprep.subr.mxu0 0.0
    %5284 = vmatpush1.msra.mxu0 %v214
    %5285 = vmatprep.subr.mxu0 0.0
    %5286 = vmatpush1.msra.mxu0 %v215
    %5287 = vmatprep.subr.mxu0 0.0
    %5288 = vmatpush1.msra.mxu0 %v216
    %5289 = vmatprep.subr.mxu0 0.0
    %5290 = vmatpush1.msra.mxu0 %v217
    %5291 = vmatprep.subr.mxu0 0.0
    %5292 = vmatpush1.msra.mxu0 %v218
    %5293 = vmatprep.subr.mxu0 0.0
    %5294 = vmatpush1.msra.mxu0 %v219
    %5295 = vmatprep.subr.mxu0 0.0
    %5296 = vmatpush1.msra.mxu0 %v220
    %5297 = vmatprep.subr.mxu0 0.0
    %5298 = vmatpush1.msra.mxu0 %v221
    %5299 = vmatprep.subr.mxu0 0.0
    %5300 = vmatpush1.msra.mxu0 %v222
    %5301 = vmatprep.subr.mxu0 0.0
    %5302 = vmatpush1.msra.mxu0 %v223
    %5303 = vmatprep.subr.mxu0 0.0
    %5304 = vmatpush1.msra.mxu0 %v224
    %5305 = vmatprep.subr.mxu0 0.0
    %5306 = vmatpush1.msra.mxu0 %v225
    %5307 = vmatprep.subr.mxu0 0.0
    %5308 = vmatpush1.msra.mxu0 %v226
    %5309 = vmatprep.subr.mxu0 0.0
    %5310 = vmatpush1.msra.mxu0 %v227
    %5311 = vmatprep.subr.mxu0 0.0
    %5312 = vmatpush1.msra.mxu0 %v228
    %5313 = vmatprep.subr.mxu0 0.0
    %5314 = vmatpush1.msra.mxu0 %v229
    %5315 = vmatprep.subr.mxu0 0.0
    %5316 = vmatpush1.msra.mxu0 %v230
    %5317 = vmatprep.mubr.f32.mxu0 %v5252
    %5318 = vmatmul.mubr.f32.gmra.mrb[0].mxu0 %v5251
    %v5319 = vpop.f32.mrb[0].mxu0
    %v5320 = vadd.f32 0.0, %v5319
    %v5321 = vpop.f32.mrb[0].mxu0
    %5322 = vdwg.mxu0
    %v5323 = vmul.f32 %v5320, 0.17677669
    %v5324 = vmax.f32 %v5242, %v5323
    %v5325 = vsub.f32 %v5242, %v5324
    %v5326 = vmul.f32 %v5325, 1.442695
    %v5327 = vpow.pop %v5326
    %v5328 = vsub.f32 %v5323, %v5324
    %v5329 = vmul.f32 %v5328, 1.442695
    %v5330 = vpow.pop %v5329
    %v5331 = vadd.f32 %v5327, %v5330
    %v5332 = vrcp.pop %v5331
    %v5333 = vmul.f32 %v5327, %v5332
    %v5335 = vsel %vm2930, %v5333, 0
    %5337 = vmatprep.subr.mxu0 %v232
    %5338 = vmatpush1.msra.mxu0 %v231
    %5339 = vmatprep.subr.mxu0 0.0
    %5340 = vmatpush1.msra.mxu0 0.0
    %5341 = vmatprep.subr.mxu0 0.0
    %5342 = vmatpush1.msra.mxu0 0.0
    %5343 = vmatprep.subr.mxu0 0.0
    %5344 = vmatpush1.msra.mxu0 0.0
    %5345 = vmatprep.subr.mxu0 0.0
    %5346 = vmatpush1.msra.mxu0 0.0
    %5347 = vmatprep.subr.mxu0 0.0
    %5348 = vmatpush1.msra.mxu0 0.0
    %5349 = vmatprep.subr.mxu0 0.0
    %5350 = vmatpush1.msra.mxu0 0.0
    %5351 = vmatprep.subr.mxu0 0.0
    %5352 = vmatpush1.msra.mxu0 0.0
    %5353 = vmatprep.subr.mxu0 0.0
    %5354 = vmatpush1.msra.mxu0 0.0
    %5355 = vmatprep.subr.mxu0 0.0
    %5356 = vmatpush1.msra.mxu0 0.0
    %5357 = vmatprep.subr.mxu0 0.0
    %5358 = vmatpush1.msra.mxu0 0.0
    %5359 = vmatprep.subr.mxu0 0.0
    %5360 = vmatpush1.msra.mxu0 0.0
    %5361 = vmatprep.subr.mxu0 0.0
    %5362 = vmatpush1.msra.mxu0 0.0
    %5363 = vmatprep.subr.mxu0 0.0
    %5364 = vmatpush1.msra.mxu0 0.0
    %5365 = vmatprep.subr.mxu0 0.0
    %5366 = vmatpush1.msra.mxu0 0.0
    %5367 = vmatprep.subr.mxu0 0.0
    %5368 = vmatpush1.msra.mxu0 0.0
    %5369 = vmatprep.subr.mxu0 0.0
    %5370 = vmatpush1.msra.mxu0 0.0
    %5371 = vmatprep.subr.mxu0 0.0
    %5372 = vmatpush1.msra.mxu0 0.0
    %5373 = vmatprep.subr.mxu0 0.0
    %5374 = vmatpush1.msra.mxu0 0.0
    %5375 = vmatprep.subr.mxu0 0.0
    %5376 = vmatpush1.msra.mxu0 0.0
    %5377 = vmatprep.subr.mxu0 0.0
    %5378 = vmatpush1.msra.mxu0 0.0
    %5379 = vmatprep.subr.mxu0 0.0
    %5380 = vmatpush1.msra.mxu0 0.0
    %5381 = vmatprep.subr.mxu0 0.0
    %5382 = vmatpush1.msra.mxu0 0.0
    %5383 = vmatprep.subr.mxu0 0.0
    %5384 = vmatpush1.msra.mxu0 0.0
    %5385 = vmatprep.subr.mxu0 0.0
    %5386 = vmatpush1.msra.mxu0 0.0
    %5387 = vmatprep.subr.mxu0 0.0
    %5388 = vmatpush1.msra.mxu0 0.0
    %5389 = vmatprep.subr.mxu0 0.0
    %5390 = vmatpush1.msra.mxu0 0.0
    %5391 = vmatprep.subr.mxu0 0.0
    %5392 = vmatpush1.msra.mxu0 0.0
    %5393 = vmatprep.subr.mxu0 0.0
    %5394 = vmatpush1.msra.mxu0 0.0
    %5395 = vmatprep.subr.mxu0 0.0
    %5396 = vmatpush1.msra.mxu0 0.0
    %5397 = vmatprep.subr.mxu0 0.0
    %5398 = vmatpush1.msra.mxu0 0.0
    %5399 = vmatprep.subr.mxu0 0.0
    %5400 = vmatpush1.msra.mxu0 0.0
    %5401 = vmatprep.mubr.f32.mxu0 0.0
    %5402 = vmatmul.mubr.f32.gmra.mrb[0].mxu0 %v5335
    %v5403 = vpop.f32.mrb[0].mxu0
    %v5404 = vadd.f32 0.0, %v5403
    %v5405 = vpop.f32.mrb[0].mxu0
    %v5406 = vadd.f32 0.0, %v5405
    %5407 = vdwg.mxu0
    %v5408 = vlaneseq
    %v5409 = vshrl.u32 %v5408, 7
    %v5410 = vsub.s32 0, %v5409
    %v5411 = vrot.slane %v5156, %v5410
    %v5412 = vlaneseq
    %v5413 = vshrl.u32 %v5412, 7
    %v5414 = vsub.s32 0, %v5413
    %v5415 = vrot.slane %v5158, %v5414
    %v5416 = vmul.f32 %v5404, %v5411
    %v5417 = vmul.f32 %v5406, %v5415
    %v5418 = vmul.f32 %v5330, %v5332
    %v5420 = vsel %vm2930, %v5418, 0
    %5422 = vmatprep.subr.mxu0 %v232
    %5423 = vmatpush1.msra.mxu0 %v231
    %5424 = vmatprep.subr.mxu0 0.0
    %5425 = vmatpush1.msra.mxu0 0.0
    %5426 = vmatprep.subr.mxu0 0.0
    %5427 = vmatpush1.msra.mxu0 0.0
    %5428 = vmatprep.subr.mxu0 0.0
    %5429 = vmatpush1.msra.mxu0 0.0
    %5430 = vmatprep.subr.mxu0 0.0
    %5431 = vmatpush1.msra.mxu0 0.0
    %5432 = vmatprep.subr.mxu0 0.0
    %5433 = vmatpush1.msra.mxu0 0.0
    %5434 = vmatprep.subr.mxu0 0.0
    %5435 = vmatpush1.msra.mxu0 0.0
    %5436 = vmatprep.subr.mxu0 0.0
    %5437 = vmatpush1.msra.mxu0 0.0
    %5438 = vmatprep.subr.mxu0 0.0
    %5439 = vmatpush1.msra.mxu0 0.0
    %5440 = vmatprep.subr.mxu0 0.0
    %5441 = vmatpush1.msra.mxu0 0.0
    %5442 = vmatprep.subr.mxu0 0.0
    %5443 = vmatpush1.msra.mxu0 0.0
    %5444 = vmatprep.subr.mxu0 0.0
    %5445 = vmatpush1.msra.mxu0 0.0
    %5446 = vmatprep.subr.mxu0 0.0
    %5447 = vmatpush1.msra.mxu0 0.0
    %5448 = vmatprep.subr.mxu0 0.0
    %5449 = vmatpush1.msra.mxu0 0.0
    %5450 = vmatprep.subr.mxu0 0.0
    %5451 = vmatpush1.msra.mxu0 0.0
    %5452 = vmatprep.subr.mxu0 0.0
    %5453 = vmatpush1.msra.mxu0 0.0
    %5454 = vmatprep.subr.mxu0 0.0
    %5455 = vmatpush1.msra.mxu0 0.0
    %5456 = vmatprep.subr.mxu0 0.0
    %5457 = vmatpush1.msra.mxu0 0.0
    %5458 = vmatprep.subr.mxu0 0.0
    %5459 = vmatpush1.msra.mxu0 0.0
    %5460 = vmatprep.subr.mxu0 0.0
    %5461 = vmatpush1.msra.mxu0 0.0
    %5462 = vmatprep.subr.mxu0 0.0
    %5463 = vmatpush1.msra.mxu0 0.0
    %5464 = vmatprep.subr.mxu0 0.0
    %5465 = vmatpush1.msra.mxu0 0.0
    %5466 = vmatprep.subr.mxu0 0.0
    %5467 = vmatpush1.msra.mxu0 0.0
    %5468 = vmatprep.subr.mxu0 0.0
    %5469 = vmatpush1.msra.mxu0 0.0
    %5470 = vmatprep.subr.mxu0 0.0
    %5471 = vmatpush1.msra.mxu0 0.0
    %5472 = vmatprep.subr.mxu0 0.0
    %5473 = vmatpush1.msra.mxu0 0.0
    %5474 = vmatprep.subr.mxu0 0.0
    %5475 = vmatpush1.msra.mxu0 0.0
    %5476 = vmatprep.subr.mxu0 0.0
    %5477 = vmatpush1.msra.mxu0 0.0
    %5478 = vmatprep.subr.mxu0 0.0
    %5479 = vmatpush1.msra.mxu0 0.0
    %5480 = vmatprep.subr.mxu0 0.0
    %5481 = vmatpush1.msra.mxu0 0.0
    %5482 = vmatprep.subr.mxu0 0.0
    %5483 = vmatpush1.msra.mxu0 0.0
    %5484 = vmatprep.subr.mxu0 0.0
    %5485 = vmatpush1.msra.mxu0 0.0
    %5486 = vmatprep.mubr.f32.mxu0 0.0
    %5487 = vmatmul.mubr.f32.gmra.mrb[0].mxu0 %v5420
    %v5488 = vpop.f32.mrb[0].mxu0
    %v5489 = vadd.f32 0.0, %v5488
    %v5490 = vpop.f32.mrb[0].mxu0
    %v5491 = vadd.f32 0.0, %v5490
    %5492 = vdwg.mxu0
    %v5493 = vlaneseq
    %v5494 = vshrl.u32 %v5493, 7
    %v5495 = vsub.s32 1, %v5494
    %v5496 = vrot.slane %v5156, %v5495
    %v5497 = vlaneseq
    %v5498 = vshrl.u32 %v5497, 7
    %v5499 = vsub.s32 1, %v5498
    %v5500 = vrot.slane %v5158, %v5499
    %v5501 = vmul.f32 %v5489, %v5496
    %v5502 = vmul.f32 %v5491, %v5500
    %v5503 = vadd.f32 %v5416, %v5501
    %v5504 = vadd.f32 %v5417, %v5502
    %s5505 = scalar_lea.vmem %s45, 256
    %v5506 = vld [vmem:[%s5505] sm:$0xff]
    %v5507 = vld [vmem:[%s5505 + $0x8] sm:$0xff]
    %v5508 = vld [vmem:[%s5505 + $0x10] sm:$0xff]
    %v5509 = vld [vmem:[%s5505 + $0x18] sm:$0xff]
    %v5510 = vld [vmem:[%s5505 + $0x20] sm:$0xff]
    %v5511 = vld [vmem:[%s5505 + $0x28] sm:$0xff]
    %v5512 = vld [vmem:[%s5505 + $0x30] sm:$0xff]
    %v5513 = vld [vmem:[%s5505 + $0x38] sm:$0xff]
    %v5514 = vld [vmem:[%s5505 + $0x40] sm:$0xff]
    %v5515 = vld [vmem:[%s5505 + $0x48] sm:$0xff]
    %v5516 = vld [vmem:[%s5505 + $0x50] sm:$0xff]
    %v5517 = vld [vmem:[%s5505 + $0x58] sm:$0xff]
    %v5518 = vld [vmem:[%s5505 + $0x60] sm:$0xff]
    %v5519 = vld [vmem:[%s5505 + $0x68] sm:$0xff]
    %v5520 = vld [vmem:[%s5505 + $0x70] sm:$0xff]
    %v5521 = vld [vmem:[%s5505 + $0x78] sm:$0xff]
    %v5522 = vld [vmem:[%s5505 + $0x80] sm:$0xff]
    %v5523 = vld [vmem:[%s5505 + $0x88] sm:$0xff]
    %v5524 = vld [vmem:[%s5505 + $0x90] sm:$0xff]
    %v5525 = vld [vmem:[%s5505 + $0x98] sm:$0xff]
    %v5526 = vld [vmem:[%s5505 + $0xa0] sm:$0xff]
    %v5527 = vld [vmem:[%s5505 + $0xa8] sm:$0xff]
    %v5528 = vld [vmem:[%s5505 + $0xb0] sm:$0xff]
    %v5529 = vld [vmem:[%s5505 + $0xb8] sm:$0xff]
    %v5530 = vld [vmem:[%s5505 + $0xc0] sm:$0xff]
    %v5531 = vld [vmem:[%s5505 + $0xc8] sm:$0xff]
    %v5532 = vld [vmem:[%s5505 + $0xd0] sm:$0xff]
    %v5533 = vld [vmem:[%s5505 + $0xd8] sm:$0xff]
    %v5534 = vld [vmem:[%s5505 + $0xe0] sm:$0xff]
    %v5535 = vld [vmem:[%s5505 + $0xe8] sm:$0xff]
    %v5536 = vld [vmem:[%s5505 + $0xf0] sm:$0xff]
    %v5537 = vld [vmem:[%s5505 + $0xf8] sm:$0xff]
    %s5538 = scalar_lea.vmem %s43, 2
    %v5539 = vld [vmem:[%s5538] sm:$0x3]
    %v5540 = vpack.c.bf16 %v5503, %v5503
    %v5541 = vpack.c.bf16 %v5504, %v5504
    %v5543 = vlaneseq
    %v5544 = vshrl.u32 %v5543, 7
    %v5545 = vsub.s32 0, %v5544
    %v5546 = vrot.slane %v5539, %v5545
    %v5547 = vlaneseq
    %v5548 = vshrl.u32 %v5547, 7
    %v5549 = vsub.s32 1, %v5548
    %v5550 = vrot.slane %v5539, %v5549
    %v5585 = vunpack.c.l.b16 %v5506
    %v5586 = vunpack.c.h.b16 %v5506
    %v5587 = vunpack.c.l.b16 %v5507
    %v5588 = vunpack.c.h.b16 %v5507
    %v5589 = vunpack.c.l.b16 %v5508
    %v5590 = vunpack.c.h.b16 %v5508
    %v5591 = vunpack.c.l.b16 %v5509
    %v5592 = vunpack.c.h.b16 %v5509
    %v5593 = vunpack.c.l.b16 %v5510
    %v5594 = vunpack.c.h.b16 %v5510
    %v5595 = vunpack.c.l.b16 %v5511
    %v5596 = vunpack.c.h.b16 %v5511
    %v5597 = vunpack.c.l.b16 %v5512
    %v5598 = vunpack.c.h.b16 %v5512
    %v5599 = vunpack.c.l.b16 %v5513
    %v5600 = vunpack.c.h.b16 %v5513
    %v5601 = vunpack.c.l.b16 %v5514
    %v5602 = vunpack.c.h.b16 %v5514
    %v5603 = vunpack.c.l.b16 %v5515
    %v5604 = vunpack.c.h.b16 %v5515
    %v5605 = vunpack.c.l.b16 %v5516
    %v5606 = vunpack.c.h.b16 %v5516
    %v5607 = vunpack.c.l.b16 %v5517
    %v5608 = vunpack.c.h.b16 %v5517
    %v5609 = vunpack.c.l.b16 %v5518
    %v5610 = vunpack.c.h.b16 %v5518
    %v5611 = vunpack.c.l.b16 %v5519
    %v5612 = vunpack.c.h.b16 %v5519
    %v5613 = vunpack.c.l.b16 %v5520
    %v5614 = vunpack.c.h.b16 %v5520
    %v5615 = vunpack.c.l.b16 %v5521
    %v5616 = vunpack.c.h.b16 %v5521
    %v5617 = vunpack.c.l.b16 %v5522
    %v5618 = vunpack.c.h.b16 %v5522
    %v5619 = vunpack.c.l.b16 %v5523
    %v5620 = vunpack.c.h.b16 %v5523
    %v5621 = vunpack.c.l.b16 %v5524
    %v5622 = vunpack.c.h.b16 %v5524
    %v5623 = vunpack.c.l.b16 %v5525
    %v5624 = vunpack.c.h.b16 %v5525
    %v5625 = vunpack.c.l.b16 %v5526
    %v5626 = vunpack.c.h.b16 %v5526
    %v5627 = vunpack.c.l.b16 %v5527
    %v5628 = vunpack.c.h.b16 %v5527
    %v5629 = vunpack.c.l.b16 %v5528
    %v5630 = vunpack.c.h.b16 %v5528
    %v5631 = vunpack.c.l.b16 %v5529
    %v5632 = vunpack.c.h.b16 %v5529
    %v5633 = vunpack.c.l.b16 %v5530
    %v5634 = vunpack.c.h.b16 %v5530
    %v5635 = vunpack.c.l.b16 %v5531
    %v5636 = vunpack.c.h.b16 %v5531
    %v5637 = vunpack.c.l.b16 %v5532
    %v5638 = vunpack.c.h.b16 %v5532
    %v5639 = vunpack.c.l.b16 %v5533
    %v5640 = vunpack.c.h.b16 %v5533
    %v5641 = vunpack.c.l.b16 %v5534
    %v5642 = vunpack.c.h.b16 %v5534
    %v5643 = vunpack.c.l.b16 %v5535
    %v5644 = vunpack.c.h.b16 %v5535
    %v5645 = vunpack.c.l.b16 %v5536
    %v5646 = vunpack.c.h.b16 %v5536
    %v5647 = vunpack.c.l.b16 %v5537
    %v5648 = vunpack.c.h.b16 %v5537
    %v5649 = vpack.c.b16 %v5587, %v5585
    %v5650 = vpack.c.b16 %v5588, %v5586
    %v5651 = vpack.c.b16 %v5591, %v5589
    %v5652 = vpack.c.b16 %v5592, %v5590
    %v5653 = vpack.c.b16 %v5595, %v5593
    %v5654 = vpack.c.b16 %v5596, %v5594
    %v5655 = vpack.c.b16 %v5599, %v5597
    %v5656 = vpack.c.b16 %v5600, %v5598
    %v5657 = vpack.c.b16 %v5603, %v5601
    %v5658 = vpack.c.b16 %v5604, %v5602
    %v5659 = vpack.c.b16 %v5607, %v5605
    %v5660 = vpack.c.b16 %v5608, %v5606
    %v5661 = vpack.c.b16 %v5611, %v5609
    %v5662 = vpack.c.b16 %v5612, %v5610
    %v5663 = vpack.c.b16 %v5615, %v5613
    %v5664 = vpack.c.b16 %v5616, %v5614
    %v5665 = vpack.c.b16 %v5619, %v5617
    %v5666 = vpack.c.b16 %v5620, %v5618
    %v5667 = vpack.c.b16 %v5623, %v5621
    %v5668 = vpack.c.b16 %v5624, %v5622
    %v5669 = vpack.c.b16 %v5627, %v5625
    %v5670 = vpack.c.b16 %v5628, %v5626
    %v5671 = vpack.c.b16 %v5631, %v5629
    %v5672 = vpack.c.b16 %v5632, %v5630
    %v5673 = vpack.c.b16 %v5635, %v5633
    %v5674 = vpack.c.b16 %v5636, %v5634
    %v5675 = vpack.c.b16 %v5639, %v5637
    %v5676 = vpack.c.b16 %v5640, %v5638
    %v5677 = vpack.c.b16 %v5643, %v5641
    %v5678 = vpack.c.b16 %v5644, %v5642
    %v5679 = vpack.c.b16 %v5647, %v5645
    %v5680 = vpack.c.b16 %v5648, %v5646
    %5713 = vmatprep.subr.bf16.mxu0 %v5650
    %5714 = vmatpush1.bf16.msra.mxu0 %v5649
    %5715 = vmatprep.subr.bf16.mxu0 %v5652
    %5716 = vmatpush1.bf16.msra.mxu0 %v5651
    %5717 = vmatprep.subr.bf16.mxu0 %v5654
    %5718 = vmatpush1.bf16.msra.mxu0 %v5653
    %5719 = vmatprep.subr.bf16.mxu0 %v5656
    %5720 = vmatpush1.bf16.msra.mxu0 %v5655
    %5721 = vmatprep.subr.bf16.mxu0 %v5658
    %5722 = vmatpush1.bf16.msra.mxu0 %v5657
    %5723 = vmatprep.subr.bf16.mxu0 %v5660
    %5724 = vmatpush1.bf16.msra.mxu0 %v5659
    %5725 = vmatprep.subr.bf16.mxu0 %v5662
    %5726 = vmatpush1.bf16.msra.mxu0 %v5661
    %5727 = vmatprep.subr.bf16.mxu0 %v5664
    %5728 = vmatpush1.bf16.msra.mxu0 %v5663
    %5729 = vmatprep.subr.bf16.mxu0 %v5666
    %5730 = vmatpush1.bf16.msra.mxu0 %v5665
    %5731 = vmatprep.subr.bf16.mxu0 %v5668
    %5732 = vmatpush1.bf16.msra.mxu0 %v5667
    %5733 = vmatprep.subr.bf16.mxu0 %v5670
    %5734 = vmatpush1.bf16.msra.mxu0 %v5669
    %5735 = vmatprep.subr.bf16.mxu0 %v5672
    %5736 = vmatpush1.bf16.msra.mxu0 %v5671
    %5737 = vmatprep.subr.bf16.mxu0 %v5674
    %5738 = vmatpush1.bf16.msra.mxu0 %v5673
    %5739 = vmatprep.subr.bf16.mxu0 %v5676
    %5740 = vmatpush1.bf16.msra.mxu0 %v5675
    %5741 = vmatprep.subr.bf16.mxu0 %v5678
    %5742 = vmatpush1.bf16.msra.mxu0 %v5677
    %5743 = vmatprep.subr.bf16.mxu0 %v5680
    %5744 = vmatpush1.bf16.msra.mxu0 %v5679
    %5745 = vmatprep.mubr.bf16.mxu0 %v5541
    %5746 = vmatmul.mubr.bf16.gmra.mrb[0].mxu0 %v5540
    %v5747 = vpop.f32.mrb[0].mxu0
    %v5748 = vadd.f32 %v5546, %v5747
    %v5749 = vpop.f32.mrb[0].mxu0
    %v5750 = vadd.f32 %v5550, %v5749
    %v5751 = vpop.f32.mrb[0].mxu0
    %v5752 = vpop.f32.mrb[0].mxu0
    %5753 = vdwg.mxu0
    %s5754 = scalar_lea.vmem %s37, 2
    %v5755 = vld [vmem:[%s5754] sm:$0x3]
    %s5756 = scalar_lea.vmem %s35, 2
    %v5757 = vld [vmem:[%s5756] sm:$0x3]
    %s5758 = scalar_lea.vmem %s51, 512
    %v5759 = vld [vmem:[%s5758] sm:$0xff]
    %v5760 = vld [vmem:[%s5758 + $0x8] sm:$0xff]
    %v5761 = vld [vmem:[%s5758 + $0x10] sm:$0xff]
    %v5762 = vld [vmem:[%s5758 + $0x18] sm:$0xff]
    %v5763 = vld [vmem:[%s5758 + $0x20] sm:$0xff]
    %v5764 = vld [vmem:[%s5758 + $0x28] sm:$0xff]
    %v5765 = vld [vmem:[%s5758 + $0x30] sm:$0xff]
    %v5766 = vld [vmem:[%s5758 + $0x38] sm:$0xff]
    %v5767 = vld [vmem:[%s5758 + $0x40] sm:$0xff]
    %v5768 = vld [vmem:[%s5758 + $0x48] sm:$0xff]
    %v5769 = vld [vmem:[%s5758 + $0x50] sm:$0xff]
    %v5770 = vld [vmem:[%s5758 + $0x58] sm:$0xff]
    %v5771 = vld [vmem:[%s5758 + $0x60] sm:$0xff]
    %v5772 = vld [vmem:[%s5758 + $0x68] sm:$0xff]
    %v5773 = vld [vmem:[%s5758 + $0x70] sm:$0xff]
    %v5774 = vld [vmem:[%s5758 + $0x78] sm:$0xff]
    %v5775 = vld [vmem:[%s5758 + $0x80] sm:$0xff]
    %v5776 = vld [vmem:[%s5758 + $0x88] sm:$0xff]
    %v5777 = vld [vmem:[%s5758 + $0x90] sm:$0xff]
    %v5778 = vld [vmem:[%s5758 + $0x98] sm:$0xff]
    %v5779 = vld [vmem:[%s5758 + $0xa0] sm:$0xff]
    %v5780 = vld [vmem:[%s5758 + $0xa8] sm:$0xff]
    %v5781 = vld [vmem:[%s5758 + $0xb0] sm:$0xff]
    %v5782 = vld [vmem:[%s5758 + $0xb8] sm:$0xff]
    %v5783 = vld [vmem:[%s5758 + $0xc0] sm:$0xff]
    %v5784 = vld [vmem:[%s5758 + $0xc8] sm:$0xff]
    %v5785 = vld [vmem:[%s5758 + $0xd0] sm:$0xff]
    %v5786 = vld [vmem:[%s5758 + $0xd8] sm:$0xff]
    %v5787 = vld [vmem:[%s5758 + $0xe0] sm:$0xff]
    %v5788 = vld [vmem:[%s5758 + $0xe8] sm:$0xff]
    %v5789 = vld [vmem:[%s5758 + $0xf0] sm:$0xff]
    %v5790 = vld [vmem:[%s5758 + $0xf8] sm:$0xff]
    %v5791 = vld [vmem:[%s5758 + $0x100] sm:$0xff]
    %v5792 = vld [vmem:[%s5758 + $0x108] sm:$0xff]
    %v5793 = vld [vmem:[%s5758 + $0x110] sm:$0xff]
    %v5794 = vld [vmem:[%s5758 + $0x118] sm:$0xff]
    %v5795 = vld [vmem:[%s5758 + $0x120] sm:$0xff]
    %v5796 = vld [vmem:[%s5758 + $0x128] sm:$0xff]
    %v5797 = vld [vmem:[%s5758 + $0x130] sm:$0xff]
    %v5798 = vld [vmem:[%s5758 + $0x138] sm:$0xff]
    %v5799 = vld [vmem:[%s5758 + $0x140] sm:$0xff]
    %v5800 = vld [vmem:[%s5758 + $0x148] sm:$0xff]
    %v5801 = vld [vmem:[%s5758 + $0x150] sm:$0xff]
    %v5802 = vld [vmem:[%s5758 + $0x158] sm:$0xff]
    %v5803 = vld [vmem:[%s5758 + $0x160] sm:$0xff]
    %v5804 = vld [vmem:[%s5758 + $0x168] sm:$0xff]
    %v5805 = vld [vmem:[%s5758 + $0x170] sm:$0xff]
    %v5806 = vld [vmem:[%s5758 + $0x178] sm:$0xff]
    %v5807 = vld [vmem:[%s5758 + $0x180] sm:$0xff]
    %v5808 = vld [vmem:[%s5758 + $0x188] sm:$0xff]
    %v5809 = vld [vmem:[%s5758 + $0x190] sm:$0xff]
    %v5810 = vld [vmem:[%s5758 + $0x198] sm:$0xff]
    %v5811 = vld [vmem:[%s5758 + $0x1a0] sm:$0xff]
    %v5812 = vld [vmem:[%s5758 + $0x1a8] sm:$0xff]
    %v5813 = vld [vmem:[%s5758 + $0x1b0] sm:$0xff]
    %v5814 = vld [vmem:[%s5758 + $0x1b8] sm:$0xff]
    %v5815 = vld [vmem:[%s5758 + $0x1c0] sm:$0xff]
    %v5816 = vld [vmem:[%s5758 + $0x1c8] sm:$0xff]
    %v5817 = vld [vmem:[%s5758 + $0x1d0] sm:$0xff]
    %v5818 = vld [vmem:[%s5758 + $0x1d8] sm:$0xff]
    %v5819 = vld [vmem:[%s5758 + $0x1e0] sm:$0xff]
    %v5820 = vld [vmem:[%s5758 + $0x1e8] sm:$0xff]
    %v5821 = vld [vmem:[%s5758 + $0x1f0] sm:$0xff]
    %v5822 = vld [vmem:[%s5758 + $0x1f8] sm:$0xff]
    %s5823 = scalar_lea.vmem %s27, 4
    %v5824 = vld [vmem:[%s5823] sm:$0xf]
    %s5825 = scalar_lea.vmem %s53, 512
    %v5826 = vld [vmem:[%s5825] sm:$0xff]
    %v5827 = vld [vmem:[%s5825 + $0x8] sm:$0xff]
    %v5828 = vld [vmem:[%s5825 + $0x10] sm:$0xff]
    %v5829 = vld [vmem:[%s5825 + $0x18] sm:$0xff]
    %v5830 = vld [vmem:[%s5825 + $0x20] sm:$0xff]
    %v5831 = vld [vmem:[%s5825 + $0x28] sm:$0xff]
    %v5832 = vld [vmem:[%s5825 + $0x30] sm:$0xff]
    %v5833 = vld [vmem:[%s5825 + $0x38] sm:$0xff]
    %v5834 = vld [vmem:[%s5825 + $0x40] sm:$0xff]
    %v5835 = vld [vmem:[%s5825 + $0x48] sm:$0xff]
    %v5836 = vld [vmem:[%s5825 + $0x50] sm:$0xff]
    %v5837 = vld [vmem:[%s5825 + $0x58] sm:$0xff]
    %v5838 = vld [vmem:[%s5825 + $0x60] sm:$0xff]
    %v5839 = vld [vmem:[%s5825 + $0x68] sm:$0xff]
    %v5840 = vld [vmem:[%s5825 + $0x70] sm:$0xff]
    %v5841 = vld [vmem:[%s5825 + $0x78] sm:$0xff]
    %v5842 = vld [vmem:[%s5825 + $0x80] sm:$0xff]
    %v5843 = vld [vmem:[%s5825 + $0x88] sm:$0xff]
    %v5844 = vld [vmem:[%s5825 + $0x90] sm:$0xff]
    %v5845 = vld [vmem:[%s5825 + $0x98] sm:$0xff]
    %v5846 = vld [vmem:[%s5825 + $0xa0] sm:$0xff]
    %v5847 = vld [vmem:[%s5825 + $0xa8] sm:$0xff]
    %v5848 = vld [vmem:[%s5825 + $0xb0] sm:$0xff]
    %v5849 = vld [vmem:[%s5825 + $0xb8] sm:$0xff]
    %v5850 = vld [vmem:[%s5825 + $0xc0] sm:$0xff]
    %v5851 = vld [vmem:[%s5825 + $0xc8] sm:$0xff]
    %v5852 = vld [vmem:[%s5825 + $0xd0] sm:$0xff]
    %v5853 = vld [vmem:[%s5825 + $0xd8] sm:$0xff]
    %v5854 = vld [vmem:[%s5825 + $0xe0] sm:$0xff]
    %v5855 = vld [vmem:[%s5825 + $0xe8] sm:$0xff]
    %v5856 = vld [vmem:[%s5825 + $0xf0] sm:$0xff]
    %v5857 = vld [vmem:[%s5825 + $0xf8] sm:$0xff]
    %v5858 = vld [vmem:[%s5825 + $0x100] sm:$0xff]
    %v5859 = vld [vmem:[%s5825 + $0x108] sm:$0xff]
    %v5860 = vld [vmem:[%s5825 + $0x110] sm:$0xff]
    %v5861 = vld [vmem:[%s5825 + $0x118] sm:$0xff]
    %v5862 = vld [vmem:[%s5825 + $0x120] sm:$0xff]
    %v5863 = vld [vmem:[%s5825 + $0x128] sm:$0xff]
    %v5864 = vld [vmem:[%s5825 + $0x130] sm:$0xff]
    %v5865 = vld [vmem:[%s5825 + $0x138] sm:$0xff]
    %v5866 = vld [vmem:[%s5825 + $0x140] sm:$0xff]
    %v5867 = vld [vmem:[%s5825 + $0x148] sm:$0xff]
    %v5868 = vld [vmem:[%s5825 + $0x150] sm:$0xff]
    %v5869 = vld [vmem:[%s5825 + $0x158] sm:$0xff]
    %v5870 = vld [vmem:[%s5825 + $0x160] sm:$0xff]
    %v5871 = vld [vmem:[%s5825 + $0x168] sm:$0xff]
    %v5872 = vld [vmem:[%s5825 + $0x170] sm:$0xff]
    %v5873 = vld [vmem:[%s5825 + $0x178] sm:$0xff]
    %v5874 = vld [vmem:[%s5825 + $0x180] sm:$0xff]
    %v5875 = vld [vmem:[%s5825 + $0x188] sm:$0xff]
    %v5876 = vld [vmem:[%s5825 + $0x190] sm:$0xff]
    %v5877 = vld [vmem:[%s5825 + $0x198] sm:$0xff]
    %v5878 = vld [vmem:[%s5825 + $0x1a0] sm:$0xff]
    %v5879 = vld [vmem:[%s5825 + $0x1a8] sm:$0xff]
    %v5880 = vld [vmem:[%s5825 + $0x1b0] sm:$0xff]
    %v5881 = vld [vmem:[%s5825 + $0x1b8] sm:$0xff]
    %v5882 = vld [vmem:[%s5825 + $0x1c0] sm:$0xff]
    %v5883 = vld [vmem:[%s5825 + $0x1c8] sm:$0xff]
    %v5884 = vld [vmem:[%s5825 + $0x1d0] sm:$0xff]
    %v5885 = vld [vmem:[%s5825 + $0x1d8] sm:$0xff]
    %v5886 = vld [vmem:[%s5825 + $0x1e0] sm:$0xff]
    %v5887 = vld [vmem:[%s5825 + $0x1e8] sm:$0xff]
    %v5888 = vld [vmem:[%s5825 + $0x1f0] sm:$0xff]
    %v5889 = vld [vmem:[%s5825 + $0x1f8] sm:$0xff]
    %s5890 = scalar_lea.vmem %s29, 2
    %v5891 = vld [vmem:[%s5890] sm:$0x3]
    %s5892 = scalar_lea.vmem %s41, 2
    %v5893 = vld [vmem:[%s5892] sm:$0x3]
    %s5894 = scalar_lea.vmem %s39, 2
    %v5895 = vld [vmem:[%s5894] sm:$0x3]
    %v5896 = vadd.f32 %v4425, %v5748
    %v5897 = vadd.f32 %v4426, %v5750
    %v5898 = vsel %vm3485, %v5896, 0.0
    %v5899 = vsel %vm3485, %v5897, 0.0
    %v5900 = vadd.f32 %v5898, %v5899
    %5901 = vadd.xlane.f32.xlu0 %v5900
    %v5902 = vpop.xlane.xlu0 %5901
    %v5903 = vmul.f32 %v5902, %v3491
    %v5904 = vsub.f32 %v5896, %v5903
    %v5905 = vsub.f32 %v5897, %v5903
    %v5906 = vmul.f32 %v5904, %v5904
    %v5907 = vmul.f32 %v5905, %v5905
    %v5908 = vsel %vm3485, %v5906, 0.0
    %v5909 = vsel %vm3485, %v5907, 0.0
    %v5910 = vadd.f32 %v5908, %v5909
    %5911 = vadd.xlane.f32.xlu0 %v5910
    %v5912 = vpop.xlane.xlu0 %5911
    %v5913 = vmul.f32 %v5912, %v3491
    %v5914 = vadd.f32 %v5913, 1e-05
    %v5915 = vrsqrt.pop %v5914
    %v5916 = vmul.f32 %v5904, %v5915
    %v5917 = vmul.f32 %v5905, %v5915
    %v5919 = vlaneseq
    %v5920 = vshrl.u32 %v5919, 7
    %v5921 = vsub.s32 0, %v5920
    %v5922 = vrot.slane %v5755, %v5921
    %v5923 = vlaneseq
    %v5924 = vshrl.u32 %v5923, 7
    %v5925 = vsub.s32 1, %v5924
    %v5926 = vrot.slane %v5755, %v5925
    %v5929 = vmul.f32 %v5916, %v5922
    %v5930 = vmul.f32 %v5917, %v5926
    %v5932 = vlaneseq
    %v5933 = vshrl.u32 %v5932, 7
    %v5934 = vsub.s32 0, %v5933
    %v5935 = vrot.slane %v5757, %v5934
    %v5936 = vlaneseq
    %v5937 = vshrl.u32 %v5936, 7
    %v5938 = vsub.s32 1, %v5937
    %v5939 = vrot.slane %v5757, %v5938
    %v5942 = vadd.f32 %v5929, %v5935
    %v5943 = vadd.f32 %v5930, %v5939
    %v5944 = vpack.c.bf16 %v5942, %v5942
    %v5945 = vpack.c.bf16 %v5943, %v5943
    %v5947 = vlaneseq
    %v5948 = vshrl.u32 %v5947, 7
    %v5949 = vsub.s32 0, %v5948
    %v5950 = vrot.slane %v5824, %v5949
    %v5951 = vlaneseq
    %v5952 = vshrl.u32 %v5951, 7
    %v5953 = vsub.s32 1, %v5952
    %v5954 = vrot.slane %v5824, %v5953
    %v5955 = vlaneseq
    %v5956 = vshrl.u32 %v5955, 7
    %v5957 = vsub.s32 2, %v5956
    %v5958 = vrot.slane %v5824, %v5957
    %v5959 = vlaneseq
    %v5960 = vshrl.u32 %v5959, 7
    %v5961 = vsub.s32 3, %v5960
    %v5962 = vrot.slane %v5824, %v5961
    %v6031 = vunpack.c.l.b16 %v5759
    %v6032 = vunpack.c.h.b16 %v5759
    %v6033 = vunpack.c.l.b16 %v5760
    %v6034 = vunpack.c.h.b16 %v5760
    %v6035 = vunpack.c.l.b16 %v5761
    %v6036 = vunpack.c.h.b16 %v5761
    %v6037 = vunpack.c.l.b16 %v5762
    %v6038 = vunpack.c.h.b16 %v5762
    %v6039 = vunpack.c.l.b16 %v5763
    %v6040 = vunpack.c.h.b16 %v5763
    %v6041 = vunpack.c.l.b16 %v5764
    %v6042 = vunpack.c.h.b16 %v5764
    %v6043 = vunpack.c.l.b16 %v5765
    %v6044 = vunpack.c.h.b16 %v5765
    %v6045 = vunpack.c.l.b16 %v5766
    %v6046 = vunpack.c.h.b16 %v5766
    %v6047 = vunpack.c.l.b16 %v5767
    %v6048 = vunpack.c.h.b16 %v5767
    %v6049 = vunpack.c.l.b16 %v5768
    %v6050 = vunpack.c.h.b16 %v5768
    %v6051 = vunpack.c.l.b16 %v5769
    %v6052 = vunpack.c.h.b16 %v5769
    %v6053 = vunpack.c.l.b16 %v5770
    %v6054 = vunpack.c.h.b16 %v5770
    %v6055 = vunpack.c.l.b16 %v5771
    %v6056 = vunpack.c.h.b16 %v5771
    %v6057 = vunpack.c.l.b16 %v5772
    %v6058 = vunpack.c.h.b16 %v5772
    %v6059 = vunpack.c.l.b16 %v5773
    %v6060 = vunpack.c.h.b16 %v5773
    %v6061 = vunpack.c.l.b16 %v5774
    %v6062 = vunpack.c.h.b16 %v5774
    %v6063 = vunpack.c.l.b16 %v5775
    %v6064 = vunpack.c.h.b16 %v5775
    %v6065 = vunpack.c.l.b16 %v5776
    %v6066 = vunpack.c.h.b16 %v5776
    %v6067 = vunpack.c.l.b16 %v5777
    %v6068 = vunpack.c.h.b16 %v5777
    %v6069 = vunpack.c.l.b16 %v5778
    %v6070 = vunpack.c.h.b16 %v5778
    %v6071 = vunpack.c.l.b16 %v5779
    %v6072 = vunpack.c.h.b16 %v5779
    %v6073 = vunpack.c.l.b16 %v5780
    %v6074 = vunpack.c.h.b16 %v5780
    %v6075 = vunpack.c.l.b16 %v5781
    %v6076 = vunpack.c.h.b16 %v5781
    %v6077 = vunpack.c.l.b16 %v5782
    %v6078 = vunpack.c.h.b16 %v5782
    %v6079 = vunpack.c.l.b16 %v5783
    %v6080 = vunpack.c.h.b16 %v5783
    %v6081 = vunpack.c.l.b16 %v5784
    %v6082 = vunpack.c.h.b16 %v5784
    %v6083 = vunpack.c.l.b16 %v5785
    %v6084 = vunpack.c.h.b16 %v5785
    %v6085 = vunpack.c.l.b16 %v5786
    %v6086 = vunpack.c.h.b16 %v5786
    %v6087 = vunpack.c.l.b16 %v5787
    %v6088 = vunpack.c.h.b16 %v5787
    %v6089 = vunpack.c.l.b16 %v5788
    %v6090 = vunpack.c.h.b16 %v5788
    %v6091 = vunpack.c.l.b16 %v5789
    %v6092 = vunpack.c.h.b16 %v5789
    %v6093 = vunpack.c.l.b16 %v5790
    %v6094 = vunpack.c.h.b16 %v5790
    %v6095 = vunpack.c.l.b16 %v5791
    %v6096 = vunpack.c.h.b16 %v5791
    %v6097 = vunpack.c.l.b16 %v5792
    %v6098 = vunpack.c.h.b16 %v5792
    %v6099 = vunpack.c.l.b16 %v5793
    %v6100 = vunpack.c.h.b16 %v5793
    %v6101 = vunpack.c.l.b16 %v5794
    %v6102 = vunpack.c.h.b16 %v5794
    %v6103 = vunpack.c.l.b16 %v5795
    %v6104 = vunpack.c.h.b16 %v5795
    %v6105 = vunpack.c.l.b16 %v5796
    %v6106 = vunpack.c.h.b16 %v5796
    %v6107 = vunpack.c.l.b16 %v5797
    %v6108 = vunpack.c.h.b16 %v5797
    %v6109 = vunpack.c.l.b16 %v5798
    %v6110 = vunpack.c.h.b16 %v5798
    %v6111 = vunpack.c.l.b16 %v5799
    %v6112 = vunpack.c.h.b16 %v5799
    %v6113 = vunpack.c.l.b16 %v5800
    %v6114 = vunpack.c.h.b16 %v5800
    %v6115 = vunpack.c.l.b16 %v5801
    %v6116 = vunpack.c.h.b16 %v5801
    %v6117 = vunpack.c.l.b16 %v5802
    %v6118 = vunpack.c.h.b16 %v5802
    %v6119 = vunpack.c.l.b16 %v5803
    %v6120 = vunpack.c.h.b16 %v5803
    %v6121 = vunpack.c.l.b16 %v5804
    %v6122 = vunpack.c.h.b16 %v5804
    %v6123 = vunpack.c.l.b16 %v5805
    %v6124 = vunpack.c.h.b16 %v5805
    %v6125 = vunpack.c.l.b16 %v5806
    %v6126 = vunpack.c.h.b16 %v5806
    %v6127 = vunpack.c.l.b16 %v5807
    %v6128 = vunpack.c.h.b16 %v5807
    %v6129 = vunpack.c.l.b16 %v5808
    %v6130 = vunpack.c.h.b16 %v5808
    %v6131 = vunpack.c.l.b16 %v5809
    %v6132 = vunpack.c.h.b16 %v5809
    %v6133 = vunpack.c.l.b16 %v5810
    %v6134 = vunpack.c.h.b16 %v5810
    %v6135 = vunpack.c.l.b16 %v5811
    %v6136 = vunpack.c.h.b16 %v5811
    %v6137 = vunpack.c.l.b16 %v5812
    %v6138 = vunpack.c.h.b16 %v5812
    %v6139 = vunpack.c.l.b16 %v5813
    %v6140 = vunpack.c.h.b16 %v5813
    %v6141 = vunpack.c.l.b16 %v5814
    %v6142 = vunpack.c.h.b16 %v5814
    %v6143 = vunpack.c.l.b16 %v5815
    %v6144 = vunpack.c.h.b16 %v5815
    %v6145 = vunpack.c.l.b16 %v5816
    %v6146 = vunpack.c.h.b16 %v5816
    %v6147 = vunpack.c.l.b16 %v5817
    %v6148 = vunpack.c.h.b16 %v5817
    %v6149 = vunpack.c.l.b16 %v5818
    %v6150 = vunpack.c.h.b16 %v5818
    %v6151 = vunpack.c.l.b16 %v5819
    %v6152 = vunpack.c.h.b16 %v5819
    %v6153 = vunpack.c.l.b16 %v5820
    %v6154 = vunpack.c.h.b16 %v5820
    %v6155 = vunpack.c.l.b16 %v5821
    %v6156 = vunpack.c.h.b16 %v5821
    %v6157 = vunpack.c.l.b16 %v5822
    %v6158 = vunpack.c.h.b16 %v5822
    %v6159 = vpack.c.b16 %v6035, %v6031
    %v6160 = vpack.c.b16 %v6036, %v6032
    %v6161 = vpack.c.b16 %v6037, %v6033
    %v6162 = vpack.c.b16 %v6038, %v6034
    %v6163 = vpack.c.b16 %v6043, %v6039
    %v6164 = vpack.c.b16 %v6044, %v6040
    %v6165 = vpack.c.b16 %v6045, %v6041
    %v6166 = vpack.c.b16 %v6046, %v6042
    %v6167 = vpack.c.b16 %v6051, %v6047
    %v6168 = vpack.c.b16 %v6052, %v6048
    %v6169 = vpack.c.b16 %v6053, %v6049
    %v6170 = vpack.c.b16 %v6054, %v6050
    %v6171 = vpack.c.b16 %v6059, %v6055
    %v6172 = vpack.c.b16 %v6060, %v6056
    %v6173 = vpack.c.b16 %v6061, %v6057
    %v6174 = vpack.c.b16 %v6062, %v6058
    %v6175 = vpack.c.b16 %v6067, %v6063
    %v6176 = vpack.c.b16 %v6068, %v6064
    %v6177 = vpack.c.b16 %v6069, %v6065
    %v6178 = vpack.c.b16 %v6070, %v6066
    %v6179 = vpack.c.b16 %v6075, %v6071
    %v6180 = vpack.c.b16 %v6076, %v6072
    %v6181 = vpack.c.b16 %v6077, %v6073
    %v6182 = vpack.c.b16 %v6078, %v6074
    %v6183 = vpack.c.b16 %v6083, %v6079
    %v6184 = vpack.c.b16 %v6084, %v6080
    %v6185 = vpack.c.b16 %v6085, %v6081
    %v6186 = vpack.c.b16 %v6086, %v6082
    %v6187 = vpack.c.b16 %v6091, %v6087
    %v6188 = vpack.c.b16 %v6092, %v6088
    %v6189 = vpack.c.b16 %v6093, %v6089
    %v6190 = vpack.c.b16 %v6094, %v6090
    %v6191 = vpack.c.b16 %v6099, %v6095
    %v6192 = vpack.c.b16 %v6100, %v6096
    %v6193 = vpack.c.b16 %v6101, %v6097
    %v6194 = vpack.c.b16 %v6102, %v6098
    %v6195 = vpack.c.b16 %v6107, %v6103
    %v6196 = vpack.c.b16 %v6108, %v6104
    %v6197 = vpack.c.b16 %v6109, %v6105
    %v6198 = vpack.c.b16 %v6110, %v6106
    %v6199 = vpack.c.b16 %v6115, %v6111
    %v6200 = vpack.c.b16 %v6116, %v6112
    %v6201 = vpack.c.b16 %v6117, %v6113
    %v6202 = vpack.c.b16 %v6118, %v6114
    %v6203 = vpack.c.b16 %v6123, %v6119
    %v6204 = vpack.c.b16 %v6124, %v6120
    %v6205 = vpack.c.b16 %v6125, %v6121
    %v6206 = vpack.c.b16 %v6126, %v6122
    %v6207 = vpack.c.b16 %v6131, %v6127
    %v6208 = vpack.c.b16 %v6132, %v6128
    %v6209 = vpack.c.b16 %v6133, %v6129
    %v6210 = vpack.c.b16 %v6134, %v6130
    %v6211 = vpack.c.b16 %v6139, %v6135
    %v6212 = vpack.c.b16 %v6140, %v6136
    %v6213 = vpack.c.b16 %v6141, %v6137
    %v6214 = vpack.c.b16 %v6142, %v6138
    %v6215 = vpack.c.b16 %v6147, %v6143
    %v6216 = vpack.c.b16 %v6148, %v6144
    %v6217 = vpack.c.b16 %v6149, %v6145
    %v6218 = vpack.c.b16 %v6150, %v6146
    %v6219 = vpack.c.b16 %v6155, %v6151
    %v6220 = vpack.c.b16 %v6156, %v6152
    %v6221 = vpack.c.b16 %v6157, %v6153
    %v6222 = vpack.c.b16 %v6158, %v6154
    %6287 = vmatprep.subr.bf16.mxu0 %v6160
    %6288 = vmatpush1.bf16.msra.mxu0 %v6159
    %6289 = vmatprep.subr.bf16.mxu0 %v6164
    %6290 = vmatpush1.bf16.msra.mxu0 %v6163
    %6291 = vmatprep.subr.bf16.mxu0 %v6168
    %6292 = vmatpush1.bf16.msra.mxu0 %v6167
    %6293 = vmatprep.subr.bf16.mxu0 %v6172
    %6294 = vmatpush1.bf16.msra.mxu0 %v6171
    %6295 = vmatprep.subr.bf16.mxu0 %v6176
    %6296 = vmatpush1.bf16.msra.mxu0 %v6175
    %6297 = vmatprep.subr.bf16.mxu0 %v6180
    %6298 = vmatpush1.bf16.msra.mxu0 %v6179
    %6299 = vmatprep.subr.bf16.mxu0 %v6184
    %6300 = vmatpush1.bf16.msra.mxu0 %v6183
    %6301 = vmatprep.subr.bf16.mxu0 %v6188
    %6302 = vmatpush1.bf16.msra.mxu0 %v6187
    %6303 = vmatprep.subr.bf16.mxu0 %v6192
    %6304 = vmatpush1.bf16.msra.mxu0 %v6191
    %6305 = vmatprep.subr.bf16.mxu0 %v6196
    %6306 = vmatpush1.bf16.msra.mxu0 %v6195
    %6307 = vmatprep.subr.bf16.mxu0 %v6200
    %6308 = vmatpush1.bf16.msra.mxu0 %v6199
    %6309 = vmatprep.subr.bf16.mxu0 %v6204
    %6310 = vmatpush1.bf16.msra.mxu0 %v6203
    %6311 = vmatprep.subr.bf16.mxu0 %v6208
    %6312 = vmatpush1.bf16.msra.mxu0 %v6207
    %6313 = vmatprep.subr.bf16.mxu0 %v6212
    %6314 = vmatpush1.bf16.msra.mxu0 %v6211
    %6315 = vmatprep.subr.bf16.mxu0 %v6216
    %6316 = vmatpush1.bf16.msra.mxu0 %v6215
    %6317 = vmatprep.subr.bf16.mxu0 %v6220
    %6318 = vmatpush1.bf16.msra.mxu0 %v6219
    %6319 = vmatprep.mubr.bf16.mxu0 %v5945
    %6320 = vmatmul.mubr.bf16.gmra.mrb[0].mxu0 %v5944
    %v6321 = vpop.f32.mrb[0].mxu0
    %v6322 = vadd.f32 %v5950, %v6321
    %v6323 = vpop.f32.mrb[0].mxu0
    %v6324 = vadd.f32 %v5954, %v6323
    %v6325 = vpop.f32.mrb[0].mxu0
    %v6326 = vpop.f32.mrb[0].mxu0
    %6327 = vdwg.mxu0
    %6328 = vmatprep.subr.bf16.mxu0 %v6162
    %6329 = vmatpush1.bf16.msra.mxu0 %v6161
    %6330 = vmatprep.subr.bf16.mxu0 %v6166
    %6331 = vmatpush1.bf16.msra.mxu0 %v6165
    %6332 = vmatprep.subr.bf16.mxu0 %v6170
    %6333 = vmatpush1.bf16.msra.mxu0 %v6169
    %6334 = vmatprep.subr.bf16.mxu0 %v6174
    %6335 = vmatpush1.bf16.msra.mxu0 %v6173
    %6336 = vmatprep.subr.bf16.mxu0 %v6178
    %6337 = vmatpush1.bf16.msra.mxu0 %v6177
    %6338 = vmatprep.subr.bf16.mxu0 %v6182
    %6339 = vmatpush1.bf16.msra.mxu0 %v6181
    %6340 = vmatprep.subr.bf16.mxu0 %v6186
    %6341 = vmatpush1.bf16.msra.mxu0 %v6185
    %6342 = vmatprep.subr.bf16.mxu0 %v6190
    %6343 = vmatpush1.bf16.msra.mxu0 %v6189
    %6344 = vmatprep.subr.bf16.mxu0 %v6194
    %6345 = vmatpush1.bf16.msra.mxu0 %v6193
    %6346 = vmatprep.subr.bf16.mxu0 %v6198
    %6347 = vmatpush1.bf16.msra.mxu0 %v6197
    %6348 = vmatprep.subr.bf16.mxu0 %v6202
    %6349 = vmatpush1.bf16.msra.mxu0 %v6201
    %6350 = vmatprep.subr.bf16.mxu0 %v6206
    %6351 = vmatpush1.bf16.msra.mxu0 %v6205
    %6352 = vmatprep.subr.bf16.mxu0 %v6210
    %6353 = vmatpush1.bf16.msra.mxu0 %v6209
    %6354 = vmatprep.subr.bf16.mxu0 %v6214
    %6355 = vmatpush1.bf16.msra.mxu0 %v6213
    %6356 = vmatprep.subr.bf16.mxu0 %v6218
    %6357 = vmatpush1.bf16.msra.mxu0 %v6217
    %6358 = vmatprep.subr.bf16.mxu0 %v6222
    %6359 = vmatpush1.bf16.msra.mxu0 %v6221
    %6360 = vmatprep.mubr.bf16.mxu0 %v5945
    %6361 = vmatmul.mubr.bf16.gmra.mrb[0].mxu0 %v5944
    %v6362 = vpop.f32.mrb[0].mxu0
    %v6363 = vadd.f32 %v5958, %v6362
    %v6364 = vpop.f32.mrb[0].mxu0
    %v6365 = vadd.f32 %v5962, %v6364
    %v6366 = vpop.f32.mrb[0].mxu0
    %v6367 = vpop.f32.mrb[0].mxu0
    %6368 = vdwg.mxu0
    %v6369 = vmax.f32 %v6322, 0.0
    %v6370 = vmax.f32 %v6324, 0.0
    %v6371 = vmax.f32 %v6363, 0.0
    %v6372 = vmax.f32 %v6365, 0.0
    %v6373 = vpack.c.bf16 %v6369, %v6369
    %v6374 = vpack.c.bf16 %v6370, %v6370
    %v6375 = vpack.c.bf16 %v6371, %v6371
    %v6376 = vpack.c.bf16 %v6372, %v6372
    %v6378 = vlaneseq
    %v6379 = vshrl.u32 %v6378, 7
    %v6380 = vsub.s32 0, %v6379
    %v6381 = vrot.slane %v5891, %v6380
    %v6382 = vlaneseq
    %v6383 = vshrl.u32 %v6382, 7
    %v6384 = vsub.s32 1, %v6383
    %v6385 = vrot.slane %v5891, %v6384
    %v6452 = vunpack.c.l.b16 %v5826
    %v6453 = vunpack.c.h.b16 %v5826
    %v6454 = vunpack.c.l.b16 %v5827
    %v6455 = vunpack.c.h.b16 %v5827
    %v6456 = vunpack.c.l.b16 %v5828
    %v6457 = vunpack.c.h.b16 %v5828
    %v6458 = vunpack.c.l.b16 %v5829
    %v6459 = vunpack.c.h.b16 %v5829
    %v6460 = vunpack.c.l.b16 %v5830
    %v6461 = vunpack.c.h.b16 %v5830
    %v6462 = vunpack.c.l.b16 %v5831
    %v6463 = vunpack.c.h.b16 %v5831
    %v6464 = vunpack.c.l.b16 %v5832
    %v6465 = vunpack.c.h.b16 %v5832
    %v6466 = vunpack.c.l.b16 %v5833
    %v6467 = vunpack.c.h.b16 %v5833
    %v6468 = vunpack.c.l.b16 %v5834
    %v6469 = vunpack.c.h.b16 %v5834
    %v6470 = vunpack.c.l.b16 %v5835
    %v6471 = vunpack.c.h.b16 %v5835
    %v6472 = vunpack.c.l.b16 %v5836
    %v6473 = vunpack.c.h.b16 %v5836
    %v6474 = vunpack.c.l.b16 %v5837
    %v6475 = vunpack.c.h.b16 %v5837
    %v6476 = vunpack.c.l.b16 %v5838
    %v6477 = vunpack.c.h.b16 %v5838
    %v6478 = vunpack.c.l.b16 %v5839
    %v6479 = vunpack.c.h.b16 %v5839
    %v6480 = vunpack.c.l.b16 %v5840
    %v6481 = vunpack.c.h.b16 %v5840
    %v6482 = vunpack.c.l.b16 %v5841
    %v6483 = vunpack.c.h.b16 %v5841
    %v6484 = vunpack.c.l.b16 %v5842
    %v6485 = vunpack.c.h.b16 %v5842
    %v6486 = vunpack.c.l.b16 %v5843
    %v6487 = vunpack.c.h.b16 %v5843
    %v6488 = vunpack.c.l.b16 %v5844
    %v6489 = vunpack.c.h.b16 %v5844
    %v6490 = vunpack.c.l.b16 %v5845
    %v6491 = vunpack.c.h.b16 %v5845
    %v6492 = vunpack.c.l.b16 %v5846
    %v6493 = vunpack.c.h.b16 %v5846
    %v6494 = vunpack.c.l.b16 %v5847
    %v6495 = vunpack.c.h.b16 %v5847
    %v6496 = vunpack.c.l.b16 %v5848
    %v6497 = vunpack.c.h.b16 %v5848
    %v6498 = vunpack.c.l.b16 %v5849
    %v6499 = vunpack.c.h.b16 %v5849
    %v6500 = vunpack.c.l.b16 %v5850
    %v6501 = vunpack.c.h.b16 %v5850
    %v6502 = vunpack.c.l.b16 %v5851
    %v6503 = vunpack.c.h.b16 %v5851
    %v6504 = vunpack.c.l.b16 %v5852
    %v6505 = vunpack.c.h.b16 %v5852
    %v6506 = vunpack.c.l.b16 %v5853
    %v6507 = vunpack.c.h.b16 %v5853
    %v6508 = vunpack.c.l.b16 %v5854
    %v6509 = vunpack.c.h.b16 %v5854
    %v6510 = vunpack.c.l.b16 %v5855
    %v6511 = vunpack.c.h.b16 %v5855
    %v6512 = vunpack.c.l.b16 %v5856
    %v6513 = vunpack.c.h.b16 %v5856
    %v6514 = vunpack.c.l.b16 %v5857
    %v6515 = vunpack.c.h.b16 %v5857
    %v6516 = vunpack.c.l.b16 %v5858
    %v6517 = vunpack.c.h.b16 %v5858
    %v6518 = vunpack.c.l.b16 %v5859
    %v6519 = vunpack.c.h.b16 %v5859
    %v6520 = vunpack.c.l.b16 %v5860
    %v6521 = vunpack.c.h.b16 %v5860
    %v6522 = vunpack.c.l.b16 %v5861
    %v6523 = vunpack.c.h.b16 %v5861
    %v6524 = vunpack.c.l.b16 %v5862
    %v6525 = vunpack.c.h.b16 %v5862
    %v6526 = vunpack.c.l.b16 %v5863
    %v6527 = vunpack.c.h.b16 %v5863
    %v6528 = vunpack.c.l.b16 %v5864
    %v6529 = vunpack.c.h.b16 %v5864
    %v6530 = vunpack.c.l.b16 %v5865
    %v6531 = vunpack.c.h.b16 %v5865
    %v6532 = vunpack.c.l.b16 %v5866
    %v6533 = vunpack.c.h.b16 %v5866
    %v6534 = vunpack.c.l.b16 %v5867
    %v6535 = vunpack.c.h.b16 %v5867
    %v6536 = vunpack.c.l.b16 %v5868
    %v6537 = vunpack.c.h.b16 %v5868
    %v6538 = vunpack.c.l.b16 %v5869
    %v6539 = vunpack.c.h.b16 %v5869
    %v6540 = vunpack.c.l.b16 %v5870
    %v6541 = vunpack.c.h.b16 %v5870
    %v6542 = vunpack.c.l.b16 %v5871
    %v6543 = vunpack.c.h.b16 %v5871
    %v6544 = vunpack.c.l.b16 %v5872
    %v6545 = vunpack.c.h.b16 %v5872
    %v6546 = vunpack.c.l.b16 %v5873
    %v6547 = vunpack.c.h.b16 %v5873
    %v6548 = vunpack.c.l.b16 %v5874
    %v6549 = vunpack.c.h.b16 %v5874
    %v6550 = vunpack.c.l.b16 %v5875
    %v6551 = vunpack.c.h.b16 %v5875
    %v6552 = vunpack.c.l.b16 %v5876
    %v6553 = vunpack.c.h.b16 %v5876
    %v6554 = vunpack.c.l.b16 %v5877
    %v6555 = vunpack.c.h.b16 %v5877
    %v6556 = vunpack.c.l.b16 %v5878
    %v6557 = vunpack.c.h.b16 %v5878
    %v6558 = vunpack.c.l.b16 %v5879
    %v6559 = vunpack.c.h.b16 %v5879
    %v6560 = vunpack.c.l.b16 %v5880
    %v6561 = vunpack.c.h.b16 %v5880
    %v6562 = vunpack.c.l.b16 %v5881
    %v6563 = vunpack.c.h.b16 %v5881
    %v6564 = vunpack.c.l.b16 %v5882
    %v6565 = vunpack.c.h.b16 %v5882
    %v6566 = vunpack.c.l.b16 %v5883
    %v6567 = vunpack.c.h.b16 %v5883
    %v6568 = vunpack.c.l.b16 %v5884
    %v6569 = vunpack.c.h.b16 %v5884
    %v6570 = vunpack.c.l.b16 %v5885
    %v6571 = vunpack.c.h.b16 %v5885
    %v6572 = vunpack.c.l.b16 %v5886
    %v6573 = vunpack.c.h.b16 %v5886
    %v6574 = vunpack.c.l.b16 %v5887
    %v6575 = vunpack.c.h.b16 %v5887
    %v6576 = vunpack.c.l.b16 %v5888
    %v6577 = vunpack.c.h.b16 %v5888
    %v6578 = vunpack.c.l.b16 %v5889
    %v6579 = vunpack.c.h.b16 %v5889
    %v6580 = vpack.c.b16 %v6454, %v6452
    %v6581 = vpack.c.b16 %v6455, %v6453
    %v6582 = vpack.c.b16 %v6458, %v6456
    %v6583 = vpack.c.b16 %v6459, %v6457
    %v6584 = vpack.c.b16 %v6462, %v6460
    %v6585 = vpack.c.b16 %v6463, %v6461
    %v6586 = vpack.c.b16 %v6466, %v6464
    %v6587 = vpack.c.b16 %v6467, %v6465
    %v6588 = vpack.c.b16 %v6470, %v6468
    %v6589 = vpack.c.b16 %v6471, %v6469
    %v6590 = vpack.c.b16 %v6474, %v6472
    %v6591 = vpack.c.b16 %v6475, %v6473
    %v6592 = vpack.c.b16 %v6478, %v6476
    %v6593 = vpack.c.b16 %v6479, %v6477
    %v6594 = vpack.c.b16 %v6482, %v6480
    %v6595 = vpack.c.b16 %v6483, %v6481
    %v6596 = vpack.c.b16 %v6486, %v6484
    %v6597 = vpack.c.b16 %v6487, %v6485
    %v6598 = vpack.c.b16 %v6490, %v6488
    %v6599 = vpack.c.b16 %v6491, %v6489
    %v6600 = vpack.c.b16 %v6494, %v6492
    %v6601 = vpack.c.b16 %v6495, %v6493
    %v6602 = vpack.c.b16 %v6498, %v6496
    %v6603 = vpack.c.b16 %v6499, %v6497
    %v6604 = vpack.c.b16 %v6502, %v6500
    %v6605 = vpack.c.b16 %v6503, %v6501
    %v6606 = vpack.c.b16 %v6506, %v6504
    %v6607 = vpack.c.b16 %v6507, %v6505
    %v6608 = vpack.c.b16 %v6510, %v6508
    %v6609 = vpack.c.b16 %v6511, %v6509
    %v6610 = vpack.c.b16 %v6514, %v6512
    %v6611 = vpack.c.b16 %v6515, %v6513
    %v6612 = vpack.c.b16 %v6518, %v6516
    %v6613 = vpack.c.b16 %v6519, %v6517
    %v6614 = vpack.c.b16 %v6522, %v6520
    %v6615 = vpack.c.b16 %v6523, %v6521
    %v6616 = vpack.c.b16 %v6526, %v6524
    %v6617 = vpack.c.b16 %v6527, %v6525
    %v6618 = vpack.c.b16 %v6530, %v6528
    %v6619 = vpack.c.b16 %v6531, %v6529
    %v6620 = vpack.c.b16 %v6534, %v6532
    %v6621 = vpack.c.b16 %v6535, %v6533
    %v6622 = vpack.c.b16 %v6538, %v6536
    %v6623 = vpack.c.b16 %v6539, %v6537
    %v6624 = vpack.c.b16 %v6542, %v6540
    %v6625 = vpack.c.b16 %v6543, %v6541
    %v6626 = vpack.c.b16 %v6546, %v6544
    %v6627 = vpack.c.b16 %v6547, %v6545
    %v6628 = vpack.c.b16 %v6550, %v6548
    %v6629 = vpack.c.b16 %v6551, %v6549
    %v6630 = vpack.c.b16 %v6554, %v6552
    %v6631 = vpack.c.b16 %v6555, %v6553
    %v6632 = vpack.c.b16 %v6558, %v6556
    %v6633 = vpack.c.b16 %v6559, %v6557
    %v6634 = vpack.c.b16 %v6562, %v6560
    %v6635 = vpack.c.b16 %v6563, %v6561
    %v6636 = vpack.c.b16 %v6566, %v6564
    %v6637 = vpack.c.b16 %v6567, %v6565
    %v6638 = vpack.c.b16 %v6570, %v6568
    %v6639 = vpack.c.b16 %v6571, %v6569
    %v6640 = vpack.c.b16 %v6574, %v6572
    %v6641 = vpack.c.b16 %v6575, %v6573
    %v6642 = vpack.c.b16 %v6578, %v6576
    %v6643 = vpack.c.b16 %v6579, %v6577
    %6708 = vmatprep.subr.bf16.mxu0 %v6581
    %6709 = vmatpush1.bf16.msra.mxu0 %v6580
    %6710 = vmatprep.subr.bf16.mxu0 %v6583
    %6711 = vmatpush1.bf16.msra.mxu0 %v6582
    %6712 = vmatprep.subr.bf16.mxu0 %v6585
    %6713 = vmatpush1.bf16.msra.mxu0 %v6584
    %6714 = vmatprep.subr.bf16.mxu0 %v6587
    %6715 = vmatpush1.bf16.msra.mxu0 %v6586
    %6716 = vmatprep.subr.bf16.mxu0 %v6589
    %6717 = vmatpush1.bf16.msra.mxu0 %v6588
    %6718 = vmatprep.subr.bf16.mxu0 %v6591
    %6719 = vmatpush1.bf16.msra.mxu0 %v6590
    %6720 = vmatprep.subr.bf16.mxu0 %v6593
    %6721 = vmatpush1.bf16.msra.mxu0 %v6592
    %6722 = vmatprep.subr.bf16.mxu0 %v6595
    %6723 = vmatpush1.bf16.msra.mxu0 %v6594
    %6724 = vmatprep.subr.bf16.mxu0 %v6597
    %6725 = vmatpush1.bf16.msra.mxu0 %v6596
    %6726 = vmatprep.subr.bf16.mxu0 %v6599
    %6727 = vmatpush1.bf16.msra.mxu0 %v6598
    %6728 = vmatprep.subr.bf16.mxu0 %v6601
    %6729 = vmatpush1.bf16.msra.mxu0 %v6600
    %6730 = vmatprep.subr.bf16.mxu0 %v6603
    %6731 = vmatpush1.bf16.msra.mxu0 %v6602
    %6732 = vmatprep.subr.bf16.mxu0 %v6605
    %6733 = vmatpush1.bf16.msra.mxu0 %v6604
    %6734 = vmatprep.subr.bf16.mxu0 %v6607
    %6735 = vmatpush1.bf16.msra.mxu0 %v6606
    %6736 = vmatprep.subr.bf16.mxu0 %v6609
    %6737 = vmatpush1.bf16.msra.mxu0 %v6608
    %6738 = vmatprep.subr.bf16.mxu0 %v6611
    %6739 = vmatpush1.bf16.msra.mxu0 %v6610
    %6740 = vmatprep.mubr.bf16.mxu0 %v6374
    %6741 = vmatmul.mubr.bf16.gmra.mrb[0].mxu0 %v6373
    %v6742 = vpop.f32.mrb[0].mxu0
    %v6743 = vadd.f32 %v6381, %v6742
    %v6744 = vpop.f32.mrb[0].mxu0
    %v6745 = vadd.f32 %v6385, %v6744
    %v6746 = vpop.f32.mrb[0].mxu0
    %v6747 = vpop.f32.mrb[0].mxu0
    %6748 = vdwg.mxu0
    %6749 = vmatprep.subr.bf16.mxu0 %v6613
    %6750 = vmatpush1.bf16.msra.mxu0 %v6612
    %6751 = vmatprep.subr.bf16.mxu0 %v6615
    %6752 = vmatpush1.bf16.msra.mxu0 %v6614
    %6753 = vmatprep.subr.bf16.mxu0 %v6617
    %6754 = vmatpush1.bf16.msra.mxu0 %v6616
    %6755 = vmatprep.subr.bf16.mxu0 %v6619
    %6756 = vmatpush1.bf16.msra.mxu0 %v6618
    %6757 = vmatprep.subr.bf16.mxu0 %v6621
    %6758 = vmatpush1.bf16.msra.mxu0 %v6620
    %6759 = vmatprep.subr.bf16.mxu0 %v6623
    %6760 = vmatpush1.bf16.msra.mxu0 %v6622
    %6761 = vmatprep.subr.bf16.mxu0 %v6625
    %6762 = vmatpush1.bf16.msra.mxu0 %v6624
    %6763 = vmatprep.subr.bf16.mxu0 %v6627
    %6764 = vmatpush1.bf16.msra.mxu0 %v6626
    %6765 = vmatprep.subr.bf16.mxu0 %v6629
    %6766 = vmatpush1.bf16.msra.mxu0 %v6628
    %6767 = vmatprep.subr.bf16.mxu0 %v6631
    %6768 = vmatpush1.bf16.msra.mxu0 %v6630
    %6769 = vmatprep.subr.bf16.mxu0 %v6633
    %6770 = vmatpush1.bf16.msra.mxu0 %v6632
    %6771 = vmatprep.subr.bf16.mxu0 %v6635
    %6772 = vmatpush1.bf16.msra.mxu0 %v6634
    %6773 = vmatprep.subr.bf16.mxu0 %v6637
    %6774 = vmatpush1.bf16.msra.mxu0 %v6636
    %6775 = vmatprep.subr.bf16.mxu0 %v6639
    %6776 = vmatpush1.bf16.msra.mxu0 %v6638
    %6777 = vmatprep.subr.bf16.mxu0 %v6641
    %6778 = vmatpush1.bf16.msra.mxu0 %v6640
    %6779 = vmatprep.subr.bf16.mxu0 %v6643
    %6780 = vmatpush1.bf16.msra.mxu0 %v6642
    %6781 = vmatprep.mubr.bf16.mxu0 %v6376
    %6782 = vmatmul.mubr.bf16.gmra.mrb[0].mxu0 %v6375
    %v6783 = vpop.f32.mrb[0].mxu0
    %v6784 = vadd.f32 %v6743, %v6783
    %v6785 = vpop.f32.mrb[0].mxu0
    %v6786 = vadd.f32 %v6745, %v6785
    %v6787 = vpop.f32.mrb[0].mxu0
    %v6788 = vpop.f32.mrb[0].mxu0
    %6789 = vdwg.mxu0
    %v6790 = vadd.f32 %v5942, %v6784
    %v6791 = vadd.f32 %v5943, %v6786
    %v6792 = vsel %vm3485, %v6790, 0.0
    %v6793 = vsel %vm3485, %v6791, 0.0
    %v6794 = vadd.f32 %v6792, %v6793
    %6795 = vadd.xlane.f32.xlu0 %v6794
    %v6796 = vpop.xlane.xlu0 %6795
    %v6797 = vmul.f32 %v6796, %v3491
    %v6798 = vsub.f32 %v6790, %v6797
    %v6799 = vsub.f32 %v6791, %v6797
    %v6800 = vmul.f32 %v6798, %v6798
    %v6801 = vmul.f32 %v6799, %v6799
    %v6802 = vsel %vm3485, %v6800, 0.0
    %v6803 = vsel %vm3485, %v6801, 0.0
    %v6804 = vadd.f32 %v6802, %v6803
    %6805 = vadd.xlane.f32.xlu0 %v6804
    %v6806 = vpop.xlane.xlu0 %6805
    %v6807 = vmul.f32 %v6806, %v3491
    %v6808 = vadd.f32 %v6807, 1e-05
    %v6809 = vrsqrt.pop %v6808
    %v6810 = vmul.f32 %v6798, %v6809
    %v6811 = vmul.f32 %v6799, %v6809
    %v6813 = vlaneseq
    %v6814 = vshrl.u32 %v6813, 7
    %v6815 = vsub.s32 0, %v6814
    %v6816 = vrot.slane %v5893, %v6815
    %v6817 = vlaneseq
    %v6818 = vshrl.u32 %v6817, 7
    %v6819 = vsub.s32 1, %v6818
    %v6820 = vrot.slane %v5893, %v6819
    %v6823 = vmul.f32 %v6810, %v6816
    %v6824 = vmul.f32 %v6811, %v6820
    %v6826 = vlaneseq
    %v6827 = vshrl.u32 %v6826, 7
    %v6828 = vsub.s32 0, %v6827
    %v6829 = vrot.slane %v5895, %v6828
    %v6830 = vlaneseq
    %v6831 = vshrl.u32 %v6830, 7
    %v6832 = vsub.s32 1, %v6831
    %v6833 = vrot.slane %v5895, %v6832
    %v6836 = vadd.f32 %v6823, %v6829
    %v6837 = vadd.f32 %v6824, %v6833
    %v6838 = vld [vmem:[%s77] sm:$0xff]
    %v6839 = vld [vmem:[%s77 + $0x8] sm:$0xff]
    %v6840 = vld [vmem:[%s77 + $0x10] sm:$0xff]
    %v6841 = vld [vmem:[%s77 + $0x18] sm:$0xff]
    %v6842 = vld [vmem:[%s77 + $0x20] sm:$0xff]
    %v6843 = vld [vmem:[%s77 + $0x28] sm:$0xff]
    %v6844 = vld [vmem:[%s77 + $0x30] sm:$0xff]
    %v6845 = vld [vmem:[%s77 + $0x38] sm:$0xff]
    %v6846 = vld [vmem:[%s77 + $0x40] sm:$0xff]
    %v6847 = vld [vmem:[%s77 + $0x48] sm:$0xff]
    %v6848 = vld [vmem:[%s77 + $0x50] sm:$0xff]
    %v6849 = vld [vmem:[%s77 + $0x58] sm:$0xff]
    %v6850 = vld [vmem:[%s77 + $0x60] sm:$0xff]
    %v6851 = vld [vmem:[%s77 + $0x68] sm:$0xff]
    %v6852 = vld [vmem:[%s77 + $0x70] sm:$0xff]
    %v6853 = vld [vmem:[%s77 + $0x78] sm:$0xff]
    %v6854 = vld [vmem:[%s77 + $0x80] sm:$0xff]
    %v6855 = vld [vmem:[%s77 + $0x88] sm:$0xff]
    %v6856 = vld [vmem:[%s77 + $0x90] sm:$0xff]
    %v6857 = vld [vmem:[%s77 + $0x98] sm:$0xff]
    %v6858 = vld [vmem:[%s77 + $0xa0] sm:$0xff]
    %v6859 = vld [vmem:[%s77 + $0xa8] sm:$0xff]
    %v6860 = vld [vmem:[%s77 + $0xb0] sm:$0xff]
    %v6861 = vld [vmem:[%s77 + $0xb8] sm:$0xff]
    %v6862 = vld [vmem:[%s77 + $0xc0] sm:$0xff]
    %v6863 = vld [vmem:[%s77 + $0xc8] sm:$0xff]
    %v6864 = vld [vmem:[%s77 + $0xd0] sm:$0xff]
    %v6865 = vld [vmem:[%s77 + $0xd8] sm:$0xff]
    %v6866 = vld [vmem:[%s77 + $0xe0] sm:$0xff]
    %v6867 = vld [vmem:[%s77 + $0xe8] sm:$0xff]
    %v6868 = vld [vmem:[%s77 + $0xf0] sm:$0xff]
    %v6869 = vld [vmem:[%s77 + $0xf8] sm:$0xff]
    %v6870 = vld [vmem:[%s75] sm:$0x3]
    %v6872 = vlaneseq
    %v6873 = vshrl.u32 %v6872, 7
    %v6874 = vsub.s32 0, %v6873
    %v6875 = vrot.slane %v6870, %v6874
    %v6876 = vlaneseq
    %v6877 = vshrl.u32 %v6876, 7
    %v6878 = vsub.s32 1, %v6877
    %v6879 = vrot.slane %v6870, %v6878
    %v6914 = vunpack.c.l.b16 %v6838
    %v6915 = vunpack.c.h.b16 %v6838
    %v6916 = vunpack.c.l.b16 %v6839
    %v6917 = vunpack.c.h.b16 %v6839
    %v6918 = vunpack.c.l.b16 %v6840
    %v6919 = vunpack.c.h.b16 %v6840
    %v6920 = vunpack.c.l.b16 %v6841
    %v6921 = vunpack.c.h.b16 %v6841
    %v6922 = vunpack.c.l.b16 %v6842
    %v6923 = vunpack.c.h.b16 %v6842
    %v6924 = vunpack.c.l.b16 %v6843
    %v6925 = vunpack.c.h.b16 %v6843
    %v6926 = vunpack.c.l.b16 %v6844
    %v6927 = vunpack.c.h.b16 %v6844
    %v6928 = vunpack.c.l.b16 %v6845
    %v6929 = vunpack.c.h.b16 %v6845
    %v6930 = vunpack.c.l.b16 %v6846
    %v6931 = vunpack.c.h.b16 %v6846
    %v6932 = vunpack.c.l.b16 %v6847
    %v6933 = vunpack.c.h.b16 %v6847
    %v6934 = vunpack.c.l.b16 %v6848
    %v6935 = vunpack.c.h.b16 %v6848
    %v6936 = vunpack.c.l.b16 %v6849
    %v6937 = vunpack.c.h.b16 %v6849
    %v6938 = vunpack.c.l.b16 %v6850
    %v6939 = vunpack.c.h.b16 %v6850
    %v6940 = vunpack.c.l.b16 %v6851
    %v6941 = vunpack.c.h.b16 %v6851
    %v6942 = vunpack.c.l.b16 %v6852
    %v6943 = vunpack.c.h.b16 %v6852
    %v6944 = vunpack.c.l.b16 %v6853
    %v6945 = vunpack.c.h.b16 %v6853
    %v6946 = vunpack.c.l.b16 %v6854
    %v6947 = vunpack.c.h.b16 %v6854
    %v6948 = vunpack.c.l.b16 %v6855
    %v6949 = vunpack.c.h.b16 %v6855
    %v6950 = vunpack.c.l.b16 %v6856
    %v6951 = vunpack.c.h.b16 %v6856
    %v6952 = vunpack.c.l.b16 %v6857
    %v6953 = vunpack.c.h.b16 %v6857
    %v6954 = vunpack.c.l.b16 %v6858
    %v6955 = vunpack.c.h.b16 %v6858
    %v6956 = vunpack.c.l.b16 %v6859
    %v6957 = vunpack.c.h.b16 %v6859
    %v6958 = vunpack.c.l.b16 %v6860
    %v6959 = vunpack.c.h.b16 %v6860
    %v6960 = vunpack.c.l.b16 %v6861
    %v6961 = vunpack.c.h.b16 %v6861
    %v6962 = vunpack.c.l.b16 %v6862
    %v6963 = vunpack.c.h.b16 %v6862
    %v6964 = vunpack.c.l.b16 %v6863
    %v6965 = vunpack.c.h.b16 %v6863
    %v6966 = vunpack.c.l.b16 %v6864
    %v6967 = vunpack.c.h.b16 %v6864
    %v6968 = vunpack.c.l.b16 %v6865
    %v6969 = vunpack.c.h.b16 %v6865
    %v6970 = vunpack.c.l.b16 %v6866
    %v6971 = vunpack.c.h.b16 %v6866
    %v6972 = vunpack.c.l.b16 %v6867
    %v6973 = vunpack.c.h.b16 %v6867
    %v6974 = vunpack.c.l.b16 %v6868
    %v6975 = vunpack.c.h.b16 %v6868
    %v6976 = vunpack.c.l.b16 %v6869
    %v6977 = vunpack.c.h.b16 %v6869
    %v6978 = vpack.c.b16 %v6916, %v6914
    %v6979 = vpack.c.b16 %v6917, %v6915
    %v6980 = vpack.c.b16 %v6920, %v6918
    %v6981 = vpack.c.b16 %v6921, %v6919
    %v6982 = vpack.c.b16 %v6924, %v6922
    %v6983 = vpack.c.b16 %v6925, %v6923
    %v6984 = vpack.c.b16 %v6928, %v6926
    %v6985 = vpack.c.b16 %v6929, %v6927
    %v6986 = vpack.c.b16 %v6932, %v6930
    %v6987 = vpack.c.b16 %v6933, %v6931
    %v6988 = vpack.c.b16 %v6936, %v6934
    %v6989 = vpack.c.b16 %v6937, %v6935
    %v6990 = vpack.c.b16 %v6940, %v6938
    %v6991 = vpack.c.b16 %v6941, %v6939
    %v6992 = vpack.c.b16 %v6944, %v6942
    %v6993 = vpack.c.b16 %v6945, %v6943
    %v6994 = vpack.c.b16 %v6948, %v6946
    %v6995 = vpack.c.b16 %v6949, %v6947
    %v6996 = vpack.c.b16 %v6952, %v6950
    %v6997 = vpack.c.b16 %v6953, %v6951
    %v6998 = vpack.c.b16 %v6956, %v6954
    %v6999 = vpack.c.b16 %v6957, %v6955
    %v7000 = vpack.c.b16 %v6960, %v6958
    %v7001 = vpack.c.b16 %v6961, %v6959
    %v7002 = vpack.c.b16 %v6964, %v6962
    %v7003 = vpack.c.b16 %v6965, %v6963
    %v7004 = vpack.c.b16 %v6968, %v6966
    %v7005 = vpack.c.b16 %v6969, %v6967
    %v7006 = vpack.c.b16 %v6972, %v6970
    %v7007 = vpack.c.b16 %v6973, %v6971
    %v7008 = vpack.c.b16 %v6976, %v6974
    %v7009 = vpack.c.b16 %v6977, %v6975
    %7042 = vmatprep.subr.bf16.mxu0 %v6979
    %7043 = vmatpush1.bf16.msra.mxu0 %v6978
    %7044 = vmatprep.subr.bf16.mxu0 %v6981
    %7045 = vmatpush1.bf16.msra.mxu0 %v6980
    %7046 = vmatprep.subr.bf16.mxu0 %v6983
    %7047 = vmatpush1.bf16.msra.mxu0 %v6982
    %7048 = vmatprep.subr.bf16.mxu0 %v6985
    %7049 = vmatpush1.bf16.msra.mxu0 %v6984
    %7050 = vmatprep.subr.bf16.mxu0 %v6987
    %7051 = vmatpush1.bf16.msra.mxu0 %v6986
    %7052 = vmatprep.subr.bf16.mxu0 %v6989
    %7053 = vmatpush1.bf16.msra.mxu0 %v6988
    %7054 = vmatprep.subr.bf16.mxu0 %v6991
    %7055 = vmatpush1.bf16.msra.mxu0 %v6990
    %7056 = vmatprep.subr.bf16.mxu0 %v6993
    %7057 = vmatpush1.bf16.msra.mxu0 %v6992
    %7058 = vmatprep.subr.bf16.mxu0 %v6995
    %7059 = vmatpush1.bf16.msra.mxu0 %v6994
    %7060 = vmatprep.subr.bf16.mxu0 %v6997
    %7061 = vmatpush1.bf16.msra.mxu0 %v6996
    %7062 = vmatprep.subr.bf16.mxu0 %v6999
    %7063 = vmatpush1.bf16.msra.mxu0 %v6998
    %7064 = vmatprep.subr.bf16.mxu0 %v7001
    %7065 = vmatpush1.bf16.msra.mxu0 %v7000
    %7066 = vmatprep.subr.bf16.mxu0 %v7003
    %7067 = vmatpush1.bf16.msra.mxu0 %v7002
    %7068 = vmatprep.subr.bf16.mxu0 %v7005
    %7069 = vmatpush1.bf16.msra.mxu0 %v7004
    %7070 = vmatprep.subr.bf16.mxu0 %v7007
    %7071 = vmatpush1.bf16.msra.mxu0 %v7006
    %7072 = vmatprep.subr.bf16.mxu0 %v7009
    %7073 = vmatpush1.bf16.msra.mxu0 %v7008
    %7074 = vmatprep.mubr.bf16.mxu0 %v799
    %7075 = vmatmul.mubr.bf16.gmra.mrb[0].mxu0 %v798
    %v7076 = vpop.f32.mrb[0].mxu0
    %v7077 = vadd.f32 %v6875, %v7076
    %v7078 = vpop.f32.mrb[0].mxu0
    %v7079 = vadd.f32 %v6879, %v7078
    %v7080 = vpop.f32.mrb[0].mxu0
    %v7081 = vpop.f32.mrb[0].mxu0
    %7082 = vdwg.mxu0
    %v7083 = vld [vmem:[%s69] sm:$0x3]
    %v7084 = vld [vmem:[%s67] sm:$0x3]
    %v7085 = vld [vmem:[%s79] sm:$0xff]
    %v7086 = vld [vmem:[%s79 + $0x8] sm:$0xff]
    %v7087 = vld [vmem:[%s79 + $0x10] sm:$0xff]
    %v7088 = vld [vmem:[%s79 + $0x18] sm:$0xff]
    %v7089 = vld [vmem:[%s79 + $0x20] sm:$0xff]
    %v7090 = vld [vmem:[%s79 + $0x28] sm:$0xff]
    %v7091 = vld [vmem:[%s79 + $0x30] sm:$0xff]
    %v7092 = vld [vmem:[%s79 + $0x38] sm:$0xff]
    %v7093 = vld [vmem:[%s79 + $0x40] sm:$0xff]
    %v7094 = vld [vmem:[%s79 + $0x48] sm:$0xff]
    %v7095 = vld [vmem:[%s79 + $0x50] sm:$0xff]
    %v7096 = vld [vmem:[%s79 + $0x58] sm:$0xff]
    %v7097 = vld [vmem:[%s79 + $0x60] sm:$0xff]
    %v7098 = vld [vmem:[%s79 + $0x68] sm:$0xff]
    %v7099 = vld [vmem:[%s79 + $0x70] sm:$0xff]
    %v7100 = vld [vmem:[%s79 + $0x78] sm:$0xff]
    %v7101 = vld [vmem:[%s79 + $0x80] sm:$0xff]
    %v7102 = vld [vmem:[%s79 + $0x88] sm:$0xff]
    %v7103 = vld [vmem:[%s79 + $0x90] sm:$0xff]
    %v7104 = vld [vmem:[%s79 + $0x98] sm:$0xff]
    %v7105 = vld [vmem:[%s79 + $0xa0] sm:$0xff]
    %v7106 = vld [vmem:[%s79 + $0xa8] sm:$0xff]
    %v7107 = vld [vmem:[%s79 + $0xb0] sm:$0xff]
    %v7108 = vld [vmem:[%s79 + $0xb8] sm:$0xff]
    %v7109 = vld [vmem:[%s79 + $0xc0] sm:$0xff]
    %v7110 = vld [vmem:[%s79 + $0xc8] sm:$0xff]
    %v7111 = vld [vmem:[%s79 + $0xd0] sm:$0xff]
    %v7112 = vld [vmem:[%s79 + $0xd8] sm:$0xff]
    %v7113 = vld [vmem:[%s79 + $0xe0] sm:$0xff]
    %v7114 = vld [vmem:[%s79 + $0xe8] sm:$0xff]
    %v7115 = vld [vmem:[%s79 + $0xf0] sm:$0xff]
    %v7116 = vld [vmem:[%s79 + $0xf8] sm:$0xff]
    %v7117 = vld [vmem:[%s79 + $0x100] sm:$0xff]
    %v7118 = vld [vmem:[%s79 + $0x108] sm:$0xff]
    %v7119 = vld [vmem:[%s79 + $0x110] sm:$0xff]
    %v7120 = vld [vmem:[%s79 + $0x118] sm:$0xff]
    %v7121 = vld [vmem:[%s79 + $0x120] sm:$0xff]
    %v7122 = vld [vmem:[%s79 + $0x128] sm:$0xff]
    %v7123 = vld [vmem:[%s79 + $0x130] sm:$0xff]
    %v7124 = vld [vmem:[%s79 + $0x138] sm:$0xff]
    %v7125 = vld [vmem:[%s79 + $0x140] sm:$0xff]
    %v7126 = vld [vmem:[%s79 + $0x148] sm:$0xff]
    %v7127 = vld [vmem:[%s79 + $0x150] sm:$0xff]
    %v7128 = vld [vmem:[%s79 + $0x158] sm:$0xff]
    %v7129 = vld [vmem:[%s79 + $0x160] sm:$0xff]
    %v7130 = vld [vmem:[%s79 + $0x168] sm:$0xff]
    %v7131 = vld [vmem:[%s79 + $0x170] sm:$0xff]
    %v7132 = vld [vmem:[%s79 + $0x178] sm:$0xff]
    %v7133 = vld [vmem:[%s79 + $0x180] sm:$0xff]
    %v7134 = vld [vmem:[%s79 + $0x188] sm:$0xff]
    %v7135 = vld [vmem:[%s79 + $0x190] sm:$0xff]
    %v7136 = vld [vmem:[%s79 + $0x198] sm:$0xff]
    %v7137 = vld [vmem:[%s79 + $0x1a0] sm:$0xff]
    %v7138 = vld [vmem:[%s79 + $0x1a8] sm:$0xff]
    %v7139 = vld [vmem:[%s79 + $0x1b0] sm:$0xff]
    %v7140 = vld [vmem:[%s79 + $0x1b8] sm:$0xff]
    %v7141 = vld [vmem:[%s79 + $0x1c0] sm:$0xff]
    %v7142 = vld [vmem:[%s79 + $0x1c8] sm:$0xff]
    %v7143 = vld [vmem:[%s79 + $0x1d0] sm:$0xff]
    %v7144 = vld [vmem:[%s79 + $0x1d8] sm:$0xff]
    %v7145 = vld [vmem:[%s79 + $0x1e0] sm:$0xff]
    %v7146 = vld [vmem:[%s79 + $0x1e8] sm:$0xff]
    %v7147 = vld [vmem:[%s79 + $0x1f0] sm:$0xff]
    %v7148 = vld [vmem:[%s79 + $0x1f8] sm:$0xff]
    %v7149 = vld [vmem:[%s59] sm:$0xf]
    %v7150 = vld [vmem:[%s81] sm:$0xff]
    %v7151 = vld [vmem:[%s81 + $0x8] sm:$0xff]
    %v7152 = vld [vmem:[%s81 + $0x10] sm:$0xff]
    %v7153 = vld [vmem:[%s81 + $0x18] sm:$0xff]
    %v7154 = vld [vmem:[%s81 + $0x20] sm:$0xff]
    %v7155 = vld [vmem:[%s81 + $0x28] sm:$0xff]
    %v7156 = vld [vmem:[%s81 + $0x30] sm:$0xff]
    %v7157 = vld [vmem:[%s81 + $0x38] sm:$0xff]
    %v7158 = vld [vmem:[%s81 + $0x40] sm:$0xff]
    %v7159 = vld [vmem:[%s81 + $0x48] sm:$0xff]
    %v7160 = vld [vmem:[%s81 + $0x50] sm:$0xff]
    %v7161 = vld [vmem:[%s81 + $0x58] sm:$0xff]
    %v7162 = vld [vmem:[%s81 + $0x60] sm:$0xff]
    %v7163 = vld [vmem:[%s81 + $0x68] sm:$0xff]
    %v7164 = vld [vmem:[%s81 + $0x70] sm:$0xff]
    %v7165 = vld [vmem:[%s81 + $0x78] sm:$0xff]
    %v7166 = vld [vmem:[%s81 + $0x80] sm:$0xff]
    %v7167 = vld [vmem:[%s81 + $0x88] sm:$0xff]
    %v7168 = vld [vmem:[%s81 + $0x90] sm:$0xff]
    %v7169 = vld [vmem:[%s81 + $0x98] sm:$0xff]
    %v7170 = vld [vmem:[%s81 + $0xa0] sm:$0xff]
    %v7171 = vld [vmem:[%s81 + $0xa8] sm:$0xff]
    %v7172 = vld [vmem:[%s81 + $0xb0] sm:$0xff]
    %v7173 = vld [vmem:[%s81 + $0xb8] sm:$0xff]
    %v7174 = vld [vmem:[%s81 + $0xc0] sm:$0xff]
    %v7175 = vld [vmem:[%s81 + $0xc8] sm:$0xff]
    %v7176 = vld [vmem:[%s81 + $0xd0] sm:$0xff]
    %v7177 = vld [vmem:[%s81 + $0xd8] sm:$0xff]
    %v7178 = vld [vmem:[%s81 + $0xe0] sm:$0xff]
    %v7179 = vld [vmem:[%s81 + $0xe8] sm:$0xff]
    %v7180 = vld [vmem:[%s81 + $0xf0] sm:$0xff]
    %v7181 = vld [vmem:[%s81 + $0xf8] sm:$0xff]
    %v7182 = vld [vmem:[%s81 + $0x100] sm:$0xff]
    %v7183 = vld [vmem:[%s81 + $0x108] sm:$0xff]
    %v7184 = vld [vmem:[%s81 + $0x110] sm:$0xff]
    %v7185 = vld [vmem:[%s81 + $0x118] sm:$0xff]
    %v7186 = vld [vmem:[%s81 + $0x120] sm:$0xff]
    %v7187 = vld [vmem:[%s81 + $0x128] sm:$0xff]
    %v7188 = vld [vmem:[%s81 + $0x130] sm:$0xff]
    %v7189 = vld [vmem:[%s81 + $0x138] sm:$0xff]
    %v7190 = vld [vmem:[%s81 + $0x140] sm:$0xff]
    %v7191 = vld [vmem:[%s81 + $0x148] sm:$0xff]
    %v7192 = vld [vmem:[%s81 + $0x150] sm:$0xff]
    %v7193 = vld [vmem:[%s81 + $0x158] sm:$0xff]
    %v7194 = vld [vmem:[%s81 + $0x160] sm:$0xff]
    %v7195 = vld [vmem:[%s81 + $0x168] sm:$0xff]
    %v7196 = vld [vmem:[%s81 + $0x170] sm:$0xff]
    %v7197 = vld [vmem:[%s81 + $0x178] sm:$0xff]
    %v7198 = vld [vmem:[%s81 + $0x180] sm:$0xff]
    %v7199 = vld [vmem:[%s81 + $0x188] sm:$0xff]
    %v7200 = vld [vmem:[%s81 + $0x190] sm:$0xff]
    %v7201 = vld [vmem:[%s81 + $0x198] sm:$0xff]
    %v7202 = vld [vmem:[%s81 + $0x1a0] sm:$0xff]
    %v7203 = vld [vmem:[%s81 + $0x1a8] sm:$0xff]
    %v7204 = vld [vmem:[%s81 + $0x1b0] sm:$0xff]
    %v7205 = vld [vmem:[%s81 + $0x1b8] sm:$0xff]
    %v7206 = vld [vmem:[%s81 + $0x1c0] sm:$0xff]
    %v7207 = vld [vmem:[%s81 + $0x1c8] sm:$0xff]
    %v7208 = vld [vmem:[%s81 + $0x1d0] sm:$0xff]
    %v7209 = vld [vmem:[%s81 + $0x1d8] sm:$0xff]
    %v7210 = vld [vmem:[%s81 + $0x1e0] sm:$0xff]
    %v7211 = vld [vmem:[%s81 + $0x1e8] sm:$0xff]
    %v7212 = vld [vmem:[%s81 + $0x1f0] sm:$0xff]
    %v7213 = vld [vmem:[%s81 + $0x1f8] sm:$0xff]
    %v7214 = vld [vmem:[%s61] sm:$0x3]
    %v7215 = vld [vmem:[%s73] sm:$0x3]
    %v7216 = vld [vmem:[%s71] sm:$0x3]
    %v7217 = vadd.f32 %v763, %v7077
    %v7218 = vadd.f32 %v764, %v7079
    %v7219 = vsel %vm3485, %v7217, 0.0
    %v7220 = vsel %vm3485, %v7218, 0.0
    %v7221 = vadd.f32 %v7219, %v7220
    %7222 = vadd.xlane.f32.xlu0 %v7221
    %v7223 = vpop.xlane.xlu0 %7222
    %v7224 = vmul.f32 %v7223, %v3491
    %v7225 = vsub.f32 %v7217, %v7224
    %v7226 = vsub.f32 %v7218, %v7224
    %v7227 = vmul.f32 %v7225, %v7225
    %v7228 = vmul.f32 %v7226, %v7226
    %v7229 = vsel %vm3485, %v7227, 0.0
    %v7230 = vsel %vm3485, %v7228, 0.0
    %v7231 = vadd.f32 %v7229, %v7230
    %7232 = vadd.xlane.f32.xlu0 %v7231
    %v7233 = vpop.xlane.xlu0 %7232
    %v7234 = vmul.f32 %v7233, %v3491
    %v7235 = vadd.f32 %v7234, 1e-05
    %v7236 = vrsqrt.pop %v7235
    %v7237 = vmul.f32 %v7225, %v7236
    %v7238 = vmul.f32 %v7226, %v7236
    %v7240 = vlaneseq
    %v7241 = vshrl.u32 %v7240, 7
    %v7242 = vsub.s32 0, %v7241
    %v7243 = vrot.slane %v7083, %v7242
    %v7244 = vlaneseq
    %v7245 = vshrl.u32 %v7244, 7
    %v7246 = vsub.s32 1, %v7245
    %v7247 = vrot.slane %v7083, %v7246
    %v7250 = vmul.f32 %v7237, %v7243
    %v7251 = vmul.f32 %v7238, %v7247
    %v7253 = vlaneseq
    %v7254 = vshrl.u32 %v7253, 7
    %v7255 = vsub.s32 0, %v7254
    %v7256 = vrot.slane %v7084, %v7255
    %v7257 = vlaneseq
    %v7258 = vshrl.u32 %v7257, 7
    %v7259 = vsub.s32 1, %v7258
    %v7260 = vrot.slane %v7084, %v7259
    %v7263 = vadd.f32 %v7250, %v7256
    %v7264 = vadd.f32 %v7251, %v7260
    %v7265 = vpack.c.bf16 %v7263, %v7263
    %v7266 = vpack.c.bf16 %v7264, %v7264
    %v7268 = vlaneseq
    %v7269 = vshrl.u32 %v7268, 7
    %v7270 = vsub.s32 0, %v7269
    %v7271 = vrot.slane %v7149, %v7270
    %v7272 = vlaneseq
    %v7273 = vshrl.u32 %v7272, 7
    %v7274 = vsub.s32 1, %v7273
    %v7275 = vrot.slane %v7149, %v7274
    %v7276 = vlaneseq
    %v7277 = vshrl.u32 %v7276, 7
    %v7278 = vsub.s32 2, %v7277
    %v7279 = vrot.slane %v7149, %v7278
    %v7280 = vlaneseq
    %v7281 = vshrl.u32 %v7280, 7
    %v7282 = vsub.s32 3, %v7281
    %v7283 = vrot.slane %v7149, %v7282
    %v7352 = vunpack.c.l.b16 %v7085
    %v7353 = vunpack.c.h.b16 %v7085
    %v7354 = vunpack.c.l.b16 %v7086
    %v7355 = vunpack.c.h.b16 %v7086
    %v7356 = vunpack.c.l.b16 %v7087
    %v7357 = vunpack.c.h.b16 %v7087
    %v7358 = vunpack.c.l.b16 %v7088
    %v7359 = vunpack.c.h.b16 %v7088
    %v7360 = vunpack.c.l.b16 %v7089
    %v7361 = vunpack.c.h.b16 %v7089
    %v7362 = vunpack.c.l.b16 %v7090
    %v7363 = vunpack.c.h.b16 %v7090
    %v7364 = vunpack.c.l.b16 %v7091
    %v7365 = vunpack.c.h.b16 %v7091
    %v7366 = vunpack.c.l.b16 %v7092
    %v7367 = vunpack.c.h.b16 %v7092
    %v7368 = vunpack.c.l.b16 %v7093
    %v7369 = vunpack.c.h.b16 %v7093
    %v7370 = vunpack.c.l.b16 %v7094
    %v7371 = vunpack.c.h.b16 %v7094
    %v7372 = vunpack.c.l.b16 %v7095
    %v7373 = vunpack.c.h.b16 %v7095
    %v7374 = vunpack.c.l.b16 %v7096
    %v7375 = vunpack.c.h.b16 %v7096
    %v7376 = vunpack.c.l.b16 %v7097
    %v7377 = vunpack.c.h.b16 %v7097
    %v7378 = vunpack.c.l.b16 %v7098
    %v7379 = vunpack.c.h.b16 %v7098
    %v7380 = vunpack.c.l.b16 %v7099
    %v7381 = vunpack.c.h.b16 %v7099
    %v7382 = vunpack.c.l.b16 %v7100
    %v7383 = vunpack.c.h.b16 %v7100
    %v7384 = vunpack.c.l.b16 %v7101
    %v7385 = vunpack.c.h.b16 %v7101
    %v7386 = vunpack.c.l.b16 %v7102
    %v7387 = vunpack.c.h.b16 %v7102
    %v7388 = vunpack.c.l.b16 %v7103
    %v7389 = vunpack.c.h.b16 %v7103
    %v7390 = vunpack.c.l.b16 %v7104
    %v7391 = vunpack.c.h.b16 %v7104
    %v7392 = vunpack.c.l.b16 %v7105
    %v7393 = vunpack.c.h.b16 %v7105
    %v7394 = vunpack.c.l.b16 %v7106
    %v7395 = vunpack.c.h.b16 %v7106
    %v7396 = vunpack.c.l.b16 %v7107
    %v7397 = vunpack.c.h.b16 %v7107
    %v7398 = vunpack.c.l.b16 %v7108
    %v7399 = vunpack.c.h.b16 %v7108
    %v7400 = vunpack.c.l.b16 %v7109
    %v7401 = vunpack.c.h.b16 %v7109
    %v7402 = vunpack.c.l.b16 %v7110
    %v7403 = vunpack.c.h.b16 %v7110
    %v7404 = vunpack.c.l.b16 %v7111
    %v7405 = vunpack.c.h.b16 %v7111
    %v7406 = vunpack.c.l.b16 %v7112
    %v7407 = vunpack.c.h.b16 %v7112
    %v7408 = vunpack.c.l.b16 %v7113
    %v7409 = vunpack.c.h.b16 %v7113
    %v7410 = vunpack.c.l.b16 %v7114
    %v7411 = vunpack.c.h.b16 %v7114
    %v7412 = vunpack.c.l.b16 %v7115
    %v7413 = vunpack.c.h.b16 %v7115
    %v7414 = vunpack.c.l.b16 %v7116
    %v7415 = vunpack.c.h.b16 %v7116
    %v7416 = vunpack.c.l.b16 %v7117
    %v7417 = vunpack.c.h.b16 %v7117
    %v7418 = vunpack.c.l.b16 %v7118
    %v7419 = vunpack.c.h.b16 %v7118
    %v7420 = vunpack.c.l.b16 %v7119
    %v7421 = vunpack.c.h.b16 %v7119
    %v7422 = vunpack.c.l.b16 %v7120
    %v7423 = vunpack.c.h.b16 %v7120
    %v7424 = vunpack.c.l.b16 %v7121
    %v7425 = vunpack.c.h.b16 %v7121
    %v7426 = vunpack.c.l.b16 %v7122
    %v7427 = vunpack.c.h.b16 %v7122
    %v7428 = vunpack.c.l.b16 %v7123
    %v7429 = vunpack.c.h.b16 %v7123
    %v7430 = vunpack.c.l.b16 %v7124
    %v7431 = vunpack.c.h.b16 %v7124
    %v7432 = vunpack.c.l.b16 %v7125
    %v7433 = vunpack.c.h.b16 %v7125
    %v7434 = vunpack.c.l.b16 %v7126
    %v7435 = vunpack.c.h.b16 %v7126
    %v7436 = vunpack.c.l.b16 %v7127
    %v7437 = vunpack.c.h.b16 %v7127
    %v7438 = vunpack.c.l.b16 %v7128
    %v7439 = vunpack.c.h.b16 %v7128
    %v7440 = vunpack.c.l.b16 %v7129
    %v7441 = vunpack.c.h.b16 %v7129
    %v7442 = vunpack.c.l.b16 %v7130
    %v7443 = vunpack.c.h.b16 %v7130
    %v7444 = vunpack.c.l.b16 %v7131
    %v7445 = vunpack.c.h.b16 %v7131
    %v7446 = vunpack.c.l.b16 %v7132
    %v7447 = vunpack.c.h.b16 %v7132
    %v7448 = vunpack.c.l.b16 %v7133
    %v7449 = vunpack.c.h.b16 %v7133
    %v7450 = vunpack.c.l.b16 %v7134
    %v7451 = vunpack.c.h.b16 %v7134
    %v7452 = vunpack.c.l.b16 %v7135
    %v7453 = vunpack.c.h.b16 %v7135
    %v7454 = vunpack.c.l.b16 %v7136
    %v7455 = vunpack.c.h.b16 %v7136
    %v7456 = vunpack.c.l.b16 %v7137
    %v7457 = vunpack.c.h.b16 %v7137
    %v7458 = vunpack.c.l.b16 %v7138
    %v7459 = vunpack.c.h.b16 %v7138
    %v7460 = vunpack.c.l.b16 %v7139
    %v7461 = vunpack.c.h.b16 %v7139
    %v7462 = vunpack.c.l.b16 %v7140
    %v7463 = vunpack.c.h.b16 %v7140
    %v7464 = vunpack.c.l.b16 %v7141
    %v7465 = vunpack.c.h.b16 %v7141
    %v7466 = vunpack.c.l.b16 %v7142
    %v7467 = vunpack.c.h.b16 %v7142
    %v7468 = vunpack.c.l.b16 %v7143
    %v7469 = vunpack.c.h.b16 %v7143
    %v7470 = vunpack.c.l.b16 %v7144
    %v7471 = vunpack.c.h.b16 %v7144
    %v7472 = vunpack.c.l.b16 %v7145
    %v7473 = vunpack.c.h.b16 %v7145
    %v7474 = vunpack.c.l.b16 %v7146
    %v7475 = vunpack.c.h.b16 %v7146
    %v7476 = vunpack.c.l.b16 %v7147
    %v7477 = vunpack.c.h.b16 %v7147
    %v7478 = vunpack.c.l.b16 %v7148
    %v7479 = vunpack.c.h.b16 %v7148
    %v7480 = vpack.c.b16 %v7356, %v7352
    %v7481 = vpack.c.b16 %v7357, %v7353
    %v7482 = vpack.c.b16 %v7358, %v7354
    %v7483 = vpack.c.b16 %v7359, %v7355
    %v7484 = vpack.c.b16 %v7364, %v7360
    %v7485 = vpack.c.b16 %v7365, %v7361
    %v7486 = vpack.c.b16 %v7366, %v7362
    %v7487 = vpack.c.b16 %v7367, %v7363
    %v7488 = vpack.c.b16 %v7372, %v7368
    %v7489 = vpack.c.b16 %v7373, %v7369
    %v7490 = vpack.c.b16 %v7374, %v7370
    %v7491 = vpack.c.b16 %v7375, %v7371
    %v7492 = vpack.c.b16 %v7380, %v7376
    %v7493 = vpack.c.b16 %v7381, %v7377
    %v7494 = vpack.c.b16 %v7382, %v7378
    %v7495 = vpack.c.b16 %v7383, %v7379
    %v7496 = vpack.c.b16 %v7388, %v7384
    %v7497 = vpack.c.b16 %v7389, %v7385
    %v7498 = vpack.c.b16 %v7390, %v7386
    %v7499 = vpack.c.b16 %v7391, %v7387
    %v7500 = vpack.c.b16 %v7396, %v7392
    %v7501 = vpack.c.b16 %v7397, %v7393
    %v7502 = vpack.c.b16 %v7398, %v7394
    %v7503 = vpack.c.b16 %v7399, %v7395
    %v7504 = vpack.c.b16 %v7404, %v7400
    %v7505 = vpack.c.b16 %v7405, %v7401
    %v7506 = vpack.c.b16 %v7406, %v7402
    %v7507 = vpack.c.b16 %v7407, %v7403
    %v7508 = vpack.c.b16 %v7412, %v7408
    %v7509 = vpack.c.b16 %v7413, %v7409
    %v7510 = vpack.c.b16 %v7414, %v7410
    %v7511 = vpack.c.b16 %v7415, %v7411
    %v7512 = vpack.c.b16 %v7420, %v7416
    %v7513 = vpack.c.b16 %v7421, %v7417
    %v7514 = vpack.c.b16 %v7422, %v7418
    %v7515 = vpack.c.b16 %v7423, %v7419
    %v7516 = vpack.c.b16 %v7428, %v7424
    %v7517 = vpack.c.b16 %v7429, %v7425
    %v7518 = vpack.c.b16 %v7430, %v7426
    %v7519 = vpack.c.b16 %v7431, %v7427
    %v7520 = vpack.c.b16 %v7436, %v7432
    %v7521 = vpack.c.b16 %v7437, %v7433
    %v7522 = vpack.c.b16 %v7438, %v7434
    %v7523 = vpack.c.b16 %v7439, %v7435
    %v7524 = vpack.c.b16 %v7444, %v7440
    %v7525 = vpack.c.b16 %v7445, %v7441
    %v7526 = vpack.c.b16 %v7446, %v7442
    %v7527 = vpack.c.b16 %v7447, %v7443
    %v7528 = vpack.c.b16 %v7452, %v7448
    %v7529 = vpack.c.b16 %v7453, %v7449
    %v7530 = vpack.c.b16 %v7454, %v7450
    %v7531 = vpack.c.b16 %v7455, %v7451
    %v7532 = vpack.c.b16 %v7460, %v7456
    %v7533 = vpack.c.b16 %v7461, %v7457
    %v7534 = vpack.c.b16 %v7462, %v7458
    %v7535 = vpack.c.b16 %v7463, %v7459
    %v7536 = vpack.c.b16 %v7468, %v7464
    %v7537 = vpack.c.b16 %v7469, %v7465
    %v7538 = vpack.c.b16 %v7470, %v7466
    %v7539 = vpack.c.b16 %v7471, %v7467
    %v7540 = vpack.c.b16 %v7476, %v7472
    %v7541 = vpack.c.b16 %v7477, %v7473
    %v7542 = vpack.c.b16 %v7478, %v7474
    %v7543 = vpack.c.b16 %v7479, %v7475
    %7608 = vmatprep.subr.bf16.mxu0 %v7481
    %7609 = vmatpush1.bf16.msra.mxu0 %v7480
    %7610 = vmatprep.subr.bf16.mxu0 %v7485
    %7611 = vmatpush1.bf16.msra.mxu0 %v7484
    %7612 = vmatprep.subr.bf16.mxu0 %v7489
    %7613 = vmatpush1.bf16.msra.mxu0 %v7488
    %7614 = vmatprep.subr.bf16.mxu0 %v7493
    %7615 = vmatpush1.bf16.msra.mxu0 %v7492
    %7616 = vmatprep.subr.bf16.mxu0 %v7497
    %7617 = vmatpush1.bf16.msra.mxu0 %v7496
    %7618 = vmatprep.subr.bf16.mxu0 %v7501
    %7619 = vmatpush1.bf16.msra.mxu0 %v7500
    %7620 = vmatprep.subr.bf16.mxu0 %v7505
    %7621 = vmatpush1.bf16.msra.mxu0 %v7504
    %7622 = vmatprep.subr.bf16.mxu0 %v7509
    %7623 = vmatpush1.bf16.msra.mxu0 %v7508
    %7624 = vmatprep.subr.bf16.mxu0 %v7513
    %7625 = vmatpush1.bf16.msra.mxu0 %v7512
    %7626 = vmatprep.subr.bf16.mxu0 %v7517
    %7627 = vmatpush1.bf16.msra.mxu0 %v7516
    %7628 = vmatprep.subr.bf16.mxu0 %v7521
    %7629 = vmatpush1.bf16.msra.mxu0 %v7520
    %7630 = vmatprep.subr.bf16.mxu0 %v7525
    %7631 = vmatpush1.bf16.msra.mxu0 %v7524
    %7632 = vmatprep.subr.bf16.mxu0 %v7529
    %7633 = vmatpush1.bf16.msra.mxu0 %v7528
    %7634 = vmatprep.subr.bf16.mxu0 %v7533
    %7635 = vmatpush1.bf16.msra.mxu0 %v7532
    %7636 = vmatprep.subr.bf16.mxu0 %v7537
    %7637 = vmatpush1.bf16.msra.mxu0 %v7536
    %7638 = vmatprep.subr.bf16.mxu0 %v7541
    %7639 = vmatpush1.bf16.msra.mxu0 %v7540
    %7640 = vmatprep.mubr.bf16.mxu0 %v7266
    %7641 = vmatmul.mubr.bf16.gmra.mrb[0].mxu0 %v7265
    %v7642 = vpop.f32.mrb[0].mxu0
    %v7643 = vadd.f32 %v7271, %v7642
    %v7644 = vpop.f32.mrb[0].mxu0
    %v7645 = vadd.f32 %v7275, %v7644
    %v7646 = vpop.f32.mrb[0].mxu0
    %v7647 = vpop.f32.mrb[0].mxu0
    %7648 = vdwg.mxu0
    %7649 = vmatprep.subr.bf16.mxu0 %v7483
    %7650 = vmatpush1.bf16.msra.mxu0 %v7482
    %7651 = vmatprep.subr.bf16.mxu0 %v7487
    %7652 = vmatpush1.bf16.msra.mxu0 %v7486
    %7653 = vmatprep.subr.bf16.mxu0 %v7491
    %7654 = vmatpush1.bf16.msra.mxu0 %v7490
    %7655 = vmatprep.subr.bf16.mxu0 %v7495
    %7656 = vmatpush1.bf16.msra.mxu0 %v7494
    %7657 = vmatprep.subr.bf16.mxu0 %v7499
    %7658 = vmatpush1.bf16.msra.mxu0 %v7498
    %7659 = vmatprep.subr.bf16.mxu0 %v7503
    %7660 = vmatpush1.bf16.msra.mxu0 %v7502
    %7661 = vmatprep.subr.bf16.mxu0 %v7507
    %7662 = vmatpush1.bf16.msra.mxu0 %v7506
    %7663 = vmatprep.subr.bf16.mxu0 %v7511
    %7664 = vmatpush1.bf16.msra.mxu0 %v7510
    %7665 = vmatprep.subr.bf16.mxu0 %v7515
    %7666 = vmatpush1.bf16.msra.mxu0 %v7514
    %7667 = vmatprep.subr.bf16.mxu0 %v7519
    %7668 = vmatpush1.bf16.msra.mxu0 %v7518
    %7669 = vmatprep.subr.bf16.mxu0 %v7523
    %7670 = vmatpush1.bf16.msra.mxu0 %v7522
    %7671 = vmatprep.subr.bf16.mxu0 %v7527
    %7672 = vmatpush1.bf16.msra.mxu0 %v7526
    %7673 = vmatprep.subr.bf16.mxu0 %v7531
    %7674 = vmatpush1.bf16.msra.mxu0 %v7530
    %7675 = vmatprep.subr.bf16.mxu0 %v7535
    %7676 = vmatpush1.bf16.msra.mxu0 %v7534
    %7677 = vmatprep.subr.bf16.mxu0 %v7539
    %7678 = vmatpush1.bf16.msra.mxu0 %v7538
    %7679 = vmatprep.subr.bf16.mxu0 %v7543
    %7680 = vmatpush1.bf16.msra.mxu0 %v7542
    %7681 = vmatprep.mubr.bf16.mxu0 %v7266
    %7682 = vmatmul.mubr.bf16.gmra.mrb[0].mxu0 %v7265
    %v7683 = vpop.f32.mrb[0].mxu0
    %v7684 = vadd.f32 %v7279, %v7683
    %v7685 = vpop.f32.mrb[0].mxu0
    %v7686 = vadd.f32 %v7283, %v7685
    %v7687 = vpop.f32.mrb[0].mxu0
    %v7688 = vpop.f32.mrb[0].mxu0
    %7689 = vdwg.mxu0
    %v7690 = vmax.f32 %v7643, 0.0
    %v7691 = vmax.f32 %v7645, 0.0
    %v7692 = vmax.f32 %v7684, 0.0
    %v7693 = vmax.f32 %v7686, 0.0
    %v7694 = vpack.c.bf16 %v7690, %v7690
    %v7695 = vpack.c.bf16 %v7691, %v7691
    %v7696 = vpack.c.bf16 %v7692, %v7692
    %v7697 = vpack.c.bf16 %v7693, %v7693
    %v7699 = vlaneseq
    %v7700 = vshrl.u32 %v7699, 7
    %v7701 = vsub.s32 0, %v7700
    %v7702 = vrot.slane %v7214, %v7701
    %v7703 = vlaneseq
    %v7704 = vshrl.u32 %v7703, 7
    %v7705 = vsub.s32 1, %v7704
    %v7706 = vrot.slane %v7214, %v7705
    %v7773 = vunpack.c.l.b16 %v7150
    %v7774 = vunpack.c.h.b16 %v7150
    %v7775 = vunpack.c.l.b16 %v7151
    %v7776 = vunpack.c.h.b16 %v7151
    %v7777 = vunpack.c.l.b16 %v7152
    %v7778 = vunpack.c.h.b16 %v7152
    %v7779 = vunpack.c.l.b16 %v7153
    %v7780 = vunpack.c.h.b16 %v7153
    %v7781 = vunpack.c.l.b16 %v7154
    %v7782 = vunpack.c.h.b16 %v7154
    %v7783 = vunpack.c.l.b16 %v7155
    %v7784 = vunpack.c.h.b16 %v7155
    %v7785 = vunpack.c.l.b16 %v7156
    %v7786 = vunpack.c.h.b16 %v7156
    %v7787 = vunpack.c.l.b16 %v7157
    %v7788 = vunpack.c.h.b16 %v7157
    %v7789 = vunpack.c.l.b16 %v7158
    %v7790 = vunpack.c.h.b16 %v7158
    %v7791 = vunpack.c.l.b16 %v7159
    %v7792 = vunpack.c.h.b16 %v7159
    %v7793 = vunpack.c.l.b16 %v7160
    %v7794 = vunpack.c.h.b16 %v7160
    %v7795 = vunpack.c.l.b16 %v7161
    %v7796 = vunpack.c.h.b16 %v7161
    %v7797 = vunpack.c.l.b16 %v7162
    %v7798 = vunpack.c.h.b16 %v7162
    %v7799 = vunpack.c.l.b16 %v7163
    %v7800 = vunpack.c.h.b16 %v7163
    %v7801 = vunpack.c.l.b16 %v7164
    %v7802 = vunpack.c.h.b16 %v7164
    %v7803 = vunpack.c.l.b16 %v7165
    %v7804 = vunpack.c.h.b16 %v7165
    %v7805 = vunpack.c.l.b16 %v7166
    %v7806 = vunpack.c.h.b16 %v7166
    %v7807 = vunpack.c.l.b16 %v7167
    %v7808 = vunpack.c.h.b16 %v7167
    %v7809 = vunpack.c.l.b16 %v7168
    %v7810 = vunpack.c.h.b16 %v7168
    %v7811 = vunpack.c.l.b16 %v7169
    %v7812 = vunpack.c.h.b16 %v7169
    %v7813 = vunpack.c.l.b16 %v7170
    %v7814 = vunpack.c.h.b16 %v7170
    %v7815 = vunpack.c.l.b16 %v7171
    %v7816 = vunpack.c.h.b16 %v7171
    %v7817 = vunpack.c.l.b16 %v7172
    %v7818 = vunpack.c.h.b16 %v7172
    %v7819 = vunpack.c.l.b16 %v7173
    %v7820 = vunpack.c.h.b16 %v7173
    %v7821 = vunpack.c.l.b16 %v7174
    %v7822 = vunpack.c.h.b16 %v7174
    %v7823 = vunpack.c.l.b16 %v7175
    %v7824 = vunpack.c.h.b16 %v7175
    %v7825 = vunpack.c.l.b16 %v7176
    %v7826 = vunpack.c.h.b16 %v7176
    %v7827 = vunpack.c.l.b16 %v7177
    %v7828 = vunpack.c.h.b16 %v7177
    %v7829 = vunpack.c.l.b16 %v7178
    %v7830 = vunpack.c.h.b16 %v7178
    %v7831 = vunpack.c.l.b16 %v7179
    %v7832 = vunpack.c.h.b16 %v7179
    %v7833 = vunpack.c.l.b16 %v7180
    %v7834 = vunpack.c.h.b16 %v7180
    %v7835 = vunpack.c.l.b16 %v7181
    %v7836 = vunpack.c.h.b16 %v7181
    %v7837 = vunpack.c.l.b16 %v7182
    %v7838 = vunpack.c.h.b16 %v7182
    %v7839 = vunpack.c.l.b16 %v7183
    %v7840 = vunpack.c.h.b16 %v7183
    %v7841 = vunpack.c.l.b16 %v7184
    %v7842 = vunpack.c.h.b16 %v7184
    %v7843 = vunpack.c.l.b16 %v7185
    %v7844 = vunpack.c.h.b16 %v7185
    %v7845 = vunpack.c.l.b16 %v7186
    %v7846 = vunpack.c.h.b16 %v7186
    %v7847 = vunpack.c.l.b16 %v7187
    %v7848 = vunpack.c.h.b16 %v7187
    %v7849 = vunpack.c.l.b16 %v7188
    %v7850 = vunpack.c.h.b16 %v7188
    %v7851 = vunpack.c.l.b16 %v7189
    %v7852 = vunpack.c.h.b16 %v7189
    %v7853 = vunpack.c.l.b16 %v7190
    %v7854 = vunpack.c.h.b16 %v7190
    %v7855 = vunpack.c.l.b16 %v7191
    %v7856 = vunpack.c.h.b16 %v7191
    %v7857 = vunpack.c.l.b16 %v7192
    %v7858 = vunpack.c.h.b16 %v7192
    %v7859 = vunpack.c.l.b16 %v7193
    %v7860 = vunpack.c.h.b16 %v7193
    %v7861 = vunpack.c.l.b16 %v7194
    %v7862 = vunpack.c.h.b16 %v7194
    %v7863 = vunpack.c.l.b16 %v7195
    %v7864 = vunpack.c.h.b16 %v7195
    %v7865 = vunpack.c.l.b16 %v7196
    %v7866 = vunpack.c.h.b16 %v7196
    %v7867 = vunpack.c.l.b16 %v7197
    %v7868 = vunpack.c.h.b16 %v7197
    %v7869 = vunpack.c.l.b16 %v7198
    %v7870 = vunpack.c.h.b16 %v7198
    %v7871 = vunpack.c.l.b16 %v7199
    %v7872 = vunpack.c.h.b16 %v7199
    %v7873 = vunpack.c.l.b16 %v7200
    %v7874 = vunpack.c.h.b16 %v7200
    %v7875 = vunpack.c.l.b16 %v7201
    %v7876 = vunpack.c.h.b16 %v7201
    %v7877 = vunpack.c.l.b16 %v7202
    %v7878 = vunpack.c.h.b16 %v7202
    %v7879 = vunpack.c.l.b16 %v7203
    %v7880 = vunpack.c.h.b16 %v7203
    %v7881 = vunpack.c.l.b16 %v7204
    %v7882 = vunpack.c.h.b16 %v7204
    %v7883 = vunpack.c.l.b16 %v7205
    %v7884 = vunpack.c.h.b16 %v7205
    %v7885 = vunpack.c.l.b16 %v7206
    %v7886 = vunpack.c.h.b16 %v7206
    %v7887 = vunpack.c.l.b16 %v7207
    %v7888 = vunpack.c.h.b16 %v7207
    %v7889 = vunpack.c.l.b16 %v7208
    %v7890 = vunpack.c.h.b16 %v7208
    %v7891 = vunpack.c.l.b16 %v7209
    %v7892 = vunpack.c.h.b16 %v7209
    %v7893 = vunpack.c.l.b16 %v7210
    %v7894 = vunpack.c.h.b16 %v7210
    %v7895 = vunpack.c.l.b16 %v7211
    %v7896 = vunpack.c.h.b16 %v7211
    %v7897 = vunpack.c.l.b16 %v7212
    %v7898 = vunpack.c.h.b16 %v7212
    %v7899 = vunpack.c.l.b16 %v7213
    %v7900 = vunpack.c.h.b16 %v7213
    %v7901 = vpack.c.b16 %v7775, %v7773
    %v7902 = vpack.c.b16 %v7776, %v7774
    %v7903 = vpack.c.b16 %v7779, %v7777
    %v7904 = vpack.c.b16 %v7780, %v7778
    %v7905 = vpack.c.b16 %v7783, %v7781
    %v7906 = vpack.c.b16 %v7784, %v7782
    %v7907 = vpack.c.b16 %v7787, %v7785
    %v7908 = vpack.c.b16 %v7788, %v7786
    %v7909 = vpack.c.b16 %v7791, %v7789
    %v7910 = vpack.c.b16 %v7792, %v7790
    %v7911 = vpack.c.b16 %v7795, %v7793
    %v7912 = vpack.c.b16 %v7796, %v7794
    %v7913 = vpack.c.b16 %v7799, %v7797
    %v7914 = vpack.c.b16 %v7800, %v7798
    %v7915 = vpack.c.b16 %v7803, %v7801
    %v7916 = vpack.c.b16 %v7804, %v7802
    %v7917 = vpack.c.b16 %v7807, %v7805
    %v7918 = vpack.c.b16 %v7808, %v7806
    %v7919 = vpack.c.b16 %v7811, %v7809
    %v7920 = vpack.c.b16 %v7812, %v7810
    %v7921 = vpack.c.b16 %v7815, %v7813
    %v7922 = vpack.c.b16 %v7816, %v7814
    %v7923 = vpack.c.b16 %v7819, %v7817
    %v7924 = vpack.c.b16 %v7820, %v7818
    %v7925 = vpack.c.b16 %v7823, %v7821
    %v7926 = vpack.c.b16 %v7824, %v7822
    %v7927 = vpack.c.b16 %v7827, %v7825
    %v7928 = vpack.c.b16 %v7828, %v7826
    %v7929 = vpack.c.b16 %v7831, %v7829
    %v7930 = vpack.c.b16 %v7832, %v7830
    %v7931 = vpack.c.b16 %v7835, %v7833
    %v7932 = vpack.c.b16 %v7836, %v7834
    %v7933 = vpack.c.b16 %v7839, %v7837
    %v7934 = vpack.c.b16 %v7840, %v7838
    %v7935 = vpack.c.b16 %v7843, %v7841
    %v7936 = vpack.c.b16 %v7844, %v7842
    %v7937 = vpack.c.b16 %v7847, %v7845
    %v7938 = vpack.c.b16 %v7848, %v7846
    %v7939 = vpack.c.b16 %v7851, %v7849
    %v7940 = vpack.c.b16 %v7852, %v7850
    %v7941 = vpack.c.b16 %v7855, %v7853
    %v7942 = vpack.c.b16 %v7856, %v7854
    %v7943 = vpack.c.b16 %v7859, %v7857
    %v7944 = vpack.c.b16 %v7860, %v7858
    %v7945 = vpack.c.b16 %v7863, %v7861
    %v7946 = vpack.c.b16 %v7864, %v7862
    %v7947 = vpack.c.b16 %v7867, %v7865
    %v7948 = vpack.c.b16 %v7868, %v7866
    %v7949 = vpack.c.b16 %v7871, %v7869
    %v7950 = vpack.c.b16 %v7872, %v7870
    %v7951 = vpack.c.b16 %v7875, %v7873
    %v7952 = vpack.c.b16 %v7876, %v7874
    %v7953 = vpack.c.b16 %v7879, %v7877
    %v7954 = vpack.c.b16 %v7880, %v7878
    %v7955 = vpack.c.b16 %v7883, %v7881
    %v7956 = vpack.c.b16 %v7884, %v7882
    %v7957 = vpack.c.b16 %v7887, %v7885
    %v7958 = vpack.c.b16 %v7888, %v7886
    %v7959 = vpack.c.b16 %v7891, %v7889
    %v7960 = vpack.c.b16 %v7892, %v7890
    %v7961 = vpack.c.b16 %v7895, %v7893
    %v7962 = vpack.c.b16 %v7896, %v7894
    %v7963 = vpack.c.b16 %v7899, %v7897
    %v7964 = vpack.c.b16 %v7900, %v7898
    %8029 = vmatprep.subr.bf16.mxu0 %v7902
    %8030 = vmatpush1.bf16.msra.mxu0 %v7901
    %8031 = vmatprep.subr.bf16.mxu0 %v7904
    %8032 = vmatpush1.bf16.msra.mxu0 %v7903
    %8033 = vmatprep.subr.bf16.mxu0 %v7906
    %8034 = vmatpush1.bf16.msra.mxu0 %v7905
    %8035 = vmatprep.subr.bf16.mxu0 %v7908
    %8036 = vmatpush1.bf16.msra.mxu0 %v7907
    %8037 = vmatprep.subr.bf16.mxu0 %v7910
    %8038 = vmatpush1.bf16.msra.mxu0 %v7909
    %8039 = vmatprep.subr.bf16.mxu0 %v7912
    %8040 = vmatpush1.bf16.msra.mxu0 %v7911
    %8041 = vmatprep.subr.bf16.mxu0 %v7914
    %8042 = vmatpush1.bf16.msra.mxu0 %v7913
    %8043 = vmatprep.subr.bf16.mxu0 %v7916
    %8044 = vmatpush1.bf16.msra.mxu0 %v7915
    %8045 = vmatprep.subr.bf16.mxu0 %v7918
    %8046 = vmatpush1.bf16.msra.mxu0 %v7917
    %8047 = vmatprep.subr.bf16.mxu0 %v7920
    %8048 = vmatpush1.bf16.msra.mxu0 %v7919
    %8049 = vmatprep.subr.bf16.mxu0 %v7922
    %8050 = vmatpush1.bf16.msra.mxu0 %v7921
    %8051 = vmatprep.subr.bf16.mxu0 %v7924
    %8052 = vmatpush1.bf16.msra.mxu0 %v7923
    %8053 = vmatprep.subr.bf16.mxu0 %v7926
    %8054 = vmatpush1.bf16.msra.mxu0 %v7925
    %8055 = vmatprep.subr.bf16.mxu0 %v7928
    %8056 = vmatpush1.bf16.msra.mxu0 %v7927
    %8057 = vmatprep.subr.bf16.mxu0 %v7930
    %8058 = vmatpush1.bf16.msra.mxu0 %v7929
    %8059 = vmatprep.subr.bf16.mxu0 %v7932
    %8060 = vmatpush1.bf16.msra.mxu0 %v7931
    %8061 = vmatprep.mubr.bf16.mxu0 %v7695
    %8062 = vmatmul.mubr.bf16.gmra.mrb[0].mxu0 %v7694
    %v8063 = vpop.f32.mrb[0].mxu0
    %v8064 = vadd.f32 %v7702, %v8063
    %v8065 = vpop.f32.mrb[0].mxu0
    %v8066 = vadd.f32 %v7706, %v8065
    %v8067 = vpop.f32.mrb[0].mxu0
    %v8068 = vpop.f32.mrb[0].mxu0
    %8069 = vdwg.mxu0
    %8070 = vmatprep.subr.bf16.mxu0 %v7934
    %8071 = vmatpush1.bf16.msra.mxu0 %v7933
    %8072 = vmatprep.subr.bf16.mxu0 %v7936
    %8073 = vmatpush1.bf16.msra.mxu0 %v7935
    %8074 = vmatprep.subr.bf16.mxu0 %v7938
    %8075 = vmatpush1.bf16.msra.mxu0 %v7937
    %8076 = vmatprep.subr.bf16.mxu0 %v7940
    %8077 = vmatpush1.bf16.msra.mxu0 %v7939
    %8078 = vmatprep.subr.bf16.mxu0 %v7942
    %8079 = vmatpush1.bf16.msra.mxu0 %v7941
    %8080 = vmatprep.subr.bf16.mxu0 %v7944
    %8081 = vmatpush1.bf16.msra.mxu0 %v7943
    %8082 = vmatprep.subr.bf16.mxu0 %v7946
    %8083 = vmatpush1.bf16.msra.mxu0 %v7945
    %8084 = vmatprep.subr.bf16.mxu0 %v7948
    %8085 = vmatpush1.bf16.msra.mxu0 %v7947
    %8086 = vmatprep.subr.bf16.mxu0 %v7950
    %8087 = vmatpush1.bf16.msra.mxu0 %v7949
    %8088 = vmatprep.subr.bf16.mxu0 %v7952
    %8089 = vmatpush1.bf16.msra.mxu0 %v7951
    %8090 = vmatprep.subr.bf16.mxu0 %v7954
    %8091 = vmatpush1.bf16.msra.mxu0 %v7953
    %8092 = vmatprep.subr.bf16.mxu0 %v7956
    %8093 = vmatpush1.bf16.msra.mxu0 %v7955
    %8094 = vmatprep.subr.bf16.mxu0 %v7958
    %8095 = vmatpush1.bf16.msra.mxu0 %v7957
    %8096 = vmatprep.subr.bf16.mxu0 %v7960
    %8097 = vmatpush1.bf16.msra.mxu0 %v7959
    %8098 = vmatprep.subr.bf16.mxu0 %v7962
    %8099 = vmatpush1.bf16.msra.mxu0 %v7961
    %8100 = vmatprep.subr.bf16.mxu0 %v7964
    %8101 = vmatpush1.bf16.msra.mxu0 %v7963
    %8102 = vmatprep.mubr.bf16.mxu0 %v7697
    %8103 = vmatmul.mubr.bf16.gmra.mrb[0].mxu0 %v7696
    %v8104 = vpop.f32.mrb[0].mxu0
    %v8105 = vadd.f32 %v8064, %v8104
    %v8106 = vpop.f32.mrb[0].mxu0
    %v8107 = vadd.f32 %v8066, %v8106
    %v8108 = vpop.f32.mrb[0].mxu0
    %v8109 = vpop.f32.mrb[0].mxu0
    %8110 = vdwg.mxu0
    %v8111 = vadd.f32 %v7263, %v8105
    %v8112 = vadd.f32 %v7264, %v8107
    %v8113 = vsel %vm3485, %v8111, 0.0
    %v8114 = vsel %vm3485, %v8112, 0.0
    %v8115 = vadd.f32 %v8113, %v8114
    %8116 = vadd.xlane.f32.xlu0 %v8115
    %v8117 = vpop.xlane.xlu0 %8116
    %v8118 = vmul.f32 %v8117, %v3491
    %v8119 = vsub.f32 %v8111, %v8118
    %v8120 = vsub.f32 %v8112, %v8118
    %v8121 = vmul.f32 %v8119, %v8119
    %v8122 = vmul.f32 %v8120, %v8120
    %v8123 = vsel %vm3485, %v8121, 0.0
    %v8124 = vsel %vm3485, %v8122, 0.0
    %v8125 = vadd.f32 %v8123, %v8124
    %8126 = vadd.xlane.f32.xlu0 %v8125
    %v8127 = vpop.xlane.xlu0 %8126
    %v8128 = vmul.f32 %v8127, %v3491
    %v8129 = vadd.f32 %v8128, 1e-05
    %v8130 = vrsqrt.pop %v8129
    %v8131 = vmul.f32 %v8119, %v8130
    %v8132 = vmul.f32 %v8120, %v8130
    %v8134 = vlaneseq
    %v8135 = vshrl.u32 %v8134, 7
    %v8136 = vsub.s32 0, %v8135
    %v8137 = vrot.slane %v7215, %v8136
    %v8138 = vlaneseq
    %v8139 = vshrl.u32 %v8138, 7
    %v8140 = vsub.s32 1, %v8139
    %v8141 = vrot.slane %v7215, %v8140
    %v8144 = vmul.f32 %v8131, %v8137
    %v8145 = vmul.f32 %v8132, %v8141
    %v8147 = vlaneseq
    %v8148 = vshrl.u32 %v8147, 7
    %v8149 = vsub.s32 0, %v8148
    %v8150 = vrot.slane %v7216, %v8149
    %v8151 = vlaneseq
    %v8152 = vshrl.u32 %v8151, 7
    %v8153 = vsub.s32 1, %v8152
    %v8154 = vrot.slane %v7216, %v8153
    %v8157 = vadd.f32 %v8144, %v8150
    %v8158 = vadd.f32 %v8145, %v8154
    %s8159 = scalar_lea.vmem %s77, 256
    %v8160 = vld [vmem:[%s8159] sm:$0xff]
    %v8161 = vld [vmem:[%s8159 + $0x8] sm:$0xff]
    %v8162 = vld [vmem:[%s8159 + $0x10] sm:$0xff]
    %v8163 = vld [vmem:[%s8159 + $0x18] sm:$0xff]
    %v8164 = vld [vmem:[%s8159 + $0x20] sm:$0xff]
    %v8165 = vld [vmem:[%s8159 + $0x28] sm:$0xff]
    %v8166 = vld [vmem:[%s8159 + $0x30] sm:$0xff]
    %v8167 = vld [vmem:[%s8159 + $0x38] sm:$0xff]
    %v8168 = vld [vmem:[%s8159 + $0x40] sm:$0xff]
    %v8169 = vld [vmem:[%s8159 + $0x48] sm:$0xff]
    %v8170 = vld [vmem:[%s8159 + $0x50] sm:$0xff]
    %v8171 = vld [vmem:[%s8159 + $0x58] sm:$0xff]
    %v8172 = vld [vmem:[%s8159 + $0x60] sm:$0xff]
    %v8173 = vld [vmem:[%s8159 + $0x68] sm:$0xff]
    %v8174 = vld [vmem:[%s8159 + $0x70] sm:$0xff]
    %v8175 = vld [vmem:[%s8159 + $0x78] sm:$0xff]
    %v8176 = vld [vmem:[%s8159 + $0x80] sm:$0xff]
    %v8177 = vld [vmem:[%s8159 + $0x88] sm:$0xff]
    %v8178 = vld [vmem:[%s8159 + $0x90] sm:$0xff]
    %v8179 = vld [vmem:[%s8159 + $0x98] sm:$0xff]
    %v8180 = vld [vmem:[%s8159 + $0xa0] sm:$0xff]
    %v8181 = vld [vmem:[%s8159 + $0xa8] sm:$0xff]
    %v8182 = vld [vmem:[%s8159 + $0xb0] sm:$0xff]
    %v8183 = vld [vmem:[%s8159 + $0xb8] sm:$0xff]
    %v8184 = vld [vmem:[%s8159 + $0xc0] sm:$0xff]
    %v8185 = vld [vmem:[%s8159 + $0xc8] sm:$0xff]
    %v8186 = vld [vmem:[%s8159 + $0xd0] sm:$0xff]
    %v8187 = vld [vmem:[%s8159 + $0xd8] sm:$0xff]
    %v8188 = vld [vmem:[%s8159 + $0xe0] sm:$0xff]
    %v8189 = vld [vmem:[%s8159 + $0xe8] sm:$0xff]
    %v8190 = vld [vmem:[%s8159 + $0xf0] sm:$0xff]
    %v8191 = vld [vmem:[%s8159 + $0xf8] sm:$0xff]
    %s8192 = scalar_lea.vmem %s75, 2
    %v8193 = vld [vmem:[%s8192] sm:$0x3]
    %v8194 = vpack.c.bf16 %v8157, %v8157
    %v8195 = vpack.c.bf16 %v8158, %v8158
    %v8197 = vlaneseq
    %v8198 = vshrl.u32 %v8197, 7
    %v8199 = vsub.s32 0, %v8198
    %v8200 = vrot.slane %v8193, %v8199
    %v8201 = vlaneseq
    %v8202 = vshrl.u32 %v8201, 7
    %v8203 = vsub.s32 1, %v8202
    %v8204 = vrot.slane %v8193, %v8203
    %v8239 = vunpack.c.l.b16 %v8160
    %v8240 = vunpack.c.h.b16 %v8160
    %v8241 = vunpack.c.l.b16 %v8161
    %v8242 = vunpack.c.h.b16 %v8161
    %v8243 = vunpack.c.l.b16 %v8162
    %v8244 = vunpack.c.h.b16 %v8162
    %v8245 = vunpack.c.l.b16 %v8163
    %v8246 = vunpack.c.h.b16 %v8163
    %v8247 = vunpack.c.l.b16 %v8164
    %v8248 = vunpack.c.h.b16 %v8164
    %v8249 = vunpack.c.l.b16 %v8165
    %v8250 = vunpack.c.h.b16 %v8165
    %v8251 = vunpack.c.l.b16 %v8166
    %v8252 = vunpack.c.h.b16 %v8166
    %v8253 = vunpack.c.l.b16 %v8167
    %v8254 = vunpack.c.h.b16 %v8167
    %v8255 = vunpack.c.l.b16 %v8168
    %v8256 = vunpack.c.h.b16 %v8168
    %v8257 = vunpack.c.l.b16 %v8169
    %v8258 = vunpack.c.h.b16 %v8169
    %v8259 = vunpack.c.l.b16 %v8170
    %v8260 = vunpack.c.h.b16 %v8170
    %v8261 = vunpack.c.l.b16 %v8171
    %v8262 = vunpack.c.h.b16 %v8171
    %v8263 = vunpack.c.l.b16 %v8172
    %v8264 = vunpack.c.h.b16 %v8172
    %v8265 = vunpack.c.l.b16 %v8173
    %v8266 = vunpack.c.h.b16 %v8173
    %v8267 = vunpack.c.l.b16 %v8174
    %v8268 = vunpack.c.h.b16 %v8174
    %v8269 = vunpack.c.l.b16 %v8175
    %v8270 = vunpack.c.h.b16 %v8175
    %v8271 = vunpack.c.l.b16 %v8176
    %v8272 = vunpack.c.h.b16 %v8176
    %v8273 = vunpack.c.l.b16 %v8177
    %v8274 = vunpack.c.h.b16 %v8177
    %v8275 = vunpack.c.l.b16 %v8178
    %v8276 = vunpack.c.h.b16 %v8178
    %v8277 = vunpack.c.l.b16 %v8179
    %v8278 = vunpack.c.h.b16 %v8179
    %v8279 = vunpack.c.l.b16 %v8180
    %v8280 = vunpack.c.h.b16 %v8180
    %v8281 = vunpack.c.l.b16 %v8181
    %v8282 = vunpack.c.h.b16 %v8181
    %v8283 = vunpack.c.l.b16 %v8182
    %v8284 = vunpack.c.h.b16 %v8182
    %v8285 = vunpack.c.l.b16 %v8183
    %v8286 = vunpack.c.h.b16 %v8183
    %v8287 = vunpack.c.l.b16 %v8184
    %v8288 = vunpack.c.h.b16 %v8184
    %v8289 = vunpack.c.l.b16 %v8185
    %v8290 = vunpack.c.h.b16 %v8185
    %v8291 = vunpack.c.l.b16 %v8186
    %v8292 = vunpack.c.h.b16 %v8186
    %v8293 = vunpack.c.l.b16 %v8187
    %v8294 = vunpack.c.h.b16 %v8187
    %v8295 = vunpack.c.l.b16 %v8188
    %v8296 = vunpack.c.h.b16 %v8188
    %v8297 = vunpack.c.l.b16 %v8189
    %v8298 = vunpack.c.h.b16 %v8189
    %v8299 = vunpack.c.l.b16 %v8190
    %v8300 = vunpack.c.h.b16 %v8190
    %v8301 = vunpack.c.l.b16 %v8191
    %v8302 = vunpack.c.h.b16 %v8191
    %v8303 = vpack.c.b16 %v8241, %v8239
    %v8304 = vpack.c.b16 %v8242, %v8240
    %v8305 = vpack.c.b16 %v8245, %v8243
    %v8306 = vpack.c.b16 %v8246, %v8244
    %v8307 = vpack.c.b16 %v8249, %v8247
    %v8308 = vpack.c.b16 %v8250, %v8248
    %v8309 = vpack.c.b16 %v8253, %v8251
    %v8310 = vpack.c.b16 %v8254, %v8252
    %v8311 = vpack.c.b16 %v8257, %v8255
    %v8312 = vpack.c.b16 %v8258, %v8256
    %v8313 = vpack.c.b16 %v8261, %v8259
    %v8314 = vpack.c.b16 %v8262, %v8260
    %v8315 = vpack.c.b16 %v8265, %v8263
    %v8316 = vpack.c.b16 %v8266, %v8264
    %v8317 = vpack.c.b16 %v8269, %v8267
    %v8318 = vpack.c.b16 %v8270, %v8268
    %v8319 = vpack.c.b16 %v8273, %v8271
    %v8320 = vpack.c.b16 %v8274, %v8272
    %v8321 = vpack.c.b16 %v8277, %v8275
    %v8322 = vpack.c.b16 %v8278, %v8276
    %v8323 = vpack.c.b16 %v8281, %v8279
    %v8324 = vpack.c.b16 %v8282, %v8280
    %v8325 = vpack.c.b16 %v8285, %v8283
    %v8326 = vpack.c.b16 %v8286, %v8284
    %v8327 = vpack.c.b16 %v8289, %v8287
    %v8328 = vpack.c.b16 %v8290, %v8288
    %v8329 = vpack.c.b16 %v8293, %v8291
    %v8330 = vpack.c.b16 %v8294, %v8292
    %v8331 = vpack.c.b16 %v8297, %v8295
    %v8332 = vpack.c.b16 %v8298, %v8296
    %v8333 = vpack.c.b16 %v8301, %v8299
    %v8334 = vpack.c.b16 %v8302, %v8300
    %8367 = vmatprep.subr.bf16.mxu0 %v8304
    %8368 = vmatpush1.bf16.msra.mxu0 %v8303
    %8369 = vmatprep.subr.bf16.mxu0 %v8306
    %8370 = vmatpush1.bf16.msra.mxu0 %v8305
    %8371 = vmatprep.subr.bf16.mxu0 %v8308
    %8372 = vmatpush1.bf16.msra.mxu0 %v8307
    %8373 = vmatprep.subr.bf16.mxu0 %v8310
    %8374 = vmatpush1.bf16.msra.mxu0 %v8309
    %8375 = vmatprep.subr.bf16.mxu0 %v8312
    %8376 = vmatpush1.bf16.msra.mxu0 %v8311
    %8377 = vmatprep.subr.bf16.mxu0 %v8314
    %8378 = vmatpush1.bf16.msra.mxu0 %v8313
    %8379 = vmatprep.subr.bf16.mxu0 %v8316
    %8380 = vmatpush1.bf16.msra.mxu0 %v8315
    %8381 = vmatprep.subr.bf16.mxu0 %v8318
    %8382 = vmatpush1.bf16.msra.mxu0 %v8317
    %8383 = vmatprep.subr.bf16.mxu0 %v8320
    %8384 = vmatpush1.bf16.msra.mxu0 %v8319
    %8385 = vmatprep.subr.bf16.mxu0 %v8322
    %8386 = vmatpush1.bf16.msra.mxu0 %v8321
    %8387 = vmatprep.subr.bf16.mxu0 %v8324
    %8388 = vmatpush1.bf16.msra.mxu0 %v8323
    %8389 = vmatprep.subr.bf16.mxu0 %v8326
    %8390 = vmatpush1.bf16.msra.mxu0 %v8325
    %8391 = vmatprep.subr.bf16.mxu0 %v8328
    %8392 = vmatpush1.bf16.msra.mxu0 %v8327
    %8393 = vmatprep.subr.bf16.mxu0 %v8330
    %8394 = vmatpush1.bf16.msra.mxu0 %v8329
    %8395 = vmatprep.subr.bf16.mxu0 %v8332
    %8396 = vmatpush1.bf16.msra.mxu0 %v8331
    %8397 = vmatprep.subr.bf16.mxu0 %v8334
    %8398 = vmatpush1.bf16.msra.mxu0 %v8333
    %8399 = vmatprep.mubr.bf16.mxu0 %v8195
    %8400 = vmatmul.mubr.bf16.gmra.mrb[0].mxu0 %v8194
    %v8401 = vpop.f32.mrb[0].mxu0
    %v8402 = vadd.f32 %v8200, %v8401
    %v8403 = vpop.f32.mrb[0].mxu0
    %v8404 = vadd.f32 %v8204, %v8403
    %v8405 = vpop.f32.mrb[0].mxu0
    %v8406 = vpop.f32.mrb[0].mxu0
    %8407 = vdwg.mxu0
    %s8408 = scalar_lea.vmem %s69, 2
    %v8409 = vld [vmem:[%s8408] sm:$0x3]
    %s8410 = scalar_lea.vmem %s67, 2
    %v8411 = vld [vmem:[%s8410] sm:$0x3]
    %s8412 = scalar_lea.vmem %s79, 512
    %v8413 = vld [vmem:[%s8412] sm:$0xff]
    %v8414 = vld [vmem:[%s8412 + $0x8] sm:$0xff]
    %v8415 = vld [vmem:[%s8412 + $0x10] sm:$0xff]
    %v8416 = vld [vmem:[%s8412 + $0x18] sm:$0xff]
    %v8417 = vld [vmem:[%s8412 + $0x20] sm:$0xff]
    %v8418 = vld [vmem:[%s8412 + $0x28] sm:$0xff]
    %v8419 = vld [vmem:[%s8412 + $0x30] sm:$0xff]
    %v8420 = vld [vmem:[%s8412 + $0x38] sm:$0xff]
    %v8421 = vld [vmem:[%s8412 + $0x40] sm:$0xff]
    %v8422 = vld [vmem:[%s8412 + $0x48] sm:$0xff]
    %v8423 = vld [vmem:[%s8412 + $0x50] sm:$0xff]
    %v8424 = vld [vmem:[%s8412 + $0x58] sm:$0xff]
    %v8425 = vld [vmem:[%s8412 + $0x60] sm:$0xff]
    %v8426 = vld [vmem:[%s8412 + $0x68] sm:$0xff]
    %v8427 = vld [vmem:[%s8412 + $0x70] sm:$0xff]
    %v8428 = vld [vmem:[%s8412 + $0x78] sm:$0xff]
    %v8429 = vld [vmem:[%s8412 + $0x80] sm:$0xff]
    %v8430 = vld [vmem:[%s8412 + $0x88] sm:$0xff]
    %v8431 = vld [vmem:[%s8412 + $0x90] sm:$0xff]
    %v8432 = vld [vmem:[%s8412 + $0x98] sm:$0xff]
    %v8433 = vld [vmem:[%s8412 + $0xa0] sm:$0xff]
    %v8434 = vld [vmem:[%s8412 + $0xa8] sm:$0xff]
    %v8435 = vld [vmem:[%s8412 + $0xb0] sm:$0xff]
    %v8436 = vld [vmem:[%s8412 + $0xb8] sm:$0xff]
    %v8437 = vld [vmem:[%s8412 + $0xc0] sm:$0xff]
    %v8438 = vld [vmem:[%s8412 + $0xc8] sm:$0xff]
    %v8439 = vld [vmem:[%s8412 + $0xd0] sm:$0xff]
    %v8440 = vld [vmem:[%s8412 + $0xd8] sm:$0xff]
    %v8441 = vld [vmem:[%s8412 + $0xe0] sm:$0xff]
    %v8442 = vld [vmem:[%s8412 + $0xe8] sm:$0xff]
    %v8443 = vld [vmem:[%s8412 + $0xf0] sm:$0xff]
    %v8444 = vld [vmem:[%s8412 + $0xf8] sm:$0xff]
    %v8445 = vld [vmem:[%s8412 + $0x100] sm:$0xff]
    %v8446 = vld [vmem:[%s8412 + $0x108] sm:$0xff]
    %v8447 = vld [vmem:[%s8412 + $0x110] sm:$0xff]
    %v8448 = vld [vmem:[%s8412 + $0x118] sm:$0xff]
    %v8449 = vld [vmem:[%s8412 + $0x120] sm:$0xff]
    %v8450 = vld [vmem:[%s8412 + $0x128] sm:$0xff]
    %v8451 = vld [vmem:[%s8412 + $0x130] sm:$0xff]
    %v8452 = vld [vmem:[%s8412 + $0x138] sm:$0xff]
    %v8453 = vld [vmem:[%s8412 + $0x140] sm:$0xff]
    %v8454 = vld [vmem:[%s8412 + $0x148] sm:$0xff]
    %v8455 = vld [vmem:[%s8412 + $0x150] sm:$0xff]
    %v8456 = vld [vmem:[%s8412 + $0x158] sm:$0xff]
    %v8457 = vld [vmem:[%s8412 + $0x160] sm:$0xff]
    %v8458 = vld [vmem:[%s8412 + $0x168] sm:$0xff]
    %v8459 = vld [vmem:[%s8412 + $0x170] sm:$0xff]
    %v8460 = vld [vmem:[%s8412 + $0x178] sm:$0xff]
    %v8461 = vld [vmem:[%s8412 + $0x180] sm:$0xff]
    %v8462 = vld [vmem:[%s8412 + $0x188] sm:$0xff]
    %v8463 = vld [vmem:[%s8412 + $0x190] sm:$0xff]
    %v8464 = vld [vmem:[%s8412 + $0x198] sm:$0xff]
    %v8465 = vld [vmem:[%s8412 + $0x1a0] sm:$0xff]
    %v8466 = vld [vmem:[%s8412 + $0x1a8] sm:$0xff]
    %v8467 = vld [vmem:[%s8412 + $0x1b0] sm:$0xff]
    %v8468 = vld [vmem:[%s8412 + $0x1b8] sm:$0xff]
    %v8469 = vld [vmem:[%s8412 + $0x1c0] sm:$0xff]
    %v8470 = vld [vmem:[%s8412 + $0x1c8] sm:$0xff]
    %v8471 = vld [vmem:[%s8412 + $0x1d0] sm:$0xff]
    %v8472 = vld [vmem:[%s8412 + $0x1d8] sm:$0xff]
    %v8473 = vld [vmem:[%s8412 + $0x1e0] sm:$0xff]
    %v8474 = vld [vmem:[%s8412 + $0x1e8] sm:$0xff]
    %v8475 = vld [vmem:[%s8412 + $0x1f0] sm:$0xff]
    %v8476 = vld [vmem:[%s8412 + $0x1f8] sm:$0xff]
    %s8477 = scalar_lea.vmem %s59, 4
    %v8478 = vld [vmem:[%s8477] sm:$0xf]
    %s8479 = scalar_lea.vmem %s81, 512
    %v8480 = vld [vmem:[%s8479] sm:$0xff]
    %v8481 = vld [vmem:[%s8479 + $0x8] sm:$0xff]
    %v8482 = vld [vmem:[%s8479 + $0x10] sm:$0xff]
    %v8483 = vld [vmem:[%s8479 + $0x18] sm:$0xff]
    %v8484 = vld [vmem:[%s8479 + $0x20] sm:$0xff]
    %v8485 = vld [vmem:[%s8479 + $0x28] sm:$0xff]
    %v8486 = vld [vmem:[%s8479 + $0x30] sm:$0xff]
    %v8487 = vld [vmem:[%s8479 + $0x38] sm:$0xff]
    %v8488 = vld [vmem:[%s8479 + $0x40] sm:$0xff]
    %v8489 = vld [vmem:[%s8479 + $0x48] sm:$0xff]
    %v8490 = vld [vmem:[%s8479 + $0x50] sm:$0xff]
    %v8491 = vld [vmem:[%s8479 + $0x58] sm:$0xff]
    %v8492 = vld [vmem:[%s8479 + $0x60] sm:$0xff]
    %v8493 = vld [vmem:[%s8479 + $0x68] sm:$0xff]
    %v8494 = vld [vmem:[%s8479 + $0x70] sm:$0xff]
    %v8495 = vld [vmem:[%s8479 + $0x78] sm:$0xff]
    %v8496 = vld [vmem:[%s8479 + $0x80] sm:$0xff]
    %v8497 = vld [vmem:[%s8479 + $0x88] sm:$0xff]
    %v8498 = vld [vmem:[%s8479 + $0x90] sm:$0xff]
    %v8499 = vld [vmem:[%s8479 + $0x98] sm:$0xff]
    %v8500 = vld [vmem:[%s8479 + $0xa0] sm:$0xff]
    %v8501 = vld [vmem:[%s8479 + $0xa8] sm:$0xff]
    %v8502 = vld [vmem:[%s8479 + $0xb0] sm:$0xff]
    %v8503 = vld [vmem:[%s8479 + $0xb8] sm:$0xff]
    %v8504 = vld [vmem:[%s8479 + $0xc0] sm:$0xff]
    %v8505 = vld [vmem:[%s8479 + $0xc8] sm:$0xff]
    %v8506 = vld [vmem:[%s8479 + $0xd0] sm:$0xff]
    %v8507 = vld [vmem:[%s8479 + $0xd8] sm:$0xff]
    %v8508 = vld [vmem:[%s8479 + $0xe0] sm:$0xff]
    %v8509 = vld [vmem:[%s8479 + $0xe8] sm:$0xff]
    %v8510 = vld [vmem:[%s8479 + $0xf0] sm:$0xff]
    %v8511 = vld [vmem:[%s8479 + $0xf8] sm:$0xff]
    %v8512 = vld [vmem:[%s8479 + $0x100] sm:$0xff]
    %v8513 = vld [vmem:[%s8479 + $0x108] sm:$0xff]
    %v8514 = vld [vmem:[%s8479 + $0x110] sm:$0xff]
    %v8515 = vld [vmem:[%s8479 + $0x118] sm:$0xff]
    %v8516 = vld [vmem:[%s8479 + $0x120] sm:$0xff]
    %v8517 = vld [vmem:[%s8479 + $0x128] sm:$0xff]
    %v8518 = vld [vmem:[%s8479 + $0x130] sm:$0xff]
    %v8519 = vld [vmem:[%s8479 + $0x138] sm:$0xff]
    %v8520 = vld [vmem:[%s8479 + $0x140] sm:$0xff]
    %v8521 = vld [vmem:[%s8479 + $0x148] sm:$0xff]
    %v8522 = vld [vmem:[%s8479 + $0x150] sm:$0xff]
    %v8523 = vld [vmem:[%s8479 + $0x158] sm:$0xff]
    %v8524 = vld [vmem:[%s8479 + $0x160] sm:$0xff]
    %v8525 = vld [vmem:[%s8479 + $0x168] sm:$0xff]
    %v8526 = vld [vmem:[%s8479 + $0x170] sm:$0xff]
    %v8527 = vld [vmem:[%s8479 + $0x178] sm:$0xff]
    %v8528 = vld [vmem:[%s8479 + $0x180] sm:$0xff]
    %v8529 = vld [vmem:[%s8479 + $0x188] sm:$0xff]
    %v8530 = vld [vmem:[%s8479 + $0x190] sm:$0xff]
    %v8531 = vld [vmem:[%s8479 + $0x198] sm:$0xff]
    %v8532 = vld [vmem:[%s8479 + $0x1a0] sm:$0xff]
    %v8533 = vld [vmem:[%s8479 + $0x1a8] sm:$0xff]
    %v8534 = vld [vmem:[%s8479 + $0x1b0] sm:$0xff]
    %v8535 = vld [vmem:[%s8479 + $0x1b8] sm:$0xff]
    %v8536 = vld [vmem:[%s8479 + $0x1c0] sm:$0xff]
    %v8537 = vld [vmem:[%s8479 + $0x1c8] sm:$0xff]
    %v8538 = vld [vmem:[%s8479 + $0x1d0] sm:$0xff]
    %v8539 = vld [vmem:[%s8479 + $0x1d8] sm:$0xff]
    %v8540 = vld [vmem:[%s8479 + $0x1e0] sm:$0xff]
    %v8541 = vld [vmem:[%s8479 + $0x1e8] sm:$0xff]
    %v8542 = vld [vmem:[%s8479 + $0x1f0] sm:$0xff]
    %v8543 = vld [vmem:[%s8479 + $0x1f8] sm:$0xff]
    %s8544 = scalar_lea.vmem %s61, 2
    %v8545 = vld [vmem:[%s8544] sm:$0x3]
    %s8546 = scalar_lea.vmem %s73, 2
    %v8547 = vld [vmem:[%s8546] sm:$0x3]
    %s8548 = scalar_lea.vmem %s71, 2
    %v8549 = vld [vmem:[%s8548] sm:$0x3]
    %v8550 = vadd.f32 %v8157, %v8402
    %v8551 = vadd.f32 %v8158, %v8404
    %v8552 = vsel %vm3485, %v8550, 0.0
    %v8553 = vsel %vm3485, %v8551, 0.0
    %v8554 = vadd.f32 %v8552, %v8553
    %8555 = vadd.xlane.f32.xlu0 %v8554
    %v8556 = vpop.xlane.xlu0 %8555
    %v8557 = vmul.f32 %v8556, %v3491
    %v8558 = vsub.f32 %v8550, %v8557
    %v8559 = vsub.f32 %v8551, %v8557
    %v8560 = vmul.f32 %v8558, %v8558
    %v8561 = vmul.f32 %v8559, %v8559
    %v8562 = vsel %vm3485, %v8560, 0.0
    %v8563 = vsel %vm3485, %v8561, 0.0
    %v8564 = vadd.f32 %v8562, %v8563
    %8565 = vadd.xlane.f32.xlu0 %v8564
    %v8566 = vpop.xlane.xlu0 %8565
    %v8567 = vmul.f32 %v8566, %v3491
    %v8568 = vadd.f32 %v8567, 1e-05
    %v8569 = vrsqrt.pop %v8568
    %v8570 = vmul.f32 %v8558, %v8569
    %v8571 = vmul.f32 %v8559, %v8569
    %v8573 = vlaneseq
    %v8574 = vshrl.u32 %v8573, 7
    %v8575 = vsub.s32 0, %v8574
    %v8576 = vrot.slane %v8409, %v8575
    %v8577 = vlaneseq
    %v8578 = vshrl.u32 %v8577, 7
    %v8579 = vsub.s32 1, %v8578
    %v8580 = vrot.slane %v8409, %v8579
    %v8583 = vmul.f32 %v8570, %v8576
    %v8584 = vmul.f32 %v8571, %v8580
    %v8586 = vlaneseq
    %v8587 = vshrl.u32 %v8586, 7
    %v8588 = vsub.s32 0, %v8587
    %v8589 = vrot.slane %v8411, %v8588
    %v8590 = vlaneseq
    %v8591 = vshrl.u32 %v8590, 7
    %v8592 = vsub.s32 1, %v8591
    %v8593 = vrot.slane %v8411, %v8592
    %v8596 = vadd.f32 %v8583, %v8589
    %v8597 = vadd.f32 %v8584, %v8593
    %v8598 = vpack.c.bf16 %v8596, %v8596
    %v8599 = vpack.c.bf16 %v8597, %v8597
    %v8601 = vlaneseq
    %v8602 = vshrl.u32 %v8601, 7
    %v8603 = vsub.s32 0, %v8602
    %v8604 = vrot.slane %v8478, %v8603
    %v8605 = vlaneseq
    %v8606 = vshrl.u32 %v8605, 7
    %v8607 = vsub.s32 1, %v8606
    %v8608 = vrot.slane %v8478, %v8607
    %v8609 = vlaneseq
    %v8610 = vshrl.u32 %v8609, 7
    %v8611 = vsub.s32 2, %v8610
    %v8612 = vrot.slane %v8478, %v8611
    %v8613 = vlaneseq
    %v8614 = vshrl.u32 %v8613, 7
    %v8615 = vsub.s32 3, %v8614
    %v8616 = vrot.slane %v8478, %v8615
    %v8685 = vunpack.c.l.b16 %v8413
    %v8686 = vunpack.c.h.b16 %v8413
    %v8687 = vunpack.c.l.b16 %v8414
    %v8688 = vunpack.c.h.b16 %v8414
    %v8689 = vunpack.c.l.b16 %v8415
    %v8690 = vunpack.c.h.b16 %v8415
    %v8691 = vunpack.c.l.b16 %v8416
    %v8692 = vunpack.c.h.b16 %v8416
    %v8693 = vunpack.c.l.b16 %v8417
    %v8694 = vunpack.c.h.b16 %v8417
    %v8695 = vunpack.c.l.b16 %v8418
    %v8696 = vunpack.c.h.b16 %v8418
    %v8697 = vunpack.c.l.b16 %v8419
    %v8698 = vunpack.c.h.b16 %v8419
    %v8699 = vunpack.c.l.b16 %v8420
    %v8700 = vunpack.c.h.b16 %v8420
    %v8701 = vunpack.c.l.b16 %v8421
    %v8702 = vunpack.c.h.b16 %v8421
    %v8703 = vunpack.c.l.b16 %v8422
    %v8704 = vunpack.c.h.b16 %v8422
    %v8705 = vunpack.c.l.b16 %v8423
    %v8706 = vunpack.c.h.b16 %v8423
    %v8707 = vunpack.c.l.b16 %v8424
    %v8708 = vunpack.c.h.b16 %v8424
    %v8709 = vunpack.c.l.b16 %v8425
    %v8710 = vunpack.c.h.b16 %v8425
    %v8711 = vunpack.c.l.b16 %v8426
    %v8712 = vunpack.c.h.b16 %v8426
    %v8713 = vunpack.c.l.b16 %v8427
    %v8714 = vunpack.c.h.b16 %v8427
    %v8715 = vunpack.c.l.b16 %v8428
    %v8716 = vunpack.c.h.b16 %v8428
    %v8717 = vunpack.c.l.b16 %v8429
    %v8718 = vunpack.c.h.b16 %v8429
    %v8719 = vunpack.c.l.b16 %v8430
    %v8720 = vunpack.c.h.b16 %v8430
    %v8721 = vunpack.c.l.b16 %v8431
    %v8722 = vunpack.c.h.b16 %v8431
    %v8723 = vunpack.c.l.b16 %v8432
    %v8724 = vunpack.c.h.b16 %v8432
    %v8725 = vunpack.c.l.b16 %v8433
    %v8726 = vunpack.c.h.b16 %v8433
    %v8727 = vunpack.c.l.b16 %v8434
    %v8728 = vunpack.c.h.b16 %v8434
    %v8729 = vunpack.c.l.b16 %v8435
    %v8730 = vunpack.c.h.b16 %v8435
    %v8731 = vunpack.c.l.b16 %v8436
    %v8732 = vunpack.c.h.b16 %v8436
    %v8733 = vunpack.c.l.b16 %v8437
    %v8734 = vunpack.c.h.b16 %v8437
    %v8735 = vunpack.c.l.b16 %v8438
    %v8736 = vunpack.c.h.b16 %v8438
    %v8737 = vunpack.c.l.b16 %v8439
    %v8738 = vunpack.c.h.b16 %v8439
    %v8739 = vunpack.c.l.b16 %v8440
    %v8740 = vunpack.c.h.b16 %v8440
    %v8741 = vunpack.c.l.b16 %v8441
    %v8742 = vunpack.c.h.b16 %v8441
    %v8743 = vunpack.c.l.b16 %v8442
    %v8744 = vunpack.c.h.b16 %v8442
    %v8745 = vunpack.c.l.b16 %v8443
    %v8746 = vunpack.c.h.b16 %v8443
    %v8747 = vunpack.c.l.b16 %v8444
    %v8748 = vunpack.c.h.b16 %v8444
    %v8749 = vunpack.c.l.b16 %v8445
    %v8750 = vunpack.c.h.b16 %v8445
    %v8751 = vunpack.c.l.b16 %v8446
    %v8752 = vunpack.c.h.b16 %v8446
    %v8753 = vunpack.c.l.b16 %v8447
    %v8754 = vunpack.c.h.b16 %v8447
    %v8755 = vunpack.c.l.b16 %v8448
    %v8756 = vunpack.c.h.b16 %v8448
    %v8757 = vunpack.c.l.b16 %v8449
    %v8758 = vunpack.c.h.b16 %v8449
    %v8759 = vunpack.c.l.b16 %v8450
    %v8760 = vunpack.c.h.b16 %v8450
    %v8761 = vunpack.c.l.b16 %v8451
    %v8762 = vunpack.c.h.b16 %v8451
    %v8763 = vunpack.c.l.b16 %v8452
    %v8764 = vunpack.c.h.b16 %v8452
    %v8765 = vunpack.c.l.b16 %v8453
    %v8766 = vunpack.c.h.b16 %v8453
    %v8767 = vunpack.c.l.b16 %v8454
    %v8768 = vunpack.c.h.b16 %v8454
    %v8769 = vunpack.c.l.b16 %v8455
    %v8770 = vunpack.c.h.b16 %v8455
    %v8771 = vunpack.c.l.b16 %v8456
    %v8772 = vunpack.c.h.b16 %v8456
    %v8773 = vunpack.c.l.b16 %v8457
    %v8774 = vunpack.c.h.b16 %v8457
    %v8775 = vunpack.c.l.b16 %v8458
    %v8776 = vunpack.c.h.b16 %v8458
    %v8777 = vunpack.c.l.b16 %v8459
    %v8778 = vunpack.c.h.b16 %v8459
    %v8779 = vunpack.c.l.b16 %v8460
    %v8780 = vunpack.c.h.b16 %v8460
    %v8781 = vunpack.c.l.b16 %v8461
    %v8782 = vunpack.c.h.b16 %v8461
    %v8783 = vunpack.c.l.b16 %v8462
    %v8784 = vunpack.c.h.b16 %v8462
    %v8785 = vunpack.c.l.b16 %v8463
    %v8786 = vunpack.c.h.b16 %v8463
    %v8787 = vunpack.c.l.b16 %v8464
    %v8788 = vunpack.c.h.b16 %v8464
    %v8789 = vunpack.c.l.b16 %v8465
    %v8790 = vunpack.c.h.b16 %v8465
    %v8791 = vunpack.c.l.b16 %v8466
    %v8792 = vunpack.c.h.b16 %v8466
    %v8793 = vunpack.c.l.b16 %v8467
    %v8794 = vunpack.c.h.b16 %v8467
    %v8795 = vunpack.c.l.b16 %v8468
    %v8796 = vunpack.c.h.b16 %v8468
    %v8797 = vunpack.c.l.b16 %v8469
    %v8798 = vunpack.c.h.b16 %v8469
    %v8799 = vunpack.c.l.b16 %v8470
    %v8800 = vunpack.c.h.b16 %v8470
    %v8801 = vunpack.c.l.b16 %v8471
    %v8802 = vunpack.c.h.b16 %v8471
    %v8803 = vunpack.c.l.b16 %v8472
    %v8804 = vunpack.c.h.b16 %v8472
    %v8805 = vunpack.c.l.b16 %v8473
    %v8806 = vunpack.c.h.b16 %v8473
    %v8807 = vunpack.c.l.b16 %v8474
    %v8808 = vunpack.c.h.b16 %v8474
    %v8809 = vunpack.c.l.b16 %v8475
    %v8810 = vunpack.c.h.b16 %v8475
    %v8811 = vunpack.c.l.b16 %v8476
    %v8812 = vunpack.c.h.b16 %v8476
    %v8813 = vpack.c.b16 %v8689, %v8685
    %v8814 = vpack.c.b16 %v8690, %v8686
    %v8815 = vpack.c.b16 %v8691, %v8687
    %v8816 = vpack.c.b16 %v8692, %v8688
    %v8817 = vpack.c.b16 %v8697, %v8693
    %v8818 = vpack.c.b16 %v8698, %v8694
    %v8819 = vpack.c.b16 %v8699, %v8695
    %v8820 = vpack.c.b16 %v8700, %v8696
    %v8821 = vpack.c.b16 %v8705, %v8701
    %v8822 = vpack.c.b16 %v8706, %v8702
    %v8823 = vpack.c.b16 %v8707, %v8703
    %v8824 = vpack.c.b16 %v8708, %v8704
    %v8825 = vpack.c.b16 %v8713, %v8709
    %v8826 = vpack.c.b16 %v8714, %v8710
    %v8827 = vpack.c.b16 %v8715, %v8711
    %v8828 = vpack.c.b16 %v8716, %v8712
    %v8829 = vpack.c.b16 %v8721, %v8717
    %v8830 = vpack.c.b16 %v8722, %v8718
    %v8831 = vpack.c.b16 %v8723, %v8719
    %v8832 = vpack.c.b16 %v8724, %v8720
    %v8833 = vpack.c.b16 %v8729, %v8725
    %v8834 = vpack.c.b16 %v8730, %v8726
    %v8835 = vpack.c.b16 %v8731, %v8727
    %v8836 = vpack.c.b16 %v8732, %v8728
    %v8837 = vpack.c.b16 %v8737, %v8733
    %v8838 = vpack.c.b16 %v8738, %v8734
    %v8839 = vpack.c.b16 %v8739, %v8735
    %v8840 = vpack.c.b16 %v8740, %v8736
    %v8841 = vpack.c.b16 %v8745, %v8741
    %v8842 = vpack.c.b16 %v8746, %v8742
    %v8843 = vpack.c.b16 %v8747, %v8743
    %v8844 = vpack.c.b16 %v8748, %v8744
    %v8845 = vpack.c.b16 %v8753, %v8749
    %v8846 = vpack.c.b16 %v8754, %v8750
    %v8847 = vpack.c.b16 %v8755, %v8751
    %v8848 = vpack.c.b16 %v8756, %v8752
    %v8849 = vpack.c.b16 %v8761, %v8757
    %v8850 = vpack.c.b16 %v8762, %v8758
    %v8851 = vpack.c.b16 %v8763, %v8759
    %v8852 = vpack.c.b16 %v8764, %v8760
    %v8853 = vpack.c.b16 %v8769, %v8765
    %v8854 = vpack.c.b16 %v8770, %v8766
    %v8855 = vpack.c.b16 %v8771, %v8767
    %v8856 = vpack.c.b16 %v8772, %v8768
    %v8857 = vpack.c.b16 %v8777, %v8773
    %v8858 = vpack.c.b16 %v8778, %v8774
    %v8859 = vpack.c.b16 %v8779, %v8775
    %v8860 = vpack.c.b16 %v8780, %v8776
    %v8861 = vpack.c.b16 %v8785, %v8781
    %v8862 = vpack.c.b16 %v8786, %v8782
    %v8863 = vpack.c.b16 %v8787, %v8783
    %v8864 = vpack.c.b16 %v8788, %v8784
    %v8865 = vpack.c.b16 %v8793, %v8789
    %v8866 = vpack.c.b16 %v8794, %v8790
    %v8867 = vpack.c.b16 %v8795, %v8791
    %v8868 = vpack.c.b16 %v8796, %v8792
    %v8869 = vpack.c.b16 %v8801, %v8797
    %v8870 = vpack.c.b16 %v8802, %v8798
    %v8871 = vpack.c.b16 %v8803, %v8799
    %v8872 = vpack.c.b16 %v8804, %v8800
    %v8873 = vpack.c.b16 %v8809, %v8805
    %v8874 = vpack.c.b16 %v8810, %v8806
    %v8875 = vpack.c.b16 %v8811, %v8807
    %v8876 = vpack.c.b16 %v8812, %v8808
    %8941 = vmatprep.subr.bf16.mxu0 %v8814
    %8942 = vmatpush1.bf16.msra.mxu0 %v8813
    %8943 = vmatprep.subr.bf16.mxu0 %v8818
    %8944 = vmatpush1.bf16.msra.mxu0 %v8817
    %8945 = vmatprep.subr.bf16.mxu0 %v8822
    %8946 = vmatpush1.bf16.msra.mxu0 %v8821
    %8947 = vmatprep.subr.bf16.mxu0 %v8826
    %8948 = vmatpush1.bf16.msra.mxu0 %v8825
    %8949 = vmatprep.subr.bf16.mxu0 %v8830
    %8950 = vmatpush1.bf16.msra.mxu0 %v8829
    %8951 = vmatprep.subr.bf16.mxu0 %v8834
    %8952 = vmatpush1.bf16.msra.mxu0 %v8833
    %8953 = vmatprep.subr.bf16.mxu0 %v8838
    %8954 = vmatpush1.bf16.msra.mxu0 %v8837
    %8955 = vmatprep.subr.bf16.mxu0 %v8842
    %8956 = vmatpush1.bf16.msra.mxu0 %v8841
    %8957 = vmatprep.subr.bf16.mxu0 %v8846
    %8958 = vmatpush1.bf16.msra.mxu0 %v8845
    %8959 = vmatprep.subr.bf16.mxu0 %v8850
    %8960 = vmatpush1.bf16.msra.mxu0 %v8849
    %8961 = vmatprep.subr.bf16.mxu0 %v8854
    %8962 = vmatpush1.bf16.msra.mxu0 %v8853
    %8963 = vmatprep.subr.bf16.mxu0 %v8858
    %8964 = vmatpush1.bf16.msra.mxu0 %v8857
    %8965 = vmatprep.subr.bf16.mxu0 %v8862
    %8966 = vmatpush1.bf16.msra.mxu0 %v8861
    %8967 = vmatprep.subr.bf16.mxu0 %v8866
    %8968 = vmatpush1.bf16.msra.mxu0 %v8865
    %8969 = vmatprep.subr.bf16.mxu0 %v8870
    %8970 = vmatpush1.bf16.msra.mxu0 %v8869
    %8971 = vmatprep.subr.bf16.mxu0 %v8874
    %8972 = vmatpush1.bf16.msra.mxu0 %v8873
    %8973 = vmatprep.mubr.bf16.mxu0 %v8599
    %8974 = vmatmul.mubr.bf16.gmra.mrb[0].mxu0 %v8598
    %v8975 = vpop.f32.mrb[0].mxu0
    %v8976 = vadd.f32 %v8604, %v8975
    %v8977 = vpop.f32.mrb[0].mxu0
    %v8978 = vadd.f32 %v8608, %v8977
    %v8979 = vpop.f32.mrb[0].mxu0
    %v8980 = vpop.f32.mrb[0].mxu0
    %8981 = vdwg.mxu0
    %8982 = vmatprep.subr.bf16.mxu0 %v8816
    %8983 = vmatpush1.bf16.msra.mxu0 %v8815
    %8984 = vmatprep.subr.bf16.mxu0 %v8820
    %8985 = vmatpush1.bf16.msra.mxu0 %v8819
    %8986 = vmatprep.subr.bf16.mxu0 %v8824
    %8987 = vmatpush1.bf16.msra.mxu0 %v8823
    %8988 = vmatprep.subr.bf16.mxu0 %v8828
    %8989 = vmatpush1.bf16.msra.mxu0 %v8827
    %8990 = vmatprep.subr.bf16.mxu0 %v8832
    %8991 = vmatpush1.bf16.msra.mxu0 %v8831
    %8992 = vmatprep.subr.bf16.mxu0 %v8836
    %8993 = vmatpush1.bf16.msra.mxu0 %v8835
    %8994 = vmatprep.subr.bf16.mxu0 %v8840
    %8995 = vmatpush1.bf16.msra.mxu0 %v8839
    %8996 = vmatprep.subr.bf16.mxu0 %v8844
    %8997 = vmatpush1.bf16.msra.mxu0 %v8843
    %8998 = vmatprep.subr.bf16.mxu0 %v8848
    %8999 = vmatpush1.bf16.msra.mxu0 %v8847
    %9000 = vmatprep.subr.bf16.mxu0 %v8852
    %9001 = vmatpush1.bf16.msra.mxu0 %v8851
    %9002 = vmatprep.subr.bf16.mxu0 %v8856
    %9003 = vmatpush1.bf16.msra.mxu0 %v8855
    %9004 = vmatprep.subr.bf16.mxu0 %v8860
    %9005 = vmatpush1.bf16.msra.mxu0 %v8859
    %9006 = vmatprep.subr.bf16.mxu0 %v8864
    %9007 = vmatpush1.bf16.msra.mxu0 %v8863
    %9008 = vmatprep.subr.bf16.mxu0 %v8868
    %9009 = vmatpush1.bf16.msra.mxu0 %v8867
    %9010 = vmatprep.subr.bf16.mxu0 %v8872
    %9011 = vmatpush1.bf16.msra.mxu0 %v8871
    %9012 = vmatprep.subr.bf16.mxu0 %v8876
    %9013 = vmatpush1.bf16.msra.mxu0 %v8875
    %9014 = vmatprep.mubr.bf16.mxu0 %v8599
    %9015 = vmatmul.mubr.bf16.gmra.mrb[0].mxu0 %v8598
    %v9016 = vpop.f32.mrb[0].mxu0
    %v9017 = vadd.f32 %v8612, %v9016
    %v9018 = vpop.f32.mrb[0].mxu0
    %v9019 = vadd.f32 %v8616, %v9018
    %v9020 = vpop.f32.mrb[0].mxu0
    %v9021 = vpop.f32.mrb[0].mxu0
    %9022 = vdwg.mxu0
    %v9023 = vmax.f32 %v8976, 0.0
    %v9024 = vmax.f32 %v8978, 0.0
    %v9025 = vmax.f32 %v9017, 0.0
    %v9026 = vmax.f32 %v9019, 0.0
    %v9027 = vpack.c.bf16 %v9023, %v9023
    %v9028 = vpack.c.bf16 %v9024, %v9024
    %v9029 = vpack.c.bf16 %v9025, %v9025
    %v9030 = vpack.c.bf16 %v9026, %v9026
    %v9032 = vlaneseq
    %v9033 = vshrl.u32 %v9032, 7
    %v9034 = vsub.s32 0, %v9033
    %v9035 = vrot.slane %v8545, %v9034
    %v9036 = vlaneseq
    %v9037 = vshrl.u32 %v9036, 7
    %v9038 = vsub.s32 1, %v9037
    %v9039 = vrot.slane %v8545, %v9038
    %v9106 = vunpack.c.l.b16 %v8480
    %v9107 = vunpack.c.h.b16 %v8480
    %v9108 = vunpack.c.l.b16 %v8481
    %v9109 = vunpack.c.h.b16 %v8481
    %v9110 = vunpack.c.l.b16 %v8482
    %v9111 = vunpack.c.h.b16 %v8482
    %v9112 = vunpack.c.l.b16 %v8483
    %v9113 = vunpack.c.h.b16 %v8483
    %v9114 = vunpack.c.l.b16 %v8484
    %v9115 = vunpack.c.h.b16 %v8484
    %v9116 = vunpack.c.l.b16 %v8485
    %v9117 = vunpack.c.h.b16 %v8485
    %v9118 = vunpack.c.l.b16 %v8486
    %v9119 = vunpack.c.h.b16 %v8486
    %v9120 = vunpack.c.l.b16 %v8487
    %v9121 = vunpack.c.h.b16 %v8487
    %v9122 = vunpack.c.l.b16 %v8488
    %v9123 = vunpack.c.h.b16 %v8488
    %v9124 = vunpack.c.l.b16 %v8489
    %v9125 = vunpack.c.h.b16 %v8489
    %v9126 = vunpack.c.l.b16 %v8490
    %v9127 = vunpack.c.h.b16 %v8490
    %v9128 = vunpack.c.l.b16 %v8491
    %v9129 = vunpack.c.h.b16 %v8491
    %v9130 = vunpack.c.l.b16 %v8492
    %v9131 = vunpack.c.h.b16 %v8492
    %v9132 = vunpack.c.l.b16 %v8493
    %v9133 = vunpack.c.h.b16 %v8493
    %v9134 = vunpack.c.l.b16 %v8494
    %v9135 = vunpack.c.h.b16 %v8494
    %v9136 = vunpack.c.l.b16 %v8495
    %v9137 = vunpack.c.h.b16 %v8495
    %v9138 = vunpack.c.l.b16 %v8496
    %v9139 = vunpack.c.h.b16 %v8496
    %v9140 = vunpack.c.l.b16 %v8497
    %v9141 = vunpack.c.h.b16 %v8497
    %v9142 = vunpack.c.l.b16 %v8498
    %v9143 = vunpack.c.h.b16 %v8498
    %v9144 = vunpack.c.l.b16 %v8499
    %v9145 = vunpack.c.h.b16 %v8499
    %v9146 = vunpack.c.l.b16 %v8500
    %v9147 = vunpack.c.h.b16 %v8500
    %v9148 = vunpack.c.l.b16 %v8501
    %v9149 = vunpack.c.h.b16 %v8501
    %v9150 = vunpack.c.l.b16 %v8502
    %v9151 = vunpack.c.h.b16 %v8502
    %v9152 = vunpack.c.l.b16 %v8503
    %v9153 = vunpack.c.h.b16 %v8503
    %v9154 = vunpack.c.l.b16 %v8504
    %v9155 = vunpack.c.h.b16 %v8504
    %v9156 = vunpack.c.l.b16 %v8505
    %v9157 = vunpack.c.h.b16 %v8505
    %v9158 = vunpack.c.l.b16 %v8506
    %v9159 = vunpack.c.h.b16 %v8506
    %v9160 = vunpack.c.l.b16 %v8507
    %v9161 = vunpack.c.h.b16 %v8507
    %v9162 = vunpack.c.l.b16 %v8508
    %v9163 = vunpack.c.h.b16 %v8508
    %v9164 = vunpack.c.l.b16 %v8509
    %v9165 = vunpack.c.h.b16 %v8509
    %v9166 = vunpack.c.l.b16 %v8510
    %v9167 = vunpack.c.h.b16 %v8510
    %v9168 = vunpack.c.l.b16 %v8511
    %v9169 = vunpack.c.h.b16 %v8511
    %v9170 = vunpack.c.l.b16 %v8512
    %v9171 = vunpack.c.h.b16 %v8512
    %v9172 = vunpack.c.l.b16 %v8513
    %v9173 = vunpack.c.h.b16 %v8513
    %v9174 = vunpack.c.l.b16 %v8514
    %v9175 = vunpack.c.h.b16 %v8514
    %v9176 = vunpack.c.l.b16 %v8515
    %v9177 = vunpack.c.h.b16 %v8515
    %v9178 = vunpack.c.l.b16 %v8516
    %v9179 = vunpack.c.h.b16 %v8516
    %v9180 = vunpack.c.l.b16 %v8517
    %v9181 = vunpack.c.h.b16 %v8517
    %v9182 = vunpack.c.l.b16 %v8518
    %v9183 = vunpack.c.h.b16 %v8518
    %v9184 = vunpack.c.l.b16 %v8519
    %v9185 = vunpack.c.h.b16 %v8519
    %v9186 = vunpack.c.l.b16 %v8520
    %v9187 = vunpack.c.h.b16 %v8520
    %v9188 = vunpack.c.l.b16 %v8521
    %v9189 = vunpack.c.h.b16 %v8521
    %v9190 = vunpack.c.l.b16 %v8522
    %v9191 = vunpack.c.h.b16 %v8522
    %v9192 = vunpack.c.l.b16 %v8523
    %v9193 = vunpack.c.h.b16 %v8523
    %v9194 = vunpack.c.l.b16 %v8524
    %v9195 = vunpack.c.h.b16 %v8524
    %v9196 = vunpack.c.l.b16 %v8525
    %v9197 = vunpack.c.h.b16 %v8525
    %v9198 = vunpack.c.l.b16 %v8526
    %v9199 = vunpack.c.h.b16 %v8526
    %v9200 = vunpack.c.l.b16 %v8527
    %v9201 = vunpack.c.h.b16 %v8527
    %v9202 = vunpack.c.l.b16 %v8528
    %v9203 = vunpack.c.h.b16 %v8528
    %v9204 = vunpack.c.l.b16 %v8529
    %v9205 = vunpack.c.h.b16 %v8529
    %v9206 = vunpack.c.l.b16 %v8530
    %v9207 = vunpack.c.h.b16 %v8530
    %v9208 = vunpack.c.l.b16 %v8531
    %v9209 = vunpack.c.h.b16 %v8531
    %v9210 = vunpack.c.l.b16 %v8532
    %v9211 = vunpack.c.h.b16 %v8532
    %v9212 = vunpack.c.l.b16 %v8533
    %v9213 = vunpack.c.h.b16 %v8533
    %v9214 = vunpack.c.l.b16 %v8534
    %v9215 = vunpack.c.h.b16 %v8534
    %v9216 = vunpack.c.l.b16 %v8535
    %v9217 = vunpack.c.h.b16 %v8535
    %v9218 = vunpack.c.l.b16 %v8536
    %v9219 = vunpack.c.h.b16 %v8536
    %v9220 = vunpack.c.l.b16 %v8537
    %v9221 = vunpack.c.h.b16 %v8537
    %v9222 = vunpack.c.l.b16 %v8538
    %v9223 = vunpack.c.h.b16 %v8538
    %v9224 = vunpack.c.l.b16 %v8539
    %v9225 = vunpack.c.h.b16 %v8539
    %v9226 = vunpack.c.l.b16 %v8540
    %v9227 = vunpack.c.h.b16 %v8540
    %v9228 = vunpack.c.l.b16 %v8541
    %v9229 = vunpack.c.h.b16 %v8541
    %v9230 = vunpack.c.l.b16 %v8542
    %v9231 = vunpack.c.h.b16 %v8542
    %v9232 = vunpack.c.l.b16 %v8543
    %v9233 = vunpack.c.h.b16 %v8543
    %v9234 = vpack.c.b16 %v9108, %v9106
    %v9235 = vpack.c.b16 %v9109, %v9107
    %v9236 = vpack.c.b16 %v9112, %v9110
    %v9237 = vpack.c.b16 %v9113, %v9111
    %v9238 = vpack.c.b16 %v9116, %v9114
    %v9239 = vpack.c.b16 %v9117, %v9115
    %v9240 = vpack.c.b16 %v9120, %v9118
    %v9241 = vpack.c.b16 %v9121, %v9119
    %v9242 = vpack.c.b16 %v9124, %v9122
    %v9243 = vpack.c.b16 %v9125, %v9123
    %v9244 = vpack.c.b16 %v9128, %v9126
    %v9245 = vpack.c.b16 %v9129, %v9127
    %v9246 = vpack.c.b16 %v9132, %v9130
    %v9247 = vpack.c.b16 %v9133, %v9131
    %v9248 = vpack.c.b16 %v9136, %v9134
    %v9249 = vpack.c.b16 %v9137, %v9135
    %v9250 = vpack.c.b16 %v9140, %v9138
    %v9251 = vpack.c.b16 %v9141, %v9139
    %v9252 = vpack.c.b16 %v9144, %v9142
    %v9253 = vpack.c.b16 %v9145, %v9143
    %v9254 = vpack.c.b16 %v9148, %v9146
    %v9255 = vpack.c.b16 %v9149, %v9147
    %v9256 = vpack.c.b16 %v9152, %v9150
    %v9257 = vpack.c.b16 %v9153, %v9151
    %v9258 = vpack.c.b16 %v9156, %v9154
    %v9259 = vpack.c.b16 %v9157, %v9155
    %v9260 = vpack.c.b16 %v9160, %v9158
    %v9261 = vpack.c.b16 %v9161, %v9159
    %v9262 = vpack.c.b16 %v9164, %v9162
    %v9263 = vpack.c.b16 %v9165, %v9163
    %v9264 = vpack.c.b16 %v9168, %v9166
    %v9265 = vpack.c.b16 %v9169, %v9167
    %v9266 = vpack.c.b16 %v9172, %v9170
    %v9267 = vpack.c.b16 %v9173, %v9171
    %v9268 = vpack.c.b16 %v9176, %v9174
    %v9269 = vpack.c.b16 %v9177, %v9175
    %v9270 = vpack.c.b16 %v9180, %v9178
    %v9271 = vpack.c.b16 %v9181, %v9179
    %v9272 = vpack.c.b16 %v9184, %v9182
    %v9273 = vpack.c.b16 %v9185, %v9183
    %v9274 = vpack.c.b16 %v9188, %v9186
    %v9275 = vpack.c.b16 %v9189, %v9187
    %v9276 = vpack.c.b16 %v9192, %v9190
    %v9277 = vpack.c.b16 %v9193, %v9191
    %v9278 = vpack.c.b16 %v9196, %v9194
    %v9279 = vpack.c.b16 %v9197, %v9195
    %v9280 = vpack.c.b16 %v9200, %v9198
    %v9281 = vpack.c.b16 %v9201, %v9199
    %v9282 = vpack.c.b16 %v9204, %v9202
    %v9283 = vpack.c.b16 %v9205, %v9203
    %v9284 = vpack.c.b16 %v9208, %v9206
    %v9285 = vpack.c.b16 %v9209, %v9207
    %v9286 = vpack.c.b16 %v9212, %v9210
    %v9287 = vpack.c.b16 %v9213, %v9211
    %v9288 = vpack.c.b16 %v9216, %v9214
    %v9289 = vpack.c.b16 %v9217, %v9215
    %v9290 = vpack.c.b16 %v9220, %v9218
    %v9291 = vpack.c.b16 %v9221, %v9219
    %v9292 = vpack.c.b16 %v9224, %v9222
    %v9293 = vpack.c.b16 %v9225, %v9223
    %v9294 = vpack.c.b16 %v9228, %v9226
    %v9295 = vpack.c.b16 %v9229, %v9227
    %v9296 = vpack.c.b16 %v9232, %v9230
    %v9297 = vpack.c.b16 %v9233, %v9231
    %9362 = vmatprep.subr.bf16.mxu0 %v9235
    %9363 = vmatpush1.bf16.msra.mxu0 %v9234
    %9364 = vmatprep.subr.bf16.mxu0 %v9237
    %9365 = vmatpush1.bf16.msra.mxu0 %v9236
    %9366 = vmatprep.subr.bf16.mxu0 %v9239
    %9367 = vmatpush1.bf16.msra.mxu0 %v9238
    %9368 = vmatprep.subr.bf16.mxu0 %v9241
    %9369 = vmatpush1.bf16.msra.mxu0 %v9240
    %9370 = vmatprep.subr.bf16.mxu0 %v9243
    %9371 = vmatpush1.bf16.msra.mxu0 %v9242
    %9372 = vmatprep.subr.bf16.mxu0 %v9245
    %9373 = vmatpush1.bf16.msra.mxu0 %v9244
    %9374 = vmatprep.subr.bf16.mxu0 %v9247
    %9375 = vmatpush1.bf16.msra.mxu0 %v9246
    %9376 = vmatprep.subr.bf16.mxu0 %v9249
    %9377 = vmatpush1.bf16.msra.mxu0 %v9248
    %9378 = vmatprep.subr.bf16.mxu0 %v9251
    %9379 = vmatpush1.bf16.msra.mxu0 %v9250
    %9380 = vmatprep.subr.bf16.mxu0 %v9253
    %9381 = vmatpush1.bf16.msra.mxu0 %v9252
    %9382 = vmatprep.subr.bf16.mxu0 %v9255
    %9383 = vmatpush1.bf16.msra.mxu0 %v9254
    %9384 = vmatprep.subr.bf16.mxu0 %v9257
    %9385 = vmatpush1.bf16.msra.mxu0 %v9256
    %9386 = vmatprep.subr.bf16.mxu0 %v9259
    %9387 = vmatpush1.bf16.msra.mxu0 %v9258
    %9388 = vmatprep.subr.bf16.mxu0 %v9261
    %9389 = vmatpush1.bf16.msra.mxu0 %v9260
    %9390 = vmatprep.subr.bf16.mxu0 %v9263
    %9391 = vmatpush1.bf16.msra.mxu0 %v9262
    %9392 = vmatprep.subr.bf16.mxu0 %v9265
    %9393 = vmatpush1.bf16.msra.mxu0 %v9264
    %9394 = vmatprep.mubr.bf16.mxu0 %v9028
    %9395 = vmatmul.mubr.bf16.gmra.mrb[0].mxu0 %v9027
    %v9396 = vpop.f32.mrb[0].mxu0
    %v9397 = vadd.f32 %v9035, %v9396
    %v9398 = vpop.f32.mrb[0].mxu0
    %v9399 = vadd.f32 %v9039, %v9398
    %v9400 = vpop.f32.mrb[0].mxu0
    %v9401 = vpop.f32.mrb[0].mxu0
    %9402 = vdwg.mxu0
    %9403 = vmatprep.subr.bf16.mxu0 %v9267
    %9404 = vmatpush1.bf16.msra.mxu0 %v9266
    %9405 = vmatprep.subr.bf16.mxu0 %v9269
    %9406 = vmatpush1.bf16.msra.mxu0 %v9268
    %9407 = vmatprep.subr.bf16.mxu0 %v9271
    %9408 = vmatpush1.bf16.msra.mxu0 %v9270
    %9409 = vmatprep.subr.bf16.mxu0 %v9273
    %9410 = vmatpush1.bf16.msra.mxu0 %v9272
    %9411 = vmatprep.subr.bf16.mxu0 %v9275
    %9412 = vmatpush1.bf16.msra.mxu0 %v9274
    %9413 = vmatprep.subr.bf16.mxu0 %v9277
    %9414 = vmatpush1.bf16.msra.mxu0 %v9276
    %9415 = vmatprep.subr.bf16.mxu0 %v9279
    %9416 = vmatpush1.bf16.msra.mxu0 %v9278
    %9417 = vmatprep.subr.bf16.mxu0 %v9281
    %9418 = vmatpush1.bf16.msra.mxu0 %v9280
    %9419 = vmatprep.subr.bf16.mxu0 %v9283
    %9420 = vmatpush1.bf16.msra.mxu0 %v9282
    %9421 = vmatprep.subr.bf16.mxu0 %v9285
    %9422 = vmatpush1.bf16.msra.mxu0 %v9284
    %9423 = vmatprep.subr.bf16.mxu0 %v9287
    %9424 = vmatpush1.bf16.msra.mxu0 %v9286
    %9425 = vmatprep.subr.bf16.mxu0 %v9289
    %9426 = vmatpush1.bf16.msra.mxu0 %v9288
    %9427 = vmatprep.subr.bf16.mxu0 %v9291
    %9428 = vmatpush1.bf16.msra.mxu0 %v9290
    %9429 = vmatprep.subr.bf16.mxu0 %v9293
    %9430 = vmatpush1.bf16.msra.mxu0 %v9292
    %9431 = vmatprep.subr.bf16.mxu0 %v9295
    %9432 = vmatpush1.bf16.msra.mxu0 %v9294
    %9433 = vmatprep.subr.bf16.mxu0 %v9297
    %9434 = vmatpush1.bf16.msra.mxu0 %v9296
    %9435 = vmatprep.mubr.bf16.mxu0 %v9030
    %9436 = vmatmul.mubr.bf16.gmra.mrb[0].mxu0 %v9029
    %v9437 = vpop.f32.mrb[0].mxu0
    %v9438 = vadd.f32 %v9397, %v9437
    %v9439 = vpop.f32.mrb[0].mxu0
    %v9440 = vadd.f32 %v9399, %v9439
    %v9441 = vpop.f32.mrb[0].mxu0
    %v9442 = vpop.f32.mrb[0].mxu0
    %9443 = vdwg.mxu0
    %v9444 = vadd.f32 %v8596, %v9438
    %v9445 = vadd.f32 %v8597, %v9440
    %v9446 = vsel %vm3485, %v9444, 0.0
    %v9447 = vsel %vm3485, %v9445, 0.0
    %v9448 = vadd.f32 %v9446, %v9447
    %9449 = vadd.xlane.f32.xlu0 %v9448
    %v9450 = vpop.xlane.xlu0 %9449
    %v9451 = vmul.f32 %v9450, %v3491
    %v9452 = vsub.f32 %v9444, %v9451
    %v9453 = vsub.f32 %v9445, %v9451
    %v9454 = vmul.f32 %v9452, %v9452
    %v9455 = vmul.f32 %v9453, %v9453
    %v9456 = vsel %vm3485, %v9454, 0.0
    %v9457 = vsel %vm3485, %v9455, 0.0
    %v9458 = vadd.f32 %v9456, %v9457
    %9459 = vadd.xlane.f32.xlu0 %v9458
    %v9460 = vpop.xlane.xlu0 %9459
    %v9461 = vmul.f32 %v9460, %v3491
    %v9462 = vadd.f32 %v9461, 1e-05
    %v9463 = vrsqrt.pop %v9462
    %v9464 = vmul.f32 %v9452, %v9463
    %v9465 = vmul.f32 %v9453, %v9463
    %v9467 = vlaneseq
    %v9468 = vshrl.u32 %v9467, 7
    %v9469 = vsub.s32 0, %v9468
    %v9470 = vrot.slane %v8547, %v9469
    %v9471 = vlaneseq
    %v9472 = vshrl.u32 %v9471, 7
    %v9473 = vsub.s32 1, %v9472
    %v9474 = vrot.slane %v8547, %v9473
    %v9477 = vmul.f32 %v9464, %v9470
    %v9478 = vmul.f32 %v9465, %v9474
    %v9480 = vlaneseq
    %v9481 = vshrl.u32 %v9480, 7
    %v9482 = vsub.s32 0, %v9481
    %v9483 = vrot.slane %v8549, %v9482
    %v9484 = vlaneseq
    %v9485 = vshrl.u32 %v9484, 7
    %v9486 = vsub.s32 1, %v9485
    %v9487 = vrot.slane %v8549, %v9486
    %v9490 = vadd.f32 %v9477, %v9483
    %v9491 = vadd.f32 %v9478, %v9487
    %v9492 = vld [vmem:[%s57] sm:$0xf]
    %v9493 = vld [vmem:[%s57 + $0x4] sm:$0xf]
    %v9494 = vld [vmem:[%s57 + $0x8] sm:$0xf]
    %v9495 = vld [vmem:[%s57 + $0xc] sm:$0xf]
    %v9496 = vld [vmem:[%s57 + $0x10] sm:$0xf]
    %v9497 = vld [vmem:[%s57 + $0x14] sm:$0xf]
    %v9498 = vld [vmem:[%s57 + $0x18] sm:$0xf]
    %v9499 = vld [vmem:[%s57 + $0x1c] sm:$0xf]
    %v9500 = vld [vmem:[%s57 + $0x20] sm:$0xf]
    %v9501 = vld [vmem:[%s57 + $0x24] sm:$0xf]
    %v9502 = vld [vmem:[%s57 + $0x28] sm:$0xf]
    %v9503 = vld [vmem:[%s57 + $0x2c] sm:$0xf]
    %v9504 = vld [vmem:[%s57 + $0x30] sm:$0xf]
    %v9505 = vld [vmem:[%s57 + $0x34] sm:$0xf]
    %v9506 = vld [vmem:[%s57 + $0x38] sm:$0xf]
    %v9507 = vld [vmem:[%s57 + $0x3c] sm:$0xf]
    %v9508 = vld [vmem:[%s57 + $0x40] sm:$0xf]
    %v9509 = vld [vmem:[%s57 + $0x44] sm:$0xf]
    %v9510 = vld [vmem:[%s57 + $0x48] sm:$0xf]
    %v9511 = vld [vmem:[%s57 + $0x4c] sm:$0xf]
    %v9512 = vld [vmem:[%s57 + $0x50] sm:$0xf]
    %v9513 = vld [vmem:[%s57 + $0x54] sm:$0xf]
    %v9514 = vld [vmem:[%s57 + $0x58] sm:$0xf]
    %v9515 = vld [vmem:[%s57 + $0x5c] sm:$0xf]
    %v9516 = vld [vmem:[%s57 + $0x60] sm:$0xf]
    %v9517 = vld [vmem:[%s57 + $0x64] sm:$0xf]
    %v9518 = vld [vmem:[%s57 + $0x68] sm:$0xf]
    %v9519 = vld [vmem:[%s57 + $0x6c] sm:$0xf]
    %v9520 = vld [vmem:[%s57 + $0x70] sm:$0xf]
    %v9521 = vld [vmem:[%s57 + $0x74] sm:$0xf]
    %v9522 = vld [vmem:[%s57 + $0x78] sm:$0xf]
    %v9523 = vld [vmem:[%s57 + $0x7c] sm:$0xf]
    %v9524 = vld [vmem:[#allocation3] sm:$0x1]
    %v9525 = vpack.c.bf16 %v9490, %v9490
    %v9526 = vpack.c.bf16 %v9491, %v9491
    %v9528 = vlaneseq
    %v9529 = vshrl.u32 %v9528, 7
    %v9530 = vsub.s32 0, %v9529
    %v9531 = vrot.slane %v9524, %v9530
    %v9565 = vunpack.c.l.b16 %v9492
    %v9566 = vunpack.c.l.b16 %v9493
    %v9567 = vunpack.c.l.b16 %v9494
    %v9568 = vunpack.c.l.b16 %v9495
    %v9569 = vunpack.c.l.b16 %v9496
    %v9570 = vunpack.c.l.b16 %v9497
    %v9571 = vunpack.c.l.b16 %v9498
    %v9572 = vunpack.c.l.b16 %v9499
    %v9573 = vunpack.c.l.b16 %v9500
    %v9574 = vunpack.c.l.b16 %v9501
    %v9575 = vunpack.c.l.b16 %v9502
    %v9576 = vunpack.c.l.b16 %v9503
    %v9577 = vunpack.c.l.b16 %v9504
    %v9578 = vunpack.c.l.b16 %v9505
    %v9579 = vunpack.c.l.b16 %v9506
    %v9580 = vunpack.c.l.b16 %v9507
    %v9581 = vunpack.c.l.b16 %v9508
    %v9582 = vunpack.c.l.b16 %v9509
    %v9583 = vunpack.c.l.b16 %v9510
    %v9584 = vunpack.c.l.b16 %v9511
    %v9585 = vunpack.c.l.b16 %v9512
    %v9586 = vunpack.c.l.b16 %v9513
    %v9587 = vunpack.c.l.b16 %v9514
    %v9588 = vunpack.c.l.b16 %v9515
    %v9589 = vunpack.c.l.b16 %v9516
    %v9590 = vunpack.c.l.b16 %v9517
    %v9591 = vunpack.c.l.b16 %v9518
    %v9592 = vunpack.c.l.b16 %v9519
    %v9593 = vunpack.c.l.b16 %v9520
    %v9594 = vunpack.c.l.b16 %v9521
    %v9595 = vunpack.c.l.b16 %v9522
    %v9596 = vunpack.c.l.b16 %v9523
    %v9597 = vpack.c.b16 %v9566, %v9565
    %v9598 = vpack.c.b16 %v9568, %v9567
    %v9599 = vpack.c.b16 %v9570, %v9569
    %v9600 = vpack.c.b16 %v9572, %v9571
    %v9601 = vpack.c.b16 %v9574, %v9573
    %v9602 = vpack.c.b16 %v9576, %v9575
    %v9603 = vpack.c.b16 %v9578, %v9577
    %v9604 = vpack.c.b16 %v9580, %v9579
    %v9605 = vpack.c.b16 %v9582, %v9581
    %v9606 = vpack.c.b16 %v9584, %v9583
    %v9607 = vpack.c.b16 %v9586, %v9585
    %v9608 = vpack.c.b16 %v9588, %v9587
    %v9609 = vpack.c.b16 %v9590, %v9589
    %v9610 = vpack.c.b16 %v9592, %v9591
    %v9611 = vpack.c.b16 %v9594, %v9593
    %v9612 = vpack.c.b16 %v9596, %v9595
    %9629 = vmatprep.subr.bf16.mxu0 0
    %9630 = vmatpush1.bf16.msra.mxu0 %v9597
    %9631 = vmatprep.subr.bf16.mxu0 0
    %9632 = vmatpush1.bf16.msra.mxu0 %v9598
    %9633 = vmatprep.subr.bf16.mxu0 0
    %9634 = vmatpush1.bf16.msra.mxu0 %v9599
    %9635 = vmatprep.subr.bf16.mxu0 0
    %9636 = vmatpush1.bf16.msra.mxu0 %v9600
    %9637 = vmatprep.subr.bf16.mxu0 0
    %9638 = vmatpush1.bf16.msra.mxu0 %v9601
    %9639 = vmatprep.subr.bf16.mxu0 0
    %9640 = vmatpush1.bf16.msra.mxu0 %v9602
    %9641 = vmatprep.subr.bf16.mxu0 0
    %9642 = vmatpush1.bf16.msra.mxu0 %v9603
    %9643 = vmatprep.subr.bf16.mxu0 0
    %9644 = vmatpush1.bf16.msra.mxu0 %v9604
    %9645 = vmatprep.subr.bf16.mxu0 0
    %9646 = vmatpush1.bf16.msra.mxu0 %v9605
    %9647 = vmatprep.subr.bf16.mxu0 0
    %9648 = vmatpush1.bf16.msra.mxu0 %v9606
    %9649 = vmatprep.subr.bf16.mxu0 0
    %9650 = vmatpush1.bf16.msra.mxu0 %v9607
    %9651 = vmatprep.subr.bf16.mxu0 0
    %9652 = vmatpush1.bf16.msra.mxu0 %v9608
    %9653 = vmatprep.subr.bf16.mxu0 0
    %9654 = vmatpush1.bf16.msra.mxu0 %v9609
    %9655 = vmatprep.subr.bf16.mxu0 0
    %9656 = vmatpush1.bf16.msra.mxu0 %v9610
    %9657 = vmatprep.subr.bf16.mxu0 0
    %9658 = vmatpush1.bf16.msra.mxu0 %v9611
    %9659 = vmatprep.subr.bf16.mxu0 0
    %9660 = vmatpush1.bf16.msra.mxu0 %v9612
    %9661 = vmatprep.mubr.bf16.mxu0 %v9526
    %9662 = vmatmul.mubr.bf16.gmra.mrb[0].mxu0 %v9525
    %v9663 = vpop.f32.mrb[0].mxu0
    %v9664 = vadd.f32 %v9531, %v9663
    %v9665 = vpop.f32.mrb[0].mxu0
    %v9666 = vpop.f32.mrb[0].mxu0
    %v9667 = vpop.f32.mrb[0].mxu0
    %9668 = vdwg.mxu0
    %vm9669 = vcmask 1024
    %v9670 = vsel %vm9669, %v9664, -inf
    %v9671 = vrot.slane %v9670, 4
    %v9672 = vmax.f32 %v9670, %v9671
    %v9673 = vrot.slane %v9672, 2
    %v9674 = vmax.f32 %v9672, %v9673
    %v9675 = vrot.slane %v9674, 1
    %v9676 = vmax.f32 %v9674, %v9675
    %v9677 = vsub.f32 %v9664, %v9676
    %v9678 = vmul.f32 %v9677, 1.442695
    %v9679 = vpow.pop %v9678
    %v9680 = vsel %vm9669, %v9679, 0.0
    %v9681 = vrot.slane %v9680, 4
    %v9682 = vadd.f32 %v9680, %v9681
    %v9683 = vrot.slane %v9682, 2
    %v9684 = vadd.f32 %v9682, %v9683
    %v9685 = vrot.slane %v9684, 1
    %v9686 = vadd.f32 %v9684, %v9685
    %v9687 = vrcp.pop %v9686
    %v9688 = vmul.f32 %v9679, %v9687
    %9690 = vset.pattern.permute.xlu0 0
    %9691 = vperm.xlu0 %9690, %v9688
    %v9692 = vpop.permute.xlu0 %9691
    %v9694 = vmul.f32 %v9692, %v9490
    %v9695 = vmul.f32 %v9692, %v9491
    %v9696 = vsel %vm3485, %v9694, 0.0
    %v9697 = vrot.slane %v9696, 4
    %v9698 = vadd.f32 %v9696, %v9697
    %v9699 = vrot.slane %v9698, 2
    %v9700 = vadd.f32 %v9698, %v9699
    %v9701 = vrot.slane %v9700, 1
    %v9702 = vadd.f32 %v9700, %v9701
    %v9703 = vsel %vm3485, %v9695, 0.0
    %v9704 = vrot.slane %v9703, 4
    %v9705 = vadd.f32 %v9703, %v9704
    %v9706 = vrot.slane %v9705, 2
    %v9707 = vadd.f32 %v9705, %v9706
    %v9708 = vrot.slane %v9707, 1
    %v9709 = vadd.f32 %v9707, %v9708
    %v9710 = vpack.c.bf16 %v6836, %v6836
    %v9711 = vpack.c.bf16 %v6837, %v6837
    %v9712 = vld [vmem:[%s85] sm:$0xff]
    %v9713 = vld [vmem:[%s85 + $0x8] sm:$0xff]
    %v9714 = vld [vmem:[%s85 + $0x10] sm:$0xff]
    %v9715 = vld [vmem:[%s85 + $0x18] sm:$0xff]
    %v9716 = vld [vmem:[%s85 + $0x20] sm:$0xff]
    %v9717 = vld [vmem:[%s85 + $0x28] sm:$0xff]
    %v9718 = vld [vmem:[%s85 + $0x30] sm:$0xff]
    %v9719 = vld [vmem:[%s85 + $0x38] sm:$0xff]
    %v9720 = vld [vmem:[%s85 + $0x40] sm:$0xff]
    %v9721 = vld [vmem:[%s85 + $0x48] sm:$0xff]
    %v9722 = vld [vmem:[%s85 + $0x50] sm:$0xff]
    %v9723 = vld [vmem:[%s85 + $0x58] sm:$0xff]
    %v9724 = vld [vmem:[%s85 + $0x60] sm:$0xff]
    %v9725 = vld [vmem:[%s85 + $0x68] sm:$0xff]
    %v9726 = vld [vmem:[%s85 + $0x70] sm:$0xff]
    %v9727 = vld [vmem:[%s85 + $0x78] sm:$0xff]
    %v9728 = vld [vmem:[%s85 + $0x80] sm:$0xff]
    %v9729 = vld [vmem:[%s85 + $0x88] sm:$0xff]
    %v9730 = vld [vmem:[%s85 + $0x90] sm:$0xff]
    %v9731 = vld [vmem:[%s85 + $0x98] sm:$0xff]
    %v9732 = vld [vmem:[%s85 + $0xa0] sm:$0xff]
    %v9733 = vld [vmem:[%s85 + $0xa8] sm:$0xff]
    %v9734 = vld [vmem:[%s85 + $0xb0] sm:$0xff]
    %v9735 = vld [vmem:[%s85 + $0xb8] sm:$0xff]
    %v9736 = vld [vmem:[%s85 + $0xc0] sm:$0xff]
    %v9737 = vld [vmem:[%s85 + $0xc8] sm:$0xff]
    %v9738 = vld [vmem:[%s85 + $0xd0] sm:$0xff]
    %v9739 = vld [vmem:[%s85 + $0xd8] sm:$0xff]
    %v9740 = vld [vmem:[%s85 + $0xe0] sm:$0xff]
    %v9741 = vld [vmem:[%s85 + $0xe8] sm:$0xff]
    %v9742 = vld [vmem:[%s85 + $0xf0] sm:$0xff]
    %v9743 = vld [vmem:[%s85 + $0xf8] sm:$0xff]
    %v9744 = vpack.c.bf16 %v9702, %v9702
    %v9745 = vpack.c.bf16 %v9709, %v9709
    %v9746 = vld [vmem:[%s87] sm:$0xff]
    %v9747 = vld [vmem:[%s87 + $0x8] sm:$0xff]
    %v9748 = vld [vmem:[%s87 + $0x10] sm:$0xff]
    %v9749 = vld [vmem:[%s87 + $0x18] sm:$0xff]
    %v9750 = vld [vmem:[%s87 + $0x20] sm:$0xff]
    %v9751 = vld [vmem:[%s87 + $0x28] sm:$0xff]
    %v9752 = vld [vmem:[%s87 + $0x30] sm:$0xff]
    %v9753 = vld [vmem:[%s87 + $0x38] sm:$0xff]
    %v9754 = vld [vmem:[%s87 + $0x40] sm:$0xff]
    %v9755 = vld [vmem:[%s87 + $0x48] sm:$0xff]
    %v9756 = vld [vmem:[%s87 + $0x50] sm:$0xff]
    %v9757 = vld [vmem:[%s87 + $0x58] sm:$0xff]
    %v9758 = vld [vmem:[%s87 + $0x60] sm:$0xff]
    %v9759 = vld [vmem:[%s87 + $0x68] sm:$0xff]
    %v9760 = vld [vmem:[%s87 + $0x70] sm:$0xff]
    %v9761 = vld [vmem:[%s87 + $0x78] sm:$0xff]
    %v9762 = vld [vmem:[%s87 + $0x80] sm:$0xff]
    %v9763 = vld [vmem:[%s87 + $0x88] sm:$0xff]
    %v9764 = vld [vmem:[%s87 + $0x90] sm:$0xff]
    %v9765 = vld [vmem:[%s87 + $0x98] sm:$0xff]
    %v9766 = vld [vmem:[%s87 + $0xa0] sm:$0xff]
    %v9767 = vld [vmem:[%s87 + $0xa8] sm:$0xff]
    %v9768 = vld [vmem:[%s87 + $0xb0] sm:$0xff]
    %v9769 = vld [vmem:[%s87 + $0xb8] sm:$0xff]
    %v9770 = vld [vmem:[%s87 + $0xc0] sm:$0xff]
    %v9771 = vld [vmem:[%s87 + $0xc8] sm:$0xff]
    %v9772 = vld [vmem:[%s87 + $0xd0] sm:$0xff]
    %v9773 = vld [vmem:[%s87 + $0xd8] sm:$0xff]
    %v9774 = vld [vmem:[%s87 + $0xe0] sm:$0xff]
    %v9775 = vld [vmem:[%s87 + $0xe8] sm:$0xff]
    %v9776 = vld [vmem:[%s87 + $0xf0] sm:$0xff]
    %v9777 = vld [vmem:[%s87 + $0xf8] sm:$0xff]
    %v9810 = vunpack.c.l.b16 %v9746
    %v9811 = vunpack.c.h.b16 %v9746
    %v9812 = vunpack.c.l.b16 %v9747
    %v9813 = vunpack.c.h.b16 %v9747
    %v9814 = vunpack.c.l.b16 %v9748
    %v9815 = vunpack.c.h.b16 %v9748
    %v9816 = vunpack.c.l.b16 %v9749
    %v9817 = vunpack.c.h.b16 %v9749
    %v9818 = vunpack.c.l.b16 %v9750
    %v9819 = vunpack.c.h.b16 %v9750
    %v9820 = vunpack.c.l.b16 %v9751
    %v9821 = vunpack.c.h.b16 %v9751
    %v9822 = vunpack.c.l.b16 %v9752
    %v9823 = vunpack.c.h.b16 %v9752
    %v9824 = vunpack.c.l.b16 %v9753
    %v9825 = vunpack.c.h.b16 %v9753
    %v9826 = vunpack.c.l.b16 %v9754
    %v9827 = vunpack.c.h.b16 %v9754
    %v9828 = vunpack.c.l.b16 %v9755
    %v9829 = vunpack.c.h.b16 %v9755
    %v9830 = vunpack.c.l.b16 %v9756
    %v9831 = vunpack.c.h.b16 %v9756
    %v9832 = vunpack.c.l.b16 %v9757
    %v9833 = vunpack.c.h.b16 %v9757
    %v9834 = vunpack.c.l.b16 %v9758
    %v9835 = vunpack.c.h.b16 %v9758
    %v9836 = vunpack.c.l.b16 %v9759
    %v9837 = vunpack.c.h.b16 %v9759
    %v9838 = vunpack.c.l.b16 %v9760
    %v9839 = vunpack.c.h.b16 %v9760
    %v9840 = vunpack.c.l.b16 %v9761
    %v9841 = vunpack.c.h.b16 %v9761
    %v9842 = vunpack.c.l.b16 %v9762
    %v9843 = vunpack.c.h.b16 %v9762
    %v9844 = vunpack.c.l.b16 %v9763
    %v9845 = vunpack.c.h.b16 %v9763
    %v9846 = vunpack.c.l.b16 %v9764
    %v9847 = vunpack.c.h.b16 %v9764
    %v9848 = vunpack.c.l.b16 %v9765
    %v9849 = vunpack.c.h.b16 %v9765
    %v9850 = vunpack.c.l.b16 %v9766
    %v9851 = vunpack.c.h.b16 %v9766
    %v9852 = vunpack.c.l.b16 %v9767
    %v9853 = vunpack.c.h.b16 %v9767
    %v9854 = vunpack.c.l.b16 %v9768
    %v9855 = vunpack.c.h.b16 %v9768
    %v9856 = vunpack.c.l.b16 %v9769
    %v9857 = vunpack.c.h.b16 %v9769
    %v9858 = vunpack.c.l.b16 %v9770
    %v9859 = vunpack.c.h.b16 %v9770
    %v9860 = vunpack.c.l.b16 %v9771
    %v9861 = vunpack.c.h.b16 %v9771
    %v9862 = vunpack.c.l.b16 %v9772
    %v9863 = vunpack.c.h.b16 %v9772
    %v9864 = vunpack.c.l.b16 %v9773
    %v9865 = vunpack.c.h.b16 %v9773
    %v9866 = vunpack.c.l.b16 %v9774
    %v9867 = vunpack.c.h.b16 %v9774
    %v9868 = vunpack.c.l.b16 %v9775
    %v9869 = vunpack.c.h.b16 %v9775
    %v9870 = vunpack.c.l.b16 %v9776
    %v9871 = vunpack.c.h.b16 %v9776
    %v9872 = vunpack.c.l.b16 %v9777
    %v9873 = vunpack.c.h.b16 %v9777
    %v9874 = vpack.c.b16 %v9812, %v9810
    %v9875 = vpack.c.b16 %v9813, %v9811
    %v9876 = vpack.c.b16 %v9816, %v9814
    %v9877 = vpack.c.b16 %v9817, %v9815
    %v9878 = vpack.c.b16 %v9820, %v9818
    %v9879 = vpack.c.b16 %v9821, %v9819
    %v9880 = vpack.c.b16 %v9824, %v9822
    %v9881 = vpack.c.b16 %v9825, %v9823
    %v9882 = vpack.c.b16 %v9828, %v9826
    %v9883 = vpack.c.b16 %v9829, %v9827
    %v9884 = vpack.c.b16 %v9832, %v9830
    %v9885 = vpack.c.b16 %v9833, %v9831
    %v9886 = vpack.c.b16 %v9836, %v9834
    %v9887 = vpack.c.b16 %v9837, %v9835
    %v9888 = vpack.c.b16 %v9840, %v9838
    %v9889 = vpack.c.b16 %v9841, %v9839
    %v9890 = vpack.c.b16 %v9844, %v9842
    %v9891 = vpack.c.b16 %v9845, %v9843
    %v9892 = vpack.c.b16 %v9848, %v9846
    %v9893 = vpack.c.b16 %v9849, %v9847
    %v9894 = vpack.c.b16 %v9852, %v9850
    %v9895 = vpack.c.b16 %v9853, %v9851
    %v9896 = vpack.c.b16 %v9856, %v9854
    %v9897 = vpack.c.b16 %v9857, %v9855
    %v9898 = vpack.c.b16 %v9860, %v9858
    %v9899 = vpack.c.b16 %v9861, %v9859
    %v9900 = vpack.c.b16 %v9864, %v9862
    %v9901 = vpack.c.b16 %v9865, %v9863
    %v9902 = vpack.c.b16 %v9868, %v9866
    %v9903 = vpack.c.b16 %v9869, %v9867
    %v9904 = vpack.c.b16 %v9872, %v9870
    %v9905 = vpack.c.b16 %v9873, %v9871
    %9938 = vmatprep.subr.bf16.mxu0 %v9875
    %9939 = vmatpush1.bf16.msra.mxu0 %v9874
    %9940 = vmatprep.subr.bf16.mxu0 %v9877
    %9941 = vmatpush1.bf16.msra.mxu0 %v9876
    %9942 = vmatprep.subr.bf16.mxu0 %v9879
    %9943 = vmatpush1.bf16.msra.mxu0 %v9878
    %9944 = vmatprep.subr.bf16.mxu0 %v9881
    %9945 = vmatpush1.bf16.msra.mxu0 %v9880
    %9946 = vmatprep.subr.bf16.mxu0 %v9883
    %9947 = vmatpush1.bf16.msra.mxu0 %v9882
    %9948 = vmatprep.subr.bf16.mxu0 %v9885
    %9949 = vmatpush1.bf16.msra.mxu0 %v9884
    %9950 = vmatprep.subr.bf16.mxu0 %v9887
    %9951 = vmatpush1.bf16.msra.mxu0 %v9886
    %9952 = vmatprep.subr.bf16.mxu0 %v9889
    %9953 = vmatpush1.bf16.msra.mxu0 %v9888
    %9954 = vmatprep.subr.bf16.mxu0 %v9891
    %9955 = vmatpush1.bf16.msra.mxu0 %v9890
    %9956 = vmatprep.subr.bf16.mxu0 %v9893
    %9957 = vmatpush1.bf16.msra.mxu0 %v9892
    %9958 = vmatprep.subr.bf16.mxu0 %v9895
    %9959 = vmatpush1.bf16.msra.mxu0 %v9894
    %9960 = vmatprep.subr.bf16.mxu0 %v9897
    %9961 = vmatpush1.bf16.msra.mxu0 %v9896
    %9962 = vmatprep.subr.bf16.mxu0 %v9899
    %9963 = vmatpush1.bf16.msra.mxu0 %v9898
    %9964 = vmatprep.subr.bf16.mxu0 %v9901
    %9965 = vmatpush1.bf16.msra.mxu0 %v9900
    %9966 = vmatprep.subr.bf16.mxu0 %v9903
    %9967 = vmatpush1.bf16.msra.mxu0 %v9902
    %9968 = vmatprep.subr.bf16.mxu0 %v9905
    %9969 = vmatpush1.bf16.msra.mxu0 %v9904
    %9970 = vmatprep.mubr.bf16.mxu0 %v9745
    %9971 = vmatmul.mubr.bf16.gmra.mrb[0].mxu0 %v9744
    %v9972 = vpop.f32.mrb[0].mxu0
    %v9973 = vadd.f32 0.0, %v9972
    %v9974 = vpop.f32.mrb[0].mxu0
    %v9975 = vadd.f32 0.0, %v9974
    %v9976 = vpop.f32.mrb[0].mxu0
    %v9977 = vpop.f32.mrb[0].mxu0
    %9978 = vdwg.mxu0
    %v9979 = vlaneseq
    %v9980 = vshrl.u32 %v9979, 7
    %v9981 = vsub.s32 0, %v9980
    %v9982 = vrot.slane %v9973, %v9981
    %v9983 = vlaneseq
    %v9984 = vshrl.u32 %v9983, 7
    %v9985 = vsub.s32 0, %v9984
    %v9986 = vrot.slane %v9975, %v9985
    %v10019 = vunpack.c.l.b16 %v9712
    %v10020 = vunpack.c.h.b16 %v9712
    %v10021 = vunpack.c.l.b16 %v9713
    %v10022 = vunpack.c.h.b16 %v9713
    %v10023 = vunpack.c.l.b16 %v9714
    %v10024 = vunpack.c.h.b16 %v9714
    %v10025 = vunpack.c.l.b16 %v9715
    %v10026 = vunpack.c.h.b16 %v9715
    %v10027 = vunpack.c.l.b16 %v9716
    %v10028 = vunpack.c.h.b16 %v9716
    %v10029 = vunpack.c.l.b16 %v9717
    %v10030 = vunpack.c.h.b16 %v9717
    %v10031 = vunpack.c.l.b16 %v9718
    %v10032 = vunpack.c.h.b16 %v9718
    %v10033 = vunpack.c.l.b16 %v9719
    %v10034 = vunpack.c.h.b16 %v9719
    %v10035 = vunpack.c.l.b16 %v9720
    %v10036 = vunpack.c.h.b16 %v9720
    %v10037 = vunpack.c.l.b16 %v9721
    %v10038 = vunpack.c.h.b16 %v9721
    %v10039 = vunpack.c.l.b16 %v9722
    %v10040 = vunpack.c.h.b16 %v9722
    %v10041 = vunpack.c.l.b16 %v9723
    %v10042 = vunpack.c.h.b16 %v9723
    %v10043 = vunpack.c.l.b16 %v9724
    %v10044 = vunpack.c.h.b16 %v9724
    %v10045 = vunpack.c.l.b16 %v9725
    %v10046 = vunpack.c.h.b16 %v9725
    %v10047 = vunpack.c.l.b16 %v9726
    %v10048 = vunpack.c.h.b16 %v9726
    %v10049 = vunpack.c.l.b16 %v9727
    %v10050 = vunpack.c.h.b16 %v9727
    %v10051 = vunpack.c.l.b16 %v9728
    %v10052 = vunpack.c.h.b16 %v9728
    %v10053 = vunpack.c.l.b16 %v9729
    %v10054 = vunpack.c.h.b16 %v9729
    %v10055 = vunpack.c.l.b16 %v9730
    %v10056 = vunpack.c.h.b16 %v9730
    %v10057 = vunpack.c.l.b16 %v9731
    %v10058 = vunpack.c.h.b16 %v9731
    %v10059 = vunpack.c.l.b16 %v9732
    %v10060 = vunpack.c.h.b16 %v9732
    %v10061 = vunpack.c.l.b16 %v9733
    %v10062 = vunpack.c.h.b16 %v9733
    %v10063 = vunpack.c.l.b16 %v9734
    %v10064 = vunpack.c.h.b16 %v9734
    %v10065 = vunpack.c.l.b16 %v9735
    %v10066 = vunpack.c.h.b16 %v9735
    %v10067 = vunpack.c.l.b16 %v9736
    %v10068 = vunpack.c.h.b16 %v9736
    %v10069 = vunpack.c.l.b16 %v9737
    %v10070 = vunpack.c.h.b16 %v9737
    %v10071 = vunpack.c.l.b16 %v9738
    %v10072 = vunpack.c.h.b16 %v9738
    %v10073 = vunpack.c.l.b16 %v9739
    %v10074 = vunpack.c.h.b16 %v9739
    %v10075 = vunpack.c.l.b16 %v9740
    %v10076 = vunpack.c.h.b16 %v9740
    %v10077 = vunpack.c.l.b16 %v9741
    %v10078 = vunpack.c.h.b16 %v9741
    %v10079 = vunpack.c.l.b16 %v9742
    %v10080 = vunpack.c.h.b16 %v9742
    %v10081 = vunpack.c.l.b16 %v9743
    %v10082 = vunpack.c.h.b16 %v9743
    %v10083 = vpack.c.b16 %v10021, %v10019
    %v10084 = vpack.c.b16 %v10022, %v10020
    %v10085 = vpack.c.b16 %v10025, %v10023
    %v10086 = vpack.c.b16 %v10026, %v10024
    %v10087 = vpack.c.b16 %v10029, %v10027
    %v10088 = vpack.c.b16 %v10030, %v10028
    %v10089 = vpack.c.b16 %v10033, %v10031
    %v10090 = vpack.c.b16 %v10034, %v10032
    %v10091 = vpack.c.b16 %v10037, %v10035
    %v10092 = vpack.c.b16 %v10038, %v10036
    %v10093 = vpack.c.b16 %v10041, %v10039
    %v10094 = vpack.c.b16 %v10042, %v10040
    %v10095 = vpack.c.b16 %v10045, %v10043
    %v10096 = vpack.c.b16 %v10046, %v10044
    %v10097 = vpack.c.b16 %v10049, %v10047
    %v10098 = vpack.c.b16 %v10050, %v10048
    %v10099 = vpack.c.b16 %v10053, %v10051
    %v10100 = vpack.c.b16 %v10054, %v10052
    %v10101 = vpack.c.b16 %v10057, %v10055
    %v10102 = vpack.c.b16 %v10058, %v10056
    %v10103 = vpack.c.b16 %v10061, %v10059
    %v10104 = vpack.c.b16 %v10062, %v10060
    %v10105 = vpack.c.b16 %v10065, %v10063
    %v10106 = vpack.c.b16 %v10066, %v10064
    %v10107 = vpack.c.b16 %v10069, %v10067
    %v10108 = vpack.c.b16 %v10070, %v10068
    %v10109 = vpack.c.b16 %v10073, %v10071
    %v10110 = vpack.c.b16 %v10074, %v10072
    %v10111 = vpack.c.b16 %v10077, %v10075
    %v10112 = vpack.c.b16 %v10078, %v10076
    %v10113 = vpack.c.b16 %v10081, %v10079
    %v10114 = vpack.c.b16 %v10082, %v10080
    %10147 = vmatprep.subr.bf16.mxu0 %v10084
    %10148 = vmatpush1.bf16.msra.mxu0 %v10083
    %10149 = vmatprep.subr.bf16.mxu0 %v10086
    %10150 = vmatpush1.bf16.msra.mxu0 %v10085
    %10151 = vmatprep.subr.bf16.mxu0 %v10088
    %10152 = vmatpush1.bf16.msra.mxu0 %v10087
    %10153 = vmatprep.subr.bf16.mxu0 %v10090
    %10154 = vmatpush1.bf16.msra.mxu0 %v10089
    %10155 = vmatprep.subr.bf16.mxu0 %v10092
    %10156 = vmatpush1.bf16.msra.mxu0 %v10091
    %10157 = vmatprep.subr.bf16.mxu0 %v10094
    %10158 = vmatpush1.bf16.msra.mxu0 %v10093
    %10159 = vmatprep.subr.bf16.mxu0 %v10096
    %10160 = vmatpush1.bf16.msra.mxu0 %v10095
    %10161 = vmatprep.subr.bf16.mxu0 %v10098
    %10162 = vmatpush1.bf16.msra.mxu0 %v10097
    %10163 = vmatprep.subr.bf16.mxu0 %v10100
    %10164 = vmatpush1.bf16.msra.mxu0 %v10099
    %10165 = vmatprep.subr.bf16.mxu0 %v10102
    %10166 = vmatpush1.bf16.msra.mxu0 %v10101
    %10167 = vmatprep.subr.bf16.mxu0 %v10104
    %10168 = vmatpush1.bf16.msra.mxu0 %v10103
    %10169 = vmatprep.subr.bf16.mxu0 %v10106
    %10170 = vmatpush1.bf16.msra.mxu0 %v10105
    %10171 = vmatprep.subr.bf16.mxu0 %v10108
    %10172 = vmatpush1.bf16.msra.mxu0 %v10107
    %10173 = vmatprep.subr.bf16.mxu0 %v10110
    %10174 = vmatpush1.bf16.msra.mxu0 %v10109
    %10175 = vmatprep.subr.bf16.mxu0 %v10112
    %10176 = vmatpush1.bf16.msra.mxu0 %v10111
    %10177 = vmatprep.subr.bf16.mxu0 %v10114
    %10178 = vmatpush1.bf16.msra.mxu0 %v10113
    %10179 = vmatprep.mubr.bf16.mxu0 %v9711
    %10180 = vmatmul.mubr.bf16.gmra.mrb[0].mxu0 %v9710
    %v10181 = vpop.f32.mrb[0].mxu0
    %v10182 = vadd.f32 %v9982, %v10181
    %v10183 = vpop.f32.mrb[0].mxu0
    %v10184 = vadd.f32 %v9986, %v10183
    %v10185 = vpop.f32.mrb[0].mxu0
    %v10186 = vpop.f32.mrb[0].mxu0
    %10187 = vdwg.mxu0
    %v10188 = vld [vmem:[%s83] sm:$0x3]
    %v10190 = vlaneseq
    %v10191 = vshrl.u32 %v10190, 7
    %v10192 = vsub.s32 0, %v10191
    %v10193 = vrot.slane %v10188, %v10192
    %v10194 = vlaneseq
    %v10195 = vshrl.u32 %v10194, 7
    %v10196 = vsub.s32 1, %v10195
    %v10197 = vrot.slane %v10188, %v10196
    %v10200 = vadd.f32 %v10182, %v10193
    %v10201 = vadd.f32 %v10184, %v10197
    %v10202 = vmax.f32 %v10200, 0.0
    %v10203 = vmax.f32 %v10201, 0.0
    %v10204 = vld [vmem:[%s91] sm:$0xff]
    %v10205 = vld [vmem:[%s91 + $0x8] sm:$0xff]
    %v10206 = vld [vmem:[%s91 + $0x10] sm:$0xff]
    %v10207 = vld [vmem:[%s91 + $0x18] sm:$0xff]
    %v10208 = vld [vmem:[%s91 + $0x20] sm:$0xff]
    %v10209 = vld [vmem:[%s91 + $0x28] sm:$0xff]
    %v10210 = vld [vmem:[%s91 + $0x30] sm:$0xff]
    %v10211 = vld [vmem:[%s91 + $0x38] sm:$0xff]
    %v10212 = vld [vmem:[%s91 + $0x40] sm:$0xff]
    %v10213 = vld [vmem:[%s91 + $0x48] sm:$0xff]
    %v10214 = vld [vmem:[%s91 + $0x50] sm:$0xff]
    %v10215 = vld [vmem:[%s91 + $0x58] sm:$0xff]
    %v10216 = vld [vmem:[%s91 + $0x60] sm:$0xff]
    %v10217 = vld [vmem:[%s91 + $0x68] sm:$0xff]
    %v10218 = vld [vmem:[%s91 + $0x70] sm:$0xff]
    %v10219 = vld [vmem:[%s91 + $0x78] sm:$0xff]
    %v10220 = vld [vmem:[%s91 + $0x80] sm:$0xff]
    %v10221 = vld [vmem:[%s91 + $0x88] sm:$0xff]
    %v10222 = vld [vmem:[%s91 + $0x90] sm:$0xff]
    %v10223 = vld [vmem:[%s91 + $0x98] sm:$0xff]
    %v10224 = vld [vmem:[%s91 + $0xa0] sm:$0xff]
    %v10225 = vld [vmem:[%s91 + $0xa8] sm:$0xff]
    %v10226 = vld [vmem:[%s91 + $0xb0] sm:$0xff]
    %v10227 = vld [vmem:[%s91 + $0xb8] sm:$0xff]
    %v10228 = vld [vmem:[%s91 + $0xc0] sm:$0xff]
    %v10229 = vld [vmem:[%s91 + $0xc8] sm:$0xff]
    %v10230 = vld [vmem:[%s91 + $0xd0] sm:$0xff]
    %v10231 = vld [vmem:[%s91 + $0xd8] sm:$0xff]
    %v10232 = vld [vmem:[%s91 + $0xe0] sm:$0xff]
    %v10233 = vld [vmem:[%s91 + $0xe8] sm:$0xff]
    %v10234 = vld [vmem:[%s91 + $0xf0] sm:$0xff]
    %v10235 = vld [vmem:[%s91 + $0xf8] sm:$0xff]
    %v10236 = vld [vmem:[%s89] sm:$0x3]
    %v10237 = vpack.c.bf16 %v10202, %v10202
    %v10238 = vpack.c.bf16 %v10203, %v10203
    %v10240 = vlaneseq
    %v10241 = vshrl.u32 %v10240, 7
    %v10242 = vsub.s32 0, %v10241
    %v10243 = vrot.slane %v10236, %v10242
    %v10244 = vlaneseq
    %v10245 = vshrl.u32 %v10244, 7
    %v10246 = vsub.s32 1, %v10245
    %v10247 = vrot.slane %v10236, %v10246
    %v10282 = vunpack.c.l.b16 %v10204
    %v10283 = vunpack.c.h.b16 %v10204
    %v10284 = vunpack.c.l.b16 %v10205
    %v10285 = vunpack.c.h.b16 %v10205
    %v10286 = vunpack.c.l.b16 %v10206
    %v10287 = vunpack.c.h.b16 %v10206
    %v10288 = vunpack.c.l.b16 %v10207
    %v10289 = vunpack.c.h.b16 %v10207
    %v10290 = vunpack.c.l.b16 %v10208
    %v10291 = vunpack.c.h.b16 %v10208
    %v10292 = vunpack.c.l.b16 %v10209
    %v10293 = vunpack.c.h.b16 %v10209
    %v10294 = vunpack.c.l.b16 %v10210
    %v10295 = vunpack.c.h.b16 %v10210
    %v10296 = vunpack.c.l.b16 %v10211
    %v10297 = vunpack.c.h.b16 %v10211
    %v10298 = vunpack.c.l.b16 %v10212
    %v10299 = vunpack.c.h.b16 %v10212
    %v10300 = vunpack.c.l.b16 %v10213
    %v10301 = vunpack.c.h.b16 %v10213
    %v10302 = vunpack.c.l.b16 %v10214
    %v10303 = vunpack.c.h.b16 %v10214
    %v10304 = vunpack.c.l.b16 %v10215
    %v10305 = vunpack.c.h.b16 %v10215
    %v10306 = vunpack.c.l.b16 %v10216
    %v10307 = vunpack.c.h.b16 %v10216
    %v10308 = vunpack.c.l.b16 %v10217
    %v10309 = vunpack.c.h.b16 %v10217
    %v10310 = vunpack.c.l.b16 %v10218
    %v10311 = vunpack.c.h.b16 %v10218
    %v10312 = vunpack.c.l.b16 %v10219
    %v10313 = vunpack.c.h.b16 %v10219
    %v10314 = vunpack.c.l.b16 %v10220
    %v10315 = vunpack.c.h.b16 %v10220
    %v10316 = vunpack.c.l.b16 %v10221
    %v10317 = vunpack.c.h.b16 %v10221
    %v10318 = vunpack.c.l.b16 %v10222
    %v10319 = vunpack.c.h.b16 %v10222
    %v10320 = vunpack.c.l.b16 %v10223
    %v10321 = vunpack.c.h.b16 %v10223
    %v10322 = vunpack.c.l.b16 %v10224
    %v10323 = vunpack.c.h.b16 %v10224
    %v10324 = vunpack.c.l.b16 %v10225
    %v10325 = vunpack.c.h.b16 %v10225
    %v10326 = vunpack.c.l.b16 %v10226
    %v10327 = vunpack.c.h.b16 %v10226
    %v10328 = vunpack.c.l.b16 %v10227
    %v10329 = vunpack.c.h.b16 %v10227
    %v10330 = vunpack.c.l.b16 %v10228
    %v10331 = vunpack.c.h.b16 %v10228
    %v10332 = vunpack.c.l.b16 %v10229
    %v10333 = vunpack.c.h.b16 %v10229
    %v10334 = vunpack.c.l.b16 %v10230
    %v10335 = vunpack.c.h.b16 %v10230
    %v10336 = vunpack.c.l.b16 %v10231
    %v10337 = vunpack.c.h.b16 %v10231
    %v10338 = vunpack.c.l.b16 %v10232
    %v10339 = vunpack.c.h.b16 %v10232
    %v10340 = vunpack.c.l.b16 %v10233
    %v10341 = vunpack.c.h.b16 %v10233
    %v10342 = vunpack.c.l.b16 %v10234
    %v10343 = vunpack.c.h.b16 %v10234
    %v10344 = vunpack.c.l.b16 %v10235
    %v10345 = vunpack.c.h.b16 %v10235
    %v10346 = vpack.c.b16 %v10284, %v10282
    %v10347 = vpack.c.b16 %v10285, %v10283
    %v10348 = vpack.c.b16 %v10288, %v10286
    %v10349 = vpack.c.b16 %v10289, %v10287
    %v10350 = vpack.c.b16 %v10292, %v10290
    %v10351 = vpack.c.b16 %v10293, %v10291
    %v10352 = vpack.c.b16 %v10296, %v10294
    %v10353 = vpack.c.b16 %v10297, %v10295
    %v10354 = vpack.c.b16 %v10300, %v10298
    %v10355 = vpack.c.b16 %v10301, %v10299
    %v10356 = vpack.c.b16 %v10304, %v10302
    %v10357 = vpack.c.b16 %v10305, %v10303
    %v10358 = vpack.c.b16 %v10308, %v10306
    %v10359 = vpack.c.b16 %v10309, %v10307
    %v10360 = vpack.c.b16 %v10312, %v10310
    %v10361 = vpack.c.b16 %v10313, %v10311
    %v10362 = vpack.c.b16 %v10316, %v10314
    %v10363 = vpack.c.b16 %v10317, %v10315
    %v10364 = vpack.c.b16 %v10320, %v10318
    %v10365 = vpack.c.b16 %v10321, %v10319
    %v10366 = vpack.c.b16 %v10324, %v10322
    %v10367 = vpack.c.b16 %v10325, %v10323
    %v10368 = vpack.c.b16 %v10328, %v10326
    %v10369 = vpack.c.b16 %v10329, %v10327
    %v10370 = vpack.c.b16 %v10332, %v10330
    %v10371 = vpack.c.b16 %v10333, %v10331
    %v10372 = vpack.c.b16 %v10336, %v10334
    %v10373 = vpack.c.b16 %v10337, %v10335
    %v10374 = vpack.c.b16 %v10340, %v10338
    %v10375 = vpack.c.b16 %v10341, %v10339
    %v10376 = vpack.c.b16 %v10344, %v10342
    %v10377 = vpack.c.b16 %v10345, %v10343
    %10410 = vmatprep.subr.bf16.mxu0 %v10347
    %10411 = vmatpush1.bf16.msra.mxu0 %v10346
    %10412 = vmatprep.subr.bf16.mxu0 %v10349
    %10413 = vmatpush1.bf16.msra.mxu0 %v10348
    %10414 = vmatprep.subr.bf16.mxu0 %v10351
    %10415 = vmatpush1.bf16.msra.mxu0 %v10350
    %10416 = vmatprep.subr.bf16.mxu0 %v10353
    %10417 = vmatpush1.bf16.msra.mxu0 %v10352
    %10418 = vmatprep.subr.bf16.mxu0 %v10355
    %10419 = vmatpush1.bf16.msra.mxu0 %v10354
    %10420 = vmatprep.subr.bf16.mxu0 %v10357
    %10421 = vmatpush1.bf16.msra.mxu0 %v10356
    %10422 = vmatprep.subr.bf16.mxu0 %v10359
    %10423 = vmatpush1.bf16.msra.mxu0 %v10358
    %10424 = vmatprep.subr.bf16.mxu0 %v10361
    %10425 = vmatpush1.bf16.msra.mxu0 %v10360
    %10426 = vmatprep.subr.bf16.mxu0 %v10363
    %10427 = vmatpush1.bf16.msra.mxu0 %v10362
    %10428 = vmatprep.subr.bf16.mxu0 %v10365
    %10429 = vmatpush1.bf16.msra.mxu0 %v10364
    %10430 = vmatprep.subr.bf16.mxu0 %v10367
    %10431 = vmatpush1.bf16.msra.mxu0 %v10366
    %10432 = vmatprep.subr.bf16.mxu0 %v10369
    %10433 = vmatpush1.bf16.msra.mxu0 %v10368
    %10434 = vmatprep.subr.bf16.mxu0 %v10371
    %10435 = vmatpush1.bf16.msra.mxu0 %v10370
    %10436 = vmatprep.subr.bf16.mxu0 %v10373
    %10437 = vmatpush1.bf16.msra.mxu0 %v10372
    %10438 = vmatprep.subr.bf16.mxu0 %v10375
    %10439 = vmatpush1.bf16.msra.mxu0 %v10374
    %10440 = vmatprep.subr.bf16.mxu0 %v10377
    %10441 = vmatpush1.bf16.msra.mxu0 %v10376
    %10442 = vmatprep.mubr.bf16.mxu0 %v10238
    %10443 = vmatmul.mubr.bf16.gmra.mrb[0].mxu0 %v10237
    %v10444 = vpop.f32.mrb[0].mxu0
    %v10445 = vadd.f32 %v10243, %v10444
    %v10446 = vpop.f32.mrb[0].mxu0
    %v10447 = vadd.f32 %v10247, %v10446
    %v10448 = vpop.f32.mrb[0].mxu0
    %v10449 = vpop.f32.mrb[0].mxu0
    %10450 = vdwg.mxu0
    %v10451 = vmax.f32 %v10445, 0.0
    %v10452 = vmax.f32 %v10447, 0.0
    %v10453 = vld [vmem:[%s13] sm:$0xf]
    %v10454 = vld [vmem:[%s13 + $0x4] sm:$0xf]
    %v10455 = vld [vmem:[%s13 + $0x8] sm:$0xf]
    %v10456 = vld [vmem:[%s13 + $0xc] sm:$0xf]
    %v10457 = vld [vmem:[%s13 + $0x10] sm:$0xf]
    %v10458 = vld [vmem:[%s13 + $0x14] sm:$0xf]
    %v10459 = vld [vmem:[%s13 + $0x18] sm:$0xf]
    %v10460 = vld [vmem:[%s13 + $0x1c] sm:$0xf]
    %v10461 = vld [vmem:[%s13 + $0x20] sm:$0xf]
    %v10462 = vld [vmem:[%s13 + $0x24] sm:$0xf]
    %v10463 = vld [vmem:[%s13 + $0x28] sm:$0xf]
    %v10464 = vld [vmem:[%s13 + $0x2c] sm:$0xf]
    %v10465 = vld [vmem:[%s13 + $0x30] sm:$0xf]
    %v10466 = vld [vmem:[%s13 + $0x34] sm:$0xf]
    %v10467 = vld [vmem:[%s13 + $0x38] sm:$0xf]
    %v10468 = vld [vmem:[%s13 + $0x3c] sm:$0xf]
    %v10469 = vld [vmem:[%s13 + $0x40] sm:$0xf]
    %v10470 = vld [vmem:[%s13 + $0x44] sm:$0xf]
    %v10471 = vld [vmem:[%s13 + $0x48] sm:$0xf]
    %v10472 = vld [vmem:[%s13 + $0x4c] sm:$0xf]
    %v10473 = vld [vmem:[%s13 + $0x50] sm:$0xf]
    %v10474 = vld [vmem:[%s13 + $0x54] sm:$0xf]
    %v10475 = vld [vmem:[%s13 + $0x58] sm:$0xf]
    %v10476 = vld [vmem:[%s13 + $0x5c] sm:$0xf]
    %v10477 = vld [vmem:[%s13 + $0x60] sm:$0xf]
    %v10478 = vld [vmem:[%s13 + $0x64] sm:$0xf]
    %v10479 = vld [vmem:[%s13 + $0x68] sm:$0xf]
    %v10480 = vld [vmem:[%s13 + $0x6c] sm:$0xf]
    %v10481 = vld [vmem:[%s13 + $0x70] sm:$0xf]
    %v10482 = vld [vmem:[%s13 + $0x74] sm:$0xf]
    %v10483 = vld [vmem:[%s13 + $0x78] sm:$0xf]
    %v10484 = vld [vmem:[%s13 + $0x7c] sm:$0xf]
    %v10485 = vld [vmem:[#allocation2] sm:$0x1]
    %v10486 = vpack.c.bf16 %v10451, %v10451
    %v10487 = vpack.c.bf16 %v10452, %v10452
    %v10489 = vlaneseq
    %v10490 = vshrl.u32 %v10489, 7
    %v10491 = vsub.s32 0, %v10490
    %v10492 = vrot.slane %v10485, %v10491
    %v10526 = vunpack.c.l.b16 %v10453
    %v10527 = vunpack.c.l.b16 %v10454
    %v10528 = vunpack.c.l.b16 %v10455
    %v10529 = vunpack.c.l.b16 %v10456
    %v10530 = vunpack.c.l.b16 %v10457
    %v10531 = vunpack.c.l.b16 %v10458
    %v10532 = vunpack.c.l.b16 %v10459
    %v10533 = vunpack.c.l.b16 %v10460
    %v10534 = vunpack.c.l.b16 %v10461
    %v10535 = vunpack.c.l.b16 %v10462
    %v10536 = vunpack.c.l.b16 %v10463
    %v10537 = vunpack.c.l.b16 %v10464
    %v10538 = vunpack.c.l.b16 %v10465
    %v10539 = vunpack.c.l.b16 %v10466
    %v10540 = vunpack.c.l.b16 %v10467
    %v10541 = vunpack.c.l.b16 %v10468
    %v10542 = vunpack.c.l.b16 %v10469
    %v10543 = vunpack.c.l.b16 %v10470
    %v10544 = vunpack.c.l.b16 %v10471
    %v10545 = vunpack.c.l.b16 %v10472
    %v10546 = vunpack.c.l.b16 %v10473
    %v10547 = vunpack.c.l.b16 %v10474
    %v10548 = vunpack.c.l.b16 %v10475
    %v10549 = vunpack.c.l.b16 %v10476
    %v10550 = vunpack.c.l.b16 %v10477
    %v10551 = vunpack.c.l.b16 %v10478
    %v10552 = vunpack.c.l.b16 %v10479
    %v10553 = vunpack.c.l.b16 %v10480
    %v10554 = vunpack.c.l.b16 %v10481
    %v10555 = vunpack.c.l.b16 %v10482
    %v10556 = vunpack.c.l.b16 %v10483
    %v10557 = vunpack.c.l.b16 %v10484
    %v10558 = vpack.c.b16 %v10527, %v10526
    %v10559 = vpack.c.b16 %v10529, %v10528
    %v10560 = vpack.c.b16 %v10531, %v10530
    %v10561 = vpack.c.b16 %v10533, %v10532
    %v10562 = vpack.c.b16 %v10535, %v10534
    %v10563 = vpack.c.b16 %v10537, %v10536
    %v10564 = vpack.c.b16 %v10539, %v10538
    %v10565 = vpack.c.b16 %v10541, %v10540
    %v10566 = vpack.c.b16 %v10543, %v10542
    %v10567 = vpack.c.b16 %v10545, %v10544
    %v10568 = vpack.c.b16 %v10547, %v10546
    %v10569 = vpack.c.b16 %v10549, %v10548
    %v10570 = vpack.c.b16 %v10551, %v10550
    %v10571 = vpack.c.b16 %v10553, %v10552
    %v10572 = vpack.c.b16 %v10555, %v10554
    %v10573 = vpack.c.b16 %v10557, %v10556
    %10590 = vmatprep.subr.bf16.mxu0 0
    %10591 = vmatpush1.bf16.msra.mxu0 %v10558
    %10592 = vmatprep.subr.bf16.mxu0 0
    %10593 = vmatpush1.bf16.msra.mxu0 %v10559
    %10594 = vmatprep.subr.bf16.mxu0 0
    %10595 = vmatpush1.bf16.msra.mxu0 %v10560
    %10596 = vmatprep.subr.bf16.mxu0 0
    %10597 = vmatpush1.bf16.msra.mxu0 %v10561
    %10598 = vmatprep.subr.bf16.mxu0 0
    %10599 = vmatpush1.bf16.msra.mxu0 %v10562
    %10600 = vmatprep.subr.bf16.mxu0 0
    %10601 = vmatpush1.bf16.msra.mxu0 %v10563
    %10602 = vmatprep.subr.bf16.mxu0 0
    %10603 = vmatpush1.bf16.msra.mxu0 %v10564
    %10604 = vmatprep.subr.bf16.mxu0 0
    %10605 = vmatpush1.bf16.msra.mxu0 %v10565
    %10606 = vmatprep.subr.bf16.mxu0 0
    %10607 = vmatpush1.bf16.msra.mxu0 %v10566
    %10608 = vmatprep.subr.bf16.mxu0 0
    %10609 = vmatpush1.bf16.msra.mxu0 %v10567
    %10610 = vmatprep.subr.bf16.mxu0 0
    %10611 = vmatpush1.bf16.msra.mxu0 %v10568
    %10612 = vmatprep.subr.bf16.mxu0 0
    %10613 = vmatpush1.bf16.msra.mxu0 %v10569
    %10614 = vmatprep.subr.bf16.mxu0 0
    %10615 = vmatpush1.bf16.msra.mxu0 %v10570
    %10616 = vmatprep.subr.bf16.mxu0 0
    %10617 = vmatpush1.bf16.msra.mxu0 %v10571
    %10618 = vmatprep.subr.bf16.mxu0 0
    %10619 = vmatpush1.bf16.msra.mxu0 %v10572
    %10620 = vmatprep.subr.bf16.mxu0 0
    %10621 = vmatpush1.bf16.msra.mxu0 %v10573
    %10622 = vmatprep.mubr.bf16.mxu0 %v10487
    %10623 = vmatmul.mubr.bf16.gmra.mrb[0].mxu0 %v10486
    %v10624 = vpop.f32.mrb[0].mxu0
    %v10625 = vadd.f32 %v10492, %v10624
    %v10626 = vpop.f32.mrb[0].mxu0
    %v10627 = vpop.f32.mrb[0].mxu0
    %v10628 = vpop.f32.mrb[0].mxu0
    %10629 = vdwg.mxu0
    %v10630 = vsub.f32 0.0, %v10625
    %v10631 = vmul.f32 %v10630, 1.442695
    %v10632 = vpow.pop %v10631
    %v10633 = vadd.f32 %v10632, 1.0
    %v10634 = vrcp.pop %v10633
    %v10635 = vmul.f32 1.0, %v10634
    %10636 = vst.msk [vmem:[%s93] sm:$0x3] %vm9669, %v10635
    // Predicated region
    $region186: #{mcat_surv_forward.1} parent=1 // pred_check
      _
    $region187: #{mcat_surv_forward.1} parent=1 // pred_check_branch
      %10638 = sbr.rel (0) target = $region189
    $region188: #{mcat_surv_forward.1} parent=1 // pred_region
      _
    $region189: #{mcat_surv_forward.1} parent=1 // pred_fallthru
      _
    // Predicated region
    $region190: #{mcat_surv_forward.1} parent=1 // pred_check
      _
    $region191: #{mcat_surv_forward.1} parent=1 // pred_check_branch
      %10640 = sbr.rel (0) target = $region193
    $region192: #{mcat_surv_forward.1} parent=1 // pred_region
      %s10642 = ssub.s32 32, 32
      %10643 = vsyncadd [#allocation5], %s10642
      %s10645 = sshll.u32 [#allocation4], 4
      %s10646 = int_to_ptr.vmem [resolvable:$true] %s10645
      %10648 = dma.vmem_to_hbm [thread:$0]  %s10646, 32, %s95, [#allocation5]
    $region193: #{mcat_surv_forward.1} parent=1 // pred_fallthru
      _
    // Predicated region
    $region194: #{mcat_surv_forward.1} parent=1 // pred_check
      _
    $region195: #{mcat_surv_forward.1} parent=1 // pred_check_branch
      %10650 = sbr.rel (0) target = $region197
    $region196: #{mcat_surv_forward.1} parent=1 // pred_region
      _
    $region197: #{mcat_surv_forward.1} parent=1 // pred_fallthru
      _
    // Predicated region
    $region198: #{mcat_surv_forward.1} parent=1 // pred_check
      _
    $region199: #{mcat_surv_forward.1} parent=1 // pred_check_branch
      %10652 = sbr.rel (0) target = $region201
    $region200: #{mcat_surv_forward.1} parent=1 // pred_region
      %10653 = dma.done [#allocation5], 32
    $region201: #{mcat_surv_forward.1} parent=1 // pred_fallthru
      _
    %10654 = vsyncpa [#allocation5], 1

</llo_original>
